<compile_context>
chip_gen: v6e
topology: v6e:2x2x1
jax: 0.10.0
libtpu: 0.0.40
codegen_flags: <defaults>
</compile_context>

<pallas_src>
import functools

import jax
import jax.numpy as jnp
from jax.experimental import pallas as pl
from jax.experimental.pallas import tpu as pltpu


# -----------------------------------------------------------------------------
# Digit conventions (per batch b, per H index h):
#   d0 in [128) = 16*e + 4*i2 + i1        (e = d2 in [8), i2, i1 in [4))
#   w0 in [256) = 64*q + 32*m1 + 16*m0 + 4*j2 + j1
#                 (q = w2//4 in [4), m = 2*m1+m0 = w2%4, j2, j1 in [4))
#   d2 = 4*d3 + i3,  d3 = i4 in [2);   w2 = 4*w3 + j3,  w3 = j4 in [4)
#
# Kernel-internal layouts (rows x lanes):
#   A1: rows (m1, i2, q, e, h)        lanes (m0, j2, i1, j1)      = 128
#   Y1: same rows                     lanes (m0, j2, c1)          = 128
#   A2: rows (q, e, h)                lanes (m1, i2, m0, j2, c1)  = 1024
#   Y2: rows (q, e, h)                lanes (m,  c2)              = 128
#   A3: rows (d3, h)                  lanes (q, i3, j3, c2)       = 2048
#   Y3: rows (d3, h)                  lanes (w3, c3)              = 256
#   A4: rows (h)                      lanes (d3, w3, c3)          = 512
#   Y4: rows (h)                      lanes (c4)                  = 128  -> out
# -----------------------------------------------------------------------------


def _band_encoder_kernel(a1_ref, w1_ref, b1_ref, w2_ref, b2_ref,
                         w3_ref, b3_ref, w4_ref, b4_ref, o_ref, *, slope):
    th = a1_ref.shape[2]  # H tile (multiple of 8)

    def lrelu(v):
        return jnp.where(v >= 0, v, slope * v)

    # ---- layer 1: (256*th, 128) @ (128, 128) -------------------------------
    a1 = a1_ref[0].reshape(256 * th, 128)
    y1 = jnp.dot(a1, w1_ref[...], preferred_element_type=jnp.float32)
    y1 = lrelu(y1 + b1_ref[...])
    y1 = y1.reshape(2, 4, 4, 8, th, 128)          # (m1, i2, q, e, h, lanes)

    # ---- layer 2: gather (m1, i2) into lanes; rows = (q, e, h) -------------
    a2 = jnp.concatenate(
        [y1[m1, i2] for m1 in range(2) for i2 in range(4)], axis=-1)
    a2 = a2.reshape(32 * th, 1024)
    y2 = jnp.dot(a2, w2_ref[...], preferred_element_type=jnp.float32)
    y2 = lrelu(y2 + b2_ref[...])
    y2 = y2.reshape(4, 2, 4, th, 128)             # (q, d3, i3, h, lanes)

    # ---- layer 3: gather (q, i3) into lanes; rows = (d3, h) ----------------
    a3 = jnp.concatenate(
        [y2[q, :, i3] for q in range(4) for i3 in range(4)], axis=-1)
    a3 = a3.reshape(2 * th, 2048)
    y3 = jnp.dot(a3, w3_ref[...], preferred_element_type=jnp.float32)
    y3 = lrelu(y3 + b3_ref[...])
    y3 = y3.reshape(2, th, 256)                   # (d3, h, lanes)

    # ---- layer 4 (no activation): gather d3 into lanes; rows = (h) ---------
    a4 = jnp.concatenate([y3[0], y3[1]], axis=-1)  # (th, 512)
    y4 = jnp.dot(a4, w4_ref[...], preferred_element_type=jnp.float32)
    y4 = y4 + b4_ref[...]
    o_ref[0] = y4.astype(o_ref.dtype)


def pack_params(params):
    """Fold PyTorch-layout Conv3d weights into the packed GEMM matrices the
    kernel expects.  Done once, outside the forward pass."""
    f32 = jnp.float32
    w1, b1 = params["w1"].astype(f32), params["b1"].astype(f32)
    w2, b2 = params["w2"].astype(f32), params["b2"].astype(f32)
    w3, b3 = params["w3"].astype(f32), params["b3"].astype(f32)
    w4, b4 = params["w4"].astype(f32), params["b4"].astype(f32)

    # layer 1: 8 output pixels per row -> 8-copy block-diagonal (128, 128).
    w1c = jnp.transpose(w1[:, 0, :, 0, :], (1, 2, 0)).reshape(16, 16)  # [(i1,j1), c1]
    w1e = jnp.kron(jnp.eye(8, dtype=f32), w1c)
    b1e = jnp.tile(b1, 8).reshape(1, 128)

    # layer 2: 4 output pixels per row; pack digit m = 2*m1 + m0 is split
    # across the A2 lane order (m1, i2, m0, j2, c1) -> permuted block-diag.
    w2c = jnp.transpose(w2[:, :, :, 0, :], (2, 3, 1, 0))               # (i2, j2, c1, c2)
    msel = jnp.eye(4, dtype=f32).reshape(2, 2, 4)                      # [m1, m0, m']
    w2e = jnp.einsum("xym,ijcd->xiyjcmd", msel, w2c).reshape(1024, 128)
    b2e = jnp.tile(b2, 4).reshape(1, 128)

    # layer 3: 4 output pixels (w3) per row; A3 lane order (q, i3, j3, c2).
    w3c = jnp.transpose(w3[:, :, :, 0, :], (2, 3, 1, 0))               # (i3, j3, c2, c3)
    w3e = jnp.einsum("qw,ijcd->qijcwd", jnp.eye(4, dtype=f32), w3c).reshape(2048, 256)
    b3e = jnp.tile(b3, 4).reshape(1, 256)

    # layer 4: plain permuted GEMM weight; A4 lane order (d3, w3, c3).
    w4e = jnp.transpose(w4[:, :, :, 0, :], (2, 3, 1, 0)).reshape(512, 128)
    b4e = b4.reshape(1, 128)

    return dict(w1=w1e, b1=b1e, w2=w2e, b2=b2e, w3=w3e, b3=b3e, w4=w4e, b4=b4e)


def band_encoder_forward(x, packed, periodicity_feature_size, tile_h=8):
    """Matches BandEncoder.forward.  Output: (B, 32, 128)."""
    P = periodicity_feature_size
    if P != 256:
        raise ValueError("BandEncoder needs periodicity_feature_size == 256 "
                         "for its final reshape to (-1, 128, 32).")
    x = x.reshape(-1, 1, 128, 32, P)
    B = x.shape[0]
    x = x.reshape(B, 128, 32, 256).astype(jnp.float32)

    assert 32 % tile_h == 0 and tile_h % 8 == 0, tile_h

    # Single host-side transpose: pack layer-1 patches into a lane-dense
    # (B, 256, 32, 128) layout: rows (m1, i2, q, e), lanes (m0, j2, i1, j1).
    xr = x.reshape(B, 8, 4, 4, 32, 4, 2, 2, 4, 4)
    a1 = xr.transpose(0, 6, 2, 5, 1, 4, 7, 8, 3, 9).reshape(B, 256, 32, 128)

    kernel = functools.partial(_band_encoder_kernel, slope=0.2)
    grid = (B, 32 // tile_h)

    in_specs = [
        pl.BlockSpec((1, 256, tile_h, 128), lambda b, t: (b, 0, t, 0)),
        pl.BlockSpec((128, 128), lambda b, t: (0, 0)),
        pl.BlockSpec((1, 128), lambda b, t: (0, 0)),
        pl.BlockSpec((1024, 128), lambda b, t: (0, 0)),
        pl.BlockSpec((1, 128), lambda b, t: (0, 0)),
        pl.BlockSpec((2048, 256), lambda b, t: (0, 0)),
        pl.BlockSpec((1, 256), lambda b, t: (0, 0)),
        pl.BlockSpec((512, 128), lambda b, t: (0, 0)),
        pl.BlockSpec((1, 128), lambda b, t: (0, 0)),
    ]

    out = pl.pallas_call(
        kernel,
        out_shape=jax.ShapeDtypeStruct((B, 32, 128), jnp.float32),
        grid_spec=pltpu.PrefetchScalarGridSpec(
            num_scalar_prefetch=0,
            grid=grid,
            in_specs=in_specs,
            out_specs=pl.BlockSpec((1, tile_h, 128), lambda b, t: (b, t, 0)),
        ),
        compiler_params=pltpu.CompilerParams(
            dimension_semantics=("parallel", "parallel"),
            vmem_limit_bytes=32 * 1024 * 1024),
    )(a1, packed["w1"], packed["b1"], packed["w2"], packed["b2"],
      packed["w3"], packed["b3"], packed["w4"], packed["b4"])
    return out


def band_encoder_reference(x, params, periodicity_feature_size):
    """Plain-JAX reference (lax conv, f32, HIGHEST precision)."""
    x = x.reshape(-1, 1, 128, 32, periodicity_feature_size).astype(jnp.float32)

    def conv(v, w, b, sd, sw):
        y = jax.lax.conv_general_dilated(
            v, w.astype(jnp.float32), window_strides=(sd, 1, sw),
            padding="VALID", dimension_numbers=("NCDHW", "OIDHW", "NCDHW"),
            precision=jax.lax.Precision.HIGHEST)
        return y + b.reshape(1, -1, 1, 1, 1)

    lrelu = lambda t: jnp.where(t >= 0, t, 0.2 * t)
    x = lrelu(conv(x, params["w1"], params["b1"], 4, 4))
    x = lrelu(conv(x, params["w2"], params["b2"], 4, 4))
    x = lrelu(conv(x, params["w3"], params["b3"], 4, 4))
    x = conv(x, params["w4"], params["b4"], 2, 4)
    x = x.reshape(-1, 128, 32)
    return jnp.transpose(x, (0, 2, 1))


def init_params(key):
    """Deterministic PyTorch-style (uniform +/- 1/sqrt(fan_in)) init."""
    def init_conv(k, cout, cin, kd, kw):
        k1, k2 = jax.random.split(k)
        fan_in = cin * kd * 1 * kw
        bound = 1.0 / float(fan_in) ** 0.5
        w = jax.random.uniform(k1, (cout, cin, kd, 1, kw), jnp.float32,
                               -bound, bound)
        b = jax.random.uniform(k2, (cout,), jnp.float32, -bound, bound)
        return w, b

    keys = jax.random.split(key, 4)
    params = {}
    params["w1"], params["b1"] = init_conv(keys[0], 16, 1, 4, 4)
    params["w2"], params["b2"] = init_conv(keys[1], 32, 16, 4, 4)
    params["w3"], params["b3"] = init_conv(keys[2], 64, 32, 4, 4)
    params["w4"], params["b4"] = init_conv(keys[3], 128, 64, 2, 4)
    return params


if __name__ == "__main__":
    key = jax.random.PRNGKey(0)
    pkey, xkey = jax.random.split(key)

    # The module's reshape to (-1, 128, 32) requires periodicity_feature_size
    # to reduce to 1 after /4/4/4/4 => P = 256; D=128 and H=32 are hard-coded.
    P = 256
    B = 2
    params = init_params(pkey)
    x = jax.random.normal(xkey, (B, 128, 32, P), jnp.float32)

    packed = pack_params(params)
    fwd = jax.jit(lambda inp, pk: band_encoder_forward(inp, pk, P))
    out = jax.block_until_ready(fwd(x, packed))
    assert out.shape == (B, 32, 128), out.shape
    assert out.dtype == jnp.float32

    # Numerical check against the plain-JAX Conv3d reference.
    ref = jax.block_until_ready(
        jax.jit(lambda inp: band_encoder_reference(inp, params, P))(x))
    err = float(jnp.max(jnp.abs(out - ref)))
    ref_max = float(jnp.max(jnp.abs(ref)))
    assert err <= 0.05 * ref_max + 1e-4, (err, ref_max)

    print("KERNEL_OK")
</pallas_src>

<mosaic_0001>
module attributes {stable_mosaic.version = 11 : i64} {
  func.func @_band_encoder_kernel(%arg0: i32, %arg1: i32, %arg2: memref<1x256x8x128xf32, #tpu.memory_space<vmem>>, %arg3: memref<128x128xf32, #tpu.memory_space<vmem>>, %arg4: memref<1x128xf32, #tpu.memory_space<vmem>>, %arg5: memref<1024x128xf32, #tpu.memory_space<vmem>>, %arg6: memref<1x128xf32, #tpu.memory_space<vmem>>, %arg7: memref<2048x256xf32, #tpu.memory_space<vmem>>, %arg8: memref<1x256xf32, #tpu.memory_space<vmem>>, %arg9: memref<512x128xf32, #tpu.memory_space<vmem>>, %arg10: memref<1x128xf32, #tpu.memory_space<vmem>>, %arg11: memref<1x8x128xf32, #tpu.memory_space<vmem>>) attributes {dimension_semantics = [#tpu.dimension_semantics<parallel>, #tpu.dimension_semantics<parallel>], iteration_bounds = array<i64: 2, 4>, scalar_prefetch = 0 : i64, scratch_operands = 0 : i64, tpu.core_type = #tpu.core_type<tc>, window_params = [{transform_indices = @transform_0, window_bounds = array<i64: 1, 256, 8, 128>}, {pipeline_mode = #tpu.pipeline_mode<synchronous>, transform_indices = @transform_1, window_bounds = array<i64: 128, 128>}, {pipeline_mode = #tpu.pipeline_mode<synchronous>, transform_indices = @transform_2, window_bounds = array<i64: 1, 128>}, {pipeline_mode = #tpu.pipeline_mode<synchronous>, transform_indices = @transform_3, window_bounds = array<i64: 1024, 128>}, {pipeline_mode = #tpu.pipeline_mode<synchronous>, transform_indices = @transform_4, window_bounds = array<i64: 1, 128>}, {pipeline_mode = #tpu.pipeline_mode<synchronous>, transform_indices = @transform_5, window_bounds = array<i64: 2048, 256>}, {pipeline_mode = #tpu.pipeline_mode<synchronous>, transform_indices = @transform_6, window_bounds = array<i64: 1, 256>}, {pipeline_mode = #tpu.pipeline_mode<synchronous>, transform_indices = @transform_7, window_bounds = array<i64: 512, 128>}, {pipeline_mode = #tpu.pipeline_mode<synchronous>, transform_indices = @transform_8, window_bounds = array<i64: 1, 128>}, {transform_indices = @transform_9, window_bounds = array<i64: 1, 8, 128>}]} {
    %c0 = arith.constant 0 : index
    %c0_0 = arith.constant 0 : index
    %c0_1 = arith.constant 0 : index
    %c0_2 = arith.constant 0 : index
    %0 = vector.load %arg2[%c0, %c0_0, %c0_1, %c0_2] : memref<1x256x8x128xf32, #tpu.memory_space<vmem>>, vector<1x256x8x128xf32>
    %1 = vector.shape_cast %0 : vector<1x256x8x128xf32> to vector<256x8x128xf32>
    %2 = vector.shape_cast %1 : vector<256x8x128xf32> to vector<2048x128xf32>
    %c0_3 = arith.constant 0 : index
    %c0_4 = arith.constant 0 : index
    %3 = vector.load %arg3[%c0_3, %c0_4] : memref<128x128xf32, #tpu.memory_space<vmem>>, vector<128x128xf32>
    %cst = arith.constant dense<0.000000e+00> : vector<2048x128xf32>
    %4 = tpu.matmul %2, %3, %cst {dimension_numbers = #tpu.dot_dimension_numbers<[1], [0], [0], [1], [0, 0, 1, 1], [], []>} : vector<2048x128xf32>, vector<128x128xf32>, vector<2048x128xf32> -> vector<2048x128xf32>
    %c0_5 = arith.constant 0 : index
    %c0_6 = arith.constant 0 : index
    %5 = vector.load %arg4[%c0_5, %c0_6] : memref<1x128xf32, #tpu.memory_space<vmem>>, vector<1x128xf32>
    %6 = vector.broadcast %5 : vector<1x128xf32> to vector<2048x128xf32>
    %7 = arith.addf %4, %6 : vector<2048x128xf32>
    %cst_7 = arith.constant 0.000000e+00 : f32
    %8 = vector.broadcast %cst_7 : f32 to vector<2048x128xf32>
    %9 = arith.cmpf oge, %7, %8 : vector<2048x128xf32>
    %cst_8 = arith.constant 2.000000e-01 : f32
    %10 = vector.broadcast %cst_8 : f32 to vector<2048x128xf32>
    %11 = arith.mulf %10, %7 : vector<2048x128xf32>
    %12 = arith.select %9, %7, %11 : vector<2048x128xi1>, vector<2048x128xf32>
    %13 = vector.shape_cast %12 : vector<2048x128xf32> to vector<2x4x4x8x8x128xf32>
    %14 = vector.extract_strided_slice %13 {offsets = [0, 0, 0, 0, 0, 0], sizes = [1, 1, 4, 8, 8, 128], strides = [1, 1, 1, 1, 1, 1]} : vector<2x4x4x8x8x128xf32> to vector<1x1x4x8x8x128xf32>
    %15 = vector.shape_cast %14 : vector<1x1x4x8x8x128xf32> to vector<4x8x8x128xf32>
    %16 = vector.extract_strided_slice %13 {offsets = [0, 1, 0, 0, 0, 0], sizes = [1, 1, 4, 8, 8, 128], strides = [1, 1, 1, 1, 1, 1]} : vector<2x4x4x8x8x128xf32> to vector<1x1x4x8x8x128xf32>
    %17 = vector.shape_cast %16 : vector<1x1x4x8x8x128xf32> to vector<4x8x8x128xf32>
    %18 = vector.extract_strided_slice %13 {offsets = [0, 2, 0, 0, 0, 0], sizes = [1, 1, 4, 8, 8, 128], strides = [1, 1, 1, 1, 1, 1]} : vector<2x4x4x8x8x128xf32> to vector<1x1x4x8x8x128xf32>
    %19 = vector.shape_cast %18 : vector<1x1x4x8x8x128xf32> to vector<4x8x8x128xf32>
    %20 = vector.extract_strided_slice %13 {offsets = [0, 3, 0, 0, 0, 0], sizes = [1, 1, 4, 8, 8, 128], strides = [1, 1, 1, 1, 1, 1]} : vector<2x4x4x8x8x128xf32> to vector<1x1x4x8x8x128xf32>
    %21 = vector.shape_cast %20 : vector<1x1x4x8x8x128xf32> to vector<4x8x8x128xf32>
    %22 = vector.extract_strided_slice %13 {offsets = [1, 0, 0, 0, 0, 0], sizes = [1, 1, 4, 8, 8, 128], strides = [1, 1, 1, 1, 1, 1]} : vector<2x4x4x8x8x128xf32> to vector<1x1x4x8x8x128xf32>
    %23 = vector.shape_cast %22 : vector<1x1x4x8x8x128xf32> to vector<4x8x8x128xf32>
    %24 = vector.extract_strided_slice %13 {offsets = [1, 1, 0, 0, 0, 0], sizes = [1, 1, 4, 8, 8, 128], strides = [1, 1, 1, 1, 1, 1]} : vector<2x4x4x8x8x128xf32> to vector<1x1x4x8x8x128xf32>
    %25 = vector.shape_cast %24 : vector<1x1x4x8x8x128xf32> to vector<4x8x8x128xf32>
    %26 = vector.extract_strided_slice %13 {offsets = [1, 2, 0, 0, 0, 0], sizes = [1, 1, 4, 8, 8, 128], strides = [1, 1, 1, 1, 1, 1]} : vector<2x4x4x8x8x128xf32> to vector<1x1x4x8x8x128xf32>
    %27 = vector.shape_cast %26 : vector<1x1x4x8x8x128xf32> to vector<4x8x8x128xf32>
    %28 = vector.extract_strided_slice %13 {offsets = [1, 3, 0, 0, 0, 0], sizes = [1, 1, 4, 8, 8, 128], strides = [1, 1, 1, 1, 1, 1]} : vector<2x4x4x8x8x128xf32> to vector<1x1x4x8x8x128xf32>
    %29 = vector.shape_cast %28 : vector<1x1x4x8x8x128xf32> to vector<4x8x8x128xf32>
    %30 = tpu.concatenate %15, %17, %19, %21, %23, %25, %27, %29 in 3 : vector<4x8x8x128xf32>, vector<4x8x8x128xf32>, vector<4x8x8x128xf32>, vector<4x8x8x128xf32>, vector<4x8x8x128xf32>, vector<4x8x8x128xf32>, vector<4x8x8x128xf32>, vector<4x8x8x128xf32> -> vector<4x8x8x1024xf32>
    %31 = vector.shape_cast %30 : vector<4x8x8x1024xf32> to vector<256x1024xf32>
    %c0_9 = arith.constant 0 : index
    %c0_10 = arith.constant 0 : index
    %32 = vector.load %arg5[%c0_9, %c0_10] : memref<1024x128xf32, #tpu.memory_space<vmem>>, vector<1024x128xf32>
    %cst_11 = arith.constant dense<0.000000e+00> : vector<256x128xf32>
    %33 = tpu.matmul %31, %32, %cst_11 {dimension_numbers = #tpu.dot_dimension_numbers<[1], [0], [0], [1], [0, 0, 1, 1], [], []>} : vector<256x1024xf32>, vector<1024x128xf32>, vector<256x128xf32> -> vector<256x128xf32>
    %c0_12 = arith.constant 0 : index
    %c0_13 = arith.constant 0 : index
    %34 = vector.load %arg6[%c0_12, %c0_13] : memref<1x128xf32, #tpu.memory_space<vmem>>, vector<1x128xf32>
    %35 = vector.broadcast %34 : vector<1x128xf32> to vector<256x128xf32>
    %36 = arith.addf %33, %35 : vector<256x128xf32>
    %cst_14 = arith.constant 0.000000e+00 : f32
    %37 = vector.broadcast %cst_14 : f32 to vector<256x128xf32>
    %38 = arith.cmpf oge, %36, %37 : vector<256x128xf32>
    %cst_15 = arith.constant 2.000000e-01 : f32
    %39 = vector.broadcast %cst_15 : f32 to vector<256x128xf32>
    %40 = arith.mulf %39, %36 : vector<256x128xf32>
    %41 = arith.select %38, %36, %40 : vector<256x128xi1>, vector<256x128xf32>
    %42 = vector.shape_cast %41 : vector<256x128xf32> to vector<4x2x4x8x128xf32>
    %43 = vector.extract_strided_slice %42 {offsets = [0, 0, 0, 0, 0], sizes = [1, 2, 1, 8, 128], strides = [1, 1, 1, 1, 1]} : vector<4x2x4x8x128xf32> to vector<1x2x1x8x128xf32>
    %44 = vector.shape_cast %43 : vector<1x2x1x8x128xf32> to vector<2x8x128xf32>
    %45 = vector.extract_strided_slice %42 {offsets = [0, 0, 1, 0, 0], sizes = [1, 2, 1, 8, 128], strides = [1, 1, 1, 1, 1]} : vector<4x2x4x8x128xf32> to vector<1x2x1x8x128xf32>
    %46 = vector.shape_cast %45 : vector<1x2x1x8x128xf32> to vector<2x8x128xf32>
    %47 = vector.extract_strided_slice %42 {offsets = [0, 0, 2, 0, 0], sizes = [1, 2, 1, 8, 128], strides = [1, 1, 1, 1, 1]} : vector<4x2x4x8x128xf32> to vector<1x2x1x8x128xf32>
    %48 = vector.shape_cast %47 : vector<1x2x1x8x128xf32> to vector<2x8x128xf32>
    %49 = vector.extract_strided_slice %42 {offsets = [0, 0, 3, 0, 0], sizes = [1, 2, 1, 8, 128], strides = [1, 1, 1, 1, 1]} : vector<4x2x4x8x128xf32> to vector<1x2x1x8x128xf32>
    %50 = vector.shape_cast %49 : vector<1x2x1x8x128xf32> to vector<2x8x128xf32>
    %51 = vector.extract_strided_slice %42 {offsets = [1, 0, 0, 0, 0], sizes = [1, 2, 1, 8, 128], strides = [1, 1, 1, 1, 1]} : vector<4x2x4x8x128xf32> to vector<1x2x1x8x128xf32>
    %52 = vector.shape_cast %51 : vector<1x2x1x8x128xf32> to vector<2x8x128xf32>
    %53 = vector.extract_strided_slice %42 {offsets = [1, 0, 1, 0, 0], sizes = [1, 2, 1, 8, 128], strides = [1, 1, 1, 1, 1]} : vector<4x2x4x8x128xf32> to vector<1x2x1x8x128xf32>
    %54 = vector.shape_cast %53 : vector<1x2x1x8x128xf32> to vector<2x8x128xf32>
    %55 = vector.extract_strided_slice %42 {offsets = [1, 0, 2, 0, 0], sizes = [1, 2, 1, 8, 128], strides = [1, 1, 1, 1, 1]} : vector<4x2x4x8x128xf32> to vector<1x2x1x8x128xf32>
    %56 = vector.shape_cast %55 : vector<1x2x1x8x128xf32> to vector<2x8x128xf32>
    %57 = vector.extract_strided_slice %42 {offsets = [1, 0, 3, 0, 0], sizes = [1, 2, 1, 8, 128], strides = [1, 1, 1, 1, 1]} : vector<4x2x4x8x128xf32> to vector<1x2x1x8x128xf32>
    %58 = vector.shape_cast %57 : vector<1x2x1x8x128xf32> to vector<2x8x128xf32>
    %59 = vector.extract_strided_slice %42 {offsets = [2, 0, 0, 0, 0], sizes = [1, 2, 1, 8, 128], strides = [1, 1, 1, 1, 1]} : vector<4x2x4x8x128xf32> to vector<1x2x1x8x128xf32>
    %60 = vector.shape_cast %59 : vector<1x2x1x8x128xf32> to vector<2x8x128xf32>
    %61 = vector.extract_strided_slice %42 {offsets = [2, 0, 1, 0, 0], sizes = [1, 2, 1, 8, 128], strides = [1, 1, 1, 1, 1]} : vector<4x2x4x8x128xf32> to vector<1x2x1x8x128xf32>
    %62 = vector.shape_cast %61 : vector<1x2x1x8x128xf32> to vector<2x8x128xf32>
    %63 = vector.extract_strided_slice %42 {offsets = [2, 0, 2, 0, 0], sizes = [1, 2, 1, 8, 128], strides = [1, 1, 1, 1, 1]} : vector<4x2x4x8x128xf32> to vector<1x2x1x8x128xf32>
    %64 = vector.shape_cast %63 : vector<1x2x1x8x128xf32> to vector<2x8x128xf32>
    %65 = vector.extract_strided_slice %42 {offsets = [2, 0, 3, 0, 0], sizes = [1, 2, 1, 8, 128], strides = [1, 1, 1, 1, 1]} : vector<4x2x4x8x128xf32> to vector<1x2x1x8x128xf32>
    %66 = vector.shape_cast %65 : vector<1x2x1x8x128xf32> to vector<2x8x128xf32>
    %67 = vector.extract_strided_slice %42 {offsets = [3, 0, 0, 0, 0], sizes = [1, 2, 1, 8, 128], strides = [1, 1, 1, 1, 1]} : vector<4x2x4x8x128xf32> to vector<1x2x1x8x128xf32>
    %68 = vector.shape_cast %67 : vector<1x2x1x8x128xf32> to vector<2x8x128xf32>
    %69 = vector.extract_strided_slice %42 {offsets = [3, 0, 1, 0, 0], sizes = [1, 2, 1, 8, 128], strides = [1, 1, 1, 1, 1]} : vector<4x2x4x8x128xf32> to vector<1x2x1x8x128xf32>
    %70 = vector.shape_cast %69 : vector<1x2x1x8x128xf32> to vector<2x8x128xf32>
    %71 = vector.extract_strided_slice %42 {offsets = [3, 0, 2, 0, 0], sizes = [1, 2, 1, 8, 128], strides = [1, 1, 1, 1, 1]} : vector<4x2x4x8x128xf32> to vector<1x2x1x8x128xf32>
    %72 = vector.shape_cast %71 : vector<1x2x1x8x128xf32> to vector<2x8x128xf32>
    %73 = vector.extract_strided_slice %42 {offsets = [3, 0, 3, 0, 0], sizes = [1, 2, 1, 8, 128], strides = [1, 1, 1, 1, 1]} : vector<4x2x4x8x128xf32> to vector<1x2x1x8x128xf32>
    %74 = vector.shape_cast %73 : vector<1x2x1x8x128xf32> to vector<2x8x128xf32>
    %75 = tpu.concatenate %44, %46, %48, %50, %52, %54, %56, %58, %60, %62, %64, %66, %68, %70, %72, %74 in 2 : vector<2x8x128xf32>, vector<2x8x128xf32>, vector<2x8x128xf32>, vector<2x8x128xf32>, vector<2x8x128xf32>, vector<2x8x128xf32>, vector<2x8x128xf32>, vector<2x8x128xf32>, vector<2x8x128xf32>, vector<2x8x128xf32>, vector<2x8x128xf32>, vector<2x8x128xf32>, vector<2x8x128xf32>, vector<2x8x128xf32>, vector<2x8x128xf32>, vector<2x8x128xf32> -> vector<2x8x2048xf32>
    %76 = vector.shape_cast %75 : vector<2x8x2048xf32> to vector<16x2048xf32>
    %c0_16 = arith.constant 0 : index
    %c0_17 = arith.constant 0 : index
    %77 = vector.load %arg7[%c0_16, %c0_17] : memref<2048x256xf32, #tpu.memory_space<vmem>>, vector<2048x256xf32>
    %cst_18 = arith.constant dense<0.000000e+00> : vector<16x256xf32>
    %78 = tpu.matmul %76, %77, %cst_18 {dimension_numbers = #tpu.dot_dimension_numbers<[1], [0], [0], [1], [0, 0, 1, 1], [], []>} : vector<16x2048xf32>, vector<2048x256xf32>, vector<16x256xf32> -> vector<16x256xf32>
    %c0_19 = arith.constant 0 : index
    %c0_20 = arith.constant 0 : index
    %79 = vector.load %arg8[%c0_19, %c0_20] : memref<1x256xf32, #tpu.memory_space<vmem>>, vector<1x256xf32>
    %80 = vector.broadcast %79 : vector<1x256xf32> to vector<16x256xf32>
    %81 = arith.addf %78, %80 : vector<16x256xf32>
    %cst_21 = arith.constant 0.000000e+00 : f32
    %82 = vector.broadcast %cst_21 : f32 to vector<16x256xf32>
    %83 = arith.cmpf oge, %81, %82 : vector<16x256xf32>
    %cst_22 = arith.constant 2.000000e-01 : f32
    %84 = vector.broadcast %cst_22 : f32 to vector<16x256xf32>
    %85 = arith.mulf %84, %81 : vector<16x256xf32>
    %86 = arith.select %83, %81, %85 : vector<16x256xi1>, vector<16x256xf32>
    %87 = vector.shape_cast %86 : vector<16x256xf32> to vector<2x8x256xf32>
    %88 = vector.extract_strided_slice %87 {offsets = [0, 0, 0], sizes = [1, 8, 256], strides = [1, 1, 1]} : vector<2x8x256xf32> to vector<1x8x256xf32>
    %89 = vector.shape_cast %88 : vector<1x8x256xf32> to vector<8x256xf32>
    %90 = vector.extract_strided_slice %87 {offsets = [1, 0, 0], sizes = [1, 8, 256], strides = [1, 1, 1]} : vector<2x8x256xf32> to vector<1x8x256xf32>
    %91 = vector.shape_cast %90 : vector<1x8x256xf32> to vector<8x256xf32>
    %92 = tpu.concatenate %89, %91 in 1 : vector<8x256xf32>, vector<8x256xf32> -> vector<8x512xf32>
    %c0_23 = arith.constant 0 : index
    %c0_24 = arith.constant 0 : index
    %93 = vector.load %arg9[%c0_23, %c0_24] : memref<512x128xf32, #tpu.memory_space<vmem>>, vector<512x128xf32>
    %cst_25 = arith.constant dense<0.000000e+00> : vector<8x128xf32>
    %94 = tpu.matmul %92, %93, %cst_25 {dimension_numbers = #tpu.dot_dimension_numbers<[1], [0], [0], [1], [0, 0, 1, 1], [], []>} : vector<8x512xf32>, vector<512x128xf32>, vector<8x128xf32> -> vector<8x128xf32>
    %c0_26 = arith.constant 0 : index
    %c0_27 = arith.constant 0 : index
    %95 = vector.load %arg10[%c0_26, %c0_27] : memref<1x128xf32, #tpu.memory_space<vmem>>, vector<1x128xf32>
    %96 = vector.broadcast %95 : vector<1x128xf32> to vector<8x128xf32>
    %97 = arith.addf %94, %96 : vector<8x128xf32>
    %c0_28 = arith.constant 0 : index
    %c0_29 = arith.constant 0 : index
    %c0_30 = arith.constant 0 : index
    %98 = vector.load %arg11[%c0_28, %c0_29, %c0_30] : memref<1x8x128xf32, #tpu.memory_space<vmem>>, vector<1x8x128xf32>
    %99 = vector.shape_cast %98 : vector<1x8x128xf32> to vector<8x128xf32>
    %100 = vector.shape_cast %97 : vector<8x128xf32> to vector<1x8x128xf32>
    tpu.vector_store %arg11[%c0_28, %c0_29, %c0_30], %100 {strides = array<i32>} : memref<1x8x128xf32, #tpu.memory_space<vmem>>, vector<1x8x128xf32>,
    return
  }
  func.func @transform_0(%arg0: i32, %arg1: i32) -> (i32, i32, i32, i32) {
    %c0_i32 = arith.constant 0 : i32
    %c0_i32_0 = arith.constant 0 : i32
    %c0_i32_1 = arith.constant 0 : i32
    return %arg0, %c0_i32, %arg1, %c0_i32_0 : i32, i32, i32, i32
  }
  func.func @transform_1(%arg0: i32, %arg1: i32) -> (i32, i32) {
    %c0_i32 = arith.constant 0 : i32
    %c0_i32_0 = arith.constant 0 : i32
    %c0_i32_1 = arith.constant 0 : i32
    return %c0_i32, %c0_i32_0 : i32, i32
  }
  func.func @transform_2(%arg0: i32, %arg1: i32) -> (i32, i32) {
    %c0_i32 = arith.constant 0 : i32
    %c0_i32_0 = arith.constant 0 : i32
    %c0_i32_1 = arith.constant 0 : i32
    return %c0_i32, %c0_i32_0 : i32, i32
  }
  func.func @transform_3(%arg0: i32, %arg1: i32) -> (i32, i32) {
    %c0_i32 = arith.constant 0 : i32
    %c0_i32_0 = arith.constant 0 : i32
    %c0_i32_1 = arith.constant 0 : i32
    return %c0_i32, %c0_i32_0 : i32, i32
  }
  func.func @transform_4(%arg0: i32, %arg1: i32) -> (i32, i32) {
    %c0_i32 = arith.constant 0 : i32
    %c0_i32_0 = arith.constant 0 : i32
    %c0_i32_1 = arith.constant 0 : i32
    return %c0_i32, %c0_i32_0 : i32, i32
  }
  func.func @transform_5(%arg0: i32, %arg1: i32) -> (i32, i32) {
    %c0_i32 = arith.constant 0 : i32
    %c0_i32_0 = arith.constant 0 : i32
    %c0_i32_1 = arith.constant 0 : i32
    return %c0_i32, %c0_i32_0 : i32, i32
  }
  func.func @transform_6(%arg0: i32, %arg1: i32) -> (i32, i32) {
    %c0_i32 = arith.constant 0 : i32
    %c0_i32_0 = arith.constant 0 : i32
    %c0_i32_1 = arith.constant 0 : i32
    return %c0_i32, %c0_i32_0 : i32, i32
  }
  func.func @transform_7(%arg0: i32, %arg1: i32) -> (i32, i32) {
    %c0_i32 = arith.constant 0 : i32
    %c0_i32_0 = arith.constant 0 : i32
    %c0_i32_1 = arith.constant 0 : i32
    return %c0_i32, %c0_i32_0 : i32, i32
  }
  func.func @transform_8(%arg0: i32, %arg1: i32) -> (i32, i32) {
    %c0_i32 = arith.constant 0 : i32
    %c0_i32_0 = arith.constant 0 : i32
    %c0_i32_1 = arith.constant 0 : i32
    return %c0_i32, %c0_i32_0 : i32, i32
  }
  func.func @transform_9(%arg0: i32, %arg1: i32) -> (i32, i32, i32) {
    %c0_i32 = arith.constant 0 : i32
    %c0_i32_0 = arith.constant 0 : i32
    return %arg0, %arg1, %c0_i32 : i32, i32, i32
  }
}

</mosaic_0001>

<llo_original>
// kernel: _lambda_.1
$region0: #{_lambda_.1}
  #allocation0 [shape = 'u32[]', space=smem, size = 0x4, offset = 0x4, fixed_abs, tag = 'smem constant byte address 0x4 - core index']
  #allocation1 [shape = 'u32[144,128]{1,0:T(1,128)}', space=vmem, size = 0x12000, scoped, tag = 'internal scratch']
  %s0 = inlined_call_operand.vmem [shape: f32[2,256,32,128], index: 0, kind: input, shape index: {}]
  %s1 = inlined_call_operand.vmem [shape: f32[128,128], index: 1, kind: input, shape index: {}]
  %s2 = inlined_call_operand.vmem [shape: f32[1,128], index: 2, kind: input, shape index: {}]
  %s3 = inlined_call_operand.vmem [shape: f32[1024,128], index: 3, kind: input, shape index: {}]
  %s4 = inlined_call_operand.vmem [shape: f32[1,128], index: 4, kind: input, shape index: {}]
  %s5 = inlined_call_operand.vmem [shape: f32[2048,256], index: 5, kind: input, shape index: {}]
  %s6 = inlined_call_operand.vmem [shape: f32[1,256], index: 6, kind: input, shape index: {}]
  %s7 = inlined_call_operand.vmem [shape: f32[512,128], index: 7, kind: input, shape index: {}]
  %s8 = inlined_call_operand.vmem [shape: f32[1,128], index: 8, kind: input, shape index: {}]
  %s9 = inlined_call_operand.hbm [shape: f32[2,32,128], index: 9, kind: output, shape index: {}]
  %s10 = sld [smem:[#allocation0]]
  $region107: #{_lambda_.1} parent=0
    _
  %s12 = ssub.s32 1, %s10
  %s13 = scalar_select 0, %s12, %s10
  $region1: #{_lambda_.1} parent=0
    #allocation2 [shape = 'u8[2097152]{0}', space=vmem, size = 0x200000, scoped, tag = 'input window, operand 0']
    #allocation3 [shape = 'u8[8192]{0}', space=vmem, size = 0x2000, scoped, tag = 'output window, operand 0']
    #allocation4 [shape = 's32[2]{0}', space=sflag, size = 0x8, scoped, tag = 'scoped memory for _lambda_.1']
    %14 = vsyncpa [#allocation4], 0
    %s15 = scalar_lea.sflag [#allocation4], 1
    %16 = vsyncpa %s15, 0
    loop: start=0, step=1, limit=10
    $region2: #{_lambda_.1} parent=1 // loop_pre_header
      _
    $region3: #{_lambda_.1} parent=1 // loop_header
      %s18 = sphi 0, %s22
      %p19 = scmp.ge.s32.totalorder %s18, 10
      %s25 = sphi 0, %s37
      %s26 = sphi 0, %s33
      %s27 = sphi 0, %s25
      %s28 = sphi 0, %s26
      %s29 = sphi 0, %s27
      %s30 = sphi 0, %s28
      %s42 = sphi 0, %s44
      %s45 = sphi 0, %s42
      %s46 = sphi 0, %s45
      %s62 = sphi 0, %s46
      %s66 = sphi 0, %s66
      %s68 = sphi 0, %s66
      %s69 = sphi 0, %s68
      %s83 = sphi 0, %s69
      %s87 = sphi 0, %s87
      %s89 = sphi 0, %s87
      %s90 = sphi 0, %s89
      %s104 = sphi 0, %s90
      %s108 = sphi 0, %s108
      %s110 = sphi 0, %s108
      %s111 = sphi 0, %s110
      %s125 = sphi 0, %s111
      %s129 = sphi 0, %s129
      %s131 = sphi 0, %s129
      %s132 = sphi 0, %s131
      %s146 = sphi 0, %s132
      %s150 = sphi 0, %s150
      %s152 = sphi 0, %s150
      %s153 = sphi 0, %s152
      %s167 = sphi 0, %s153
      %s171 = sphi 0, %s171
      %s173 = sphi 0, %s171
      %s174 = sphi 0, %s173
      %s188 = sphi 0, %s174
      %s192 = sphi 0, %s192
      %s194 = sphi 0, %s192
      %s195 = sphi 0, %s194
      %s209 = sphi 0, %s195
      %s213 = sphi 0, %s213
      %s215 = sphi 0, %s213
      %s216 = sphi 0, %s215
      %s230 = sphi 0, %s216
      %s238 = sphi 0, %s240
      %s241 = sphi 0, %s238
      %s242 = sphi 0, %s241
      %s258 = sphi 0, %s242
    $region4: #{_lambda_.1} parent=1 // loop_header_branch
      %21 = sbr.rel (%p19) target = $region8
    $region5: #{_lambda_.1} parent=1 // loop_body
      %s23 = ssub.s32 %s18, 1
      %s24 = ssub.s32 %s18, 2
      %s31 = sadd.s32 1, %s26
      %p32 = scmp.ge.s32.totalorder %s31, 4
      %s33 = scalar_select %p32, 0, %s31
      %s34 = sadd.s32 1, %s25
      %s35 = scalar_select %p32, %s34, %s25
      %p36 = scmp.ge.s32.totalorder %s35, 2
      %s37 = scalar_select %p36, 0, %s35
      %s38 = ssub.s32 %s25, %s37
      %s39 = ssub.s32 %s26, %s33
      %s40 = sor.u32 %s38, %s39
      %p41 = scmp.eq.s32.totalorder %s40, 0
      %s43 = sadd.s32 %s42, 1
      %s44 = scalar_select %p41, %s42, %s43
      %p47 = pneg %p41
      %p48 = scmp.eq.s32.totalorder %s18, 7
      %p49 = por %p47, %p48
      %p50 = scmp.ne.s32.totalorder %s42, %s45
      %p51 = scmp.eq.s32.totalorder %s18, 0
      %p52 = por %p50, %p51
      %p53 = scmp.ne.s32.totalorder %s42, %s45
      %p54 = scmp.eq.s32.totalorder %s23, 7
      %p55 = por %p53, %p54
      %p56 = scmp.ne.s32.totalorder %s45, %s46
      %p57 = scmp.eq.s32.totalorder %s23, 0
      %p58 = por %p56, %p57
      %p59 = scmp.ne.s32.totalorder %s45, %s46
      %p60 = scmp.eq.s32.totalorder %s24, 7
      %p61 = por %p59, %p60
      %p63 = scmp.ne.s32.totalorder %s46, %s62
      %p64 = scmp.eq.s32.totalorder %s24, 0
      %p65 = por %p63, %p64
      %s67 = sadd.s32 %s66, 1
      %p70 = scmp.eq.s32.totalorder %s18, 7
      %p71 = scmp.ne.s32.totalorder %s66, %s68
      %p72 = scmp.eq.s32.totalorder %s18, 0
      %p73 = por %p71, %p72
      %p74 = scmp.ne.s32.totalorder %s66, %s68
      %p75 = scmp.eq.s32.totalorder %s23, 7
      %p76 = por %p74, %p75
      %p77 = scmp.ne.s32.totalorder %s68, %s69
      %p78 = scmp.eq.s32.totalorder %s23, 0
      %p79 = por %p77, %p78
      %p80 = scmp.ne.s32.totalorder %s68, %s69
      %p81 = scmp.eq.s32.totalorder %s24, 7
      %p82 = por %p80, %p81
      %p84 = scmp.ne.s32.totalorder %s69, %s83
      %p85 = scmp.eq.s32.totalorder %s24, 0
      %p86 = por %p84, %p85
      %s88 = sadd.s32 %s87, 1
      %p91 = scmp.eq.s32.totalorder %s18, 7
      %p92 = scmp.ne.s32.totalorder %s87, %s89
      %p93 = scmp.eq.s32.totalorder %s18, 0
      %p94 = por %p92, %p93
      %p95 = scmp.ne.s32.totalorder %s87, %s89
      %p96 = scmp.eq.s32.totalorder %s23, 7
      %p97 = por %p95, %p96
      %p98 = scmp.ne.s32.totalorder %s89, %s90
      %p99 = scmp.eq.s32.totalorder %s23, 0
      %p100 = por %p98, %p99
      %p101 = scmp.ne.s32.totalorder %s89, %s90
      %p102 = scmp.eq.s32.totalorder %s24, 7
      %p103 = por %p101, %p102
      %p105 = scmp.ne.s32.totalorder %s90, %s104
      %p106 = scmp.eq.s32.totalorder %s24, 0
      %p107 = por %p105, %p106
      %s109 = sadd.s32 %s108, 1
      %p112 = scmp.eq.s32.totalorder %s18, 7
      %p113 = scmp.ne.s32.totalorder %s108, %s110
      %p114 = scmp.eq.s32.totalorder %s18, 0
      %p115 = por %p113, %p114
      %p116 = scmp.ne.s32.totalorder %s108, %s110
      %p117 = scmp.eq.s32.totalorder %s23, 7
      %p118 = por %p116, %p117
      %p119 = scmp.ne.s32.totalorder %s110, %s111
      %p120 = scmp.eq.s32.totalorder %s23, 0
      %p121 = por %p119, %p120
      %p122 = scmp.ne.s32.totalorder %s110, %s111
      %p123 = scmp.eq.s32.totalorder %s24, 7
      %p124 = por %p122, %p123
      %p126 = scmp.ne.s32.totalorder %s111, %s125
      %p127 = scmp.eq.s32.totalorder %s24, 0
      %p128 = por %p126, %p127
      %s130 = sadd.s32 %s129, 1
      %p133 = scmp.eq.s32.totalorder %s18, 7
      %p134 = scmp.ne.s32.totalorder %s129, %s131
      %p135 = scmp.eq.s32.totalorder %s18, 0
      %p136 = por %p134, %p135
      %p137 = scmp.ne.s32.totalorder %s129, %s131
      %p138 = scmp.eq.s32.totalorder %s23, 7
      %p139 = por %p137, %p138
      %p140 = scmp.ne.s32.totalorder %s131, %s132
      %p141 = scmp.eq.s32.totalorder %s23, 0
      %p142 = por %p140, %p141
      %p143 = scmp.ne.s32.totalorder %s131, %s132
      %p144 = scmp.eq.s32.totalorder %s24, 7
      %p145 = por %p143, %p144
      %p147 = scmp.ne.s32.totalorder %s132, %s146
      %p148 = scmp.eq.s32.totalorder %s24, 0
      %p149 = por %p147, %p148
      %s151 = sadd.s32 %s150, 1
      %p154 = scmp.eq.s32.totalorder %s18, 7
      %p155 = scmp.ne.s32.totalorder %s150, %s152
      %p156 = scmp.eq.s32.totalorder %s18, 0
      %p157 = por %p155, %p156
      %p158 = scmp.ne.s32.totalorder %s150, %s152
      %p159 = scmp.eq.s32.totalorder %s23, 7
      %p160 = por %p158, %p159
      %p161 = scmp.ne.s32.totalorder %s152, %s153
      %p162 = scmp.eq.s32.totalorder %s23, 0
      %p163 = por %p161, %p162
      %p164 = scmp.ne.s32.totalorder %s152, %s153
      %p165 = scmp.eq.s32.totalorder %s24, 7
      %p166 = por %p164, %p165
      %p168 = scmp.ne.s32.totalorder %s153, %s167
      %p169 = scmp.eq.s32.totalorder %s24, 0
      %p170 = por %p168, %p169
      %s172 = sadd.s32 %s171, 1
      %p175 = scmp.eq.s32.totalorder %s18, 7
      %p176 = scmp.ne.s32.totalorder %s171, %s173
      %p177 = scmp.eq.s32.totalorder %s18, 0
      %p178 = por %p176, %p177
      %p179 = scmp.ne.s32.totalorder %s171, %s173
      %p180 = scmp.eq.s32.totalorder %s23, 7
      %p181 = por %p179, %p180
      %p182 = scmp.ne.s32.totalorder %s173, %s174
      %p183 = scmp.eq.s32.totalorder %s23, 0
      %p184 = por %p182, %p183
      %p185 = scmp.ne.s32.totalorder %s173, %s174
      %p186 = scmp.eq.s32.totalorder %s24, 7
      %p187 = por %p185, %p186
      %p189 = scmp.ne.s32.totalorder %s174, %s188
      %p190 = scmp.eq.s32.totalorder %s24, 0
      %p191 = por %p189, %p190
      %s193 = sadd.s32 %s192, 1
      %p196 = scmp.eq.s32.totalorder %s18, 7
      %p197 = scmp.ne.s32.totalorder %s192, %s194
      %p198 = scmp.eq.s32.totalorder %s18, 0
      %p199 = por %p197, %p198
      %p200 = scmp.ne.s32.totalorder %s192, %s194
      %p201 = scmp.eq.s32.totalorder %s23, 7
      %p202 = por %p200, %p201
      %p203 = scmp.ne.s32.totalorder %s194, %s195
      %p204 = scmp.eq.s32.totalorder %s23, 0
      %p205 = por %p203, %p204
      %p206 = scmp.ne.s32.totalorder %s194, %s195
      %p207 = scmp.eq.s32.totalorder %s24, 7
      %p208 = por %p206, %p207
      %p210 = scmp.ne.s32.totalorder %s195, %s209
      %p211 = scmp.eq.s32.totalorder %s24, 0
      %p212 = por %p210, %p211
      %s214 = sadd.s32 %s213, 1
      %p217 = scmp.eq.s32.totalorder %s18, 7
      %p218 = scmp.ne.s32.totalorder %s213, %s215
      %p219 = scmp.eq.s32.totalorder %s18, 0
      %p220 = por %p218, %p219
      %p221 = scmp.ne.s32.totalorder %s213, %s215
      %p222 = scmp.eq.s32.totalorder %s23, 7
      %p223 = por %p221, %p222
      %p224 = scmp.ne.s32.totalorder %s215, %s216
      %p225 = scmp.eq.s32.totalorder %s23, 0
      %p226 = por %p224, %p225
      %p227 = scmp.ne.s32.totalorder %s215, %s216
      %p228 = scmp.eq.s32.totalorder %s24, 7
      %p229 = por %p227, %p228
      %p231 = scmp.ne.s32.totalorder %s216, %s230
      %p232 = scmp.eq.s32.totalorder %s24, 0
      %p233 = por %p231, %p232
      %s234 = ssub.s32 %s25, %s37
      %s235 = ssub.s32 %s26, %s33
      %s236 = sor.u32 %s234, %s235
      %p237 = scmp.eq.s32.totalorder %s236, 0
      %s239 = sadd.s32 %s238, 1
      %s240 = scalar_select %p237, %s238, %s239
      %p243 = pneg %p237
      %p244 = scmp.eq.s32.totalorder %s18, 7
      %p245 = por %p243, %p244
      %p246 = scmp.ne.s32.totalorder %s238, %s241
      %p247 = scmp.eq.s32.totalorder %s18, 0
      %p248 = por %p246, %p247
      %p249 = scmp.ne.s32.totalorder %s238, %s241
      %p250 = scmp.eq.s32.totalorder %s23, 7
      %p251 = por %p249, %p250
      %p252 = scmp.ne.s32.totalorder %s241, %s242
      %p253 = scmp.eq.s32.totalorder %s23, 0
      %p254 = por %p252, %p253
      %p255 = scmp.ne.s32.totalorder %s241, %s242
      %p256 = scmp.eq.s32.totalorder %s24, 7
      %p257 = por %p255, %p256
      %p259 = scmp.ne.s32.totalorder %s242, %s258
      %p260 = scmp.eq.s32.totalorder %s24, 0
      %p261 = por %p259, %p260
      %p262 = scmp.le.s32.totalorder 1, %s18
      %p263 = scmp.lt.s32.totalorder %s18, 9
      %p264 = pnand %p262, %p263
      %p265 = pneg %p264
      // Predicated region
      $region9: #{_lambda_.1} parent=5 // pred_check
        _
      $region10: #{_lambda_.1} parent=5 // pred_check_branch
        %267 = sbr.rel (%p264) target = $region12
      $region11: #{_lambda_.1} parent=5 // pred_region
        %s268 = ssub.s32 %s18, 1
        // Predicated region
        $region13: #{_lambda_.1} parent=11 // pred_check
          %p269 = pneg %p79
        $region14: #{_lambda_.1} parent=11 // pred_check_branch
          %271 = sbr.rel (%p269) target = $region16
        $region15: #{_lambda_.1} parent=11 // pred_region
          _
        $region16: #{_lambda_.1} parent=11 // pred_fallthru
          _
        // Predicated region
        $region17: #{_lambda_.1} parent=11 // pred_check
          %p272 = pneg %p100
        $region18: #{_lambda_.1} parent=11 // pred_check_branch
          %274 = sbr.rel (%p272) target = $region20
        $region19: #{_lambda_.1} parent=11 // pred_region
          _
        $region20: #{_lambda_.1} parent=11 // pred_fallthru
          _
        // Predicated region
        $region21: #{_lambda_.1} parent=11 // pred_check
          %p275 = pneg %p121
        $region22: #{_lambda_.1} parent=11 // pred_check_branch
          %277 = sbr.rel (%p275) target = $region24
        $region23: #{_lambda_.1} parent=11 // pred_region
          _
        $region24: #{_lambda_.1} parent=11 // pred_fallthru
          _
        // Predicated region
        $region25: #{_lambda_.1} parent=11 // pred_check
          %p278 = pneg %p142
        $region26: #{_lambda_.1} parent=11 // pred_check_branch
          %280 = sbr.rel (%p278) target = $region28
        $region27: #{_lambda_.1} parent=11 // pred_region
          _
        $region28: #{_lambda_.1} parent=11 // pred_fallthru
          _
        // Predicated region
        $region29: #{_lambda_.1} parent=11 // pred_check
          %p281 = pneg %p163
        $region30: #{_lambda_.1} parent=11 // pred_check_branch
          %283 = sbr.rel (%p281) target = $region32
        $region31: #{_lambda_.1} parent=11 // pred_region
          _
        $region32: #{_lambda_.1} parent=11 // pred_fallthru
          _
        // Predicated region
        $region33: #{_lambda_.1} parent=11 // pred_check
          %p284 = pneg %p184
        $region34: #{_lambda_.1} parent=11 // pred_check_branch
          %286 = sbr.rel (%p284) target = $region36
        $region35: #{_lambda_.1} parent=11 // pred_region
          _
        $region36: #{_lambda_.1} parent=11 // pred_fallthru
          _
        // Predicated region
        $region37: #{_lambda_.1} parent=11 // pred_check
          %p287 = pneg %p205
        $region38: #{_lambda_.1} parent=11 // pred_check_branch
          %289 = sbr.rel (%p287) target = $region40
        $region39: #{_lambda_.1} parent=11 // pred_region
          _
        $region40: #{_lambda_.1} parent=11 // pred_fallthru
          _
        // Predicated region
        $region41: #{_lambda_.1} parent=11 // pred_check
          %p290 = pneg %p226
        $region42: #{_lambda_.1} parent=11 // pred_check_branch
          %292 = sbr.rel (%p290) target = $region44
        $region43: #{_lambda_.1} parent=11 // pred_region
          _
        $region44: #{_lambda_.1} parent=11 // pred_fallthru
          _
      $region12: #{_lambda_.1} parent=5 // pred_fallthru
        _
      %p293 = scmp.lt.s32.totalorder %s18, 8
      // Predicated region
      $region45: #{_lambda_.1} parent=5 // pred_check
        %p294 = pneg %p293
      $region46: #{_lambda_.1} parent=5 // pred_check_branch
        %296 = sbr.rel (%p294) target = $region48
      $region47: #{_lambda_.1} parent=5 // pred_region
        // Predicated region
        $region49: #{_lambda_.1} parent=47 // pred_check
          %p297 = pneg %p52
        $region50: #{_lambda_.1} parent=47 // pred_check_branch
          %299 = sbr.rel (%p297) target = $region52
        $region51: #{_lambda_.1} parent=47 // pred_region
          %s300 = sand.u32 %s42, 1
          %s301 = sand.u32 %s42, 1
          %s302 = smul.addr %s301, 2048
          %s303 = scalar_lea.vmem [#allocation2], %s302
          %s304 = smul.addr %s25, 1024
          %s305 = sadd.s32 %s26, %s304
          %s306 = smul.addr %s305, 8
          %s307 = scalar_lea.vmem %s0, %s306
          // Predicated region
          $region53: #{_lambda_.1} parent=51 // pred_check
            _
          $region54: #{_lambda_.1} parent=51 // pred_check_branch
            %309 = sbr.rel (0) target = $region56
          $region55: #{_lambda_.1} parent=51 // pred_region
            // Predicated region
            $region57: #{_lambda_.1} parent=55 // pred_check
              _
            $region58: #{_lambda_.1} parent=55 // pred_check_branch
              %311 = sbr.rel (0) target = $region60
            $region59: #{_lambda_.1} parent=55 // pred_region
              // Predicated region
              $region72: #{_lambda_.1} parent=59 // pred_check
                _
              $region73: #{_lambda_.1} parent=59 // pred_check_branch
                %837 = sbr.rel (0) target = $region75
              $region74: #{_lambda_.1} parent=59 // pred_region
                loop: start=0, step=1, limit=1
                $region76: #{_lambda_.1} parent=74 // loop_pre_header
                  _
                $region77: #{_lambda_.1} parent=74 // loop_header
                  %s839 = sphi 0, %s843
                  %p840 = scmp.ge.s32.totalorder %s839, 1
                  %s844 = sphi %s307, %s307
                  %s845 = sphi %s303, %s303
                $region78: #{_lambda_.1} parent=74 // loop_header_branch
                  %842 = sbr.rel (%p840) target = $region82
                $region79: #{_lambda_.1} parent=74 // loop_body
                  %v846 = vld [vmem:[%s844] sm:$0xff]
                  %847 = vst [vmem:[%s845] sm:$0xff] %v846
                  %v848 = vld [vmem:[%s844 + $0x20] sm:$0xff]
                  %849 = vst [vmem:[%s845 + $0x8] sm:$0xff] %v848
                  %v850 = vld [vmem:[%s844 + $0x40] sm:$0xff]
                  %851 = vst [vmem:[%s845 + $0x10] sm:$0xff] %v850
                  %v852 = vld [vmem:[%s844 + $0x60] sm:$0xff]
                  %853 = vst [vmem:[%s845 + $0x18] sm:$0xff] %v852
                  %v854 = vld [vmem:[%s844 + $0x80] sm:$0xff]
                  %855 = vst [vmem:[%s845 + $0x20] sm:$0xff] %v854
                  %v856 = vld [vmem:[%s844 + $0xa0] sm:$0xff]
                  %857 = vst [vmem:[%s845 + $0x28] sm:$0xff] %v856
                  %v858 = vld [vmem:[%s844 + $0xc0] sm:$0xff]
                  %859 = vst [vmem:[%s845 + $0x30] sm:$0xff] %v858
                  %v860 = vld [vmem:[%s844 + $0xe0] sm:$0xff]
                  %861 = vst [vmem:[%s845 + $0x38] sm:$0xff] %v860
                  %v862 = vld [vmem:[%s844 + $0x100] sm:$0xff]
                  %863 = vst [vmem:[%s845 + $0x40] sm:$0xff] %v862
                  %v864 = vld [vmem:[%s844 + $0x120] sm:$0xff]
                  %865 = vst [vmem:[%s845 + $0x48] sm:$0xff] %v864
                  %v866 = vld [vmem:[%s844 + $0x140] sm:$0xff]
                  %867 = vst [vmem:[%s845 + $0x50] sm:$0xff] %v866
                  %v868 = vld [vmem:[%s844 + $0x160] sm:$0xff]
                  %869 = vst [vmem:[%s845 + $0x58] sm:$0xff] %v868
                  %v870 = vld [vmem:[%s844 + $0x180] sm:$0xff]
                  %871 = vst [vmem:[%s845 + $0x60] sm:$0xff] %v870
                  %v872 = vld [vmem:[%s844 + $0x1a0] sm:$0xff]
                  %873 = vst [vmem:[%s845 + $0x68] sm:$0xff] %v872
                  %v874 = vld [vmem:[%s844 + $0x1c0] sm:$0xff]
                  %875 = vst [vmem:[%s845 + $0x70] sm:$0xff] %v874
                  %v876 = vld [vmem:[%s844 + $0x1e0] sm:$0xff]
                  %877 = vst [vmem:[%s845 + $0x78] sm:$0xff] %v876
                  %v878 = vld [vmem:[%s844 + $0x200] sm:$0xff]
                  %879 = vst [vmem:[%s845 + $0x80] sm:$0xff] %v878
                  %v880 = vld [vmem:[%s844 + $0x220] sm:$0xff]
                  %881 = vst [vmem:[%s845 + $0x88] sm:$0xff] %v880
                  %v882 = vld [vmem:[%s844 + $0x240] sm:$0xff]
                  %883 = vst [vmem:[%s845 + $0x90] sm:$0xff] %v882
                  %v884 = vld [vmem:[%s844 + $0x260] sm:$0xff]
                  %885 = vst [vmem:[%s845 + $0x98] sm:$0xff] %v884
                  %v886 = vld [vmem:[%s844 + $0x280] sm:$0xff]
                  %887 = vst [vmem:[%s845 + $0xa0] sm:$0xff] %v886
                  %v888 = vld [vmem:[%s844 + $0x2a0] sm:$0xff]
                  %889 = vst [vmem:[%s845 + $0xa8] sm:$0xff] %v888
                  %v890 = vld [vmem:[%s844 + $0x2c0] sm:$0xff]
                  %891 = vst [vmem:[%s845 + $0xb0] sm:$0xff] %v890
                  %v892 = vld [vmem:[%s844 + $0x2e0] sm:$0xff]
                  %893 = vst [vmem:[%s845 + $0xb8] sm:$0xff] %v892
                  %v894 = vld [vmem:[%s844 + $0x300] sm:$0xff]
                  %895 = vst [vmem:[%s845 + $0xc0] sm:$0xff] %v894
                  %v896 = vld [vmem:[%s844 + $0x320] sm:$0xff]
                  %897 = vst [vmem:[%s845 + $0xc8] sm:$0xff] %v896
                  %v898 = vld [vmem:[%s844 + $0x340] sm:$0xff]
                  %899 = vst [vmem:[%s845 + $0xd0] sm:$0xff] %v898
                  %v900 = vld [vmem:[%s844 + $0x360] sm:$0xff]
                  %901 = vst [vmem:[%s845 + $0xd8] sm:$0xff] %v900
                  %v902 = vld [vmem:[%s844 + $0x380] sm:$0xff]
                  %903 = vst [vmem:[%s845 + $0xe0] sm:$0xff] %v902
                  %v904 = vld [vmem:[%s844 + $0x3a0] sm:$0xff]
                  %905 = vst [vmem:[%s845 + $0xe8] sm:$0xff] %v904
                  %v906 = vld [vmem:[%s844 + $0x3c0] sm:$0xff]
                  %907 = vst [vmem:[%s845 + $0xf0] sm:$0xff] %v906
                  %v908 = vld [vmem:[%s844 + $0x3e0] sm:$0xff]
                  %909 = vst [vmem:[%s845 + $0xf8] sm:$0xff] %v908
                  %v910 = vld [vmem:[%s844 + $0x400] sm:$0xff]
                  %911 = vst [vmem:[%s845 + $0x100] sm:$0xff] %v910
                  %v912 = vld [vmem:[%s844 + $0x420] sm:$0xff]
                  %913 = vst [vmem:[%s845 + $0x108] sm:$0xff] %v912
                  %v914 = vld [vmem:[%s844 + $0x440] sm:$0xff]
                  %915 = vst [vmem:[%s845 + $0x110] sm:$0xff] %v914
                  %v916 = vld [vmem:[%s844 + $0x460] sm:$0xff]
                  %917 = vst [vmem:[%s845 + $0x118] sm:$0xff] %v916
                  %v918 = vld [vmem:[%s844 + $0x480] sm:$0xff]
                  %919 = vst [vmem:[%s845 + $0x120] sm:$0xff] %v918
                  %v920 = vld [vmem:[%s844 + $0x4a0] sm:$0xff]
                  %921 = vst [vmem:[%s845 + $0x128] sm:$0xff] %v920
                  %v922 = vld [vmem:[%s844 + $0x4c0] sm:$0xff]
                  %923 = vst [vmem:[%s845 + $0x130] sm:$0xff] %v922
                  %v924 = vld [vmem:[%s844 + $0x4e0] sm:$0xff]
                  %925 = vst [vmem:[%s845 + $0x138] sm:$0xff] %v924
                  %v926 = vld [vmem:[%s844 + $0x500] sm:$0xff]
                  %927 = vst [vmem:[%s845 + $0x140] sm:$0xff] %v926
                  %v928 = vld [vmem:[%s844 + $0x520] sm:$0xff]
                  %929 = vst [vmem:[%s845 + $0x148] sm:$0xff] %v928
                  %v930 = vld [vmem:[%s844 + $0x540] sm:$0xff]
                  %931 = vst [vmem:[%s845 + $0x150] sm:$0xff] %v930
                  %v932 = vld [vmem:[%s844 + $0x560] sm:$0xff]
                  %933 = vst [vmem:[%s845 + $0x158] sm:$0xff] %v932
                  %v934 = vld [vmem:[%s844 + $0x580] sm:$0xff]
                  %935 = vst [vmem:[%s845 + $0x160] sm:$0xff] %v934
                  %v936 = vld [vmem:[%s844 + $0x5a0] sm:$0xff]
                  %937 = vst [vmem:[%s845 + $0x168] sm:$0xff] %v936
                  %v938 = vld [vmem:[%s844 + $0x5c0] sm:$0xff]
                  %939 = vst [vmem:[%s845 + $0x170] sm:$0xff] %v938
                  %v940 = vld [vmem:[%s844 + $0x5e0] sm:$0xff]
                  %941 = vst [vmem:[%s845 + $0x178] sm:$0xff] %v940
                  %v942 = vld [vmem:[%s844 + $0x600] sm:$0xff]
                  %943 = vst [vmem:[%s845 + $0x180] sm:$0xff] %v942
                  %v944 = vld [vmem:[%s844 + $0x620] sm:$0xff]
                  %945 = vst [vmem:[%s845 + $0x188] sm:$0xff] %v944
                  %v946 = vld [vmem:[%s844 + $0x640] sm:$0xff]
                  %947 = vst [vmem:[%s845 + $0x190] sm:$0xff] %v946
                  %v948 = vld [vmem:[%s844 + $0x660] sm:$0xff]
                  %949 = vst [vmem:[%s845 + $0x198] sm:$0xff] %v948
                  %v950 = vld [vmem:[%s844 + $0x680] sm:$0xff]
                  %951 = vst [vmem:[%s845 + $0x1a0] sm:$0xff] %v950
                  %v952 = vld [vmem:[%s844 + $0x6a0] sm:$0xff]
                  %953 = vst [vmem:[%s845 + $0x1a8] sm:$0xff] %v952
                  %v954 = vld [vmem:[%s844 + $0x6c0] sm:$0xff]
                  %955 = vst [vmem:[%s845 + $0x1b0] sm:$0xff] %v954
                  %v956 = vld [vmem:[%s844 + $0x6e0] sm:$0xff]
                  %957 = vst [vmem:[%s845 + $0x1b8] sm:$0xff] %v956
                  %v958 = vld [vmem:[%s844 + $0x700] sm:$0xff]
                  %959 = vst [vmem:[%s845 + $0x1c0] sm:$0xff] %v958
                  %v960 = vld [vmem:[%s844 + $0x720] sm:$0xff]
                  %961 = vst [vmem:[%s845 + $0x1c8] sm:$0xff] %v960
                  %v962 = vld [vmem:[%s844 + $0x740] sm:$0xff]
                  %963 = vst [vmem:[%s845 + $0x1d0] sm:$0xff] %v962
                  %v964 = vld [vmem:[%s844 + $0x760] sm:$0xff]
                  %965 = vst [vmem:[%s845 + $0x1d8] sm:$0xff] %v964
                  %v966 = vld [vmem:[%s844 + $0x780] sm:$0xff]
                  %967 = vst [vmem:[%s845 + $0x1e0] sm:$0xff] %v966
                  %v968 = vld [vmem:[%s844 + $0x7a0] sm:$0xff]
                  %969 = vst [vmem:[%s845 + $0x1e8] sm:$0xff] %v968
                  %v970 = vld [vmem:[%s844 + $0x7c0] sm:$0xff]
                  %971 = vst [vmem:[%s845 + $0x1f0] sm:$0xff] %v970
                  %v972 = vld [vmem:[%s844 + $0x7e0] sm:$0xff]
                  %973 = vst [vmem:[%s845 + $0x1f8] sm:$0xff] %v972
                  %v974 = vld [vmem:[%s844 + $0x800] sm:$0xff]
                  %975 = vst [vmem:[%s845 + $0x200] sm:$0xff] %v974
                  %v976 = vld [vmem:[%s844 + $0x820] sm:$0xff]
                  %977 = vst [vmem:[%s845 + $0x208] sm:$0xff] %v976
                  %v978 = vld [vmem:[%s844 + $0x840] sm:$0xff]
                  %979 = vst [vmem:[%s845 + $0x210] sm:$0xff] %v978
                  %v980 = vld [vmem:[%s844 + $0x860] sm:$0xff]
                  %981 = vst [vmem:[%s845 + $0x218] sm:$0xff] %v980
                  %v982 = vld [vmem:[%s844 + $0x880] sm:$0xff]
                  %983 = vst [vmem:[%s845 + $0x220] sm:$0xff] %v982
                  %v984 = vld [vmem:[%s844 + $0x8a0] sm:$0xff]
                  %985 = vst [vmem:[%s845 + $0x228] sm:$0xff] %v984
                  %v986 = vld [vmem:[%s844 + $0x8c0] sm:$0xff]
                  %987 = vst [vmem:[%s845 + $0x230] sm:$0xff] %v986
                  %v988 = vld [vmem:[%s844 + $0x8e0] sm:$0xff]
                  %989 = vst [vmem:[%s845 + $0x238] sm:$0xff] %v988
                  %v990 = vld [vmem:[%s844 + $0x900] sm:$0xff]
                  %991 = vst [vmem:[%s845 + $0x240] sm:$0xff] %v990
                  %v992 = vld [vmem:[%s844 + $0x920] sm:$0xff]
                  %993 = vst [vmem:[%s845 + $0x248] sm:$0xff] %v992
                  %v994 = vld [vmem:[%s844 + $0x940] sm:$0xff]
                  %995 = vst [vmem:[%s845 + $0x250] sm:$0xff] %v994
                  %v996 = vld [vmem:[%s844 + $0x960] sm:$0xff]
                  %997 = vst [vmem:[%s845 + $0x258] sm:$0xff] %v996
                  %v998 = vld [vmem:[%s844 + $0x980] sm:$0xff]
                  %999 = vst [vmem:[%s845 + $0x260] sm:$0xff] %v998
                  %v1000 = vld [vmem:[%s844 + $0x9a0] sm:$0xff]
                  %1001 = vst [vmem:[%s845 + $0x268] sm:$0xff] %v1000
                  %v1002 = vld [vmem:[%s844 + $0x9c0] sm:$0xff]
                  %1003 = vst [vmem:[%s845 + $0x270] sm:$0xff] %v1002
                  %v1004 = vld [vmem:[%s844 + $0x9e0] sm:$0xff]
                  %1005 = vst [vmem:[%s845 + $0x278] sm:$0xff] %v1004
                  %v1006 = vld [vmem:[%s844 + $0xa00] sm:$0xff]
                  %1007 = vst [vmem:[%s845 + $0x280] sm:$0xff] %v1006
                  %v1008 = vld [vmem:[%s844 + $0xa20] sm:$0xff]
                  %1009 = vst [vmem:[%s845 + $0x288] sm:$0xff] %v1008
                  %v1010 = vld [vmem:[%s844 + $0xa40] sm:$0xff]
                  %1011 = vst [vmem:[%s845 + $0x290] sm:$0xff] %v1010
                  %v1012 = vld [vmem:[%s844 + $0xa60] sm:$0xff]
                  %1013 = vst [vmem:[%s845 + $0x298] sm:$0xff] %v1012
                  %v1014 = vld [vmem:[%s844 + $0xa80] sm:$0xff]
                  %1015 = vst [vmem:[%s845 + $0x2a0] sm:$0xff] %v1014
                  %v1016 = vld [vmem:[%s844 + $0xaa0] sm:$0xff]
                  %1017 = vst [vmem:[%s845 + $0x2a8] sm:$0xff] %v1016
                  %v1018 = vld [vmem:[%s844 + $0xac0] sm:$0xff]
                  %1019 = vst [vmem:[%s845 + $0x2b0] sm:$0xff] %v1018
                  %v1020 = vld [vmem:[%s844 + $0xae0] sm:$0xff]
                  %1021 = vst [vmem:[%s845 + $0x2b8] sm:$0xff] %v1020
                  %v1022 = vld [vmem:[%s844 + $0xb00] sm:$0xff]
                  %1023 = vst [vmem:[%s845 + $0x2c0] sm:$0xff] %v1022
                  %v1024 = vld [vmem:[%s844 + $0xb20] sm:$0xff]
                  %1025 = vst [vmem:[%s845 + $0x2c8] sm:$0xff] %v1024
                  %v1026 = vld [vmem:[%s844 + $0xb40] sm:$0xff]
                  %1027 = vst [vmem:[%s845 + $0x2d0] sm:$0xff] %v1026
                  %v1028 = vld [vmem:[%s844 + $0xb60] sm:$0xff]
                  %1029 = vst [vmem:[%s845 + $0x2d8] sm:$0xff] %v1028
                  %v1030 = vld [vmem:[%s844 + $0xb80] sm:$0xff]
                  %1031 = vst [vmem:[%s845 + $0x2e0] sm:$0xff] %v1030
                  %v1032 = vld [vmem:[%s844 + $0xba0] sm:$0xff]
                  %1033 = vst [vmem:[%s845 + $0x2e8] sm:$0xff] %v1032
                  %v1034 = vld [vmem:[%s844 + $0xbc0] sm:$0xff]
                  %1035 = vst [vmem:[%s845 + $0x2f0] sm:$0xff] %v1034
                  %v1036 = vld [vmem:[%s844 + $0xbe0] sm:$0xff]
                  %1037 = vst [vmem:[%s845 + $0x2f8] sm:$0xff] %v1036
                  %v1038 = vld [vmem:[%s844 + $0xc00] sm:$0xff]
                  %1039 = vst [vmem:[%s845 + $0x300] sm:$0xff] %v1038
                  %v1040 = vld [vmem:[%s844 + $0xc20] sm:$0xff]
                  %1041 = vst [vmem:[%s845 + $0x308] sm:$0xff] %v1040
                  %v1042 = vld [vmem:[%s844 + $0xc40] sm:$0xff]
                  %1043 = vst [vmem:[%s845 + $0x310] sm:$0xff] %v1042
                  %v1044 = vld [vmem:[%s844 + $0xc60] sm:$0xff]
                  %1045 = vst [vmem:[%s845 + $0x318] sm:$0xff] %v1044
                  %v1046 = vld [vmem:[%s844 + $0xc80] sm:$0xff]
                  %1047 = vst [vmem:[%s845 + $0x320] sm:$0xff] %v1046
                  %v1048 = vld [vmem:[%s844 + $0xca0] sm:$0xff]
                  %1049 = vst [vmem:[%s845 + $0x328] sm:$0xff] %v1048
                  %v1050 = vld [vmem:[%s844 + $0xcc0] sm:$0xff]
                  %1051 = vst [vmem:[%s845 + $0x330] sm:$0xff] %v1050
                  %v1052 = vld [vmem:[%s844 + $0xce0] sm:$0xff]
                  %1053 = vst [vmem:[%s845 + $0x338] sm:$0xff] %v1052
                  %v1054 = vld [vmem:[%s844 + $0xd00] sm:$0xff]
                  %1055 = vst [vmem:[%s845 + $0x340] sm:$0xff] %v1054
                  %v1056 = vld [vmem:[%s844 + $0xd20] sm:$0xff]
                  %1057 = vst [vmem:[%s845 + $0x348] sm:$0xff] %v1056
                  %v1058 = vld [vmem:[%s844 + $0xd40] sm:$0xff]
                  %1059 = vst [vmem:[%s845 + $0x350] sm:$0xff] %v1058
                  %v1060 = vld [vmem:[%s844 + $0xd60] sm:$0xff]
                  %1061 = vst [vmem:[%s845 + $0x358] sm:$0xff] %v1060
                  %v1062 = vld [vmem:[%s844 + $0xd80] sm:$0xff]
                  %1063 = vst [vmem:[%s845 + $0x360] sm:$0xff] %v1062
                  %v1064 = vld [vmem:[%s844 + $0xda0] sm:$0xff]
                  %1065 = vst [vmem:[%s845 + $0x368] sm:$0xff] %v1064
                  %v1066 = vld [vmem:[%s844 + $0xdc0] sm:$0xff]
                  %1067 = vst [vmem:[%s845 + $0x370] sm:$0xff] %v1066
                  %v1068 = vld [vmem:[%s844 + $0xde0] sm:$0xff]
                  %1069 = vst [vmem:[%s845 + $0x378] sm:$0xff] %v1068
                  %v1070 = vld [vmem:[%s844 + $0xe00] sm:$0xff]
                  %1071 = vst [vmem:[%s845 + $0x380] sm:$0xff] %v1070
                  %v1072 = vld [vmem:[%s844 + $0xe20] sm:$0xff]
                  %1073 = vst [vmem:[%s845 + $0x388] sm:$0xff] %v1072
                  %v1074 = vld [vmem:[%s844 + $0xe40] sm:$0xff]
                  %1075 = vst [vmem:[%s845 + $0x390] sm:$0xff] %v1074
                  %v1076 = vld [vmem:[%s844 + $0xe60] sm:$0xff]
                  %1077 = vst [vmem:[%s845 + $0x398] sm:$0xff] %v1076
                  %v1078 = vld [vmem:[%s844 + $0xe80] sm:$0xff]
                  %1079 = vst [vmem:[%s845 + $0x3a0] sm:$0xff] %v1078
                  %v1080 = vld [vmem:[%s844 + $0xea0] sm:$0xff]
                  %1081 = vst [vmem:[%s845 + $0x3a8] sm:$0xff] %v1080
                  %v1082 = vld [vmem:[%s844 + $0xec0] sm:$0xff]
                  %1083 = vst [vmem:[%s845 + $0x3b0] sm:$0xff] %v1082
                  %v1084 = vld [vmem:[%s844 + $0xee0] sm:$0xff]
                  %1085 = vst [vmem:[%s845 + $0x3b8] sm:$0xff] %v1084
                  %v1086 = vld [vmem:[%s844 + $0xf00] sm:$0xff]
                  %1087 = vst [vmem:[%s845 + $0x3c0] sm:$0xff] %v1086
                  %v1088 = vld [vmem:[%s844 + $0xf20] sm:$0xff]
                  %1089 = vst [vmem:[%s845 + $0x3c8] sm:$0xff] %v1088
                  %v1090 = vld [vmem:[%s844 + $0xf40] sm:$0xff]
                  %1091 = vst [vmem:[%s845 + $0x3d0] sm:$0xff] %v1090
                  %v1092 = vld [vmem:[%s844 + $0xf60] sm:$0xff]
                  %1093 = vst [vmem:[%s845 + $0x3d8] sm:$0xff] %v1092
                  %v1094 = vld [vmem:[%s844 + $0xf80] sm:$0xff]
                  %1095 = vst [vmem:[%s845 + $0x3e0] sm:$0xff] %v1094
                  %v1096 = vld [vmem:[%s844 + $0xfa0] sm:$0xff]
                  %1097 = vst [vmem:[%s845 + $0x3e8] sm:$0xff] %v1096
                  %v1098 = vld [vmem:[%s844 + $0xfc0] sm:$0xff]
                  %1099 = vst [vmem:[%s845 + $0x3f0] sm:$0xff] %v1098
                  %v1100 = vld [vmem:[%s844 + $0xfe0] sm:$0xff]
                  %1101 = vst [vmem:[%s845 + $0x3f8] sm:$0xff] %v1100
                  %v1102 = vld [vmem:[%s844 + $0x1000] sm:$0xff]
                  %1103 = vst [vmem:[%s845 + $0x400] sm:$0xff] %v1102
                  %v1104 = vld [vmem:[%s844 + $0x1020] sm:$0xff]
                  %1105 = vst [vmem:[%s845 + $0x408] sm:$0xff] %v1104
                  %v1106 = vld [vmem:[%s844 + $0x1040] sm:$0xff]
                  %1107 = vst [vmem:[%s845 + $0x410] sm:$0xff] %v1106
                  %v1108 = vld [vmem:[%s844 + $0x1060] sm:$0xff]
                  %1109 = vst [vmem:[%s845 + $0x418] sm:$0xff] %v1108
                  %v1110 = vld [vmem:[%s844 + $0x1080] sm:$0xff]
                  %1111 = vst [vmem:[%s845 + $0x420] sm:$0xff] %v1110
                  %v1112 = vld [vmem:[%s844 + $0x10a0] sm:$0xff]
                  %1113 = vst [vmem:[%s845 + $0x428] sm:$0xff] %v1112
                  %v1114 = vld [vmem:[%s844 + $0x10c0] sm:$0xff]
                  %1115 = vst [vmem:[%s845 + $0x430] sm:$0xff] %v1114
                  %v1116 = vld [vmem:[%s844 + $0x10e0] sm:$0xff]
                  %1117 = vst [vmem:[%s845 + $0x438] sm:$0xff] %v1116
                  %v1118 = vld [vmem:[%s844 + $0x1100] sm:$0xff]
                  %1119 = vst [vmem:[%s845 + $0x440] sm:$0xff] %v1118
                  %v1120 = vld [vmem:[%s844 + $0x1120] sm:$0xff]
                  %1121 = vst [vmem:[%s845 + $0x448] sm:$0xff] %v1120
                  %v1122 = vld [vmem:[%s844 + $0x1140] sm:$0xff]
                  %1123 = vst [vmem:[%s845 + $0x450] sm:$0xff] %v1122
                  %v1124 = vld [vmem:[%s844 + $0x1160] sm:$0xff]
                  %1125 = vst [vmem:[%s845 + $0x458] sm:$0xff] %v1124
                  %v1126 = vld [vmem:[%s844 + $0x1180] sm:$0xff]
                  %1127 = vst [vmem:[%s845 + $0x460] sm:$0xff] %v1126
                  %v1128 = vld [vmem:[%s844 + $0x11a0] sm:$0xff]
                  %1129 = vst [vmem:[%s845 + $0x468] sm:$0xff] %v1128
                  %v1130 = vld [vmem:[%s844 + $0x11c0] sm:$0xff]
                  %1131 = vst [vmem:[%s845 + $0x470] sm:$0xff] %v1130
                  %v1132 = vld [vmem:[%s844 + $0x11e0] sm:$0xff]
                  %1133 = vst [vmem:[%s845 + $0x478] sm:$0xff] %v1132
                  %v1134 = vld [vmem:[%s844 + $0x1200] sm:$0xff]
                  %1135 = vst [vmem:[%s845 + $0x480] sm:$0xff] %v1134
                  %v1136 = vld [vmem:[%s844 + $0x1220] sm:$0xff]
                  %1137 = vst [vmem:[%s845 + $0x488] sm:$0xff] %v1136
                  %v1138 = vld [vmem:[%s844 + $0x1240] sm:$0xff]
                  %1139 = vst [vmem:[%s845 + $0x490] sm:$0xff] %v1138
                  %v1140 = vld [vmem:[%s844 + $0x1260] sm:$0xff]
                  %1141 = vst [vmem:[%s845 + $0x498] sm:$0xff] %v1140
                  %v1142 = vld [vmem:[%s844 + $0x1280] sm:$0xff]
                  %1143 = vst [vmem:[%s845 + $0x4a0] sm:$0xff] %v1142
                  %v1144 = vld [vmem:[%s844 + $0x12a0] sm:$0xff]
                  %1145 = vst [vmem:[%s845 + $0x4a8] sm:$0xff] %v1144
                  %v1146 = vld [vmem:[%s844 + $0x12c0] sm:$0xff]
                  %1147 = vst [vmem:[%s845 + $0x4b0] sm:$0xff] %v1146
                  %v1148 = vld [vmem:[%s844 + $0x12e0] sm:$0xff]
                  %1149 = vst [vmem:[%s845 + $0x4b8] sm:$0xff] %v1148
                  %v1150 = vld [vmem:[%s844 + $0x1300] sm:$0xff]
                  %1151 = vst [vmem:[%s845 + $0x4c0] sm:$0xff] %v1150
                  %v1152 = vld [vmem:[%s844 + $0x1320] sm:$0xff]
                  %1153 = vst [vmem:[%s845 + $0x4c8] sm:$0xff] %v1152
                  %v1154 = vld [vmem:[%s844 + $0x1340] sm:$0xff]
                  %1155 = vst [vmem:[%s845 + $0x4d0] sm:$0xff] %v1154
                  %v1156 = vld [vmem:[%s844 + $0x1360] sm:$0xff]
                  %1157 = vst [vmem:[%s845 + $0x4d8] sm:$0xff] %v1156
                  %v1158 = vld [vmem:[%s844 + $0x1380] sm:$0xff]
                  %1159 = vst [vmem:[%s845 + $0x4e0] sm:$0xff] %v1158
                  %v1160 = vld [vmem:[%s844 + $0x13a0] sm:$0xff]
                  %1161 = vst [vmem:[%s845 + $0x4e8] sm:$0xff] %v1160
                  %v1162 = vld [vmem:[%s844 + $0x13c0] sm:$0xff]
                  %1163 = vst [vmem:[%s845 + $0x4f0] sm:$0xff] %v1162
                  %v1164 = vld [vmem:[%s844 + $0x13e0] sm:$0xff]
                  %1165 = vst [vmem:[%s845 + $0x4f8] sm:$0xff] %v1164
                  %v1166 = vld [vmem:[%s844 + $0x1400] sm:$0xff]
                  %1167 = vst [vmem:[%s845 + $0x500] sm:$0xff] %v1166
                  %v1168 = vld [vmem:[%s844 + $0x1420] sm:$0xff]
                  %1169 = vst [vmem:[%s845 + $0x508] sm:$0xff] %v1168
                  %v1170 = vld [vmem:[%s844 + $0x1440] sm:$0xff]
                  %1171 = vst [vmem:[%s845 + $0x510] sm:$0xff] %v1170
                  %v1172 = vld [vmem:[%s844 + $0x1460] sm:$0xff]
                  %1173 = vst [vmem:[%s845 + $0x518] sm:$0xff] %v1172
                  %v1174 = vld [vmem:[%s844 + $0x1480] sm:$0xff]
                  %1175 = vst [vmem:[%s845 + $0x520] sm:$0xff] %v1174
                  %v1176 = vld [vmem:[%s844 + $0x14a0] sm:$0xff]
                  %1177 = vst [vmem:[%s845 + $0x528] sm:$0xff] %v1176
                  %v1178 = vld [vmem:[%s844 + $0x14c0] sm:$0xff]
                  %1179 = vst [vmem:[%s845 + $0x530] sm:$0xff] %v1178
                  %v1180 = vld [vmem:[%s844 + $0x14e0] sm:$0xff]
                  %1181 = vst [vmem:[%s845 + $0x538] sm:$0xff] %v1180
                  %v1182 = vld [vmem:[%s844 + $0x1500] sm:$0xff]
                  %1183 = vst [vmem:[%s845 + $0x540] sm:$0xff] %v1182
                  %v1184 = vld [vmem:[%s844 + $0x1520] sm:$0xff]
                  %1185 = vst [vmem:[%s845 + $0x548] sm:$0xff] %v1184
                  %v1186 = vld [vmem:[%s844 + $0x1540] sm:$0xff]
                  %1187 = vst [vmem:[%s845 + $0x550] sm:$0xff] %v1186
                  %v1188 = vld [vmem:[%s844 + $0x1560] sm:$0xff]
                  %1189 = vst [vmem:[%s845 + $0x558] sm:$0xff] %v1188
                  %v1190 = vld [vmem:[%s844 + $0x1580] sm:$0xff]
                  %1191 = vst [vmem:[%s845 + $0x560] sm:$0xff] %v1190
                  %v1192 = vld [vmem:[%s844 + $0x15a0] sm:$0xff]
                  %1193 = vst [vmem:[%s845 + $0x568] sm:$0xff] %v1192
                  %v1194 = vld [vmem:[%s844 + $0x15c0] sm:$0xff]
                  %1195 = vst [vmem:[%s845 + $0x570] sm:$0xff] %v1194
                  %v1196 = vld [vmem:[%s844 + $0x15e0] sm:$0xff]
                  %1197 = vst [vmem:[%s845 + $0x578] sm:$0xff] %v1196
                  %v1198 = vld [vmem:[%s844 + $0x1600] sm:$0xff]
                  %1199 = vst [vmem:[%s845 + $0x580] sm:$0xff] %v1198
                  %v1200 = vld [vmem:[%s844 + $0x1620] sm:$0xff]
                  %1201 = vst [vmem:[%s845 + $0x588] sm:$0xff] %v1200
                  %v1202 = vld [vmem:[%s844 + $0x1640] sm:$0xff]
                  %1203 = vst [vmem:[%s845 + $0x590] sm:$0xff] %v1202
                  %v1204 = vld [vmem:[%s844 + $0x1660] sm:$0xff]
                  %1205 = vst [vmem:[%s845 + $0x598] sm:$0xff] %v1204
                  %v1206 = vld [vmem:[%s844 + $0x1680] sm:$0xff]
                  %1207 = vst [vmem:[%s845 + $0x5a0] sm:$0xff] %v1206
                  %v1208 = vld [vmem:[%s844 + $0x16a0] sm:$0xff]
                  %1209 = vst [vmem:[%s845 + $0x5a8] sm:$0xff] %v1208
                  %v1210 = vld [vmem:[%s844 + $0x16c0] sm:$0xff]
                  %1211 = vst [vmem:[%s845 + $0x5b0] sm:$0xff] %v1210
                  %v1212 = vld [vmem:[%s844 + $0x16e0] sm:$0xff]
                  %1213 = vst [vmem:[%s845 + $0x5b8] sm:$0xff] %v1212
                  %v1214 = vld [vmem:[%s844 + $0x1700] sm:$0xff]
                  %1215 = vst [vmem:[%s845 + $0x5c0] sm:$0xff] %v1214
                  %v1216 = vld [vmem:[%s844 + $0x1720] sm:$0xff]
                  %1217 = vst [vmem:[%s845 + $0x5c8] sm:$0xff] %v1216
                  %v1218 = vld [vmem:[%s844 + $0x1740] sm:$0xff]
                  %1219 = vst [vmem:[%s845 + $0x5d0] sm:$0xff] %v1218
                  %v1220 = vld [vmem:[%s844 + $0x1760] sm:$0xff]
                  %1221 = vst [vmem:[%s845 + $0x5d8] sm:$0xff] %v1220
                  %v1222 = vld [vmem:[%s844 + $0x1780] sm:$0xff]
                  %1223 = vst [vmem:[%s845 + $0x5e0] sm:$0xff] %v1222
                  %v1224 = vld [vmem:[%s844 + $0x17a0] sm:$0xff]
                  %1225 = vst [vmem:[%s845 + $0x5e8] sm:$0xff] %v1224
                  %v1226 = vld [vmem:[%s844 + $0x17c0] sm:$0xff]
                  %1227 = vst [vmem:[%s845 + $0x5f0] sm:$0xff] %v1226
                  %v1228 = vld [vmem:[%s844 + $0x17e0] sm:$0xff]
                  %1229 = vst [vmem:[%s845 + $0x5f8] sm:$0xff] %v1228
                  %v1230 = vld [vmem:[%s844 + $0x1800] sm:$0xff]
                  %1231 = vst [vmem:[%s845 + $0x600] sm:$0xff] %v1230
                  %v1232 = vld [vmem:[%s844 + $0x1820] sm:$0xff]
                  %1233 = vst [vmem:[%s845 + $0x608] sm:$0xff] %v1232
                  %v1234 = vld [vmem:[%s844 + $0x1840] sm:$0xff]
                  %1235 = vst [vmem:[%s845 + $0x610] sm:$0xff] %v1234
                  %v1236 = vld [vmem:[%s844 + $0x1860] sm:$0xff]
                  %1237 = vst [vmem:[%s845 + $0x618] sm:$0xff] %v1236
                  %v1238 = vld [vmem:[%s844 + $0x1880] sm:$0xff]
                  %1239 = vst [vmem:[%s845 + $0x620] sm:$0xff] %v1238
                  %v1240 = vld [vmem:[%s844 + $0x18a0] sm:$0xff]
                  %1241 = vst [vmem:[%s845 + $0x628] sm:$0xff] %v1240
                  %v1242 = vld [vmem:[%s844 + $0x18c0] sm:$0xff]
                  %1243 = vst [vmem:[%s845 + $0x630] sm:$0xff] %v1242
                  %v1244 = vld [vmem:[%s844 + $0x18e0] sm:$0xff]
                  %1245 = vst [vmem:[%s845 + $0x638] sm:$0xff] %v1244
                  %v1246 = vld [vmem:[%s844 + $0x1900] sm:$0xff]
                  %1247 = vst [vmem:[%s845 + $0x640] sm:$0xff] %v1246
                  %v1248 = vld [vmem:[%s844 + $0x1920] sm:$0xff]
                  %1249 = vst [vmem:[%s845 + $0x648] sm:$0xff] %v1248
                  %v1250 = vld [vmem:[%s844 + $0x1940] sm:$0xff]
                  %1251 = vst [vmem:[%s845 + $0x650] sm:$0xff] %v1250
                  %v1252 = vld [vmem:[%s844 + $0x1960] sm:$0xff]
                  %1253 = vst [vmem:[%s845 + $0x658] sm:$0xff] %v1252
                  %v1254 = vld [vmem:[%s844 + $0x1980] sm:$0xff]
                  %1255 = vst [vmem:[%s845 + $0x660] sm:$0xff] %v1254
                  %v1256 = vld [vmem:[%s844 + $0x19a0] sm:$0xff]
                  %1257 = vst [vmem:[%s845 + $0x668] sm:$0xff] %v1256
                  %v1258 = vld [vmem:[%s844 + $0x19c0] sm:$0xff]
                  %1259 = vst [vmem:[%s845 + $0x670] sm:$0xff] %v1258
                  %v1260 = vld [vmem:[%s844 + $0x19e0] sm:$0xff]
                  %1261 = vst [vmem:[%s845 + $0x678] sm:$0xff] %v1260
                  %v1262 = vld [vmem:[%s844 + $0x1a00] sm:$0xff]
                  %1263 = vst [vmem:[%s845 + $0x680] sm:$0xff] %v1262
                  %v1264 = vld [vmem:[%s844 + $0x1a20] sm:$0xff]
                  %1265 = vst [vmem:[%s845 + $0x688] sm:$0xff] %v1264
                  %v1266 = vld [vmem:[%s844 + $0x1a40] sm:$0xff]
                  %1267 = vst [vmem:[%s845 + $0x690] sm:$0xff] %v1266
                  %v1268 = vld [vmem:[%s844 + $0x1a60] sm:$0xff]
                  %1269 = vst [vmem:[%s845 + $0x698] sm:$0xff] %v1268
                  %v1270 = vld [vmem:[%s844 + $0x1a80] sm:$0xff]
                  %1271 = vst [vmem:[%s845 + $0x6a0] sm:$0xff] %v1270
                  %v1272 = vld [vmem:[%s844 + $0x1aa0] sm:$0xff]
                  %1273 = vst [vmem:[%s845 + $0x6a8] sm:$0xff] %v1272
                  %v1274 = vld [vmem:[%s844 + $0x1ac0] sm:$0xff]
                  %1275 = vst [vmem:[%s845 + $0x6b0] sm:$0xff] %v1274
                  %v1276 = vld [vmem:[%s844 + $0x1ae0] sm:$0xff]
                  %1277 = vst [vmem:[%s845 + $0x6b8] sm:$0xff] %v1276
                  %v1278 = vld [vmem:[%s844 + $0x1b00] sm:$0xff]
                  %1279 = vst [vmem:[%s845 + $0x6c0] sm:$0xff] %v1278
                  %v1280 = vld [vmem:[%s844 + $0x1b20] sm:$0xff]
                  %1281 = vst [vmem:[%s845 + $0x6c8] sm:$0xff] %v1280
                  %v1282 = vld [vmem:[%s844 + $0x1b40] sm:$0xff]
                  %1283 = vst [vmem:[%s845 + $0x6d0] sm:$0xff] %v1282
                  %v1284 = vld [vmem:[%s844 + $0x1b60] sm:$0xff]
                  %1285 = vst [vmem:[%s845 + $0x6d8] sm:$0xff] %v1284
                  %v1286 = vld [vmem:[%s844 + $0x1b80] sm:$0xff]
                  %1287 = vst [vmem:[%s845 + $0x6e0] sm:$0xff] %v1286
                  %v1288 = vld [vmem:[%s844 + $0x1ba0] sm:$0xff]
                  %1289 = vst [vmem:[%s845 + $0x6e8] sm:$0xff] %v1288
                  %v1290 = vld [vmem:[%s844 + $0x1bc0] sm:$0xff]
                  %1291 = vst [vmem:[%s845 + $0x6f0] sm:$0xff] %v1290
                  %v1292 = vld [vmem:[%s844 + $0x1be0] sm:$0xff]
                  %1293 = vst [vmem:[%s845 + $0x6f8] sm:$0xff] %v1292
                  %v1294 = vld [vmem:[%s844 + $0x1c00] sm:$0xff]
                  %1295 = vst [vmem:[%s845 + $0x700] sm:$0xff] %v1294
                  %v1296 = vld [vmem:[%s844 + $0x1c20] sm:$0xff]
                  %1297 = vst [vmem:[%s845 + $0x708] sm:$0xff] %v1296
                  %v1298 = vld [vmem:[%s844 + $0x1c40] sm:$0xff]
                  %1299 = vst [vmem:[%s845 + $0x710] sm:$0xff] %v1298
                  %v1300 = vld [vmem:[%s844 + $0x1c60] sm:$0xff]
                  %1301 = vst [vmem:[%s845 + $0x718] sm:$0xff] %v1300
                  %v1302 = vld [vmem:[%s844 + $0x1c80] sm:$0xff]
                  %1303 = vst [vmem:[%s845 + $0x720] sm:$0xff] %v1302
                  %v1304 = vld [vmem:[%s844 + $0x1ca0] sm:$0xff]
                  %1305 = vst [vmem:[%s845 + $0x728] sm:$0xff] %v1304
                  %v1306 = vld [vmem:[%s844 + $0x1cc0] sm:$0xff]
                  %1307 = vst [vmem:[%s845 + $0x730] sm:$0xff] %v1306
                  %v1308 = vld [vmem:[%s844 + $0x1ce0] sm:$0xff]
                  %1309 = vst [vmem:[%s845 + $0x738] sm:$0xff] %v1308
                  %v1310 = vld [vmem:[%s844 + $0x1d00] sm:$0xff]
                  %1311 = vst [vmem:[%s845 + $0x740] sm:$0xff] %v1310
                  %v1312 = vld [vmem:[%s844 + $0x1d20] sm:$0xff]
                  %1313 = vst [vmem:[%s845 + $0x748] sm:$0xff] %v1312
                  %v1314 = vld [vmem:[%s844 + $0x1d40] sm:$0xff]
                  %1315 = vst [vmem:[%s845 + $0x750] sm:$0xff] %v1314
                  %v1316 = vld [vmem:[%s844 + $0x1d60] sm:$0xff]
                  %1317 = vst [vmem:[%s845 + $0x758] sm:$0xff] %v1316
                  %v1318 = vld [vmem:[%s844 + $0x1d80] sm:$0xff]
                  %1319 = vst [vmem:[%s845 + $0x760] sm:$0xff] %v1318
                  %v1320 = vld [vmem:[%s844 + $0x1da0] sm:$0xff]
                  %1321 = vst [vmem:[%s845 + $0x768] sm:$0xff] %v1320
                  %v1322 = vld [vmem:[%s844 + $0x1dc0] sm:$0xff]
                  %1323 = vst [vmem:[%s845 + $0x770] sm:$0xff] %v1322
                  %v1324 = vld [vmem:[%s844 + $0x1de0] sm:$0xff]
                  %1325 = vst [vmem:[%s845 + $0x778] sm:$0xff] %v1324
                  %v1326 = vld [vmem:[%s844 + $0x1e00] sm:$0xff]
                  %1327 = vst [vmem:[%s845 + $0x780] sm:$0xff] %v1326
                  %v1328 = vld [vmem:[%s844 + $0x1e20] sm:$0xff]
                  %1329 = vst [vmem:[%s845 + $0x788] sm:$0xff] %v1328
                  %v1330 = vld [vmem:[%s844 + $0x1e40] sm:$0xff]
                  %1331 = vst [vmem:[%s845 + $0x790] sm:$0xff] %v1330
                  %v1332 = vld [vmem:[%s844 + $0x1e60] sm:$0xff]
                  %1333 = vst [vmem:[%s845 + $0x798] sm:$0xff] %v1332
                  %v1334 = vld [vmem:[%s844 + $0x1e80] sm:$0xff]
                  %1335 = vst [vmem:[%s845 + $0x7a0] sm:$0xff] %v1334
                  %v1336 = vld [vmem:[%s844 + $0x1ea0] sm:$0xff]
                  %1337 = vst [vmem:[%s845 + $0x7a8] sm:$0xff] %v1336
                  %v1338 = vld [vmem:[%s844 + $0x1ec0] sm:$0xff]
                  %1339 = vst [vmem:[%s845 + $0x7b0] sm:$0xff] %v1338
                  %v1340 = vld [vmem:[%s844 + $0x1ee0] sm:$0xff]
                  %1341 = vst [vmem:[%s845 + $0x7b8] sm:$0xff] %v1340
                  %v1342 = vld [vmem:[%s844 + $0x1f00] sm:$0xff]
                  %1343 = vst [vmem:[%s845 + $0x7c0] sm:$0xff] %v1342
                  %v1344 = vld [vmem:[%s844 + $0x1f20] sm:$0xff]
                  %1345 = vst [vmem:[%s845 + $0x7c8] sm:$0xff] %v1344
                  %v1346 = vld [vmem:[%s844 + $0x1f40] sm:$0xff]
                  %1347 = vst [vmem:[%s845 + $0x7d0] sm:$0xff] %v1346
                  %v1348 = vld [vmem:[%s844 + $0x1f60] sm:$0xff]
                  %1349 = vst [vmem:[%s845 + $0x7d8] sm:$0xff] %v1348
                  %v1350 = vld [vmem:[%s844 + $0x1f80] sm:$0xff]
                  %1351 = vst [vmem:[%s845 + $0x7e0] sm:$0xff] %v1350
                  %v1352 = vld [vmem:[%s844 + $0x1fa0] sm:$0xff]
                  %1353 = vst [vmem:[%s845 + $0x7e8] sm:$0xff] %v1352
                  %v1354 = vld [vmem:[%s844 + $0x1fc0] sm:$0xff]
                  %1355 = vst [vmem:[%s845 + $0x7f0] sm:$0xff] %v1354
                  %v1356 = vld [vmem:[%s844 + $0x1fe0] sm:$0xff]
                  %1357 = vst [vmem:[%s845 + $0x7f8] sm:$0xff] %v1356
                $region80: #{_lambda_.1} parent=74 // loop_footer
                  %s843 = sadd.s32 1, %s839
                $region81: #{_lambda_.1} parent=74 // loop_footer_branch
                  %838 = sbr.rel target = $region77
                $region82: #{_lambda_.1} parent=74 // loop_exit
                  _
              $region75: #{_lambda_.1} parent=59 // pred_fallthru
                _
              // Predicated region
              $region83: #{_lambda_.1} parent=59 // pred_check
                _
              $region84: #{_lambda_.1} parent=59 // pred_check_branch
                %1359 = sbr.rel target = $region86
              $region85: #{_lambda_.1} parent=59 // pred_region
                _
              $region86: #{_lambda_.1} parent=59 // pred_fallthru
                _
            $region60: #{_lambda_.1} parent=55 // pred_fallthru
              _
            // Predicated region
            $region61: #{_lambda_.1} parent=55 // pred_check
              _
            $region62: #{_lambda_.1} parent=55 // pred_check_branch
              %313 = sbr.rel target = $region64
            $region63: #{_lambda_.1} parent=55 // pred_region
              %s315 = ssub.s32 256, 1
              loop: start=0, step=1, limit=1
              $region65: #{_lambda_.1} parent=63 // loop_pre_header
                _
              $region66: #{_lambda_.1} parent=63 // loop_header
                %s317 = sphi 0, %s321
                %p318 = scmp.ge.s32.totalorder %s317, 1
                %s322 = sphi %s307, %s307
                %s323 = sphi %s303, %s303
              $region67: #{_lambda_.1} parent=63 // loop_header_branch
                %320 = sbr.rel (%p318) target = $region71
              $region68: #{_lambda_.1} parent=63 // loop_body
                %v324 = vld [vmem:[%s322] sm:%s315]
                %325 = vst [vmem:[%s323] sm:%s315] %v324
                %v326 = vld [vmem:[%s322 + $0x20] sm:%s315]
                %327 = vst [vmem:[%s323 + $0x8] sm:%s315] %v326
                %v328 = vld [vmem:[%s322 + $0x40] sm:%s315]
                %329 = vst [vmem:[%s323 + $0x10] sm:%s315] %v328
                %v330 = vld [vmem:[%s322 + $0x60] sm:%s315]
                %331 = vst [vmem:[%s323 + $0x18] sm:%s315] %v330
                %v332 = vld [vmem:[%s322 + $0x80] sm:%s315]
                %333 = vst [vmem:[%s323 + $0x20] sm:%s315] %v332
                %v334 = vld [vmem:[%s322 + $0xa0] sm:%s315]
                %335 = vst [vmem:[%s323 + $0x28] sm:%s315] %v334
                %v336 = vld [vmem:[%s322 + $0xc0] sm:%s315]
                %337 = vst [vmem:[%s323 + $0x30] sm:%s315] %v336
                %v338 = vld [vmem:[%s322 + $0xe0] sm:%s315]
                %339 = vst [vmem:[%s323 + $0x38] sm:%s315] %v338
                %v340 = vld [vmem:[%s322 + $0x100] sm:%s315]
                %341 = vst [vmem:[%s323 + $0x40] sm:%s315] %v340
                %v342 = vld [vmem:[%s322 + $0x120] sm:%s315]
                %343 = vst [vmem:[%s323 + $0x48] sm:%s315] %v342
                %v344 = vld [vmem:[%s322 + $0x140] sm:%s315]
                %345 = vst [vmem:[%s323 + $0x50] sm:%s315] %v344
                %v346 = vld [vmem:[%s322 + $0x160] sm:%s315]
                %347 = vst [vmem:[%s323 + $0x58] sm:%s315] %v346
                %v348 = vld [vmem:[%s322 + $0x180] sm:%s315]
                %349 = vst [vmem:[%s323 + $0x60] sm:%s315] %v348
                %v350 = vld [vmem:[%s322 + $0x1a0] sm:%s315]
                %351 = vst [vmem:[%s323 + $0x68] sm:%s315] %v350
                %v352 = vld [vmem:[%s322 + $0x1c0] sm:%s315]
                %353 = vst [vmem:[%s323 + $0x70] sm:%s315] %v352
                %v354 = vld [vmem:[%s322 + $0x1e0] sm:%s315]
                %355 = vst [vmem:[%s323 + $0x78] sm:%s315] %v354
                %v356 = vld [vmem:[%s322 + $0x200] sm:%s315]
                %357 = vst [vmem:[%s323 + $0x80] sm:%s315] %v356
                %v358 = vld [vmem:[%s322 + $0x220] sm:%s315]
                %359 = vst [vmem:[%s323 + $0x88] sm:%s315] %v358
                %v360 = vld [vmem:[%s322 + $0x240] sm:%s315]
                %361 = vst [vmem:[%s323 + $0x90] sm:%s315] %v360
                %v362 = vld [vmem:[%s322 + $0x260] sm:%s315]
                %363 = vst [vmem:[%s323 + $0x98] sm:%s315] %v362
                %v364 = vld [vmem:[%s322 + $0x280] sm:%s315]
                %365 = vst [vmem:[%s323 + $0xa0] sm:%s315] %v364
                %v366 = vld [vmem:[%s322 + $0x2a0] sm:%s315]
                %367 = vst [vmem:[%s323 + $0xa8] sm:%s315] %v366
                %v368 = vld [vmem:[%s322 + $0x2c0] sm:%s315]
                %369 = vst [vmem:[%s323 + $0xb0] sm:%s315] %v368
                %v370 = vld [vmem:[%s322 + $0x2e0] sm:%s315]
                %371 = vst [vmem:[%s323 + $0xb8] sm:%s315] %v370
                %v372 = vld [vmem:[%s322 + $0x300] sm:%s315]
                %373 = vst [vmem:[%s323 + $0xc0] sm:%s315] %v372
                %v374 = vld [vmem:[%s322 + $0x320] sm:%s315]
                %375 = vst [vmem:[%s323 + $0xc8] sm:%s315] %v374
                %v376 = vld [vmem:[%s322 + $0x340] sm:%s315]
                %377 = vst [vmem:[%s323 + $0xd0] sm:%s315] %v376
                %v378 = vld [vmem:[%s322 + $0x360] sm:%s315]
                %379 = vst [vmem:[%s323 + $0xd8] sm:%s315] %v378
                %v380 = vld [vmem:[%s322 + $0x380] sm:%s315]
                %381 = vst [vmem:[%s323 + $0xe0] sm:%s315] %v380
                %v382 = vld [vmem:[%s322 + $0x3a0] sm:%s315]
                %383 = vst [vmem:[%s323 + $0xe8] sm:%s315] %v382
                %v384 = vld [vmem:[%s322 + $0x3c0] sm:%s315]
                %385 = vst [vmem:[%s323 + $0xf0] sm:%s315] %v384
                %v386 = vld [vmem:[%s322 + $0x3e0] sm:%s315]
                %387 = vst [vmem:[%s323 + $0xf8] sm:%s315] %v386
                %v388 = vld [vmem:[%s322 + $0x400] sm:%s315]
                %389 = vst [vmem:[%s323 + $0x100] sm:%s315] %v388
                %v390 = vld [vmem:[%s322 + $0x420] sm:%s315]
                %391 = vst [vmem:[%s323 + $0x108] sm:%s315] %v390
                %v392 = vld [vmem:[%s322 + $0x440] sm:%s315]
                %393 = vst [vmem:[%s323 + $0x110] sm:%s315] %v392
                %v394 = vld [vmem:[%s322 + $0x460] sm:%s315]
                %395 = vst [vmem:[%s323 + $0x118] sm:%s315] %v394
                %v396 = vld [vmem:[%s322 + $0x480] sm:%s315]
                %397 = vst [vmem:[%s323 + $0x120] sm:%s315] %v396
                %v398 = vld [vmem:[%s322 + $0x4a0] sm:%s315]
                %399 = vst [vmem:[%s323 + $0x128] sm:%s315] %v398
                %v400 = vld [vmem:[%s322 + $0x4c0] sm:%s315]
                %401 = vst [vmem:[%s323 + $0x130] sm:%s315] %v400
                %v402 = vld [vmem:[%s322 + $0x4e0] sm:%s315]
                %403 = vst [vmem:[%s323 + $0x138] sm:%s315] %v402
                %v404 = vld [vmem:[%s322 + $0x500] sm:%s315]
                %405 = vst [vmem:[%s323 + $0x140] sm:%s315] %v404
                %v406 = vld [vmem:[%s322 + $0x520] sm:%s315]
                %407 = vst [vmem:[%s323 + $0x148] sm:%s315] %v406
                %v408 = vld [vmem:[%s322 + $0x540] sm:%s315]
                %409 = vst [vmem:[%s323 + $0x150] sm:%s315] %v408
                %v410 = vld [vmem:[%s322 + $0x560] sm:%s315]
                %411 = vst [vmem:[%s323 + $0x158] sm:%s315] %v410
                %v412 = vld [vmem:[%s322 + $0x580] sm:%s315]
                %413 = vst [vmem:[%s323 + $0x160] sm:%s315] %v412
                %v414 = vld [vmem:[%s322 + $0x5a0] sm:%s315]
                %415 = vst [vmem:[%s323 + $0x168] sm:%s315] %v414
                %v416 = vld [vmem:[%s322 + $0x5c0] sm:%s315]
                %417 = vst [vmem:[%s323 + $0x170] sm:%s315] %v416
                %v418 = vld [vmem:[%s322 + $0x5e0] sm:%s315]
                %419 = vst [vmem:[%s323 + $0x178] sm:%s315] %v418
                %v420 = vld [vmem:[%s322 + $0x600] sm:%s315]
                %421 = vst [vmem:[%s323 + $0x180] sm:%s315] %v420
                %v422 = vld [vmem:[%s322 + $0x620] sm:%s315]
                %423 = vst [vmem:[%s323 + $0x188] sm:%s315] %v422
                %v424 = vld [vmem:[%s322 + $0x640] sm:%s315]
                %425 = vst [vmem:[%s323 + $0x190] sm:%s315] %v424
                %v426 = vld [vmem:[%s322 + $0x660] sm:%s315]
                %427 = vst [vmem:[%s323 + $0x198] sm:%s315] %v426
                %v428 = vld [vmem:[%s322 + $0x680] sm:%s315]
                %429 = vst [vmem:[%s323 + $0x1a0] sm:%s315] %v428
                %v430 = vld [vmem:[%s322 + $0x6a0] sm:%s315]
                %431 = vst [vmem:[%s323 + $0x1a8] sm:%s315] %v430
                %v432 = vld [vmem:[%s322 + $0x6c0] sm:%s315]
                %433 = vst [vmem:[%s323 + $0x1b0] sm:%s315] %v432
                %v434 = vld [vmem:[%s322 + $0x6e0] sm:%s315]
                %435 = vst [vmem:[%s323 + $0x1b8] sm:%s315] %v434
                %v436 = vld [vmem:[%s322 + $0x700] sm:%s315]
                %437 = vst [vmem:[%s323 + $0x1c0] sm:%s315] %v436
                %v438 = vld [vmem:[%s322 + $0x720] sm:%s315]
                %439 = vst [vmem:[%s323 + $0x1c8] sm:%s315] %v438
                %v440 = vld [vmem:[%s322 + $0x740] sm:%s315]
                %441 = vst [vmem:[%s323 + $0x1d0] sm:%s315] %v440
                %v442 = vld [vmem:[%s322 + $0x760] sm:%s315]
                %443 = vst [vmem:[%s323 + $0x1d8] sm:%s315] %v442
                %v444 = vld [vmem:[%s322 + $0x780] sm:%s315]
                %445 = vst [vmem:[%s323 + $0x1e0] sm:%s315] %v444
                %v446 = vld [vmem:[%s322 + $0x7a0] sm:%s315]
                %447 = vst [vmem:[%s323 + $0x1e8] sm:%s315] %v446
                %v448 = vld [vmem:[%s322 + $0x7c0] sm:%s315]
                %449 = vst [vmem:[%s323 + $0x1f0] sm:%s315] %v448
                %v450 = vld [vmem:[%s322 + $0x7e0] sm:%s315]
                %451 = vst [vmem:[%s323 + $0x1f8] sm:%s315] %v450
                %v452 = vld [vmem:[%s322 + $0x800] sm:%s315]
                %453 = vst [vmem:[%s323 + $0x200] sm:%s315] %v452
                %v454 = vld [vmem:[%s322 + $0x820] sm:%s315]
                %455 = vst [vmem:[%s323 + $0x208] sm:%s315] %v454
                %v456 = vld [vmem:[%s322 + $0x840] sm:%s315]
                %457 = vst [vmem:[%s323 + $0x210] sm:%s315] %v456
                %v458 = vld [vmem:[%s322 + $0x860] sm:%s315]
                %459 = vst [vmem:[%s323 + $0x218] sm:%s315] %v458
                %v460 = vld [vmem:[%s322 + $0x880] sm:%s315]
                %461 = vst [vmem:[%s323 + $0x220] sm:%s315] %v460
                %v462 = vld [vmem:[%s322 + $0x8a0] sm:%s315]
                %463 = vst [vmem:[%s323 + $0x228] sm:%s315] %v462
                %v464 = vld [vmem:[%s322 + $0x8c0] sm:%s315]
                %465 = vst [vmem:[%s323 + $0x230] sm:%s315] %v464
                %v466 = vld [vmem:[%s322 + $0x8e0] sm:%s315]
                %467 = vst [vmem:[%s323 + $0x238] sm:%s315] %v466
                %v468 = vld [vmem:[%s322 + $0x900] sm:%s315]
                %469 = vst [vmem:[%s323 + $0x240] sm:%s315] %v468
                %v470 = vld [vmem:[%s322 + $0x920] sm:%s315]
                %471 = vst [vmem:[%s323 + $0x248] sm:%s315] %v470
                %v472 = vld [vmem:[%s322 + $0x940] sm:%s315]
                %473 = vst [vmem:[%s323 + $0x250] sm:%s315] %v472
                %v474 = vld [vmem:[%s322 + $0x960] sm:%s315]
                %475 = vst [vmem:[%s323 + $0x258] sm:%s315] %v474
                %v476 = vld [vmem:[%s322 + $0x980] sm:%s315]
                %477 = vst [vmem:[%s323 + $0x260] sm:%s315] %v476
                %v478 = vld [vmem:[%s322 + $0x9a0] sm:%s315]
                %479 = vst [vmem:[%s323 + $0x268] sm:%s315] %v478
                %v480 = vld [vmem:[%s322 + $0x9c0] sm:%s315]
                %481 = vst [vmem:[%s323 + $0x270] sm:%s315] %v480
                %v482 = vld [vmem:[%s322 + $0x9e0] sm:%s315]
                %483 = vst [vmem:[%s323 + $0x278] sm:%s315] %v482
                %v484 = vld [vmem:[%s322 + $0xa00] sm:%s315]
                %485 = vst [vmem:[%s323 + $0x280] sm:%s315] %v484
                %v486 = vld [vmem:[%s322 + $0xa20] sm:%s315]
                %487 = vst [vmem:[%s323 + $0x288] sm:%s315] %v486
                %v488 = vld [vmem:[%s322 + $0xa40] sm:%s315]
                %489 = vst [vmem:[%s323 + $0x290] sm:%s315] %v488
                %v490 = vld [vmem:[%s322 + $0xa60] sm:%s315]
                %491 = vst [vmem:[%s323 + $0x298] sm:%s315] %v490
                %v492 = vld [vmem:[%s322 + $0xa80] sm:%s315]
                %493 = vst [vmem:[%s323 + $0x2a0] sm:%s315] %v492
                %v494 = vld [vmem:[%s322 + $0xaa0] sm:%s315]
                %495 = vst [vmem:[%s323 + $0x2a8] sm:%s315] %v494
                %v496 = vld [vmem:[%s322 + $0xac0] sm:%s315]
                %497 = vst [vmem:[%s323 + $0x2b0] sm:%s315] %v496
                %v498 = vld [vmem:[%s322 + $0xae0] sm:%s315]
                %499 = vst [vmem:[%s323 + $0x2b8] sm:%s315] %v498
                %v500 = vld [vmem:[%s322 + $0xb00] sm:%s315]
                %501 = vst [vmem:[%s323 + $0x2c0] sm:%s315] %v500
                %v502 = vld [vmem:[%s322 + $0xb20] sm:%s315]
                %503 = vst [vmem:[%s323 + $0x2c8] sm:%s315] %v502
                %v504 = vld [vmem:[%s322 + $0xb40] sm:%s315]
                %505 = vst [vmem:[%s323 + $0x2d0] sm:%s315] %v504
                %v506 = vld [vmem:[%s322 + $0xb60] sm:%s315]
                %507 = vst [vmem:[%s323 + $0x2d8] sm:%s315] %v506
                %v508 = vld [vmem:[%s322 + $0xb80] sm:%s315]
                %509 = vst [vmem:[%s323 + $0x2e0] sm:%s315] %v508
                %v510 = vld [vmem:[%s322 + $0xba0] sm:%s315]
                %511 = vst [vmem:[%s323 + $0x2e8] sm:%s315] %v510
                %v512 = vld [vmem:[%s322 + $0xbc0] sm:%s315]
                %513 = vst [vmem:[%s323 + $0x2f0] sm:%s315] %v512
                %v514 = vld [vmem:[%s322 + $0xbe0] sm:%s315]
                %515 = vst [vmem:[%s323 + $0x2f8] sm:%s315] %v514
                %v516 = vld [vmem:[%s322 + $0xc00] sm:%s315]
                %517 = vst [vmem:[%s323 + $0x300] sm:%s315] %v516
                %v518 = vld [vmem:[%s322 + $0xc20] sm:%s315]
                %519 = vst [vmem:[%s323 + $0x308] sm:%s315] %v518
                %v520 = vld [vmem:[%s322 + $0xc40] sm:%s315]
                %521 = vst [vmem:[%s323 + $0x310] sm:%s315] %v520
                %v522 = vld [vmem:[%s322 + $0xc60] sm:%s315]
                %523 = vst [vmem:[%s323 + $0x318] sm:%s315] %v522
                %v524 = vld [vmem:[%s322 + $0xc80] sm:%s315]
                %525 = vst [vmem:[%s323 + $0x320] sm:%s315] %v524
                %v526 = vld [vmem:[%s322 + $0xca0] sm:%s315]
                %527 = vst [vmem:[%s323 + $0x328] sm:%s315] %v526
                %v528 = vld [vmem:[%s322 + $0xcc0] sm:%s315]
                %529 = vst [vmem:[%s323 + $0x330] sm:%s315] %v528
                %v530 = vld [vmem:[%s322 + $0xce0] sm:%s315]
                %531 = vst [vmem:[%s323 + $0x338] sm:%s315] %v530
                %v532 = vld [vmem:[%s322 + $0xd00] sm:%s315]
                %533 = vst [vmem:[%s323 + $0x340] sm:%s315] %v532
                %v534 = vld [vmem:[%s322 + $0xd20] sm:%s315]
                %535 = vst [vmem:[%s323 + $0x348] sm:%s315] %v534
                %v536 = vld [vmem:[%s322 + $0xd40] sm:%s315]
                %537 = vst [vmem:[%s323 + $0x350] sm:%s315] %v536
                %v538 = vld [vmem:[%s322 + $0xd60] sm:%s315]
                %539 = vst [vmem:[%s323 + $0x358] sm:%s315] %v538
                %v540 = vld [vmem:[%s322 + $0xd80] sm:%s315]
                %541 = vst [vmem:[%s323 + $0x360] sm:%s315] %v540
                %v542 = vld [vmem:[%s322 + $0xda0] sm:%s315]
                %543 = vst [vmem:[%s323 + $0x368] sm:%s315] %v542
                %v544 = vld [vmem:[%s322 + $0xdc0] sm:%s315]
                %545 = vst [vmem:[%s323 + $0x370] sm:%s315] %v544
                %v546 = vld [vmem:[%s322 + $0xde0] sm:%s315]
                %547 = vst [vmem:[%s323 + $0x378] sm:%s315] %v546
                %v548 = vld [vmem:[%s322 + $0xe00] sm:%s315]
                %549 = vst [vmem:[%s323 + $0x380] sm:%s315] %v548
                %v550 = vld [vmem:[%s322 + $0xe20] sm:%s315]
                %551 = vst [vmem:[%s323 + $0x388] sm:%s315] %v550
                %v552 = vld [vmem:[%s322 + $0xe40] sm:%s315]
                %553 = vst [vmem:[%s323 + $0x390] sm:%s315] %v552
                %v554 = vld [vmem:[%s322 + $0xe60] sm:%s315]
                %555 = vst [vmem:[%s323 + $0x398] sm:%s315] %v554
                %v556 = vld [vmem:[%s322 + $0xe80] sm:%s315]
                %557 = vst [vmem:[%s323 + $0x3a0] sm:%s315] %v556
                %v558 = vld [vmem:[%s322 + $0xea0] sm:%s315]
                %559 = vst [vmem:[%s323 + $0x3a8] sm:%s315] %v558
                %v560 = vld [vmem:[%s322 + $0xec0] sm:%s315]
                %561 = vst [vmem:[%s323 + $0x3b0] sm:%s315] %v560
                %v562 = vld [vmem:[%s322 + $0xee0] sm:%s315]
                %563 = vst [vmem:[%s323 + $0x3b8] sm:%s315] %v562
                %v564 = vld [vmem:[%s322 + $0xf00] sm:%s315]
                %565 = vst [vmem:[%s323 + $0x3c0] sm:%s315] %v564
                %v566 = vld [vmem:[%s322 + $0xf20] sm:%s315]
                %567 = vst [vmem:[%s323 + $0x3c8] sm:%s315] %v566
                %v568 = vld [vmem:[%s322 + $0xf40] sm:%s315]
                %569 = vst [vmem:[%s323 + $0x3d0] sm:%s315] %v568
                %v570 = vld [vmem:[%s322 + $0xf60] sm:%s315]
                %571 = vst [vmem:[%s323 + $0x3d8] sm:%s315] %v570
                %v572 = vld [vmem:[%s322 + $0xf80] sm:%s315]
                %573 = vst [vmem:[%s323 + $0x3e0] sm:%s315] %v572
                %v574 = vld [vmem:[%s322 + $0xfa0] sm:%s315]
                %575 = vst [vmem:[%s323 + $0x3e8] sm:%s315] %v574
                %v576 = vld [vmem:[%s322 + $0xfc0] sm:%s315]
                %577 = vst [vmem:[%s323 + $0x3f0] sm:%s315] %v576
                %v578 = vld [vmem:[%s322 + $0xfe0] sm:%s315]
                %579 = vst [vmem:[%s323 + $0x3f8] sm:%s315] %v578
                %v580 = vld [vmem:[%s322 + $0x1000] sm:%s315]
                %581 = vst [vmem:[%s323 + $0x400] sm:%s315] %v580
                %v582 = vld [vmem:[%s322 + $0x1020] sm:%s315]
                %583 = vst [vmem:[%s323 + $0x408] sm:%s315] %v582
                %v584 = vld [vmem:[%s322 + $0x1040] sm:%s315]
                %585 = vst [vmem:[%s323 + $0x410] sm:%s315] %v584
                %v586 = vld [vmem:[%s322 + $0x1060] sm:%s315]
                %587 = vst [vmem:[%s323 + $0x418] sm:%s315] %v586
                %v588 = vld [vmem:[%s322 + $0x1080] sm:%s315]
                %589 = vst [vmem:[%s323 + $0x420] sm:%s315] %v588
                %v590 = vld [vmem:[%s322 + $0x10a0] sm:%s315]
                %591 = vst [vmem:[%s323 + $0x428] sm:%s315] %v590
                %v592 = vld [vmem:[%s322 + $0x10c0] sm:%s315]
                %593 = vst [vmem:[%s323 + $0x430] sm:%s315] %v592
                %v594 = vld [vmem:[%s322 + $0x10e0] sm:%s315]
                %595 = vst [vmem:[%s323 + $0x438] sm:%s315] %v594
                %v596 = vld [vmem:[%s322 + $0x1100] sm:%s315]
                %597 = vst [vmem:[%s323 + $0x440] sm:%s315] %v596
                %v598 = vld [vmem:[%s322 + $0x1120] sm:%s315]
                %599 = vst [vmem:[%s323 + $0x448] sm:%s315] %v598
                %v600 = vld [vmem:[%s322 + $0x1140] sm:%s315]
                %601 = vst [vmem:[%s323 + $0x450] sm:%s315] %v600
                %v602 = vld [vmem:[%s322 + $0x1160] sm:%s315]
                %603 = vst [vmem:[%s323 + $0x458] sm:%s315] %v602
                %v604 = vld [vmem:[%s322 + $0x1180] sm:%s315]
                %605 = vst [vmem:[%s323 + $0x460] sm:%s315] %v604
                %v606 = vld [vmem:[%s322 + $0x11a0] sm:%s315]
                %607 = vst [vmem:[%s323 + $0x468] sm:%s315] %v606
                %v608 = vld [vmem:[%s322 + $0x11c0] sm:%s315]
                %609 = vst [vmem:[%s323 + $0x470] sm:%s315] %v608
                %v610 = vld [vmem:[%s322 + $0x11e0] sm:%s315]
                %611 = vst [vmem:[%s323 + $0x478] sm:%s315] %v610
                %v612 = vld [vmem:[%s322 + $0x1200] sm:%s315]
                %613 = vst [vmem:[%s323 + $0x480] sm:%s315] %v612
                %v614 = vld [vmem:[%s322 + $0x1220] sm:%s315]
                %615 = vst [vmem:[%s323 + $0x488] sm:%s315] %v614
                %v616 = vld [vmem:[%s322 + $0x1240] sm:%s315]
                %617 = vst [vmem:[%s323 + $0x490] sm:%s315] %v616
                %v618 = vld [vmem:[%s322 + $0x1260] sm:%s315]
                %619 = vst [vmem:[%s323 + $0x498] sm:%s315] %v618
                %v620 = vld [vmem:[%s322 + $0x1280] sm:%s315]
                %621 = vst [vmem:[%s323 + $0x4a0] sm:%s315] %v620
                %v622 = vld [vmem:[%s322 + $0x12a0] sm:%s315]
                %623 = vst [vmem:[%s323 + $0x4a8] sm:%s315] %v622
                %v624 = vld [vmem:[%s322 + $0x12c0] sm:%s315]
                %625 = vst [vmem:[%s323 + $0x4b0] sm:%s315] %v624
                %v626 = vld [vmem:[%s322 + $0x12e0] sm:%s315]
                %627 = vst [vmem:[%s323 + $0x4b8] sm:%s315] %v626
                %v628 = vld [vmem:[%s322 + $0x1300] sm:%s315]
                %629 = vst [vmem:[%s323 + $0x4c0] sm:%s315] %v628
                %v630 = vld [vmem:[%s322 + $0x1320] sm:%s315]
                %631 = vst [vmem:[%s323 + $0x4c8] sm:%s315] %v630
                %v632 = vld [vmem:[%s322 + $0x1340] sm:%s315]
                %633 = vst [vmem:[%s323 + $0x4d0] sm:%s315] %v632
                %v634 = vld [vmem:[%s322 + $0x1360] sm:%s315]
                %635 = vst [vmem:[%s323 + $0x4d8] sm:%s315] %v634
                %v636 = vld [vmem:[%s322 + $0x1380] sm:%s315]
                %637 = vst [vmem:[%s323 + $0x4e0] sm:%s315] %v636
                %v638 = vld [vmem:[%s322 + $0x13a0] sm:%s315]
                %639 = vst [vmem:[%s323 + $0x4e8] sm:%s315] %v638
                %v640 = vld [vmem:[%s322 + $0x13c0] sm:%s315]
                %641 = vst [vmem:[%s323 + $0x4f0] sm:%s315] %v640
                %v642 = vld [vmem:[%s322 + $0x13e0] sm:%s315]
                %643 = vst [vmem:[%s323 + $0x4f8] sm:%s315] %v642
                %v644 = vld [vmem:[%s322 + $0x1400] sm:%s315]
                %645 = vst [vmem:[%s323 + $0x500] sm:%s315] %v644
                %v646 = vld [vmem:[%s322 + $0x1420] sm:%s315]
                %647 = vst [vmem:[%s323 + $0x508] sm:%s315] %v646
                %v648 = vld [vmem:[%s322 + $0x1440] sm:%s315]
                %649 = vst [vmem:[%s323 + $0x510] sm:%s315] %v648
                %v650 = vld [vmem:[%s322 + $0x1460] sm:%s315]
                %651 = vst [vmem:[%s323 + $0x518] sm:%s315] %v650
                %v652 = vld [vmem:[%s322 + $0x1480] sm:%s315]
                %653 = vst [vmem:[%s323 + $0x520] sm:%s315] %v652
                %v654 = vld [vmem:[%s322 + $0x14a0] sm:%s315]
                %655 = vst [vmem:[%s323 + $0x528] sm:%s315] %v654
                %v656 = vld [vmem:[%s322 + $0x14c0] sm:%s315]
                %657 = vst [vmem:[%s323 + $0x530] sm:%s315] %v656
                %v658 = vld [vmem:[%s322 + $0x14e0] sm:%s315]
                %659 = vst [vmem:[%s323 + $0x538] sm:%s315] %v658
                %v660 = vld [vmem:[%s322 + $0x1500] sm:%s315]
                %661 = vst [vmem:[%s323 + $0x540] sm:%s315] %v660
                %v662 = vld [vmem:[%s322 + $0x1520] sm:%s315]
                %663 = vst [vmem:[%s323 + $0x548] sm:%s315] %v662
                %v664 = vld [vmem:[%s322 + $0x1540] sm:%s315]
                %665 = vst [vmem:[%s323 + $0x550] sm:%s315] %v664
                %v666 = vld [vmem:[%s322 + $0x1560] sm:%s315]
                %667 = vst [vmem:[%s323 + $0x558] sm:%s315] %v666
                %v668 = vld [vmem:[%s322 + $0x1580] sm:%s315]
                %669 = vst [vmem:[%s323 + $0x560] sm:%s315] %v668
                %v670 = vld [vmem:[%s322 + $0x15a0] sm:%s315]
                %671 = vst [vmem:[%s323 + $0x568] sm:%s315] %v670
                %v672 = vld [vmem:[%s322 + $0x15c0] sm:%s315]
                %673 = vst [vmem:[%s323 + $0x570] sm:%s315] %v672
                %v674 = vld [vmem:[%s322 + $0x15e0] sm:%s315]
                %675 = vst [vmem:[%s323 + $0x578] sm:%s315] %v674
                %v676 = vld [vmem:[%s322 + $0x1600] sm:%s315]
                %677 = vst [vmem:[%s323 + $0x580] sm:%s315] %v676
                %v678 = vld [vmem:[%s322 + $0x1620] sm:%s315]
                %679 = vst [vmem:[%s323 + $0x588] sm:%s315] %v678
                %v680 = vld [vmem:[%s322 + $0x1640] sm:%s315]
                %681 = vst [vmem:[%s323 + $0x590] sm:%s315] %v680
                %v682 = vld [vmem:[%s322 + $0x1660] sm:%s315]
                %683 = vst [vmem:[%s323 + $0x598] sm:%s315] %v682
                %v684 = vld [vmem:[%s322 + $0x1680] sm:%s315]
                %685 = vst [vmem:[%s323 + $0x5a0] sm:%s315] %v684
                %v686 = vld [vmem:[%s322 + $0x16a0] sm:%s315]
                %687 = vst [vmem:[%s323 + $0x5a8] sm:%s315] %v686
                %v688 = vld [vmem:[%s322 + $0x16c0] sm:%s315]
                %689 = vst [vmem:[%s323 + $0x5b0] sm:%s315] %v688
                %v690 = vld [vmem:[%s322 + $0x16e0] sm:%s315]
                %691 = vst [vmem:[%s323 + $0x5b8] sm:%s315] %v690
                %v692 = vld [vmem:[%s322 + $0x1700] sm:%s315]
                %693 = vst [vmem:[%s323 + $0x5c0] sm:%s315] %v692
                %v694 = vld [vmem:[%s322 + $0x1720] sm:%s315]
                %695 = vst [vmem:[%s323 + $0x5c8] sm:%s315] %v694
                %v696 = vld [vmem:[%s322 + $0x1740] sm:%s315]
                %697 = vst [vmem:[%s323 + $0x5d0] sm:%s315] %v696
                %v698 = vld [vmem:[%s322 + $0x1760] sm:%s315]
                %699 = vst [vmem:[%s323 + $0x5d8] sm:%s315] %v698
                %v700 = vld [vmem:[%s322 + $0x1780] sm:%s315]
                %701 = vst [vmem:[%s323 + $0x5e0] sm:%s315] %v700
                %v702 = vld [vmem:[%s322 + $0x17a0] sm:%s315]
                %703 = vst [vmem:[%s323 + $0x5e8] sm:%s315] %v702
                %v704 = vld [vmem:[%s322 + $0x17c0] sm:%s315]
                %705 = vst [vmem:[%s323 + $0x5f0] sm:%s315] %v704
                %v706 = vld [vmem:[%s322 + $0x17e0] sm:%s315]
                %707 = vst [vmem:[%s323 + $0x5f8] sm:%s315] %v706
                %v708 = vld [vmem:[%s322 + $0x1800] sm:%s315]
                %709 = vst [vmem:[%s323 + $0x600] sm:%s315] %v708
                %v710 = vld [vmem:[%s322 + $0x1820] sm:%s315]
                %711 = vst [vmem:[%s323 + $0x608] sm:%s315] %v710
                %v712 = vld [vmem:[%s322 + $0x1840] sm:%s315]
                %713 = vst [vmem:[%s323 + $0x610] sm:%s315] %v712
                %v714 = vld [vmem:[%s322 + $0x1860] sm:%s315]
                %715 = vst [vmem:[%s323 + $0x618] sm:%s315] %v714
                %v716 = vld [vmem:[%s322 + $0x1880] sm:%s315]
                %717 = vst [vmem:[%s323 + $0x620] sm:%s315] %v716
                %v718 = vld [vmem:[%s322 + $0x18a0] sm:%s315]
                %719 = vst [vmem:[%s323 + $0x628] sm:%s315] %v718
                %v720 = vld [vmem:[%s322 + $0x18c0] sm:%s315]
                %721 = vst [vmem:[%s323 + $0x630] sm:%s315] %v720
                %v722 = vld [vmem:[%s322 + $0x18e0] sm:%s315]
                %723 = vst [vmem:[%s323 + $0x638] sm:%s315] %v722
                %v724 = vld [vmem:[%s322 + $0x1900] sm:%s315]
                %725 = vst [vmem:[%s323 + $0x640] sm:%s315] %v724
                %v726 = vld [vmem:[%s322 + $0x1920] sm:%s315]
                %727 = vst [vmem:[%s323 + $0x648] sm:%s315] %v726
                %v728 = vld [vmem:[%s322 + $0x1940] sm:%s315]
                %729 = vst [vmem:[%s323 + $0x650] sm:%s315] %v728
                %v730 = vld [vmem:[%s322 + $0x1960] sm:%s315]
                %731 = vst [vmem:[%s323 + $0x658] sm:%s315] %v730
                %v732 = vld [vmem:[%s322 + $0x1980] sm:%s315]
                %733 = vst [vmem:[%s323 + $0x660] sm:%s315] %v732
                %v734 = vld [vmem:[%s322 + $0x19a0] sm:%s315]
                %735 = vst [vmem:[%s323 + $0x668] sm:%s315] %v734
                %v736 = vld [vmem:[%s322 + $0x19c0] sm:%s315]
                %737 = vst [vmem:[%s323 + $0x670] sm:%s315] %v736
                %v738 = vld [vmem:[%s322 + $0x19e0] sm:%s315]
                %739 = vst [vmem:[%s323 + $0x678] sm:%s315] %v738
                %v740 = vld [vmem:[%s322 + $0x1a00] sm:%s315]
                %741 = vst [vmem:[%s323 + $0x680] sm:%s315] %v740
                %v742 = vld [vmem:[%s322 + $0x1a20] sm:%s315]
                %743 = vst [vmem:[%s323 + $0x688] sm:%s315] %v742
                %v744 = vld [vmem:[%s322 + $0x1a40] sm:%s315]
                %745 = vst [vmem:[%s323 + $0x690] sm:%s315] %v744
                %v746 = vld [vmem:[%s322 + $0x1a60] sm:%s315]
                %747 = vst [vmem:[%s323 + $0x698] sm:%s315] %v746
                %v748 = vld [vmem:[%s322 + $0x1a80] sm:%s315]
                %749 = vst [vmem:[%s323 + $0x6a0] sm:%s315] %v748
                %v750 = vld [vmem:[%s322 + $0x1aa0] sm:%s315]
                %751 = vst [vmem:[%s323 + $0x6a8] sm:%s315] %v750
                %v752 = vld [vmem:[%s322 + $0x1ac0] sm:%s315]
                %753 = vst [vmem:[%s323 + $0x6b0] sm:%s315] %v752
                %v754 = vld [vmem:[%s322 + $0x1ae0] sm:%s315]
                %755 = vst [vmem:[%s323 + $0x6b8] sm:%s315] %v754
                %v756 = vld [vmem:[%s322 + $0x1b00] sm:%s315]
                %757 = vst [vmem:[%s323 + $0x6c0] sm:%s315] %v756
                %v758 = vld [vmem:[%s322 + $0x1b20] sm:%s315]
                %759 = vst [vmem:[%s323 + $0x6c8] sm:%s315] %v758
                %v760 = vld [vmem:[%s322 + $0x1b40] sm:%s315]
                %761 = vst [vmem:[%s323 + $0x6d0] sm:%s315] %v760
                %v762 = vld [vmem:[%s322 + $0x1b60] sm:%s315]
                %763 = vst [vmem:[%s323 + $0x6d8] sm:%s315] %v762
                %v764 = vld [vmem:[%s322 + $0x1b80] sm:%s315]
                %765 = vst [vmem:[%s323 + $0x6e0] sm:%s315] %v764
                %v766 = vld [vmem:[%s322 + $0x1ba0] sm:%s315]
                %767 = vst [vmem:[%s323 + $0x6e8] sm:%s315] %v766
                %v768 = vld [vmem:[%s322 + $0x1bc0] sm:%s315]
                %769 = vst [vmem:[%s323 + $0x6f0] sm:%s315] %v768
                %v770 = vld [vmem:[%s322 + $0x1be0] sm:%s315]
                %771 = vst [vmem:[%s323 + $0x6f8] sm:%s315] %v770
                %v772 = vld [vmem:[%s322 + $0x1c00] sm:%s315]
                %773 = vst [vmem:[%s323 + $0x700] sm:%s315] %v772
                %v774 = vld [vmem:[%s322 + $0x1c20] sm:%s315]
                %775 = vst [vmem:[%s323 + $0x708] sm:%s315] %v774
                %v776 = vld [vmem:[%s322 + $0x1c40] sm:%s315]
                %777 = vst [vmem:[%s323 + $0x710] sm:%s315] %v776
                %v778 = vld [vmem:[%s322 + $0x1c60] sm:%s315]
                %779 = vst [vmem:[%s323 + $0x718] sm:%s315] %v778
                %v780 = vld [vmem:[%s322 + $0x1c80] sm:%s315]
                %781 = vst [vmem:[%s323 + $0x720] sm:%s315] %v780
                %v782 = vld [vmem:[%s322 + $0x1ca0] sm:%s315]
                %783 = vst [vmem:[%s323 + $0x728] sm:%s315] %v782
                %v784 = vld [vmem:[%s322 + $0x1cc0] sm:%s315]
                %785 = vst [vmem:[%s323 + $0x730] sm:%s315] %v784
                %v786 = vld [vmem:[%s322 + $0x1ce0] sm:%s315]
                %787 = vst [vmem:[%s323 + $0x738] sm:%s315] %v786
                %v788 = vld [vmem:[%s322 + $0x1d00] sm:%s315]
                %789 = vst [vmem:[%s323 + $0x740] sm:%s315] %v788
                %v790 = vld [vmem:[%s322 + $0x1d20] sm:%s315]
                %791 = vst [vmem:[%s323 + $0x748] sm:%s315] %v790
                %v792 = vld [vmem:[%s322 + $0x1d40] sm:%s315]
                %793 = vst [vmem:[%s323 + $0x750] sm:%s315] %v792
                %v794 = vld [vmem:[%s322 + $0x1d60] sm:%s315]
                %795 = vst [vmem:[%s323 + $0x758] sm:%s315] %v794
                %v796 = vld [vmem:[%s322 + $0x1d80] sm:%s315]
                %797 = vst [vmem:[%s323 + $0x760] sm:%s315] %v796
                %v798 = vld [vmem:[%s322 + $0x1da0] sm:%s315]
                %799 = vst [vmem:[%s323 + $0x768] sm:%s315] %v798
                %v800 = vld [vmem:[%s322 + $0x1dc0] sm:%s315]
                %801 = vst [vmem:[%s323 + $0x770] sm:%s315] %v800
                %v802 = vld [vmem:[%s322 + $0x1de0] sm:%s315]
                %803 = vst [vmem:[%s323 + $0x778] sm:%s315] %v802
                %v804 = vld [vmem:[%s322 + $0x1e00] sm:%s315]
                %805 = vst [vmem:[%s323 + $0x780] sm:%s315] %v804
                %v806 = vld [vmem:[%s322 + $0x1e20] sm:%s315]
                %807 = vst [vmem:[%s323 + $0x788] sm:%s315] %v806
                %v808 = vld [vmem:[%s322 + $0x1e40] sm:%s315]
                %809 = vst [vmem:[%s323 + $0x790] sm:%s315] %v808
                %v810 = vld [vmem:[%s322 + $0x1e60] sm:%s315]
                %811 = vst [vmem:[%s323 + $0x798] sm:%s315] %v810
                %v812 = vld [vmem:[%s322 + $0x1e80] sm:%s315]
                %813 = vst [vmem:[%s323 + $0x7a0] sm:%s315] %v812
                %v814 = vld [vmem:[%s322 + $0x1ea0] sm:%s315]
                %815 = vst [vmem:[%s323 + $0x7a8] sm:%s315] %v814
                %v816 = vld [vmem:[%s322 + $0x1ec0] sm:%s315]
                %817 = vst [vmem:[%s323 + $0x7b0] sm:%s315] %v816
                %v818 = vld [vmem:[%s322 + $0x1ee0] sm:%s315]
                %819 = vst [vmem:[%s323 + $0x7b8] sm:%s315] %v818
                %v820 = vld [vmem:[%s322 + $0x1f00] sm:%s315]
                %821 = vst [vmem:[%s323 + $0x7c0] sm:%s315] %v820
                %v822 = vld [vmem:[%s322 + $0x1f20] sm:%s315]
                %823 = vst [vmem:[%s323 + $0x7c8] sm:%s315] %v822
                %v824 = vld [vmem:[%s322 + $0x1f40] sm:%s315]
                %825 = vst [vmem:[%s323 + $0x7d0] sm:%s315] %v824
                %v826 = vld [vmem:[%s322 + $0x1f60] sm:%s315]
                %827 = vst [vmem:[%s323 + $0x7d8] sm:%s315] %v826
                %v828 = vld [vmem:[%s322 + $0x1f80] sm:%s315]
                %829 = vst [vmem:[%s323 + $0x7e0] sm:%s315] %v828
                %v830 = vld [vmem:[%s322 + $0x1fa0] sm:%s315]
                %831 = vst [vmem:[%s323 + $0x7e8] sm:%s315] %v830
                %v832 = vld [vmem:[%s322 + $0x1fc0] sm:%s315]
                %833 = vst [vmem:[%s323 + $0x7f0] sm:%s315] %v832
                %v834 = vld [vmem:[%s322 + $0x1fe0] sm:%s315]
                %835 = vst [vmem:[%s323 + $0x7f8] sm:%s315] %v834
              $region69: #{_lambda_.1} parent=63 // loop_footer
                %s321 = sadd.s32 1, %s317
              $region70: #{_lambda_.1} parent=63 // loop_footer_branch
                %316 = sbr.rel target = $region66
              $region71: #{_lambda_.1} parent=63 // loop_exit
                _
            $region64: #{_lambda_.1} parent=55 // pred_fallthru
              _
          $region56: #{_lambda_.1} parent=51 // pred_fallthru
            _
          %1360 = vnop
        $region52: #{_lambda_.1} parent=47 // pred_fallthru
          _
      $region48: #{_lambda_.1} parent=5 // pred_fallthru
        _
      %p1361 = scmp.le.s32.totalorder 1, %s18
      %p1362 = scmp.lt.s32.totalorder %s18, 9
      %p1363 = pnand %p1361, %p1362
      %p1364 = pneg %p1363
      // Predicated region
      $region87: #{_lambda_.1} parent=5 // pred_check
        _
      $region88: #{_lambda_.1} parent=5 // pred_check_branch
        %1366 = sbr.rel (%p1363) target = $region90
      $region89: #{_lambda_.1} parent=5 // pred_region
        %s1367 = ssub.s32 %s18, 1
        %s1368 = sand.u32 %s45, 1
        %s1369 = sand.u32 %s45, 1
        %s1370 = smul.addr %s1369, 2048
        %s1371 = scalar_lea.vmem [#allocation2], %s1370
        // Predicated region
        $region91: #{_lambda_.1} parent=89 // pred_check
          %p1372 = pneg %p58
        $region92: #{_lambda_.1} parent=89 // pred_check_branch
          %1374 = sbr.rel (%p1372) target = $region94
        $region93: #{_lambda_.1} parent=89 // pred_region
          _
        $region94: #{_lambda_.1} parent=89 // pred_fallthru
          _
        %s1375 = sand.u32 %s45, 1
        %s1376 = sand.u32 %s45, 1
        %s1377 = smul.addr %s1376, 2048
        %s1378 = scalar_lea.vmem [#allocation2], %s1377
        %p1379 = pneg %p58
        %p1380 = pneg %p55
        %p1381 = pneg %p79
        %p1382 = pneg %p76
        %p1383 = pneg %p100
        %p1384 = pneg %p97
        %p1385 = pneg %p121
        %p1386 = pneg %p118
        %p1387 = pneg %p142
        %p1388 = pneg %p139
        %p1389 = pneg %p163
        %p1390 = pneg %p160
        %p1391 = pneg %p184
        %p1392 = pneg %p181
        %p1393 = pneg %p205
        %p1394 = pneg %p202
        %p1395 = pneg %p226
        %p1396 = pneg %p223
        %p1397 = pneg %p254
        %p1398 = pneg %p251
        %s1399 = sand.u32 %s241, 1
        %s1400 = scalar_lea.sflag [#allocation4], %s1399
        %s1401 = sand.u32 %s241, 1
        %s1402 = smul.addr %s1401, 8
        %s1403 = scalar_lea.vmem [#allocation3], %s1402
        %v1404 = vld [vmem:[%s1371] sm:$0xff]
        %v1405 = vld [vmem:[%s1371 + $0x8] sm:$0xff]
        %v1406 = vld [vmem:[%s1371 + $0x10] sm:$0xff]
        %v1407 = vld [vmem:[%s1371 + $0x18] sm:$0xff]
        %v1408 = vld [vmem:[%s1371 + $0x20] sm:$0xff]
        %v1409 = vld [vmem:[%s1371 + $0x28] sm:$0xff]
        %v1410 = vld [vmem:[%s1371 + $0x30] sm:$0xff]
        %v1411 = vld [vmem:[%s1371 + $0x38] sm:$0xff]
        %v1412 = vld [vmem:[%s1371 + $0x40] sm:$0xff]
        %v1413 = vld [vmem:[%s1371 + $0x48] sm:$0xff]
        %v1414 = vld [vmem:[%s1371 + $0x50] sm:$0xff]
        %v1415 = vld [vmem:[%s1371 + $0x58] sm:$0xff]
        %v1416 = vld [vmem:[%s1371 + $0x60] sm:$0xff]
        %v1417 = vld [vmem:[%s1371 + $0x68] sm:$0xff]
        %v1418 = vld [vmem:[%s1371 + $0x70] sm:$0xff]
        %v1419 = vld [vmem:[%s1371 + $0x78] sm:$0xff]
        %v1420 = vld [vmem:[%s1371 + $0x80] sm:$0xff]
        %v1421 = vld [vmem:[%s1371 + $0x88] sm:$0xff]
        %v1422 = vld [vmem:[%s1371 + $0x90] sm:$0xff]
        %v1423 = vld [vmem:[%s1371 + $0x98] sm:$0xff]
        %v1424 = vld [vmem:[%s1371 + $0xa0] sm:$0xff]
        %v1425 = vld [vmem:[%s1371 + $0xa8] sm:$0xff]
        %v1426 = vld [vmem:[%s1371 + $0xb0] sm:$0xff]
        %v1427 = vld [vmem:[%s1371 + $0xb8] sm:$0xff]
        %v1428 = vld [vmem:[%s1371 + $0xc0] sm:$0xff]
        %v1429 = vld [vmem:[%s1371 + $0xc8] sm:$0xff]
        %v1430 = vld [vmem:[%s1371 + $0xd0] sm:$0xff]
        %v1431 = vld [vmem:[%s1371 + $0xd8] sm:$0xff]
        %v1432 = vld [vmem:[%s1371 + $0xe0] sm:$0xff]
        %v1433 = vld [vmem:[%s1371 + $0xe8] sm:$0xff]
        %v1434 = vld [vmem:[%s1371 + $0xf0] sm:$0xff]
        %v1435 = vld [vmem:[%s1371 + $0xf8] sm:$0xff]
        %v1436 = vld [vmem:[%s1371 + $0x100] sm:$0xff]
        %v1437 = vld [vmem:[%s1371 + $0x108] sm:$0xff]
        %v1438 = vld [vmem:[%s1371 + $0x110] sm:$0xff]
        %v1439 = vld [vmem:[%s1371 + $0x118] sm:$0xff]
        %v1440 = vld [vmem:[%s1371 + $0x120] sm:$0xff]
        %v1441 = vld [vmem:[%s1371 + $0x128] sm:$0xff]
        %v1442 = vld [vmem:[%s1371 + $0x130] sm:$0xff]
        %v1443 = vld [vmem:[%s1371 + $0x138] sm:$0xff]
        %v1444 = vld [vmem:[%s1371 + $0x140] sm:$0xff]
        %v1445 = vld [vmem:[%s1371 + $0x148] sm:$0xff]
        %v1446 = vld [vmem:[%s1371 + $0x150] sm:$0xff]
        %v1447 = vld [vmem:[%s1371 + $0x158] sm:$0xff]
        %v1448 = vld [vmem:[%s1371 + $0x160] sm:$0xff]
        %v1449 = vld [vmem:[%s1371 + $0x168] sm:$0xff]
        %v1450 = vld [vmem:[%s1371 + $0x170] sm:$0xff]
        %v1451 = vld [vmem:[%s1371 + $0x178] sm:$0xff]
        %v1452 = vld [vmem:[%s1371 + $0x180] sm:$0xff]
        %v1453 = vld [vmem:[%s1371 + $0x188] sm:$0xff]
        %v1454 = vld [vmem:[%s1371 + $0x190] sm:$0xff]
        %v1455 = vld [vmem:[%s1371 + $0x198] sm:$0xff]
        %v1456 = vld [vmem:[%s1371 + $0x1a0] sm:$0xff]
        %v1457 = vld [vmem:[%s1371 + $0x1a8] sm:$0xff]
        %v1458 = vld [vmem:[%s1371 + $0x1b0] sm:$0xff]
        %v1459 = vld [vmem:[%s1371 + $0x1b8] sm:$0xff]
        %v1460 = vld [vmem:[%s1371 + $0x1c0] sm:$0xff]
        %v1461 = vld [vmem:[%s1371 + $0x1c8] sm:$0xff]
        %v1462 = vld [vmem:[%s1371 + $0x1d0] sm:$0xff]
        %v1463 = vld [vmem:[%s1371 + $0x1d8] sm:$0xff]
        %v1464 = vld [vmem:[%s1371 + $0x1e0] sm:$0xff]
        %v1465 = vld [vmem:[%s1371 + $0x1e8] sm:$0xff]
        %v1466 = vld [vmem:[%s1371 + $0x1f0] sm:$0xff]
        %v1467 = vld [vmem:[%s1371 + $0x1f8] sm:$0xff]
        %v1468 = vld [vmem:[%s1371 + $0x200] sm:$0xff]
        %v1469 = vld [vmem:[%s1371 + $0x208] sm:$0xff]
        %v1470 = vld [vmem:[%s1371 + $0x210] sm:$0xff]
        %v1471 = vld [vmem:[%s1371 + $0x218] sm:$0xff]
        %v1472 = vld [vmem:[%s1371 + $0x220] sm:$0xff]
        %v1473 = vld [vmem:[%s1371 + $0x228] sm:$0xff]
        %v1474 = vld [vmem:[%s1371 + $0x230] sm:$0xff]
        %v1475 = vld [vmem:[%s1371 + $0x238] sm:$0xff]
        %v1476 = vld [vmem:[%s1371 + $0x240] sm:$0xff]
        %v1477 = vld [vmem:[%s1371 + $0x248] sm:$0xff]
        %v1478 = vld [vmem:[%s1371 + $0x250] sm:$0xff]
        %v1479 = vld [vmem:[%s1371 + $0x258] sm:$0xff]
        %v1480 = vld [vmem:[%s1371 + $0x260] sm:$0xff]
        %v1481 = vld [vmem:[%s1371 + $0x268] sm:$0xff]
        %v1482 = vld [vmem:[%s1371 + $0x270] sm:$0xff]
        %v1483 = vld [vmem:[%s1371 + $0x278] sm:$0xff]
        %v1484 = vld [vmem:[%s1371 + $0x280] sm:$0xff]
        %v1485 = vld [vmem:[%s1371 + $0x288] sm:$0xff]
        %v1486 = vld [vmem:[%s1371 + $0x290] sm:$0xff]
        %v1487 = vld [vmem:[%s1371 + $0x298] sm:$0xff]
        %v1488 = vld [vmem:[%s1371 + $0x2a0] sm:$0xff]
        %v1489 = vld [vmem:[%s1371 + $0x2a8] sm:$0xff]
        %v1490 = vld [vmem:[%s1371 + $0x2b0] sm:$0xff]
        %v1491 = vld [vmem:[%s1371 + $0x2b8] sm:$0xff]
        %v1492 = vld [vmem:[%s1371 + $0x2c0] sm:$0xff]
        %v1493 = vld [vmem:[%s1371 + $0x2c8] sm:$0xff]
        %v1494 = vld [vmem:[%s1371 + $0x2d0] sm:$0xff]
        %v1495 = vld [vmem:[%s1371 + $0x2d8] sm:$0xff]
        %v1496 = vld [vmem:[%s1371 + $0x2e0] sm:$0xff]
        %v1497 = vld [vmem:[%s1371 + $0x2e8] sm:$0xff]
        %v1498 = vld [vmem:[%s1371 + $0x2f0] sm:$0xff]
        %v1499 = vld [vmem:[%s1371 + $0x2f8] sm:$0xff]
        %v1500 = vld [vmem:[%s1371 + $0x300] sm:$0xff]
        %v1501 = vld [vmem:[%s1371 + $0x308] sm:$0xff]
        %v1502 = vld [vmem:[%s1371 + $0x310] sm:$0xff]
        %v1503 = vld [vmem:[%s1371 + $0x318] sm:$0xff]
        %v1504 = vld [vmem:[%s1371 + $0x320] sm:$0xff]
        %v1505 = vld [vmem:[%s1371 + $0x328] sm:$0xff]
        %v1506 = vld [vmem:[%s1371 + $0x330] sm:$0xff]
        %v1507 = vld [vmem:[%s1371 + $0x338] sm:$0xff]
        %v1508 = vld [vmem:[%s1371 + $0x340] sm:$0xff]
        %v1509 = vld [vmem:[%s1371 + $0x348] sm:$0xff]
        %v1510 = vld [vmem:[%s1371 + $0x350] sm:$0xff]
        %v1511 = vld [vmem:[%s1371 + $0x358] sm:$0xff]
        %v1512 = vld [vmem:[%s1371 + $0x360] sm:$0xff]
        %v1513 = vld [vmem:[%s1371 + $0x368] sm:$0xff]
        %v1514 = vld [vmem:[%s1371 + $0x370] sm:$0xff]
        %v1515 = vld [vmem:[%s1371 + $0x378] sm:$0xff]
        %v1516 = vld [vmem:[%s1371 + $0x380] sm:$0xff]
        %v1517 = vld [vmem:[%s1371 + $0x388] sm:$0xff]
        %v1518 = vld [vmem:[%s1371 + $0x390] sm:$0xff]
        %v1519 = vld [vmem:[%s1371 + $0x398] sm:$0xff]
        %v1520 = vld [vmem:[%s1371 + $0x3a0] sm:$0xff]
        %v1521 = vld [vmem:[%s1371 + $0x3a8] sm:$0xff]
        %v1522 = vld [vmem:[%s1371 + $0x3b0] sm:$0xff]
        %v1523 = vld [vmem:[%s1371 + $0x3b8] sm:$0xff]
        %v1524 = vld [vmem:[%s1371 + $0x3c0] sm:$0xff]
        %v1525 = vld [vmem:[%s1371 + $0x3c8] sm:$0xff]
        %v1526 = vld [vmem:[%s1371 + $0x3d0] sm:$0xff]
        %v1527 = vld [vmem:[%s1371 + $0x3d8] sm:$0xff]
        %v1528 = vld [vmem:[%s1371 + $0x3e0] sm:$0xff]
        %v1529 = vld [vmem:[%s1371 + $0x3e8] sm:$0xff]
        %v1530 = vld [vmem:[%s1371 + $0x3f0] sm:$0xff]
        %v1531 = vld [vmem:[%s1371 + $0x3f8] sm:$0xff]
        %v1532 = vld [vmem:[%s1371 + $0x400] sm:$0xff]
        %v1533 = vld [vmem:[%s1371 + $0x408] sm:$0xff]
        %v1534 = vld [vmem:[%s1371 + $0x410] sm:$0xff]
        %v1535 = vld [vmem:[%s1371 + $0x418] sm:$0xff]
        %v1536 = vld [vmem:[%s1371 + $0x420] sm:$0xff]
        %v1537 = vld [vmem:[%s1371 + $0x428] sm:$0xff]
        %v1538 = vld [vmem:[%s1371 + $0x430] sm:$0xff]
        %v1539 = vld [vmem:[%s1371 + $0x438] sm:$0xff]
        %v1540 = vld [vmem:[%s1371 + $0x440] sm:$0xff]
        %v1541 = vld [vmem:[%s1371 + $0x448] sm:$0xff]
        %v1542 = vld [vmem:[%s1371 + $0x450] sm:$0xff]
        %v1543 = vld [vmem:[%s1371 + $0x458] sm:$0xff]
        %v1544 = vld [vmem:[%s1371 + $0x460] sm:$0xff]
        %v1545 = vld [vmem:[%s1371 + $0x468] sm:$0xff]
        %v1546 = vld [vmem:[%s1371 + $0x470] sm:$0xff]
        %v1547 = vld [vmem:[%s1371 + $0x478] sm:$0xff]
        %v1548 = vld [vmem:[%s1371 + $0x480] sm:$0xff]
        %v1549 = vld [vmem:[%s1371 + $0x488] sm:$0xff]
        %v1550 = vld [vmem:[%s1371 + $0x490] sm:$0xff]
        %v1551 = vld [vmem:[%s1371 + $0x498] sm:$0xff]
        %v1552 = vld [vmem:[%s1371 + $0x4a0] sm:$0xff]
        %v1553 = vld [vmem:[%s1371 + $0x4a8] sm:$0xff]
        %v1554 = vld [vmem:[%s1371 + $0x4b0] sm:$0xff]
        %v1555 = vld [vmem:[%s1371 + $0x4b8] sm:$0xff]
        %v1556 = vld [vmem:[%s1371 + $0x4c0] sm:$0xff]
        %v1557 = vld [vmem:[%s1371 + $0x4c8] sm:$0xff]
        %v1558 = vld [vmem:[%s1371 + $0x4d0] sm:$0xff]
        %v1559 = vld [vmem:[%s1371 + $0x4d8] sm:$0xff]
        %v1560 = vld [vmem:[%s1371 + $0x4e0] sm:$0xff]
        %v1561 = vld [vmem:[%s1371 + $0x4e8] sm:$0xff]
        %v1562 = vld [vmem:[%s1371 + $0x4f0] sm:$0xff]
        %v1563 = vld [vmem:[%s1371 + $0x4f8] sm:$0xff]
        %v1564 = vld [vmem:[%s1371 + $0x500] sm:$0xff]
        %v1565 = vld [vmem:[%s1371 + $0x508] sm:$0xff]
        %v1566 = vld [vmem:[%s1371 + $0x510] sm:$0xff]
        %v1567 = vld [vmem:[%s1371 + $0x518] sm:$0xff]
        %v1568 = vld [vmem:[%s1371 + $0x520] sm:$0xff]
        %v1569 = vld [vmem:[%s1371 + $0x528] sm:$0xff]
        %v1570 = vld [vmem:[%s1371 + $0x530] sm:$0xff]
        %v1571 = vld [vmem:[%s1371 + $0x538] sm:$0xff]
        %v1572 = vld [vmem:[%s1371 + $0x540] sm:$0xff]
        %v1573 = vld [vmem:[%s1371 + $0x548] sm:$0xff]
        %v1574 = vld [vmem:[%s1371 + $0x550] sm:$0xff]
        %v1575 = vld [vmem:[%s1371 + $0x558] sm:$0xff]
        %v1576 = vld [vmem:[%s1371 + $0x560] sm:$0xff]
        %v1577 = vld [vmem:[%s1371 + $0x568] sm:$0xff]
        %v1578 = vld [vmem:[%s1371 + $0x570] sm:$0xff]
        %v1579 = vld [vmem:[%s1371 + $0x578] sm:$0xff]
        %v1580 = vld [vmem:[%s1371 + $0x580] sm:$0xff]
        %v1581 = vld [vmem:[%s1371 + $0x588] sm:$0xff]
        %v1582 = vld [vmem:[%s1371 + $0x590] sm:$0xff]
        %v1583 = vld [vmem:[%s1371 + $0x598] sm:$0xff]
        %v1584 = vld [vmem:[%s1371 + $0x5a0] sm:$0xff]
        %v1585 = vld [vmem:[%s1371 + $0x5a8] sm:$0xff]
        %v1586 = vld [vmem:[%s1371 + $0x5b0] sm:$0xff]
        %v1587 = vld [vmem:[%s1371 + $0x5b8] sm:$0xff]
        %v1588 = vld [vmem:[%s1371 + $0x5c0] sm:$0xff]
        %v1589 = vld [vmem:[%s1371 + $0x5c8] sm:$0xff]
        %v1590 = vld [vmem:[%s1371 + $0x5d0] sm:$0xff]
        %v1591 = vld [vmem:[%s1371 + $0x5d8] sm:$0xff]
        %v1592 = vld [vmem:[%s1371 + $0x5e0] sm:$0xff]
        %v1593 = vld [vmem:[%s1371 + $0x5e8] sm:$0xff]
        %v1594 = vld [vmem:[%s1371 + $0x5f0] sm:$0xff]
        %v1595 = vld [vmem:[%s1371 + $0x5f8] sm:$0xff]
        %v1596 = vld [vmem:[%s1371 + $0x600] sm:$0xff]
        %v1597 = vld [vmem:[%s1371 + $0x608] sm:$0xff]
        %v1598 = vld [vmem:[%s1371 + $0x610] sm:$0xff]
        %v1599 = vld [vmem:[%s1371 + $0x618] sm:$0xff]
        %v1600 = vld [vmem:[%s1371 + $0x620] sm:$0xff]
        %v1601 = vld [vmem:[%s1371 + $0x628] sm:$0xff]
        %v1602 = vld [vmem:[%s1371 + $0x630] sm:$0xff]
        %v1603 = vld [vmem:[%s1371 + $0x638] sm:$0xff]
        %v1604 = vld [vmem:[%s1371 + $0x640] sm:$0xff]
        %v1605 = vld [vmem:[%s1371 + $0x648] sm:$0xff]
        %v1606 = vld [vmem:[%s1371 + $0x650] sm:$0xff]
        %v1607 = vld [vmem:[%s1371 + $0x658] sm:$0xff]
        %v1608 = vld [vmem:[%s1371 + $0x660] sm:$0xff]
        %v1609 = vld [vmem:[%s1371 + $0x668] sm:$0xff]
        %v1610 = vld [vmem:[%s1371 + $0x670] sm:$0xff]
        %v1611 = vld [vmem:[%s1371 + $0x678] sm:$0xff]
        %v1612 = vld [vmem:[%s1371 + $0x680] sm:$0xff]
        %v1613 = vld [vmem:[%s1371 + $0x688] sm:$0xff]
        %v1614 = vld [vmem:[%s1371 + $0x690] sm:$0xff]
        %v1615 = vld [vmem:[%s1371 + $0x698] sm:$0xff]
        %v1616 = vld [vmem:[%s1371 + $0x6a0] sm:$0xff]
        %v1617 = vld [vmem:[%s1371 + $0x6a8] sm:$0xff]
        %v1618 = vld [vmem:[%s1371 + $0x6b0] sm:$0xff]
        %v1619 = vld [vmem:[%s1371 + $0x6b8] sm:$0xff]
        %v1620 = vld [vmem:[%s1371 + $0x6c0] sm:$0xff]
        %v1621 = vld [vmem:[%s1371 + $0x6c8] sm:$0xff]
        %v1622 = vld [vmem:[%s1371 + $0x6d0] sm:$0xff]
        %v1623 = vld [vmem:[%s1371 + $0x6d8] sm:$0xff]
        %v1624 = vld [vmem:[%s1371 + $0x6e0] sm:$0xff]
        %v1625 = vld [vmem:[%s1371 + $0x6e8] sm:$0xff]
        %v1626 = vld [vmem:[%s1371 + $0x6f0] sm:$0xff]
        %v1627 = vld [vmem:[%s1371 + $0x6f8] sm:$0xff]
        %v1628 = vld [vmem:[%s1371 + $0x700] sm:$0xff]
        %v1629 = vld [vmem:[%s1371 + $0x708] sm:$0xff]
        %v1630 = vld [vmem:[%s1371 + $0x710] sm:$0xff]
        %v1631 = vld [vmem:[%s1371 + $0x718] sm:$0xff]
        %v1632 = vld [vmem:[%s1371 + $0x720] sm:$0xff]
        %v1633 = vld [vmem:[%s1371 + $0x728] sm:$0xff]
        %v1634 = vld [vmem:[%s1371 + $0x730] sm:$0xff]
        %v1635 = vld [vmem:[%s1371 + $0x738] sm:$0xff]
        %v1636 = vld [vmem:[%s1371 + $0x740] sm:$0xff]
        %v1637 = vld [vmem:[%s1371 + $0x748] sm:$0xff]
        %v1638 = vld [vmem:[%s1371 + $0x750] sm:$0xff]
        %v1639 = vld [vmem:[%s1371 + $0x758] sm:$0xff]
        %v1640 = vld [vmem:[%s1371 + $0x760] sm:$0xff]
        %v1641 = vld [vmem:[%s1371 + $0x768] sm:$0xff]
        %v1642 = vld [vmem:[%s1371 + $0x770] sm:$0xff]
        %v1643 = vld [vmem:[%s1371 + $0x778] sm:$0xff]
        %v1644 = vld [vmem:[%s1371 + $0x780] sm:$0xff]
        %v1645 = vld [vmem:[%s1371 + $0x788] sm:$0xff]
        %v1646 = vld [vmem:[%s1371 + $0x790] sm:$0xff]
        %v1647 = vld [vmem:[%s1371 + $0x798] sm:$0xff]
        %v1648 = vld [vmem:[%s1371 + $0x7a0] sm:$0xff]
        %v1649 = vld [vmem:[%s1371 + $0x7a8] sm:$0xff]
        %v1650 = vld [vmem:[%s1371 + $0x7b0] sm:$0xff]
        %v1651 = vld [vmem:[%s1371 + $0x7b8] sm:$0xff]
        %v1652 = vld [vmem:[%s1371 + $0x7c0] sm:$0xff]
        %v1653 = vld [vmem:[%s1371 + $0x7c8] sm:$0xff]
        %v1654 = vld [vmem:[%s1371 + $0x7d0] sm:$0xff]
        %v1655 = vld [vmem:[%s1371 + $0x7d8] sm:$0xff]
        %v1656 = vld [vmem:[%s1371 + $0x7e0] sm:$0xff]
        %v1657 = vld [vmem:[%s1371 + $0x7e8] sm:$0xff]
        %v1658 = vld [vmem:[%s1371 + $0x7f0] sm:$0xff]
        %v1659 = vld [vmem:[%s1371 + $0x7f8] sm:$0xff]
        %v1660 = vld [vmem:[%s1] sm:$0xff]
        %v1661 = vld [vmem:[%s1 + $0x8] sm:$0xff]
        %v1662 = vld [vmem:[%s1 + $0x10] sm:$0xff]
        %v1663 = vld [vmem:[%s1 + $0x18] sm:$0xff]
        %v1664 = vld [vmem:[%s1 + $0x20] sm:$0xff]
        %v1665 = vld [vmem:[%s1 + $0x28] sm:$0xff]
        %v1666 = vld [vmem:[%s1 + $0x30] sm:$0xff]
        %v1667 = vld [vmem:[%s1 + $0x38] sm:$0xff]
        %v1668 = vld [vmem:[%s1 + $0x40] sm:$0xff]
        %v1669 = vld [vmem:[%s1 + $0x48] sm:$0xff]
        %v1670 = vld [vmem:[%s1 + $0x50] sm:$0xff]
        %v1671 = vld [vmem:[%s1 + $0x58] sm:$0xff]
        %v1672 = vld [vmem:[%s1 + $0x60] sm:$0xff]
        %v1673 = vld [vmem:[%s1 + $0x68] sm:$0xff]
        %v1674 = vld [vmem:[%s1 + $0x70] sm:$0xff]
        %v1675 = vld [vmem:[%s1 + $0x78] sm:$0xff]
        %v1676 = vld [vmem:[%s2] sm:$0x1]
        %v1678 = vlaneseq
        %v1679 = vshrl.u32 %v1678, 7
        %v1680 = vsub.s32 0, %v1679
        %v1681 = vrot.slane %v1676, %v1680
        %1683 = vmatprep.subr.mxu0 0.0
        %1684 = vmatpush1.msra.mxu0 %v1675
        %1685 = vmatprep.subr.mxu0 0.0
        %1686 = vmatpush1.msra.mxu0 %v1674
        %1687 = vmatprep.subr.mxu0 0.0
        %1688 = vmatpush1.msra.mxu0 %v1673
        %1689 = vmatprep.subr.mxu0 0.0
        %1690 = vmatpush1.msra.mxu0 %v1672
        %1691 = vmatprep.subr.mxu0 0.0
        %1692 = vmatpush1.msra.mxu0 %v1671
        %1693 = vmatprep.subr.mxu0 0.0
        %1694 = vmatpush1.msra.mxu0 %v1670
        %1695 = vmatprep.subr.mxu0 0.0
        %1696 = vmatpush1.msra.mxu0 %v1669
        %1697 = vmatprep.subr.mxu0 0.0
        %1698 = vmatpush1.msra.mxu0 %v1668
        %1699 = vmatprep.subr.mxu0 0.0
        %1700 = vmatpush1.msra.mxu0 %v1667
        %1701 = vmatprep.subr.mxu0 0.0
        %1702 = vmatpush1.msra.mxu0 %v1666
        %1703 = vmatprep.subr.mxu0 0.0
        %1704 = vmatpush1.msra.mxu0 %v1665
        %1705 = vmatprep.subr.mxu0 0.0
        %1706 = vmatpush1.msra.mxu0 %v1664
        %1707 = vmatprep.subr.mxu0 0.0
        %1708 = vmatpush1.msra.mxu0 %v1663
        %1709 = vmatprep.subr.mxu0 0.0
        %1710 = vmatpush1.msra.mxu0 %v1662
        %1711 = vmatprep.subr.mxu0 0.0
        %1712 = vmatpush1.msra.mxu0 %v1661
        %1713 = vmatprep.subr.mxu0 0.0
        %1714 = vmatpush1.msra.mxu0 %v1660
        %1715 = vmatprep.subr.mxu0 0.0
        %1716 = vmatpush2.msra.mxu0 0.0
        %1717 = vmatprep.subr.mxu0 0.0
        %1718 = vmatpush2.msra.mxu0 0.0
        %1719 = vmatprep.subr.mxu0 0.0
        %1720 = vmatpush2.msra.mxu0 0.0
        %1721 = vmatprep.subr.mxu0 0.0
        %1722 = vmatpush2.msra.mxu0 0.0
        %1723 = vmatprep.subr.mxu0 0.0
        %1724 = vmatpush2.msra.mxu0 0.0
        %1725 = vmatprep.subr.mxu0 0.0
        %1726 = vmatpush2.msra.mxu0 0.0
        %1727 = vmatprep.subr.mxu0 0.0
        %1728 = vmatpush2.msra.mxu0 0.0
        %1729 = vmatprep.subr.mxu0 0.0
        %1730 = vmatpush2.msra.mxu0 0.0
        %1731 = vmatprep.subr.mxu0 0.0
        %1732 = vmatpush2.msra.mxu0 0.0
        %1733 = vmatprep.subr.mxu0 0.0
        %1734 = vmatpush2.msra.mxu0 0.0
        %1735 = vmatprep.subr.mxu0 0.0
        %1736 = vmatpush2.msra.mxu0 0.0
        %1737 = vmatprep.subr.mxu0 0.0
        %1738 = vmatpush2.msra.mxu0 0.0
        %1739 = vmatprep.subr.mxu0 0.0
        %1740 = vmatpush2.msra.mxu0 0.0
        %1741 = vmatprep.subr.mxu0 0.0
        %1742 = vmatpush2.msra.mxu0 0.0
        %1743 = vmatprep.subr.mxu0 0.0
        %1744 = vmatpush2.msra.mxu0 0.0
        %1745 = vmatprep.subr.mxu0 0.0
        %1746 = vmatpush2.msra.mxu0 0.0
        %1747 = vmatprep.mubr.f32.mxu0 0.0
        %1748 = vmatmul.mubr.f32.gmra.mxu0 %v1404
        %v1749 = vpop.f32.mrf.mxu0
        %v1750 = vadd.f32 %v1681, %v1749
        %v1751 = vpop.f32.mrf.mxu0
        %1752 = vmatprep.mubr.f32.mxu0 0.0
        %1753 = vmatmul.mubr.f32.gmra.mxu0 %v1405
        %v1754 = vpop.f32.mrf.mxu0
        %v1755 = vadd.f32 %v1681, %v1754
        %v1756 = vpop.f32.mrf.mxu0
        %1757 = vmatprep.mubr.f32.mxu0 0.0
        %1758 = vmatmul.mubr.f32.gmra.mxu0 %v1406
        %v1759 = vpop.f32.mrf.mxu0
        %v1760 = vadd.f32 %v1681, %v1759
        %v1761 = vpop.f32.mrf.mxu0
        %1762 = vmatprep.mubr.f32.mxu0 0.0
        %1763 = vmatmul.mubr.f32.gmra.mxu0 %v1407
        %v1764 = vpop.f32.mrf.mxu0
        %v1765 = vadd.f32 %v1681, %v1764
        %v1766 = vpop.f32.mrf.mxu0
        %1767 = vmatprep.mubr.f32.mxu0 0.0
        %1768 = vmatmul.mubr.f32.gmra.mxu0 %v1408
        %v1769 = vpop.f32.mrf.mxu0
        %v1770 = vadd.f32 %v1681, %v1769
        %v1771 = vpop.f32.mrf.mxu0
        %1772 = vmatprep.mubr.f32.mxu0 0.0
        %1773 = vmatmul.mubr.f32.gmra.mxu0 %v1409
        %v1774 = vpop.f32.mrf.mxu0
        %v1775 = vadd.f32 %v1681, %v1774
        %v1776 = vpop.f32.mrf.mxu0
        %1777 = vmatprep.mubr.f32.mxu0 0.0
        %1778 = vmatmul.mubr.f32.gmra.mxu0 %v1410
        %v1779 = vpop.f32.mrf.mxu0
        %v1780 = vadd.f32 %v1681, %v1779
        %v1781 = vpop.f32.mrf.mxu0
        %1782 = vmatprep.mubr.f32.mxu0 0.0
        %1783 = vmatmul.mubr.f32.gmra.mxu0 %v1411
        %v1784 = vpop.f32.mrf.mxu0
        %v1785 = vadd.f32 %v1681, %v1784
        %v1786 = vpop.f32.mrf.mxu0
        %1787 = vmatprep.mubr.f32.mxu0 0.0
        %1788 = vmatmul.mubr.f32.gmra.mxu0 %v1412
        %v1789 = vpop.f32.mrf.mxu0
        %v1790 = vadd.f32 %v1681, %v1789
        %v1791 = vpop.f32.mrf.mxu0
        %1792 = vmatprep.mubr.f32.mxu0 0.0
        %1793 = vmatmul.mubr.f32.gmra.mxu0 %v1413
        %v1794 = vpop.f32.mrf.mxu0
        %v1795 = vadd.f32 %v1681, %v1794
        %v1796 = vpop.f32.mrf.mxu0
        %1797 = vmatprep.mubr.f32.mxu0 0.0
        %1798 = vmatmul.mubr.f32.gmra.mxu0 %v1414
        %v1799 = vpop.f32.mrf.mxu0
        %v1800 = vadd.f32 %v1681, %v1799
        %v1801 = vpop.f32.mrf.mxu0
        %1802 = vmatprep.mubr.f32.mxu0 0.0
        %1803 = vmatmul.mubr.f32.gmra.mxu0 %v1415
        %v1804 = vpop.f32.mrf.mxu0
        %v1805 = vadd.f32 %v1681, %v1804
        %v1806 = vpop.f32.mrf.mxu0
        %1807 = vmatprep.mubr.f32.mxu0 0.0
        %1808 = vmatmul.mubr.f32.gmra.mxu0 %v1416
        %v1809 = vpop.f32.mrf.mxu0
        %v1810 = vadd.f32 %v1681, %v1809
        %v1811 = vpop.f32.mrf.mxu0
        %1812 = vmatprep.mubr.f32.mxu0 0.0
        %1813 = vmatmul.mubr.f32.gmra.mxu0 %v1417
        %v1814 = vpop.f32.mrf.mxu0
        %v1815 = vadd.f32 %v1681, %v1814
        %v1816 = vpop.f32.mrf.mxu0
        %1817 = vmatprep.mubr.f32.mxu0 0.0
        %1818 = vmatmul.mubr.f32.gmra.mxu0 %v1418
        %v1819 = vpop.f32.mrf.mxu0
        %v1820 = vadd.f32 %v1681, %v1819
        %v1821 = vpop.f32.mrf.mxu0
        %1822 = vmatprep.mubr.f32.mxu0 0.0
        %1823 = vmatmul.mubr.f32.gmra.mxu0 %v1419
        %v1824 = vpop.f32.mrf.mxu0
        %v1825 = vadd.f32 %v1681, %v1824
        %v1826 = vpop.f32.mrf.mxu0
        %1827 = vmatprep.mubr.f32.mxu0 0.0
        %1828 = vmatmul.mubr.f32.gmra.mxu0 %v1420
        %v1829 = vpop.f32.mrf.mxu0
        %v1830 = vadd.f32 %v1681, %v1829
        %v1831 = vpop.f32.mrf.mxu0
        %1832 = vmatprep.mubr.f32.mxu0 0.0
        %1833 = vmatmul.mubr.f32.gmra.mxu0 %v1421
        %v1834 = vpop.f32.mrf.mxu0
        %v1835 = vadd.f32 %v1681, %v1834
        %v1836 = vpop.f32.mrf.mxu0
        %1837 = vmatprep.mubr.f32.mxu0 0.0
        %1838 = vmatmul.mubr.f32.gmra.mxu0 %v1422
        %v1839 = vpop.f32.mrf.mxu0
        %v1840 = vadd.f32 %v1681, %v1839
        %v1841 = vpop.f32.mrf.mxu0
        %1842 = vmatprep.mubr.f32.mxu0 0.0
        %1843 = vmatmul.mubr.f32.gmra.mxu0 %v1423
        %v1844 = vpop.f32.mrf.mxu0
        %v1845 = vadd.f32 %v1681, %v1844
        %v1846 = vpop.f32.mrf.mxu0
        %1847 = vmatprep.mubr.f32.mxu0 0.0
        %1848 = vmatmul.mubr.f32.gmra.mxu0 %v1424
        %v1849 = vpop.f32.mrf.mxu0
        %v1850 = vadd.f32 %v1681, %v1849
        %v1851 = vpop.f32.mrf.mxu0
        %1852 = vmatprep.mubr.f32.mxu0 0.0
        %1853 = vmatmul.mubr.f32.gmra.mxu0 %v1425
        %v1854 = vpop.f32.mrf.mxu0
        %v1855 = vadd.f32 %v1681, %v1854
        %v1856 = vpop.f32.mrf.mxu0
        %1857 = vmatprep.mubr.f32.mxu0 0.0
        %1858 = vmatmul.mubr.f32.gmra.mxu0 %v1426
        %v1859 = vpop.f32.mrf.mxu0
        %v1860 = vadd.f32 %v1681, %v1859
        %v1861 = vpop.f32.mrf.mxu0
        %1862 = vmatprep.mubr.f32.mxu0 0.0
        %1863 = vmatmul.mubr.f32.gmra.mxu0 %v1427
        %v1864 = vpop.f32.mrf.mxu0
        %v1865 = vadd.f32 %v1681, %v1864
        %v1866 = vpop.f32.mrf.mxu0
        %1867 = vmatprep.mubr.f32.mxu0 0.0
        %1868 = vmatmul.mubr.f32.gmra.mxu0 %v1428
        %v1869 = vpop.f32.mrf.mxu0
        %v1870 = vadd.f32 %v1681, %v1869
        %v1871 = vpop.f32.mrf.mxu0
        %1872 = vmatprep.mubr.f32.mxu0 0.0
        %1873 = vmatmul.mubr.f32.gmra.mxu0 %v1429
        %v1874 = vpop.f32.mrf.mxu0
        %v1875 = vadd.f32 %v1681, %v1874
        %v1876 = vpop.f32.mrf.mxu0
        %1877 = vmatprep.mubr.f32.mxu0 0.0
        %1878 = vmatmul.mubr.f32.gmra.mxu0 %v1430
        %v1879 = vpop.f32.mrf.mxu0
        %v1880 = vadd.f32 %v1681, %v1879
        %v1881 = vpop.f32.mrf.mxu0
        %1882 = vmatprep.mubr.f32.mxu0 0.0
        %1883 = vmatmul.mubr.f32.gmra.mxu0 %v1431
        %v1884 = vpop.f32.mrf.mxu0
        %v1885 = vadd.f32 %v1681, %v1884
        %v1886 = vpop.f32.mrf.mxu0
        %1887 = vmatprep.mubr.f32.mxu0 0.0
        %1888 = vmatmul.mubr.f32.gmra.mxu0 %v1432
        %v1889 = vpop.f32.mrf.mxu0
        %v1890 = vadd.f32 %v1681, %v1889
        %v1891 = vpop.f32.mrf.mxu0
        %1892 = vmatprep.mubr.f32.mxu0 0.0
        %1893 = vmatmul.mubr.f32.gmra.mxu0 %v1433
        %v1894 = vpop.f32.mrf.mxu0
        %v1895 = vadd.f32 %v1681, %v1894
        %v1896 = vpop.f32.mrf.mxu0
        %1897 = vmatprep.mubr.f32.mxu0 0.0
        %1898 = vmatmul.mubr.f32.gmra.mxu0 %v1434
        %v1899 = vpop.f32.mrf.mxu0
        %v1900 = vadd.f32 %v1681, %v1899
        %v1901 = vpop.f32.mrf.mxu0
        %1902 = vmatprep.mubr.f32.mxu0 0.0
        %1903 = vmatmul.mubr.f32.gmra.mxu0 %v1435
        %v1904 = vpop.f32.mrf.mxu0
        %v1905 = vadd.f32 %v1681, %v1904
        %v1906 = vpop.f32.mrf.mxu0
        %1907 = vmatprep.mubr.f32.mxu0 0.0
        %1908 = vmatmul.mubr.f32.gmra.mxu0 %v1436
        %v1909 = vpop.f32.mrf.mxu0
        %v1910 = vadd.f32 %v1681, %v1909
        %v1911 = vpop.f32.mrf.mxu0
        %1912 = vmatprep.mubr.f32.mxu0 0.0
        %1913 = vmatmul.mubr.f32.gmra.mxu0 %v1437
        %v1914 = vpop.f32.mrf.mxu0
        %v1915 = vadd.f32 %v1681, %v1914
        %v1916 = vpop.f32.mrf.mxu0
        %1917 = vmatprep.mubr.f32.mxu0 0.0
        %1918 = vmatmul.mubr.f32.gmra.mxu0 %v1438
        %v1919 = vpop.f32.mrf.mxu0
        %v1920 = vadd.f32 %v1681, %v1919
        %v1921 = vpop.f32.mrf.mxu0
        %1922 = vmatprep.mubr.f32.mxu0 0.0
        %1923 = vmatmul.mubr.f32.gmra.mxu0 %v1439
        %v1924 = vpop.f32.mrf.mxu0
        %v1925 = vadd.f32 %v1681, %v1924
        %v1926 = vpop.f32.mrf.mxu0
        %1927 = vmatprep.mubr.f32.mxu0 0.0
        %1928 = vmatmul.mubr.f32.gmra.mxu0 %v1440
        %v1929 = vpop.f32.mrf.mxu0
        %v1930 = vadd.f32 %v1681, %v1929
        %v1931 = vpop.f32.mrf.mxu0
        %1932 = vmatprep.mubr.f32.mxu0 0.0
        %1933 = vmatmul.mubr.f32.gmra.mxu0 %v1441
        %v1934 = vpop.f32.mrf.mxu0
        %v1935 = vadd.f32 %v1681, %v1934
        %v1936 = vpop.f32.mrf.mxu0
        %1937 = vmatprep.mubr.f32.mxu0 0.0
        %1938 = vmatmul.mubr.f32.gmra.mxu0 %v1442
        %v1939 = vpop.f32.mrf.mxu0
        %v1940 = vadd.f32 %v1681, %v1939
        %v1941 = vpop.f32.mrf.mxu0
        %1942 = vmatprep.mubr.f32.mxu0 0.0
        %1943 = vmatmul.mubr.f32.gmra.mxu0 %v1443
        %v1944 = vpop.f32.mrf.mxu0
        %v1945 = vadd.f32 %v1681, %v1944
        %v1946 = vpop.f32.mrf.mxu0
        %1947 = vmatprep.mubr.f32.mxu0 0.0
        %1948 = vmatmul.mubr.f32.gmra.mxu0 %v1444
        %v1949 = vpop.f32.mrf.mxu0
        %v1950 = vadd.f32 %v1681, %v1949
        %v1951 = vpop.f32.mrf.mxu0
        %1952 = vmatprep.mubr.f32.mxu0 0.0
        %1953 = vmatmul.mubr.f32.gmra.mxu0 %v1445
        %v1954 = vpop.f32.mrf.mxu0
        %v1955 = vadd.f32 %v1681, %v1954
        %v1956 = vpop.f32.mrf.mxu0
        %1957 = vmatprep.mubr.f32.mxu0 0.0
        %1958 = vmatmul.mubr.f32.gmra.mxu0 %v1446
        %v1959 = vpop.f32.mrf.mxu0
        %v1960 = vadd.f32 %v1681, %v1959
        %v1961 = vpop.f32.mrf.mxu0
        %1962 = vmatprep.mubr.f32.mxu0 0.0
        %1963 = vmatmul.mubr.f32.gmra.mxu0 %v1447
        %v1964 = vpop.f32.mrf.mxu0
        %v1965 = vadd.f32 %v1681, %v1964
        %v1966 = vpop.f32.mrf.mxu0
        %1967 = vmatprep.mubr.f32.mxu0 0.0
        %1968 = vmatmul.mubr.f32.gmra.mxu0 %v1448
        %v1969 = vpop.f32.mrf.mxu0
        %v1970 = vadd.f32 %v1681, %v1969
        %v1971 = vpop.f32.mrf.mxu0
        %1972 = vmatprep.mubr.f32.mxu0 0.0
        %1973 = vmatmul.mubr.f32.gmra.mxu0 %v1449
        %v1974 = vpop.f32.mrf.mxu0
        %v1975 = vadd.f32 %v1681, %v1974
        %v1976 = vpop.f32.mrf.mxu0
        %1977 = vmatprep.mubr.f32.mxu0 0.0
        %1978 = vmatmul.mubr.f32.gmra.mxu0 %v1450
        %v1979 = vpop.f32.mrf.mxu0
        %v1980 = vadd.f32 %v1681, %v1979
        %v1981 = vpop.f32.mrf.mxu0
        %1982 = vmatprep.mubr.f32.mxu0 0.0
        %1983 = vmatmul.mubr.f32.gmra.mxu0 %v1451
        %v1984 = vpop.f32.mrf.mxu0
        %v1985 = vadd.f32 %v1681, %v1984
        %v1986 = vpop.f32.mrf.mxu0
        %1987 = vmatprep.mubr.f32.mxu0 0.0
        %1988 = vmatmul.mubr.f32.gmra.mxu0 %v1452
        %v1989 = vpop.f32.mrf.mxu0
        %v1990 = vadd.f32 %v1681, %v1989
        %v1991 = vpop.f32.mrf.mxu0
        %1992 = vmatprep.mubr.f32.mxu0 0.0
        %1993 = vmatmul.mubr.f32.gmra.mxu0 %v1453
        %v1994 = vpop.f32.mrf.mxu0
        %v1995 = vadd.f32 %v1681, %v1994
        %v1996 = vpop.f32.mrf.mxu0
        %1997 = vmatprep.mubr.f32.mxu0 0.0
        %1998 = vmatmul.mubr.f32.gmra.mxu0 %v1454
        %v1999 = vpop.f32.mrf.mxu0
        %v2000 = vadd.f32 %v1681, %v1999
        %v2001 = vpop.f32.mrf.mxu0
        %2002 = vmatprep.mubr.f32.mxu0 0.0
        %2003 = vmatmul.mubr.f32.gmra.mxu0 %v1455
        %v2004 = vpop.f32.mrf.mxu0
        %v2005 = vadd.f32 %v1681, %v2004
        %v2006 = vpop.f32.mrf.mxu0
        %2007 = vmatprep.mubr.f32.mxu0 0.0
        %2008 = vmatmul.mubr.f32.gmra.mxu0 %v1456
        %v2009 = vpop.f32.mrf.mxu0
        %v2010 = vadd.f32 %v1681, %v2009
        %v2011 = vpop.f32.mrf.mxu0
        %2012 = vmatprep.mubr.f32.mxu0 0.0
        %2013 = vmatmul.mubr.f32.gmra.mxu0 %v1457
        %v2014 = vpop.f32.mrf.mxu0
        %v2015 = vadd.f32 %v1681, %v2014
        %v2016 = vpop.f32.mrf.mxu0
        %2017 = vmatprep.mubr.f32.mxu0 0.0
        %2018 = vmatmul.mubr.f32.gmra.mxu0 %v1458
        %v2019 = vpop.f32.mrf.mxu0
        %v2020 = vadd.f32 %v1681, %v2019
        %v2021 = vpop.f32.mrf.mxu0
        %2022 = vmatprep.mubr.f32.mxu0 0.0
        %2023 = vmatmul.mubr.f32.gmra.mxu0 %v1459
        %v2024 = vpop.f32.mrf.mxu0
        %v2025 = vadd.f32 %v1681, %v2024
        %v2026 = vpop.f32.mrf.mxu0
        %2027 = vmatprep.mubr.f32.mxu0 0.0
        %2028 = vmatmul.mubr.f32.gmra.mxu0 %v1460
        %v2029 = vpop.f32.mrf.mxu0
        %v2030 = vadd.f32 %v1681, %v2029
        %v2031 = vpop.f32.mrf.mxu0
        %2032 = vmatprep.mubr.f32.mxu0 0.0
        %2033 = vmatmul.mubr.f32.gmra.mxu0 %v1461
        %v2034 = vpop.f32.mrf.mxu0
        %v2035 = vadd.f32 %v1681, %v2034
        %v2036 = vpop.f32.mrf.mxu0
        %2037 = vmatprep.mubr.f32.mxu0 0.0
        %2038 = vmatmul.mubr.f32.gmra.mxu0 %v1462
        %v2039 = vpop.f32.mrf.mxu0
        %v2040 = vadd.f32 %v1681, %v2039
        %v2041 = vpop.f32.mrf.mxu0
        %2042 = vmatprep.mubr.f32.mxu0 0.0
        %2043 = vmatmul.mubr.f32.gmra.mxu0 %v1463
        %v2044 = vpop.f32.mrf.mxu0
        %v2045 = vadd.f32 %v1681, %v2044
        %v2046 = vpop.f32.mrf.mxu0
        %2047 = vmatprep.mubr.f32.mxu0 0.0
        %2048 = vmatmul.mubr.f32.gmra.mxu0 %v1464
        %v2049 = vpop.f32.mrf.mxu0
        %v2050 = vadd.f32 %v1681, %v2049
        %v2051 = vpop.f32.mrf.mxu0
        %2052 = vmatprep.mubr.f32.mxu0 0.0
        %2053 = vmatmul.mubr.f32.gmra.mxu0 %v1465
        %v2054 = vpop.f32.mrf.mxu0
        %v2055 = vadd.f32 %v1681, %v2054
        %v2056 = vpop.f32.mrf.mxu0
        %2057 = vmatprep.mubr.f32.mxu0 0.0
        %2058 = vmatmul.mubr.f32.gmra.mxu0 %v1466
        %v2059 = vpop.f32.mrf.mxu0
        %v2060 = vadd.f32 %v1681, %v2059
        %v2061 = vpop.f32.mrf.mxu0
        %2062 = vmatprep.mubr.f32.mxu0 0.0
        %2063 = vmatmul.mubr.f32.gmra.mxu0 %v1467
        %v2064 = vpop.f32.mrf.mxu0
        %v2065 = vadd.f32 %v1681, %v2064
        %v2066 = vpop.f32.mrf.mxu0
        %2067 = vmatprep.mubr.f32.mxu0 0.0
        %2068 = vmatmul.mubr.f32.gmra.mxu0 %v1468
        %v2069 = vpop.f32.mrf.mxu0
        %v2070 = vadd.f32 %v1681, %v2069
        %v2071 = vpop.f32.mrf.mxu0
        %2072 = vmatprep.mubr.f32.mxu0 0.0
        %2073 = vmatmul.mubr.f32.gmra.mxu0 %v1469
        %v2074 = vpop.f32.mrf.mxu0
        %v2075 = vadd.f32 %v1681, %v2074
        %v2076 = vpop.f32.mrf.mxu0
        %2077 = vmatprep.mubr.f32.mxu0 0.0
        %2078 = vmatmul.mubr.f32.gmra.mxu0 %v1470
        %v2079 = vpop.f32.mrf.mxu0
        %v2080 = vadd.f32 %v1681, %v2079
        %v2081 = vpop.f32.mrf.mxu0
        %2082 = vmatprep.mubr.f32.mxu0 0.0
        %2083 = vmatmul.mubr.f32.gmra.mxu0 %v1471
        %v2084 = vpop.f32.mrf.mxu0
        %v2085 = vadd.f32 %v1681, %v2084
        %v2086 = vpop.f32.mrf.mxu0
        %2087 = vmatprep.mubr.f32.mxu0 0.0
        %2088 = vmatmul.mubr.f32.gmra.mxu0 %v1472
        %v2089 = vpop.f32.mrf.mxu0
        %v2090 = vadd.f32 %v1681, %v2089
        %v2091 = vpop.f32.mrf.mxu0
        %2092 = vmatprep.mubr.f32.mxu0 0.0
        %2093 = vmatmul.mubr.f32.gmra.mxu0 %v1473
        %v2094 = vpop.f32.mrf.mxu0
        %v2095 = vadd.f32 %v1681, %v2094
        %v2096 = vpop.f32.mrf.mxu0
        %2097 = vmatprep.mubr.f32.mxu0 0.0
        %2098 = vmatmul.mubr.f32.gmra.mxu0 %v1474
        %v2099 = vpop.f32.mrf.mxu0
        %v2100 = vadd.f32 %v1681, %v2099
        %v2101 = vpop.f32.mrf.mxu0
        %2102 = vmatprep.mubr.f32.mxu0 0.0
        %2103 = vmatmul.mubr.f32.gmra.mxu0 %v1475
        %v2104 = vpop.f32.mrf.mxu0
        %v2105 = vadd.f32 %v1681, %v2104
        %v2106 = vpop.f32.mrf.mxu0
        %2107 = vmatprep.mubr.f32.mxu0 0.0
        %2108 = vmatmul.mubr.f32.gmra.mxu0 %v1476
        %v2109 = vpop.f32.mrf.mxu0
        %v2110 = vadd.f32 %v1681, %v2109
        %v2111 = vpop.f32.mrf.mxu0
        %2112 = vmatprep.mubr.f32.mxu0 0.0
        %2113 = vmatmul.mubr.f32.gmra.mxu0 %v1477
        %v2114 = vpop.f32.mrf.mxu0
        %v2115 = vadd.f32 %v1681, %v2114
        %v2116 = vpop.f32.mrf.mxu0
        %2117 = vmatprep.mubr.f32.mxu0 0.0
        %2118 = vmatmul.mubr.f32.gmra.mxu0 %v1478
        %v2119 = vpop.f32.mrf.mxu0
        %v2120 = vadd.f32 %v1681, %v2119
        %v2121 = vpop.f32.mrf.mxu0
        %2122 = vmatprep.mubr.f32.mxu0 0.0
        %2123 = vmatmul.mubr.f32.gmra.mxu0 %v1479
        %v2124 = vpop.f32.mrf.mxu0
        %v2125 = vadd.f32 %v1681, %v2124
        %v2126 = vpop.f32.mrf.mxu0
        %2127 = vmatprep.mubr.f32.mxu0 0.0
        %2128 = vmatmul.mubr.f32.gmra.mxu0 %v1480
        %v2129 = vpop.f32.mrf.mxu0
        %v2130 = vadd.f32 %v1681, %v2129
        %v2131 = vpop.f32.mrf.mxu0
        %2132 = vmatprep.mubr.f32.mxu0 0.0
        %2133 = vmatmul.mubr.f32.gmra.mxu0 %v1481
        %v2134 = vpop.f32.mrf.mxu0
        %v2135 = vadd.f32 %v1681, %v2134
        %v2136 = vpop.f32.mrf.mxu0
        %2137 = vmatprep.mubr.f32.mxu0 0.0
        %2138 = vmatmul.mubr.f32.gmra.mxu0 %v1482
        %v2139 = vpop.f32.mrf.mxu0
        %v2140 = vadd.f32 %v1681, %v2139
        %v2141 = vpop.f32.mrf.mxu0
        %2142 = vmatprep.mubr.f32.mxu0 0.0
        %2143 = vmatmul.mubr.f32.gmra.mxu0 %v1483
        %v2144 = vpop.f32.mrf.mxu0
        %v2145 = vadd.f32 %v1681, %v2144
        %v2146 = vpop.f32.mrf.mxu0
        %2147 = vmatprep.mubr.f32.mxu0 0.0
        %2148 = vmatmul.mubr.f32.gmra.mxu0 %v1484
        %v2149 = vpop.f32.mrf.mxu0
        %v2150 = vadd.f32 %v1681, %v2149
        %v2151 = vpop.f32.mrf.mxu0
        %2152 = vmatprep.mubr.f32.mxu0 0.0
        %2153 = vmatmul.mubr.f32.gmra.mxu0 %v1485
        %v2154 = vpop.f32.mrf.mxu0
        %v2155 = vadd.f32 %v1681, %v2154
        %v2156 = vpop.f32.mrf.mxu0
        %2157 = vmatprep.mubr.f32.mxu0 0.0
        %2158 = vmatmul.mubr.f32.gmra.mxu0 %v1486
        %v2159 = vpop.f32.mrf.mxu0
        %v2160 = vadd.f32 %v1681, %v2159
        %v2161 = vpop.f32.mrf.mxu0
        %2162 = vmatprep.mubr.f32.mxu0 0.0
        %2163 = vmatmul.mubr.f32.gmra.mxu0 %v1487
        %v2164 = vpop.f32.mrf.mxu0
        %v2165 = vadd.f32 %v1681, %v2164
        %v2166 = vpop.f32.mrf.mxu0
        %2167 = vmatprep.mubr.f32.mxu0 0.0
        %2168 = vmatmul.mubr.f32.gmra.mxu0 %v1488
        %v2169 = vpop.f32.mrf.mxu0
        %v2170 = vadd.f32 %v1681, %v2169
        %v2171 = vpop.f32.mrf.mxu0
        %2172 = vmatprep.mubr.f32.mxu0 0.0
        %2173 = vmatmul.mubr.f32.gmra.mxu0 %v1489
        %v2174 = vpop.f32.mrf.mxu0
        %v2175 = vadd.f32 %v1681, %v2174
        %v2176 = vpop.f32.mrf.mxu0
        %2177 = vmatprep.mubr.f32.mxu0 0.0
        %2178 = vmatmul.mubr.f32.gmra.mxu0 %v1490
        %v2179 = vpop.f32.mrf.mxu0
        %v2180 = vadd.f32 %v1681, %v2179
        %v2181 = vpop.f32.mrf.mxu0
        %2182 = vmatprep.mubr.f32.mxu0 0.0
        %2183 = vmatmul.mubr.f32.gmra.mxu0 %v1491
        %v2184 = vpop.f32.mrf.mxu0
        %v2185 = vadd.f32 %v1681, %v2184
        %v2186 = vpop.f32.mrf.mxu0
        %2187 = vmatprep.mubr.f32.mxu0 0.0
        %2188 = vmatmul.mubr.f32.gmra.mxu0 %v1492
        %v2189 = vpop.f32.mrf.mxu0
        %v2190 = vadd.f32 %v1681, %v2189
        %v2191 = vpop.f32.mrf.mxu0
        %2192 = vmatprep.mubr.f32.mxu0 0.0
        %2193 = vmatmul.mubr.f32.gmra.mxu0 %v1493
        %v2194 = vpop.f32.mrf.mxu0
        %v2195 = vadd.f32 %v1681, %v2194
        %v2196 = vpop.f32.mrf.mxu0
        %2197 = vmatprep.mubr.f32.mxu0 0.0
        %2198 = vmatmul.mubr.f32.gmra.mxu0 %v1494
        %v2199 = vpop.f32.mrf.mxu0
        %v2200 = vadd.f32 %v1681, %v2199
        %v2201 = vpop.f32.mrf.mxu0
        %2202 = vmatprep.mubr.f32.mxu0 0.0
        %2203 = vmatmul.mubr.f32.gmra.mxu0 %v1495
        %v2204 = vpop.f32.mrf.mxu0
        %v2205 = vadd.f32 %v1681, %v2204
        %v2206 = vpop.f32.mrf.mxu0
        %2207 = vmatprep.mubr.f32.mxu0 0.0
        %2208 = vmatmul.mubr.f32.gmra.mxu0 %v1496
        %v2209 = vpop.f32.mrf.mxu0
        %v2210 = vadd.f32 %v1681, %v2209
        %v2211 = vpop.f32.mrf.mxu0
        %2212 = vmatprep.mubr.f32.mxu0 0.0
        %2213 = vmatmul.mubr.f32.gmra.mxu0 %v1497
        %v2214 = vpop.f32.mrf.mxu0
        %v2215 = vadd.f32 %v1681, %v2214
        %v2216 = vpop.f32.mrf.mxu0
        %2217 = vmatprep.mubr.f32.mxu0 0.0
        %2218 = vmatmul.mubr.f32.gmra.mxu0 %v1498
        %v2219 = vpop.f32.mrf.mxu0
        %v2220 = vadd.f32 %v1681, %v2219
        %v2221 = vpop.f32.mrf.mxu0
        %2222 = vmatprep.mubr.f32.mxu0 0.0
        %2223 = vmatmul.mubr.f32.gmra.mxu0 %v1499
        %v2224 = vpop.f32.mrf.mxu0
        %v2225 = vadd.f32 %v1681, %v2224
        %v2226 = vpop.f32.mrf.mxu0
        %2227 = vmatprep.mubr.f32.mxu0 0.0
        %2228 = vmatmul.mubr.f32.gmra.mxu0 %v1500
        %v2229 = vpop.f32.mrf.mxu0
        %v2230 = vadd.f32 %v1681, %v2229
        %v2231 = vpop.f32.mrf.mxu0
        %2232 = vmatprep.mubr.f32.mxu0 0.0
        %2233 = vmatmul.mubr.f32.gmra.mxu0 %v1501
        %v2234 = vpop.f32.mrf.mxu0
        %v2235 = vadd.f32 %v1681, %v2234
        %v2236 = vpop.f32.mrf.mxu0
        %2237 = vmatprep.mubr.f32.mxu0 0.0
        %2238 = vmatmul.mubr.f32.gmra.mxu0 %v1502
        %v2239 = vpop.f32.mrf.mxu0
        %v2240 = vadd.f32 %v1681, %v2239
        %v2241 = vpop.f32.mrf.mxu0
        %2242 = vmatprep.mubr.f32.mxu0 0.0
        %2243 = vmatmul.mubr.f32.gmra.mxu0 %v1503
        %v2244 = vpop.f32.mrf.mxu0
        %v2245 = vadd.f32 %v1681, %v2244
        %v2246 = vpop.f32.mrf.mxu0
        %2247 = vmatprep.mubr.f32.mxu0 0.0
        %2248 = vmatmul.mubr.f32.gmra.mxu0 %v1504
        %v2249 = vpop.f32.mrf.mxu0
        %v2250 = vadd.f32 %v1681, %v2249
        %v2251 = vpop.f32.mrf.mxu0
        %2252 = vmatprep.mubr.f32.mxu0 0.0
        %2253 = vmatmul.mubr.f32.gmra.mxu0 %v1505
        %v2254 = vpop.f32.mrf.mxu0
        %v2255 = vadd.f32 %v1681, %v2254
        %v2256 = vpop.f32.mrf.mxu0
        %2257 = vmatprep.mubr.f32.mxu0 0.0
        %2258 = vmatmul.mubr.f32.gmra.mxu0 %v1506
        %v2259 = vpop.f32.mrf.mxu0
        %v2260 = vadd.f32 %v1681, %v2259
        %v2261 = vpop.f32.mrf.mxu0
        %2262 = vmatprep.mubr.f32.mxu0 0.0
        %2263 = vmatmul.mubr.f32.gmra.mxu0 %v1507
        %v2264 = vpop.f32.mrf.mxu0
        %v2265 = vadd.f32 %v1681, %v2264
        %v2266 = vpop.f32.mrf.mxu0
        %2267 = vmatprep.mubr.f32.mxu0 0.0
        %2268 = vmatmul.mubr.f32.gmra.mxu0 %v1508
        %v2269 = vpop.f32.mrf.mxu0
        %v2270 = vadd.f32 %v1681, %v2269
        %v2271 = vpop.f32.mrf.mxu0
        %2272 = vmatprep.mubr.f32.mxu0 0.0
        %2273 = vmatmul.mubr.f32.gmra.mxu0 %v1509
        %v2274 = vpop.f32.mrf.mxu0
        %v2275 = vadd.f32 %v1681, %v2274
        %v2276 = vpop.f32.mrf.mxu0
        %2277 = vmatprep.mubr.f32.mxu0 0.0
        %2278 = vmatmul.mubr.f32.gmra.mxu0 %v1510
        %v2279 = vpop.f32.mrf.mxu0
        %v2280 = vadd.f32 %v1681, %v2279
        %v2281 = vpop.f32.mrf.mxu0
        %2282 = vmatprep.mubr.f32.mxu0 0.0
        %2283 = vmatmul.mubr.f32.gmra.mxu0 %v1511
        %v2284 = vpop.f32.mrf.mxu0
        %v2285 = vadd.f32 %v1681, %v2284
        %v2286 = vpop.f32.mrf.mxu0
        %2287 = vmatprep.mubr.f32.mxu0 0.0
        %2288 = vmatmul.mubr.f32.gmra.mxu0 %v1512
        %v2289 = vpop.f32.mrf.mxu0
        %v2290 = vadd.f32 %v1681, %v2289
        %v2291 = vpop.f32.mrf.mxu0
        %2292 = vmatprep.mubr.f32.mxu0 0.0
        %2293 = vmatmul.mubr.f32.gmra.mxu0 %v1513
        %v2294 = vpop.f32.mrf.mxu0
        %v2295 = vadd.f32 %v1681, %v2294
        %v2296 = vpop.f32.mrf.mxu0
        %2297 = vmatprep.mubr.f32.mxu0 0.0
        %2298 = vmatmul.mubr.f32.gmra.mxu0 %v1514
        %v2299 = vpop.f32.mrf.mxu0
        %v2300 = vadd.f32 %v1681, %v2299
        %v2301 = vpop.f32.mrf.mxu0
        %2302 = vmatprep.mubr.f32.mxu0 0.0
        %2303 = vmatmul.mubr.f32.gmra.mxu0 %v1515
        %v2304 = vpop.f32.mrf.mxu0
        %v2305 = vadd.f32 %v1681, %v2304
        %v2306 = vpop.f32.mrf.mxu0
        %2307 = vmatprep.mubr.f32.mxu0 0.0
        %2308 = vmatmul.mubr.f32.gmra.mxu0 %v1516
        %v2309 = vpop.f32.mrf.mxu0
        %v2310 = vadd.f32 %v1681, %v2309
        %v2311 = vpop.f32.mrf.mxu0
        %2312 = vmatprep.mubr.f32.mxu0 0.0
        %2313 = vmatmul.mubr.f32.gmra.mxu0 %v1517
        %v2314 = vpop.f32.mrf.mxu0
        %v2315 = vadd.f32 %v1681, %v2314
        %v2316 = vpop.f32.mrf.mxu0
        %2317 = vmatprep.mubr.f32.mxu0 0.0
        %2318 = vmatmul.mubr.f32.gmra.mxu0 %v1518
        %v2319 = vpop.f32.mrf.mxu0
        %v2320 = vadd.f32 %v1681, %v2319
        %v2321 = vpop.f32.mrf.mxu0
        %2322 = vmatprep.mubr.f32.mxu0 0.0
        %2323 = vmatmul.mubr.f32.gmra.mxu0 %v1519
        %v2324 = vpop.f32.mrf.mxu0
        %v2325 = vadd.f32 %v1681, %v2324
        %v2326 = vpop.f32.mrf.mxu0
        %2327 = vmatprep.mubr.f32.mxu0 0.0
        %2328 = vmatmul.mubr.f32.gmra.mxu0 %v1520
        %v2329 = vpop.f32.mrf.mxu0
        %v2330 = vadd.f32 %v1681, %v2329
        %v2331 = vpop.f32.mrf.mxu0
        %2332 = vmatprep.mubr.f32.mxu0 0.0
        %2333 = vmatmul.mubr.f32.gmra.mxu0 %v1521
        %v2334 = vpop.f32.mrf.mxu0
        %v2335 = vadd.f32 %v1681, %v2334
        %v2336 = vpop.f32.mrf.mxu0
        %2337 = vmatprep.mubr.f32.mxu0 0.0
        %2338 = vmatmul.mubr.f32.gmra.mxu0 %v1522
        %v2339 = vpop.f32.mrf.mxu0
        %v2340 = vadd.f32 %v1681, %v2339
        %v2341 = vpop.f32.mrf.mxu0
        %2342 = vmatprep.mubr.f32.mxu0 0.0
        %2343 = vmatmul.mubr.f32.gmra.mxu0 %v1523
        %v2344 = vpop.f32.mrf.mxu0
        %v2345 = vadd.f32 %v1681, %v2344
        %v2346 = vpop.f32.mrf.mxu0
        %2347 = vmatprep.mubr.f32.mxu0 0.0
        %2348 = vmatmul.mubr.f32.gmra.mxu0 %v1524
        %v2349 = vpop.f32.mrf.mxu0
        %v2350 = vadd.f32 %v1681, %v2349
        %v2351 = vpop.f32.mrf.mxu0
        %2352 = vmatprep.mubr.f32.mxu0 0.0
        %2353 = vmatmul.mubr.f32.gmra.mxu0 %v1525
        %v2354 = vpop.f32.mrf.mxu0
        %v2355 = vadd.f32 %v1681, %v2354
        %v2356 = vpop.f32.mrf.mxu0
        %2357 = vmatprep.mubr.f32.mxu0 0.0
        %2358 = vmatmul.mubr.f32.gmra.mxu0 %v1526
        %v2359 = vpop.f32.mrf.mxu0
        %v2360 = vadd.f32 %v1681, %v2359
        %v2361 = vpop.f32.mrf.mxu0
        %2362 = vmatprep.mubr.f32.mxu0 0.0
        %2363 = vmatmul.mubr.f32.gmra.mxu0 %v1527
        %v2364 = vpop.f32.mrf.mxu0
        %v2365 = vadd.f32 %v1681, %v2364
        %v2366 = vpop.f32.mrf.mxu0
        %2367 = vmatprep.mubr.f32.mxu0 0.0
        %2368 = vmatmul.mubr.f32.gmra.mxu0 %v1528
        %v2369 = vpop.f32.mrf.mxu0
        %v2370 = vadd.f32 %v1681, %v2369
        %v2371 = vpop.f32.mrf.mxu0
        %2372 = vmatprep.mubr.f32.mxu0 0.0
        %2373 = vmatmul.mubr.f32.gmra.mxu0 %v1529
        %v2374 = vpop.f32.mrf.mxu0
        %v2375 = vadd.f32 %v1681, %v2374
        %v2376 = vpop.f32.mrf.mxu0
        %2377 = vmatprep.mubr.f32.mxu0 0.0
        %2378 = vmatmul.mubr.f32.gmra.mxu0 %v1530
        %v2379 = vpop.f32.mrf.mxu0
        %v2380 = vadd.f32 %v1681, %v2379
        %v2381 = vpop.f32.mrf.mxu0
        %2382 = vmatprep.mubr.f32.mxu0 0.0
        %2383 = vmatmul.mubr.f32.gmra.mxu0 %v1531
        %v2384 = vpop.f32.mrf.mxu0
        %v2385 = vadd.f32 %v1681, %v2384
        %v2386 = vpop.f32.mrf.mxu0
        %2387 = vmatprep.mubr.f32.mxu0 0.0
        %2388 = vmatmul.mubr.f32.gmra.mxu0 %v1532
        %v2389 = vpop.f32.mrf.mxu0
        %v2390 = vadd.f32 %v1681, %v2389
        %v2391 = vpop.f32.mrf.mxu0
        %2392 = vmatprep.mubr.f32.mxu0 0.0
        %2393 = vmatmul.mubr.f32.gmra.mxu0 %v1533
        %v2394 = vpop.f32.mrf.mxu0
        %v2395 = vadd.f32 %v1681, %v2394
        %v2396 = vpop.f32.mrf.mxu0
        %2397 = vmatprep.mubr.f32.mxu0 0.0
        %2398 = vmatmul.mubr.f32.gmra.mxu0 %v1534
        %v2399 = vpop.f32.mrf.mxu0
        %v2400 = vadd.f32 %v1681, %v2399
        %v2401 = vpop.f32.mrf.mxu0
        %2402 = vmatprep.mubr.f32.mxu0 0.0
        %2403 = vmatmul.mubr.f32.gmra.mxu0 %v1535
        %v2404 = vpop.f32.mrf.mxu0
        %v2405 = vadd.f32 %v1681, %v2404
        %v2406 = vpop.f32.mrf.mxu0
        %2407 = vmatprep.mubr.f32.mxu0 0.0
        %2408 = vmatmul.mubr.f32.gmra.mxu0 %v1536
        %v2409 = vpop.f32.mrf.mxu0
        %v2410 = vadd.f32 %v1681, %v2409
        %v2411 = vpop.f32.mrf.mxu0
        %2412 = vmatprep.mubr.f32.mxu0 0.0
        %2413 = vmatmul.mubr.f32.gmra.mxu0 %v1537
        %v2414 = vpop.f32.mrf.mxu0
        %v2415 = vadd.f32 %v1681, %v2414
        %v2416 = vpop.f32.mrf.mxu0
        %2417 = vmatprep.mubr.f32.mxu0 0.0
        %2418 = vmatmul.mubr.f32.gmra.mxu0 %v1538
        %v2419 = vpop.f32.mrf.mxu0
        %v2420 = vadd.f32 %v1681, %v2419
        %v2421 = vpop.f32.mrf.mxu0
        %2422 = vmatprep.mubr.f32.mxu0 0.0
        %2423 = vmatmul.mubr.f32.gmra.mxu0 %v1539
        %v2424 = vpop.f32.mrf.mxu0
        %v2425 = vadd.f32 %v1681, %v2424
        %v2426 = vpop.f32.mrf.mxu0
        %2427 = vmatprep.mubr.f32.mxu0 0.0
        %2428 = vmatmul.mubr.f32.gmra.mxu0 %v1540
        %v2429 = vpop.f32.mrf.mxu0
        %v2430 = vadd.f32 %v1681, %v2429
        %v2431 = vpop.f32.mrf.mxu0
        %2432 = vmatprep.mubr.f32.mxu0 0.0
        %2433 = vmatmul.mubr.f32.gmra.mxu0 %v1541
        %v2434 = vpop.f32.mrf.mxu0
        %v2435 = vadd.f32 %v1681, %v2434
        %v2436 = vpop.f32.mrf.mxu0
        %2437 = vmatprep.mubr.f32.mxu0 0.0
        %2438 = vmatmul.mubr.f32.gmra.mxu0 %v1542
        %v2439 = vpop.f32.mrf.mxu0
        %v2440 = vadd.f32 %v1681, %v2439
        %v2441 = vpop.f32.mrf.mxu0
        %2442 = vmatprep.mubr.f32.mxu0 0.0
        %2443 = vmatmul.mubr.f32.gmra.mxu0 %v1543
        %v2444 = vpop.f32.mrf.mxu0
        %v2445 = vadd.f32 %v1681, %v2444
        %v2446 = vpop.f32.mrf.mxu0
        %2447 = vmatprep.mubr.f32.mxu0 0.0
        %2448 = vmatmul.mubr.f32.gmra.mxu0 %v1544
        %v2449 = vpop.f32.mrf.mxu0
        %v2450 = vadd.f32 %v1681, %v2449
        %v2451 = vpop.f32.mrf.mxu0
        %2452 = vmatprep.mubr.f32.mxu0 0.0
        %2453 = vmatmul.mubr.f32.gmra.mxu0 %v1545
        %v2454 = vpop.f32.mrf.mxu0
        %v2455 = vadd.f32 %v1681, %v2454
        %v2456 = vpop.f32.mrf.mxu0
        %2457 = vmatprep.mubr.f32.mxu0 0.0
        %2458 = vmatmul.mubr.f32.gmra.mxu0 %v1546
        %v2459 = vpop.f32.mrf.mxu0
        %v2460 = vadd.f32 %v1681, %v2459
        %v2461 = vpop.f32.mrf.mxu0
        %2462 = vmatprep.mubr.f32.mxu0 0.0
        %2463 = vmatmul.mubr.f32.gmra.mxu0 %v1547
        %v2464 = vpop.f32.mrf.mxu0
        %v2465 = vadd.f32 %v1681, %v2464
        %v2466 = vpop.f32.mrf.mxu0
        %2467 = vmatprep.mubr.f32.mxu0 0.0
        %2468 = vmatmul.mubr.f32.gmra.mxu0 %v1548
        %v2469 = vpop.f32.mrf.mxu0
        %v2470 = vadd.f32 %v1681, %v2469
        %v2471 = vpop.f32.mrf.mxu0
        %2472 = vmatprep.mubr.f32.mxu0 0.0
        %2473 = vmatmul.mubr.f32.gmra.mxu0 %v1549
        %v2474 = vpop.f32.mrf.mxu0
        %v2475 = vadd.f32 %v1681, %v2474
        %v2476 = vpop.f32.mrf.mxu0
        %2477 = vmatprep.mubr.f32.mxu0 0.0
        %2478 = vmatmul.mubr.f32.gmra.mxu0 %v1550
        %v2479 = vpop.f32.mrf.mxu0
        %v2480 = vadd.f32 %v1681, %v2479
        %v2481 = vpop.f32.mrf.mxu0
        %2482 = vmatprep.mubr.f32.mxu0 0.0
        %2483 = vmatmul.mubr.f32.gmra.mxu0 %v1551
        %v2484 = vpop.f32.mrf.mxu0
        %v2485 = vadd.f32 %v1681, %v2484
        %v2486 = vpop.f32.mrf.mxu0
        %2487 = vmatprep.mubr.f32.mxu0 0.0
        %2488 = vmatmul.mubr.f32.gmra.mxu0 %v1552
        %v2489 = vpop.f32.mrf.mxu0
        %v2490 = vadd.f32 %v1681, %v2489
        %v2491 = vpop.f32.mrf.mxu0
        %2492 = vmatprep.mubr.f32.mxu0 0.0
        %2493 = vmatmul.mubr.f32.gmra.mxu0 %v1553
        %v2494 = vpop.f32.mrf.mxu0
        %v2495 = vadd.f32 %v1681, %v2494
        %v2496 = vpop.f32.mrf.mxu0
        %2497 = vmatprep.mubr.f32.mxu0 0.0
        %2498 = vmatmul.mubr.f32.gmra.mxu0 %v1554
        %v2499 = vpop.f32.mrf.mxu0
        %v2500 = vadd.f32 %v1681, %v2499
        %v2501 = vpop.f32.mrf.mxu0
        %2502 = vmatprep.mubr.f32.mxu0 0.0
        %2503 = vmatmul.mubr.f32.gmra.mxu0 %v1555
        %v2504 = vpop.f32.mrf.mxu0
        %v2505 = vadd.f32 %v1681, %v2504
        %v2506 = vpop.f32.mrf.mxu0
        %2507 = vmatprep.mubr.f32.mxu0 0.0
        %2508 = vmatmul.mubr.f32.gmra.mxu0 %v1556
        %v2509 = vpop.f32.mrf.mxu0
        %v2510 = vadd.f32 %v1681, %v2509
        %v2511 = vpop.f32.mrf.mxu0
        %2512 = vmatprep.mubr.f32.mxu0 0.0
        %2513 = vmatmul.mubr.f32.gmra.mxu0 %v1557
        %v2514 = vpop.f32.mrf.mxu0
        %v2515 = vadd.f32 %v1681, %v2514
        %v2516 = vpop.f32.mrf.mxu0
        %2517 = vmatprep.mubr.f32.mxu0 0.0
        %2518 = vmatmul.mubr.f32.gmra.mxu0 %v1558
        %v2519 = vpop.f32.mrf.mxu0
        %v2520 = vadd.f32 %v1681, %v2519
        %v2521 = vpop.f32.mrf.mxu0
        %2522 = vmatprep.mubr.f32.mxu0 0.0
        %2523 = vmatmul.mubr.f32.gmra.mxu0 %v1559
        %v2524 = vpop.f32.mrf.mxu0
        %v2525 = vadd.f32 %v1681, %v2524
        %v2526 = vpop.f32.mrf.mxu0
        %2527 = vmatprep.mubr.f32.mxu0 0.0
        %2528 = vmatmul.mubr.f32.gmra.mxu0 %v1560
        %v2529 = vpop.f32.mrf.mxu0
        %v2530 = vadd.f32 %v1681, %v2529
        %v2531 = vpop.f32.mrf.mxu0
        %2532 = vmatprep.mubr.f32.mxu0 0.0
        %2533 = vmatmul.mubr.f32.gmra.mxu0 %v1561
        %v2534 = vpop.f32.mrf.mxu0
        %v2535 = vadd.f32 %v1681, %v2534
        %v2536 = vpop.f32.mrf.mxu0
        %2537 = vmatprep.mubr.f32.mxu0 0.0
        %2538 = vmatmul.mubr.f32.gmra.mxu0 %v1562
        %v2539 = vpop.f32.mrf.mxu0
        %v2540 = vadd.f32 %v1681, %v2539
        %v2541 = vpop.f32.mrf.mxu0
        %2542 = vmatprep.mubr.f32.mxu0 0.0
        %2543 = vmatmul.mubr.f32.gmra.mxu0 %v1563
        %v2544 = vpop.f32.mrf.mxu0
        %v2545 = vadd.f32 %v1681, %v2544
        %v2546 = vpop.f32.mrf.mxu0
        %2547 = vmatprep.mubr.f32.mxu0 0.0
        %2548 = vmatmul.mubr.f32.gmra.mxu0 %v1564
        %v2549 = vpop.f32.mrf.mxu0
        %v2550 = vadd.f32 %v1681, %v2549
        %v2551 = vpop.f32.mrf.mxu0
        %2552 = vmatprep.mubr.f32.mxu0 0.0
        %2553 = vmatmul.mubr.f32.gmra.mxu0 %v1565
        %v2554 = vpop.f32.mrf.mxu0
        %v2555 = vadd.f32 %v1681, %v2554
        %v2556 = vpop.f32.mrf.mxu0
        %2557 = vmatprep.mubr.f32.mxu0 0.0
        %2558 = vmatmul.mubr.f32.gmra.mxu0 %v1566
        %v2559 = vpop.f32.mrf.mxu0
        %v2560 = vadd.f32 %v1681, %v2559
        %v2561 = vpop.f32.mrf.mxu0
        %2562 = vmatprep.mubr.f32.mxu0 0.0
        %2563 = vmatmul.mubr.f32.gmra.mxu0 %v1567
        %v2564 = vpop.f32.mrf.mxu0
        %v2565 = vadd.f32 %v1681, %v2564
        %v2566 = vpop.f32.mrf.mxu0
        %2567 = vmatprep.mubr.f32.mxu0 0.0
        %2568 = vmatmul.mubr.f32.gmra.mxu0 %v1568
        %v2569 = vpop.f32.mrf.mxu0
        %v2570 = vadd.f32 %v1681, %v2569
        %v2571 = vpop.f32.mrf.mxu0
        %2572 = vmatprep.mubr.f32.mxu0 0.0
        %2573 = vmatmul.mubr.f32.gmra.mxu0 %v1569
        %v2574 = vpop.f32.mrf.mxu0
        %v2575 = vadd.f32 %v1681, %v2574
        %v2576 = vpop.f32.mrf.mxu0
        %2577 = vmatprep.mubr.f32.mxu0 0.0
        %2578 = vmatmul.mubr.f32.gmra.mxu0 %v1570
        %v2579 = vpop.f32.mrf.mxu0
        %v2580 = vadd.f32 %v1681, %v2579
        %v2581 = vpop.f32.mrf.mxu0
        %2582 = vmatprep.mubr.f32.mxu0 0.0
        %2583 = vmatmul.mubr.f32.gmra.mxu0 %v1571
        %v2584 = vpop.f32.mrf.mxu0
        %v2585 = vadd.f32 %v1681, %v2584
        %v2586 = vpop.f32.mrf.mxu0
        %2587 = vmatprep.mubr.f32.mxu0 0.0
        %2588 = vmatmul.mubr.f32.gmra.mxu0 %v1572
        %v2589 = vpop.f32.mrf.mxu0
        %v2590 = vadd.f32 %v1681, %v2589
        %v2591 = vpop.f32.mrf.mxu0
        %2592 = vmatprep.mubr.f32.mxu0 0.0
        %2593 = vmatmul.mubr.f32.gmra.mxu0 %v1573
        %v2594 = vpop.f32.mrf.mxu0
        %v2595 = vadd.f32 %v1681, %v2594
        %v2596 = vpop.f32.mrf.mxu0
        %2597 = vmatprep.mubr.f32.mxu0 0.0
        %2598 = vmatmul.mubr.f32.gmra.mxu0 %v1574
        %v2599 = vpop.f32.mrf.mxu0
        %v2600 = vadd.f32 %v1681, %v2599
        %v2601 = vpop.f32.mrf.mxu0
        %2602 = vmatprep.mubr.f32.mxu0 0.0
        %2603 = vmatmul.mubr.f32.gmra.mxu0 %v1575
        %v2604 = vpop.f32.mrf.mxu0
        %v2605 = vadd.f32 %v1681, %v2604
        %v2606 = vpop.f32.mrf.mxu0
        %2607 = vmatprep.mubr.f32.mxu0 0.0
        %2608 = vmatmul.mubr.f32.gmra.mxu0 %v1576
        %v2609 = vpop.f32.mrf.mxu0
        %v2610 = vadd.f32 %v1681, %v2609
        %v2611 = vpop.f32.mrf.mxu0
        %2612 = vmatprep.mubr.f32.mxu0 0.0
        %2613 = vmatmul.mubr.f32.gmra.mxu0 %v1577
        %v2614 = vpop.f32.mrf.mxu0
        %v2615 = vadd.f32 %v1681, %v2614
        %v2616 = vpop.f32.mrf.mxu0
        %2617 = vmatprep.mubr.f32.mxu0 0.0
        %2618 = vmatmul.mubr.f32.gmra.mxu0 %v1578
        %v2619 = vpop.f32.mrf.mxu0
        %v2620 = vadd.f32 %v1681, %v2619
        %v2621 = vpop.f32.mrf.mxu0
        %2622 = vmatprep.mubr.f32.mxu0 0.0
        %2623 = vmatmul.mubr.f32.gmra.mxu0 %v1579
        %v2624 = vpop.f32.mrf.mxu0
        %v2625 = vadd.f32 %v1681, %v2624
        %v2626 = vpop.f32.mrf.mxu0
        %2627 = vmatprep.mubr.f32.mxu0 0.0
        %2628 = vmatmul.mubr.f32.gmra.mxu0 %v1580
        %v2629 = vpop.f32.mrf.mxu0
        %v2630 = vadd.f32 %v1681, %v2629
        %v2631 = vpop.f32.mrf.mxu0
        %2632 = vmatprep.mubr.f32.mxu0 0.0
        %2633 = vmatmul.mubr.f32.gmra.mxu0 %v1581
        %v2634 = vpop.f32.mrf.mxu0
        %v2635 = vadd.f32 %v1681, %v2634
        %v2636 = vpop.f32.mrf.mxu0
        %2637 = vmatprep.mubr.f32.mxu0 0.0
        %2638 = vmatmul.mubr.f32.gmra.mxu0 %v1582
        %v2639 = vpop.f32.mrf.mxu0
        %v2640 = vadd.f32 %v1681, %v2639
        %v2641 = vpop.f32.mrf.mxu0
        %2642 = vmatprep.mubr.f32.mxu0 0.0
        %2643 = vmatmul.mubr.f32.gmra.mxu0 %v1583
        %v2644 = vpop.f32.mrf.mxu0
        %v2645 = vadd.f32 %v1681, %v2644
        %v2646 = vpop.f32.mrf.mxu0
        %2647 = vmatprep.mubr.f32.mxu0 0.0
        %2648 = vmatmul.mubr.f32.gmra.mxu0 %v1584
        %v2649 = vpop.f32.mrf.mxu0
        %v2650 = vadd.f32 %v1681, %v2649
        %v2651 = vpop.f32.mrf.mxu0
        %2652 = vmatprep.mubr.f32.mxu0 0.0
        %2653 = vmatmul.mubr.f32.gmra.mxu0 %v1585
        %v2654 = vpop.f32.mrf.mxu0
        %v2655 = vadd.f32 %v1681, %v2654
        %v2656 = vpop.f32.mrf.mxu0
        %2657 = vmatprep.mubr.f32.mxu0 0.0
        %2658 = vmatmul.mubr.f32.gmra.mxu0 %v1586
        %v2659 = vpop.f32.mrf.mxu0
        %v2660 = vadd.f32 %v1681, %v2659
        %v2661 = vpop.f32.mrf.mxu0
        %2662 = vmatprep.mubr.f32.mxu0 0.0
        %2663 = vmatmul.mubr.f32.gmra.mxu0 %v1587
        %v2664 = vpop.f32.mrf.mxu0
        %v2665 = vadd.f32 %v1681, %v2664
        %v2666 = vpop.f32.mrf.mxu0
        %2667 = vmatprep.mubr.f32.mxu0 0.0
        %2668 = vmatmul.mubr.f32.gmra.mxu0 %v1588
        %v2669 = vpop.f32.mrf.mxu0
        %v2670 = vadd.f32 %v1681, %v2669
        %v2671 = vpop.f32.mrf.mxu0
        %2672 = vmatprep.mubr.f32.mxu0 0.0
        %2673 = vmatmul.mubr.f32.gmra.mxu0 %v1589
        %v2674 = vpop.f32.mrf.mxu0
        %v2675 = vadd.f32 %v1681, %v2674
        %v2676 = vpop.f32.mrf.mxu0
        %2677 = vmatprep.mubr.f32.mxu0 0.0
        %2678 = vmatmul.mubr.f32.gmra.mxu0 %v1590
        %v2679 = vpop.f32.mrf.mxu0
        %v2680 = vadd.f32 %v1681, %v2679
        %v2681 = vpop.f32.mrf.mxu0
        %2682 = vmatprep.mubr.f32.mxu0 0.0
        %2683 = vmatmul.mubr.f32.gmra.mxu0 %v1591
        %v2684 = vpop.f32.mrf.mxu0
        %v2685 = vadd.f32 %v1681, %v2684
        %v2686 = vpop.f32.mrf.mxu0
        %2687 = vmatprep.mubr.f32.mxu0 0.0
        %2688 = vmatmul.mubr.f32.gmra.mxu0 %v1592
        %v2689 = vpop.f32.mrf.mxu0
        %v2690 = vadd.f32 %v1681, %v2689
        %v2691 = vpop.f32.mrf.mxu0
        %2692 = vmatprep.mubr.f32.mxu0 0.0
        %2693 = vmatmul.mubr.f32.gmra.mxu0 %v1593
        %v2694 = vpop.f32.mrf.mxu0
        %v2695 = vadd.f32 %v1681, %v2694
        %v2696 = vpop.f32.mrf.mxu0
        %2697 = vmatprep.mubr.f32.mxu0 0.0
        %2698 = vmatmul.mubr.f32.gmra.mxu0 %v1594
        %v2699 = vpop.f32.mrf.mxu0
        %v2700 = vadd.f32 %v1681, %v2699
        %v2701 = vpop.f32.mrf.mxu0
        %2702 = vmatprep.mubr.f32.mxu0 0.0
        %2703 = vmatmul.mubr.f32.gmra.mxu0 %v1595
        %v2704 = vpop.f32.mrf.mxu0
        %v2705 = vadd.f32 %v1681, %v2704
        %v2706 = vpop.f32.mrf.mxu0
        %2707 = vmatprep.mubr.f32.mxu0 0.0
        %2708 = vmatmul.mubr.f32.gmra.mxu0 %v1596
        %v2709 = vpop.f32.mrf.mxu0
        %v2710 = vadd.f32 %v1681, %v2709
        %v2711 = vpop.f32.mrf.mxu0
        %2712 = vmatprep.mubr.f32.mxu0 0.0
        %2713 = vmatmul.mubr.f32.gmra.mxu0 %v1597
        %v2714 = vpop.f32.mrf.mxu0
        %v2715 = vadd.f32 %v1681, %v2714
        %v2716 = vpop.f32.mrf.mxu0
        %2717 = vmatprep.mubr.f32.mxu0 0.0
        %2718 = vmatmul.mubr.f32.gmra.mxu0 %v1598
        %v2719 = vpop.f32.mrf.mxu0
        %v2720 = vadd.f32 %v1681, %v2719
        %v2721 = vpop.f32.mrf.mxu0
        %2722 = vmatprep.mubr.f32.mxu0 0.0
        %2723 = vmatmul.mubr.f32.gmra.mxu0 %v1599
        %v2724 = vpop.f32.mrf.mxu0
        %v2725 = vadd.f32 %v1681, %v2724
        %v2726 = vpop.f32.mrf.mxu0
        %2727 = vmatprep.mubr.f32.mxu0 0.0
        %2728 = vmatmul.mubr.f32.gmra.mxu0 %v1600
        %v2729 = vpop.f32.mrf.mxu0
        %v2730 = vadd.f32 %v1681, %v2729
        %v2731 = vpop.f32.mrf.mxu0
        %2732 = vmatprep.mubr.f32.mxu0 0.0
        %2733 = vmatmul.mubr.f32.gmra.mxu0 %v1601
        %v2734 = vpop.f32.mrf.mxu0
        %v2735 = vadd.f32 %v1681, %v2734
        %v2736 = vpop.f32.mrf.mxu0
        %2737 = vmatprep.mubr.f32.mxu0 0.0
        %2738 = vmatmul.mubr.f32.gmra.mxu0 %v1602
        %v2739 = vpop.f32.mrf.mxu0
        %v2740 = vadd.f32 %v1681, %v2739
        %v2741 = vpop.f32.mrf.mxu0
        %2742 = vmatprep.mubr.f32.mxu0 0.0
        %2743 = vmatmul.mubr.f32.gmra.mxu0 %v1603
        %v2744 = vpop.f32.mrf.mxu0
        %v2745 = vadd.f32 %v1681, %v2744
        %v2746 = vpop.f32.mrf.mxu0
        %2747 = vmatprep.mubr.f32.mxu0 0.0
        %2748 = vmatmul.mubr.f32.gmra.mxu0 %v1604
        %v2749 = vpop.f32.mrf.mxu0
        %v2750 = vadd.f32 %v1681, %v2749
        %v2751 = vpop.f32.mrf.mxu0
        %2752 = vmatprep.mubr.f32.mxu0 0.0
        %2753 = vmatmul.mubr.f32.gmra.mxu0 %v1605
        %v2754 = vpop.f32.mrf.mxu0
        %v2755 = vadd.f32 %v1681, %v2754
        %v2756 = vpop.f32.mrf.mxu0
        %2757 = vmatprep.mubr.f32.mxu0 0.0
        %2758 = vmatmul.mubr.f32.gmra.mxu0 %v1606
        %v2759 = vpop.f32.mrf.mxu0
        %v2760 = vadd.f32 %v1681, %v2759
        %v2761 = vpop.f32.mrf.mxu0
        %2762 = vmatprep.mubr.f32.mxu0 0.0
        %2763 = vmatmul.mubr.f32.gmra.mxu0 %v1607
        %v2764 = vpop.f32.mrf.mxu0
        %v2765 = vadd.f32 %v1681, %v2764
        %v2766 = vpop.f32.mrf.mxu0
        %2767 = vmatprep.mubr.f32.mxu0 0.0
        %2768 = vmatmul.mubr.f32.gmra.mxu0 %v1608
        %v2769 = vpop.f32.mrf.mxu0
        %v2770 = vadd.f32 %v1681, %v2769
        %v2771 = vpop.f32.mrf.mxu0
        %2772 = vmatprep.mubr.f32.mxu0 0.0
        %2773 = vmatmul.mubr.f32.gmra.mxu0 %v1609
        %v2774 = vpop.f32.mrf.mxu0
        %v2775 = vadd.f32 %v1681, %v2774
        %v2776 = vpop.f32.mrf.mxu0
        %2777 = vmatprep.mubr.f32.mxu0 0.0
        %2778 = vmatmul.mubr.f32.gmra.mxu0 %v1610
        %v2779 = vpop.f32.mrf.mxu0
        %v2780 = vadd.f32 %v1681, %v2779
        %v2781 = vpop.f32.mrf.mxu0
        %2782 = vmatprep.mubr.f32.mxu0 0.0
        %2783 = vmatmul.mubr.f32.gmra.mxu0 %v1611
        %v2784 = vpop.f32.mrf.mxu0
        %v2785 = vadd.f32 %v1681, %v2784
        %v2786 = vpop.f32.mrf.mxu0
        %2787 = vmatprep.mubr.f32.mxu0 0.0
        %2788 = vmatmul.mubr.f32.gmra.mxu0 %v1612
        %v2789 = vpop.f32.mrf.mxu0
        %v2790 = vadd.f32 %v1681, %v2789
        %v2791 = vpop.f32.mrf.mxu0
        %2792 = vmatprep.mubr.f32.mxu0 0.0
        %2793 = vmatmul.mubr.f32.gmra.mxu0 %v1613
        %v2794 = vpop.f32.mrf.mxu0
        %v2795 = vadd.f32 %v1681, %v2794
        %v2796 = vpop.f32.mrf.mxu0
        %2797 = vmatprep.mubr.f32.mxu0 0.0
        %2798 = vmatmul.mubr.f32.gmra.mxu0 %v1614
        %v2799 = vpop.f32.mrf.mxu0
        %v2800 = vadd.f32 %v1681, %v2799
        %v2801 = vpop.f32.mrf.mxu0
        %2802 = vmatprep.mubr.f32.mxu0 0.0
        %2803 = vmatmul.mubr.f32.gmra.mxu0 %v1615
        %v2804 = vpop.f32.mrf.mxu0
        %v2805 = vadd.f32 %v1681, %v2804
        %v2806 = vpop.f32.mrf.mxu0
        %2807 = vmatprep.mubr.f32.mxu0 0.0
        %2808 = vmatmul.mubr.f32.gmra.mxu0 %v1616
        %v2809 = vpop.f32.mrf.mxu0
        %v2810 = vadd.f32 %v1681, %v2809
        %v2811 = vpop.f32.mrf.mxu0
        %2812 = vmatprep.mubr.f32.mxu0 0.0
        %2813 = vmatmul.mubr.f32.gmra.mxu0 %v1617
        %v2814 = vpop.f32.mrf.mxu0
        %v2815 = vadd.f32 %v1681, %v2814
        %v2816 = vpop.f32.mrf.mxu0
        %2817 = vmatprep.mubr.f32.mxu0 0.0
        %2818 = vmatmul.mubr.f32.gmra.mxu0 %v1618
        %v2819 = vpop.f32.mrf.mxu0
        %v2820 = vadd.f32 %v1681, %v2819
        %v2821 = vpop.f32.mrf.mxu0
        %2822 = vmatprep.mubr.f32.mxu0 0.0
        %2823 = vmatmul.mubr.f32.gmra.mxu0 %v1619
        %v2824 = vpop.f32.mrf.mxu0
        %v2825 = vadd.f32 %v1681, %v2824
        %v2826 = vpop.f32.mrf.mxu0
        %2827 = vmatprep.mubr.f32.mxu0 0.0
        %2828 = vmatmul.mubr.f32.gmra.mxu0 %v1620
        %v2829 = vpop.f32.mrf.mxu0
        %v2830 = vadd.f32 %v1681, %v2829
        %v2831 = vpop.f32.mrf.mxu0
        %2832 = vmatprep.mubr.f32.mxu0 0.0
        %2833 = vmatmul.mubr.f32.gmra.mxu0 %v1621
        %v2834 = vpop.f32.mrf.mxu0
        %v2835 = vadd.f32 %v1681, %v2834
        %v2836 = vpop.f32.mrf.mxu0
        %2837 = vmatprep.mubr.f32.mxu0 0.0
        %2838 = vmatmul.mubr.f32.gmra.mxu0 %v1622
        %v2839 = vpop.f32.mrf.mxu0
        %v2840 = vadd.f32 %v1681, %v2839
        %v2841 = vpop.f32.mrf.mxu0
        %2842 = vmatprep.mubr.f32.mxu0 0.0
        %2843 = vmatmul.mubr.f32.gmra.mxu0 %v1623
        %v2844 = vpop.f32.mrf.mxu0
        %v2845 = vadd.f32 %v1681, %v2844
        %v2846 = vpop.f32.mrf.mxu0
        %2847 = vmatprep.mubr.f32.mxu0 0.0
        %2848 = vmatmul.mubr.f32.gmra.mxu0 %v1624
        %v2849 = vpop.f32.mrf.mxu0
        %v2850 = vadd.f32 %v1681, %v2849
        %v2851 = vpop.f32.mrf.mxu0
        %2852 = vmatprep.mubr.f32.mxu0 0.0
        %2853 = vmatmul.mubr.f32.gmra.mxu0 %v1625
        %v2854 = vpop.f32.mrf.mxu0
        %v2855 = vadd.f32 %v1681, %v2854
        %v2856 = vpop.f32.mrf.mxu0
        %2857 = vmatprep.mubr.f32.mxu0 0.0
        %2858 = vmatmul.mubr.f32.gmra.mxu0 %v1626
        %v2859 = vpop.f32.mrf.mxu0
        %v2860 = vadd.f32 %v1681, %v2859
        %v2861 = vpop.f32.mrf.mxu0
        %2862 = vmatprep.mubr.f32.mxu0 0.0
        %2863 = vmatmul.mubr.f32.gmra.mxu0 %v1627
        %v2864 = vpop.f32.mrf.mxu0
        %v2865 = vadd.f32 %v1681, %v2864
        %v2866 = vpop.f32.mrf.mxu0
        %2867 = vmatprep.mubr.f32.mxu0 0.0
        %2868 = vmatmul.mubr.f32.gmra.mxu0 %v1628
        %v2869 = vpop.f32.mrf.mxu0
        %v2870 = vadd.f32 %v1681, %v2869
        %v2871 = vpop.f32.mrf.mxu0
        %2872 = vmatprep.mubr.f32.mxu0 0.0
        %2873 = vmatmul.mubr.f32.gmra.mxu0 %v1629
        %v2874 = vpop.f32.mrf.mxu0
        %v2875 = vadd.f32 %v1681, %v2874
        %v2876 = vpop.f32.mrf.mxu0
        %2877 = vmatprep.mubr.f32.mxu0 0.0
        %2878 = vmatmul.mubr.f32.gmra.mxu0 %v1630
        %v2879 = vpop.f32.mrf.mxu0
        %v2880 = vadd.f32 %v1681, %v2879
        %v2881 = vpop.f32.mrf.mxu0
        %2882 = vmatprep.mubr.f32.mxu0 0.0
        %2883 = vmatmul.mubr.f32.gmra.mxu0 %v1631
        %v2884 = vpop.f32.mrf.mxu0
        %v2885 = vadd.f32 %v1681, %v2884
        %v2886 = vpop.f32.mrf.mxu0
        %2887 = vmatprep.mubr.f32.mxu0 0.0
        %2888 = vmatmul.mubr.f32.gmra.mxu0 %v1632
        %v2889 = vpop.f32.mrf.mxu0
        %v2890 = vadd.f32 %v1681, %v2889
        %v2891 = vpop.f32.mrf.mxu0
        %2892 = vmatprep.mubr.f32.mxu0 0.0
        %2893 = vmatmul.mubr.f32.gmra.mxu0 %v1633
        %v2894 = vpop.f32.mrf.mxu0
        %v2895 = vadd.f32 %v1681, %v2894
        %v2896 = vpop.f32.mrf.mxu0
        %2897 = vmatprep.mubr.f32.mxu0 0.0
        %2898 = vmatmul.mubr.f32.gmra.mxu0 %v1634
        %v2899 = vpop.f32.mrf.mxu0
        %v2900 = vadd.f32 %v1681, %v2899
        %v2901 = vpop.f32.mrf.mxu0
        %2902 = vmatprep.mubr.f32.mxu0 0.0
        %2903 = vmatmul.mubr.f32.gmra.mxu0 %v1635
        %v2904 = vpop.f32.mrf.mxu0
        %v2905 = vadd.f32 %v1681, %v2904
        %v2906 = vpop.f32.mrf.mxu0
        %2907 = vmatprep.mubr.f32.mxu0 0.0
        %2908 = vmatmul.mubr.f32.gmra.mxu0 %v1636
        %v2909 = vpop.f32.mrf.mxu0
        %v2910 = vadd.f32 %v1681, %v2909
        %v2911 = vpop.f32.mrf.mxu0
        %2912 = vmatprep.mubr.f32.mxu0 0.0
        %2913 = vmatmul.mubr.f32.gmra.mxu0 %v1637
        %v2914 = vpop.f32.mrf.mxu0
        %v2915 = vadd.f32 %v1681, %v2914
        %v2916 = vpop.f32.mrf.mxu0
        %2917 = vmatprep.mubr.f32.mxu0 0.0
        %2918 = vmatmul.mubr.f32.gmra.mxu0 %v1638
        %v2919 = vpop.f32.mrf.mxu0
        %v2920 = vadd.f32 %v1681, %v2919
        %v2921 = vpop.f32.mrf.mxu0
        %2922 = vmatprep.mubr.f32.mxu0 0.0
        %2923 = vmatmul.mubr.f32.gmra.mxu0 %v1639
        %v2924 = vpop.f32.mrf.mxu0
        %v2925 = vadd.f32 %v1681, %v2924
        %v2926 = vpop.f32.mrf.mxu0
        %2927 = vmatprep.mubr.f32.mxu0 0.0
        %2928 = vmatmul.mubr.f32.gmra.mxu0 %v1640
        %v2929 = vpop.f32.mrf.mxu0
        %v2930 = vadd.f32 %v1681, %v2929
        %v2931 = vpop.f32.mrf.mxu0
        %2932 = vmatprep.mubr.f32.mxu0 0.0
        %2933 = vmatmul.mubr.f32.gmra.mxu0 %v1641
        %v2934 = vpop.f32.mrf.mxu0
        %v2935 = vadd.f32 %v1681, %v2934
        %v2936 = vpop.f32.mrf.mxu0
        %2937 = vmatprep.mubr.f32.mxu0 0.0
        %2938 = vmatmul.mubr.f32.gmra.mxu0 %v1642
        %v2939 = vpop.f32.mrf.mxu0
        %v2940 = vadd.f32 %v1681, %v2939
        %v2941 = vpop.f32.mrf.mxu0
        %2942 = vmatprep.mubr.f32.mxu0 0.0
        %2943 = vmatmul.mubr.f32.gmra.mxu0 %v1643
        %v2944 = vpop.f32.mrf.mxu0
        %v2945 = vadd.f32 %v1681, %v2944
        %v2946 = vpop.f32.mrf.mxu0
        %2947 = vmatprep.mubr.f32.mxu0 0.0
        %2948 = vmatmul.mubr.f32.gmra.mxu0 %v1644
        %v2949 = vpop.f32.mrf.mxu0
        %v2950 = vadd.f32 %v1681, %v2949
        %v2951 = vpop.f32.mrf.mxu0
        %2952 = vmatprep.mubr.f32.mxu0 0.0
        %2953 = vmatmul.mubr.f32.gmra.mxu0 %v1645
        %v2954 = vpop.f32.mrf.mxu0
        %v2955 = vadd.f32 %v1681, %v2954
        %v2956 = vpop.f32.mrf.mxu0
        %2957 = vmatprep.mubr.f32.mxu0 0.0
        %2958 = vmatmul.mubr.f32.gmra.mxu0 %v1646
        %v2959 = vpop.f32.mrf.mxu0
        %v2960 = vadd.f32 %v1681, %v2959
        %v2961 = vpop.f32.mrf.mxu0
        %2962 = vmatprep.mubr.f32.mxu0 0.0
        %2963 = vmatmul.mubr.f32.gmra.mxu0 %v1647
        %v2964 = vpop.f32.mrf.mxu0
        %v2965 = vadd.f32 %v1681, %v2964
        %v2966 = vpop.f32.mrf.mxu0
        %2967 = vmatprep.mubr.f32.mxu0 0.0
        %2968 = vmatmul.mubr.f32.gmra.mxu0 %v1648
        %v2969 = vpop.f32.mrf.mxu0
        %v2970 = vadd.f32 %v1681, %v2969
        %v2971 = vpop.f32.mrf.mxu0
        %2972 = vmatprep.mubr.f32.mxu0 0.0
        %2973 = vmatmul.mubr.f32.gmra.mxu0 %v1649
        %v2974 = vpop.f32.mrf.mxu0
        %v2975 = vadd.f32 %v1681, %v2974
        %v2976 = vpop.f32.mrf.mxu0
        %2977 = vmatprep.mubr.f32.mxu0 0.0
        %2978 = vmatmul.mubr.f32.gmra.mxu0 %v1650
        %v2979 = vpop.f32.mrf.mxu0
        %v2980 = vadd.f32 %v1681, %v2979
        %v2981 = vpop.f32.mrf.mxu0
        %2982 = vmatprep.mubr.f32.mxu0 0.0
        %2983 = vmatmul.mubr.f32.gmra.mxu0 %v1651
        %v2984 = vpop.f32.mrf.mxu0
        %v2985 = vadd.f32 %v1681, %v2984
        %v2986 = vpop.f32.mrf.mxu0
        %2987 = vmatprep.mubr.f32.mxu0 0.0
        %2988 = vmatmul.mubr.f32.gmra.mxu0 %v1652
        %v2989 = vpop.f32.mrf.mxu0
        %v2990 = vadd.f32 %v1681, %v2989
        %v2991 = vpop.f32.mrf.mxu0
        %2992 = vmatprep.mubr.f32.mxu0 0.0
        %2993 = vmatmul.mubr.f32.gmra.mxu0 %v1653
        %v2994 = vpop.f32.mrf.mxu0
        %v2995 = vadd.f32 %v1681, %v2994
        %v2996 = vpop.f32.mrf.mxu0
        %2997 = vmatprep.mubr.f32.mxu0 0.0
        %2998 = vmatmul.mubr.f32.gmra.mxu0 %v1654
        %v2999 = vpop.f32.mrf.mxu0
        %v3000 = vadd.f32 %v1681, %v2999
        %v3001 = vpop.f32.mrf.mxu0
        %3002 = vmatprep.mubr.f32.mxu0 0.0
        %3003 = vmatmul.mubr.f32.gmra.mxu0 %v1655
        %v3004 = vpop.f32.mrf.mxu0
        %v3005 = vadd.f32 %v1681, %v3004
        %v3006 = vpop.f32.mrf.mxu0
        %3007 = vmatprep.mubr.f32.mxu0 0.0
        %3008 = vmatmul.mubr.f32.gmra.mxu0 %v1656
        %v3009 = vpop.f32.mrf.mxu0
        %v3010 = vadd.f32 %v1681, %v3009
        %v3011 = vpop.f32.mrf.mxu0
        %3012 = vmatprep.mubr.f32.mxu0 0.0
        %3013 = vmatmul.mubr.f32.gmra.mxu0 %v1657
        %v3014 = vpop.f32.mrf.mxu0
        %v3015 = vadd.f32 %v1681, %v3014
        %v3016 = vpop.f32.mrf.mxu0
        %3017 = vmatprep.mubr.f32.mxu0 0.0
        %3018 = vmatmul.mubr.f32.gmra.mxu0 %v1658
        %v3019 = vpop.f32.mrf.mxu0
        %v3020 = vadd.f32 %v1681, %v3019
        %v3021 = vpop.f32.mrf.mxu0
        %3022 = vmatprep.mubr.f32.mxu0 0.0
        %3023 = vmatmul.mubr.f32.gmra.mxu0 %v1659
        %v3024 = vpop.f32.mrf.mxu0
        %v3025 = vadd.f32 %v1681, %v3024
        %v3026 = vpop.f32.mrf.mxu0
        %3027 = vdwg.mxu0
        %vm3028 = vcmp.ge.f32.partialorder %v1750, 0.0
        %vm3029 = vcmp.ge.f32.partialorder %v1755, 0.0
        %vm3030 = vcmp.ge.f32.partialorder %v1760, 0.0
        %vm3031 = vcmp.ge.f32.partialorder %v1765, 0.0
        %vm3032 = vcmp.ge.f32.partialorder %v1770, 0.0
        %vm3033 = vcmp.ge.f32.partialorder %v1775, 0.0
        %vm3034 = vcmp.ge.f32.partialorder %v1780, 0.0
        %vm3035 = vcmp.ge.f32.partialorder %v1785, 0.0
        %vm3036 = vcmp.ge.f32.partialorder %v1790, 0.0
        %vm3037 = vcmp.ge.f32.partialorder %v1795, 0.0
        %vm3038 = vcmp.ge.f32.partialorder %v1800, 0.0
        %vm3039 = vcmp.ge.f32.partialorder %v1805, 0.0
        %vm3040 = vcmp.ge.f32.partialorder %v1810, 0.0
        %vm3041 = vcmp.ge.f32.partialorder %v1815, 0.0
        %vm3042 = vcmp.ge.f32.partialorder %v1820, 0.0
        %vm3043 = vcmp.ge.f32.partialorder %v1825, 0.0
        %vm3044 = vcmp.ge.f32.partialorder %v1830, 0.0
        %vm3045 = vcmp.ge.f32.partialorder %v1835, 0.0
        %vm3046 = vcmp.ge.f32.partialorder %v1840, 0.0
        %vm3047 = vcmp.ge.f32.partialorder %v1845, 0.0
        %vm3048 = vcmp.ge.f32.partialorder %v1850, 0.0
        %vm3049 = vcmp.ge.f32.partialorder %v1855, 0.0
        %vm3050 = vcmp.ge.f32.partialorder %v1860, 0.0
        %vm3051 = vcmp.ge.f32.partialorder %v1865, 0.0
        %vm3052 = vcmp.ge.f32.partialorder %v1870, 0.0
        %vm3053 = vcmp.ge.f32.partialorder %v1875, 0.0
        %vm3054 = vcmp.ge.f32.partialorder %v1880, 0.0
        %vm3055 = vcmp.ge.f32.partialorder %v1885, 0.0
        %vm3056 = vcmp.ge.f32.partialorder %v1890, 0.0
        %vm3057 = vcmp.ge.f32.partialorder %v1895, 0.0
        %vm3058 = vcmp.ge.f32.partialorder %v1900, 0.0
        %vm3059 = vcmp.ge.f32.partialorder %v1905, 0.0
        %vm3060 = vcmp.ge.f32.partialorder %v1910, 0.0
        %vm3061 = vcmp.ge.f32.partialorder %v1915, 0.0
        %vm3062 = vcmp.ge.f32.partialorder %v1920, 0.0
        %vm3063 = vcmp.ge.f32.partialorder %v1925, 0.0
        %vm3064 = vcmp.ge.f32.partialorder %v1930, 0.0
        %vm3065 = vcmp.ge.f32.partialorder %v1935, 0.0
        %vm3066 = vcmp.ge.f32.partialorder %v1940, 0.0
        %vm3067 = vcmp.ge.f32.partialorder %v1945, 0.0
        %vm3068 = vcmp.ge.f32.partialorder %v1950, 0.0
        %vm3069 = vcmp.ge.f32.partialorder %v1955, 0.0
        %vm3070 = vcmp.ge.f32.partialorder %v1960, 0.0
        %vm3071 = vcmp.ge.f32.partialorder %v1965, 0.0
        %vm3072 = vcmp.ge.f32.partialorder %v1970, 0.0
        %vm3073 = vcmp.ge.f32.partialorder %v1975, 0.0
        %vm3074 = vcmp.ge.f32.partialorder %v1980, 0.0
        %vm3075 = vcmp.ge.f32.partialorder %v1985, 0.0
        %vm3076 = vcmp.ge.f32.partialorder %v1990, 0.0
        %vm3077 = vcmp.ge.f32.partialorder %v1995, 0.0
        %vm3078 = vcmp.ge.f32.partialorder %v2000, 0.0
        %vm3079 = vcmp.ge.f32.partialorder %v2005, 0.0
        %vm3080 = vcmp.ge.f32.partialorder %v2010, 0.0
        %vm3081 = vcmp.ge.f32.partialorder %v2015, 0.0
        %vm3082 = vcmp.ge.f32.partialorder %v2020, 0.0
        %vm3083 = vcmp.ge.f32.partialorder %v2025, 0.0
        %vm3084 = vcmp.ge.f32.partialorder %v2030, 0.0
        %vm3085 = vcmp.ge.f32.partialorder %v2035, 0.0
        %vm3086 = vcmp.ge.f32.partialorder %v2040, 0.0
        %vm3087 = vcmp.ge.f32.partialorder %v2045, 0.0
        %vm3088 = vcmp.ge.f32.partialorder %v2050, 0.0
        %vm3089 = vcmp.ge.f32.partialorder %v2055, 0.0
        %vm3090 = vcmp.ge.f32.partialorder %v2060, 0.0
        %vm3091 = vcmp.ge.f32.partialorder %v2065, 0.0
        %vm3092 = vcmp.ge.f32.partialorder %v2070, 0.0
        %vm3093 = vcmp.ge.f32.partialorder %v2075, 0.0
        %vm3094 = vcmp.ge.f32.partialorder %v2080, 0.0
        %vm3095 = vcmp.ge.f32.partialorder %v2085, 0.0
        %vm3096 = vcmp.ge.f32.partialorder %v2090, 0.0
        %vm3097 = vcmp.ge.f32.partialorder %v2095, 0.0
        %vm3098 = vcmp.ge.f32.partialorder %v2100, 0.0
        %vm3099 = vcmp.ge.f32.partialorder %v2105, 0.0
        %vm3100 = vcmp.ge.f32.partialorder %v2110, 0.0
        %vm3101 = vcmp.ge.f32.partialorder %v2115, 0.0
        %vm3102 = vcmp.ge.f32.partialorder %v2120, 0.0
        %vm3103 = vcmp.ge.f32.partialorder %v2125, 0.0
        %vm3104 = vcmp.ge.f32.partialorder %v2130, 0.0
        %vm3105 = vcmp.ge.f32.partialorder %v2135, 0.0
        %vm3106 = vcmp.ge.f32.partialorder %v2140, 0.0
        %vm3107 = vcmp.ge.f32.partialorder %v2145, 0.0
        %vm3108 = vcmp.ge.f32.partialorder %v2150, 0.0
        %vm3109 = vcmp.ge.f32.partialorder %v2155, 0.0
        %vm3110 = vcmp.ge.f32.partialorder %v2160, 0.0
        %vm3111 = vcmp.ge.f32.partialorder %v2165, 0.0
        %vm3112 = vcmp.ge.f32.partialorder %v2170, 0.0
        %vm3113 = vcmp.ge.f32.partialorder %v2175, 0.0
        %vm3114 = vcmp.ge.f32.partialorder %v2180, 0.0
        %vm3115 = vcmp.ge.f32.partialorder %v2185, 0.0
        %vm3116 = vcmp.ge.f32.partialorder %v2190, 0.0
        %vm3117 = vcmp.ge.f32.partialorder %v2195, 0.0
        %vm3118 = vcmp.ge.f32.partialorder %v2200, 0.0
        %vm3119 = vcmp.ge.f32.partialorder %v2205, 0.0
        %vm3120 = vcmp.ge.f32.partialorder %v2210, 0.0
        %vm3121 = vcmp.ge.f32.partialorder %v2215, 0.0
        %vm3122 = vcmp.ge.f32.partialorder %v2220, 0.0
        %vm3123 = vcmp.ge.f32.partialorder %v2225, 0.0
        %vm3124 = vcmp.ge.f32.partialorder %v2230, 0.0
        %vm3125 = vcmp.ge.f32.partialorder %v2235, 0.0
        %vm3126 = vcmp.ge.f32.partialorder %v2240, 0.0
        %vm3127 = vcmp.ge.f32.partialorder %v2245, 0.0
        %vm3128 = vcmp.ge.f32.partialorder %v2250, 0.0
        %vm3129 = vcmp.ge.f32.partialorder %v2255, 0.0
        %vm3130 = vcmp.ge.f32.partialorder %v2260, 0.0
        %vm3131 = vcmp.ge.f32.partialorder %v2265, 0.0
        %vm3132 = vcmp.ge.f32.partialorder %v2270, 0.0
        %vm3133 = vcmp.ge.f32.partialorder %v2275, 0.0
        %vm3134 = vcmp.ge.f32.partialorder %v2280, 0.0
        %vm3135 = vcmp.ge.f32.partialorder %v2285, 0.0
        %vm3136 = vcmp.ge.f32.partialorder %v2290, 0.0
        %vm3137 = vcmp.ge.f32.partialorder %v2295, 0.0
        %vm3138 = vcmp.ge.f32.partialorder %v2300, 0.0
        %vm3139 = vcmp.ge.f32.partialorder %v2305, 0.0
        %vm3140 = vcmp.ge.f32.partialorder %v2310, 0.0
        %vm3141 = vcmp.ge.f32.partialorder %v2315, 0.0
        %vm3142 = vcmp.ge.f32.partialorder %v2320, 0.0
        %vm3143 = vcmp.ge.f32.partialorder %v2325, 0.0
        %vm3144 = vcmp.ge.f32.partialorder %v2330, 0.0
        %vm3145 = vcmp.ge.f32.partialorder %v2335, 0.0
        %vm3146 = vcmp.ge.f32.partialorder %v2340, 0.0
        %vm3147 = vcmp.ge.f32.partialorder %v2345, 0.0
        %vm3148 = vcmp.ge.f32.partialorder %v2350, 0.0
        %vm3149 = vcmp.ge.f32.partialorder %v2355, 0.0
        %vm3150 = vcmp.ge.f32.partialorder %v2360, 0.0
        %vm3151 = vcmp.ge.f32.partialorder %v2365, 0.0
        %vm3152 = vcmp.ge.f32.partialorder %v2370, 0.0
        %vm3153 = vcmp.ge.f32.partialorder %v2375, 0.0
        %vm3154 = vcmp.ge.f32.partialorder %v2380, 0.0
        %vm3155 = vcmp.ge.f32.partialorder %v2385, 0.0
        %vm3156 = vcmp.ge.f32.partialorder %v2390, 0.0
        %vm3157 = vcmp.ge.f32.partialorder %v2395, 0.0
        %vm3158 = vcmp.ge.f32.partialorder %v2400, 0.0
        %vm3159 = vcmp.ge.f32.partialorder %v2405, 0.0
        %vm3160 = vcmp.ge.f32.partialorder %v2410, 0.0
        %vm3161 = vcmp.ge.f32.partialorder %v2415, 0.0
        %vm3162 = vcmp.ge.f32.partialorder %v2420, 0.0
        %vm3163 = vcmp.ge.f32.partialorder %v2425, 0.0
        %vm3164 = vcmp.ge.f32.partialorder %v2430, 0.0
        %vm3165 = vcmp.ge.f32.partialorder %v2435, 0.0
        %vm3166 = vcmp.ge.f32.partialorder %v2440, 0.0
        %vm3167 = vcmp.ge.f32.partialorder %v2445, 0.0
        %vm3168 = vcmp.ge.f32.partialorder %v2450, 0.0
        %vm3169 = vcmp.ge.f32.partialorder %v2455, 0.0
        %vm3170 = vcmp.ge.f32.partialorder %v2460, 0.0
        %vm3171 = vcmp.ge.f32.partialorder %v2465, 0.0
        %vm3172 = vcmp.ge.f32.partialorder %v2470, 0.0
        %vm3173 = vcmp.ge.f32.partialorder %v2475, 0.0
        %vm3174 = vcmp.ge.f32.partialorder %v2480, 0.0
        %vm3175 = vcmp.ge.f32.partialorder %v2485, 0.0
        %vm3176 = vcmp.ge.f32.partialorder %v2490, 0.0
        %vm3177 = vcmp.ge.f32.partialorder %v2495, 0.0
        %vm3178 = vcmp.ge.f32.partialorder %v2500, 0.0
        %vm3179 = vcmp.ge.f32.partialorder %v2505, 0.0
        %vm3180 = vcmp.ge.f32.partialorder %v2510, 0.0
        %vm3181 = vcmp.ge.f32.partialorder %v2515, 0.0
        %vm3182 = vcmp.ge.f32.partialorder %v2520, 0.0
        %vm3183 = vcmp.ge.f32.partialorder %v2525, 0.0
        %vm3184 = vcmp.ge.f32.partialorder %v2530, 0.0
        %vm3185 = vcmp.ge.f32.partialorder %v2535, 0.0
        %vm3186 = vcmp.ge.f32.partialorder %v2540, 0.0
        %vm3187 = vcmp.ge.f32.partialorder %v2545, 0.0
        %vm3188 = vcmp.ge.f32.partialorder %v2550, 0.0
        %vm3189 = vcmp.ge.f32.partialorder %v2555, 0.0
        %vm3190 = vcmp.ge.f32.partialorder %v2560, 0.0
        %vm3191 = vcmp.ge.f32.partialorder %v2565, 0.0
        %vm3192 = vcmp.ge.f32.partialorder %v2570, 0.0
        %vm3193 = vcmp.ge.f32.partialorder %v2575, 0.0
        %vm3194 = vcmp.ge.f32.partialorder %v2580, 0.0
        %vm3195 = vcmp.ge.f32.partialorder %v2585, 0.0
        %vm3196 = vcmp.ge.f32.partialorder %v2590, 0.0
        %vm3197 = vcmp.ge.f32.partialorder %v2595, 0.0
        %vm3198 = vcmp.ge.f32.partialorder %v2600, 0.0
        %vm3199 = vcmp.ge.f32.partialorder %v2605, 0.0
        %vm3200 = vcmp.ge.f32.partialorder %v2610, 0.0
        %vm3201 = vcmp.ge.f32.partialorder %v2615, 0.0
        %vm3202 = vcmp.ge.f32.partialorder %v2620, 0.0
        %vm3203 = vcmp.ge.f32.partialorder %v2625, 0.0
        %vm3204 = vcmp.ge.f32.partialorder %v2630, 0.0
        %vm3205 = vcmp.ge.f32.partialorder %v2635, 0.0
        %vm3206 = vcmp.ge.f32.partialorder %v2640, 0.0
        %vm3207 = vcmp.ge.f32.partialorder %v2645, 0.0
        %vm3208 = vcmp.ge.f32.partialorder %v2650, 0.0
        %vm3209 = vcmp.ge.f32.partialorder %v2655, 0.0
        %vm3210 = vcmp.ge.f32.partialorder %v2660, 0.0
        %vm3211 = vcmp.ge.f32.partialorder %v2665, 0.0
        %vm3212 = vcmp.ge.f32.partialorder %v2670, 0.0
        %vm3213 = vcmp.ge.f32.partialorder %v2675, 0.0
        %vm3214 = vcmp.ge.f32.partialorder %v2680, 0.0
        %vm3215 = vcmp.ge.f32.partialorder %v2685, 0.0
        %vm3216 = vcmp.ge.f32.partialorder %v2690, 0.0
        %vm3217 = vcmp.ge.f32.partialorder %v2695, 0.0
        %vm3218 = vcmp.ge.f32.partialorder %v2700, 0.0
        %vm3219 = vcmp.ge.f32.partialorder %v2705, 0.0
        %vm3220 = vcmp.ge.f32.partialorder %v2710, 0.0
        %vm3221 = vcmp.ge.f32.partialorder %v2715, 0.0
        %vm3222 = vcmp.ge.f32.partialorder %v2720, 0.0
        %vm3223 = vcmp.ge.f32.partialorder %v2725, 0.0
        %vm3224 = vcmp.ge.f32.partialorder %v2730, 0.0
        %vm3225 = vcmp.ge.f32.partialorder %v2735, 0.0
        %vm3226 = vcmp.ge.f32.partialorder %v2740, 0.0
        %vm3227 = vcmp.ge.f32.partialorder %v2745, 0.0
        %vm3228 = vcmp.ge.f32.partialorder %v2750, 0.0
        %vm3229 = vcmp.ge.f32.partialorder %v2755, 0.0
        %vm3230 = vcmp.ge.f32.partialorder %v2760, 0.0
        %vm3231 = vcmp.ge.f32.partialorder %v2765, 0.0
        %vm3232 = vcmp.ge.f32.partialorder %v2770, 0.0
        %vm3233 = vcmp.ge.f32.partialorder %v2775, 0.0
        %vm3234 = vcmp.ge.f32.partialorder %v2780, 0.0
        %vm3235 = vcmp.ge.f32.partialorder %v2785, 0.0
        %vm3236 = vcmp.ge.f32.partialorder %v2790, 0.0
        %vm3237 = vcmp.ge.f32.partialorder %v2795, 0.0
        %vm3238 = vcmp.ge.f32.partialorder %v2800, 0.0
        %vm3239 = vcmp.ge.f32.partialorder %v2805, 0.0
        %vm3240 = vcmp.ge.f32.partialorder %v2810, 0.0
        %vm3241 = vcmp.ge.f32.partialorder %v2815, 0.0
        %vm3242 = vcmp.ge.f32.partialorder %v2820, 0.0
        %vm3243 = vcmp.ge.f32.partialorder %v2825, 0.0
        %vm3244 = vcmp.ge.f32.partialorder %v2830, 0.0
        %vm3245 = vcmp.ge.f32.partialorder %v2835, 0.0
        %vm3246 = vcmp.ge.f32.partialorder %v2840, 0.0
        %vm3247 = vcmp.ge.f32.partialorder %v2845, 0.0
        %vm3248 = vcmp.ge.f32.partialorder %v2850, 0.0
        %vm3249 = vcmp.ge.f32.partialorder %v2855, 0.0
        %vm3250 = vcmp.ge.f32.partialorder %v2860, 0.0
        %vm3251 = vcmp.ge.f32.partialorder %v2865, 0.0
        %vm3252 = vcmp.ge.f32.partialorder %v2870, 0.0
        %vm3253 = vcmp.ge.f32.partialorder %v2875, 0.0
        %vm3254 = vcmp.ge.f32.partialorder %v2880, 0.0
        %vm3255 = vcmp.ge.f32.partialorder %v2885, 0.0
        %vm3256 = vcmp.ge.f32.partialorder %v2890, 0.0
        %vm3257 = vcmp.ge.f32.partialorder %v2895, 0.0
        %vm3258 = vcmp.ge.f32.partialorder %v2900, 0.0
        %vm3259 = vcmp.ge.f32.partialorder %v2905, 0.0
        %vm3260 = vcmp.ge.f32.partialorder %v2910, 0.0
        %vm3261 = vcmp.ge.f32.partialorder %v2915, 0.0
        %vm3262 = vcmp.ge.f32.partialorder %v2920, 0.0
        %vm3263 = vcmp.ge.f32.partialorder %v2925, 0.0
        %vm3264 = vcmp.ge.f32.partialorder %v2930, 0.0
        %vm3265 = vcmp.ge.f32.partialorder %v2935, 0.0
        %vm3266 = vcmp.ge.f32.partialorder %v2940, 0.0
        %vm3267 = vcmp.ge.f32.partialorder %v2945, 0.0
        %vm3268 = vcmp.ge.f32.partialorder %v2950, 0.0
        %vm3269 = vcmp.ge.f32.partialorder %v2955, 0.0
        %vm3270 = vcmp.ge.f32.partialorder %v2960, 0.0
        %vm3271 = vcmp.ge.f32.partialorder %v2965, 0.0
        %vm3272 = vcmp.ge.f32.partialorder %v2970, 0.0
        %vm3273 = vcmp.ge.f32.partialorder %v2975, 0.0
        %vm3274 = vcmp.ge.f32.partialorder %v2980, 0.0
        %vm3275 = vcmp.ge.f32.partialorder %v2985, 0.0
        %vm3276 = vcmp.ge.f32.partialorder %v2990, 0.0
        %vm3277 = vcmp.ge.f32.partialorder %v2995, 0.0
        %vm3278 = vcmp.ge.f32.partialorder %v3000, 0.0
        %vm3279 = vcmp.ge.f32.partialorder %v3005, 0.0
        %vm3280 = vcmp.ge.f32.partialorder %v3010, 0.0
        %vm3281 = vcmp.ge.f32.partialorder %v3015, 0.0
        %vm3282 = vcmp.ge.f32.partialorder %v3020, 0.0
        %vm3283 = vcmp.ge.f32.partialorder %v3025, 0.0
        %v3284 = vmul.f32 %v1750, 0.2
        %v3285 = vmul.f32 %v1755, 0.2
        %v3286 = vmul.f32 %v1760, 0.2
        %v3287 = vmul.f32 %v1765, 0.2
        %v3288 = vmul.f32 %v1770, 0.2
        %v3289 = vmul.f32 %v1775, 0.2
        %v3290 = vmul.f32 %v1780, 0.2
        %v3291 = vmul.f32 %v1785, 0.2
        %v3292 = vmul.f32 %v1790, 0.2
        %v3293 = vmul.f32 %v1795, 0.2
        %v3294 = vmul.f32 %v1800, 0.2
        %v3295 = vmul.f32 %v1805, 0.2
        %v3296 = vmul.f32 %v1810, 0.2
        %v3297 = vmul.f32 %v1815, 0.2
        %v3298 = vmul.f32 %v1820, 0.2
        %v3299 = vmul.f32 %v1825, 0.2
        %v3300 = vmul.f32 %v1830, 0.2
        %v3301 = vmul.f32 %v1835, 0.2
        %v3302 = vmul.f32 %v1840, 0.2
        %v3303 = vmul.f32 %v1845, 0.2
        %v3304 = vmul.f32 %v1850, 0.2
        %v3305 = vmul.f32 %v1855, 0.2
        %v3306 = vmul.f32 %v1860, 0.2
        %v3307 = vmul.f32 %v1865, 0.2
        %v3308 = vmul.f32 %v1870, 0.2
        %v3309 = vmul.f32 %v1875, 0.2
        %v3310 = vmul.f32 %v1880, 0.2
        %v3311 = vmul.f32 %v1885, 0.2
        %v3312 = vmul.f32 %v1890, 0.2
        %v3313 = vmul.f32 %v1895, 0.2
        %v3314 = vmul.f32 %v1900, 0.2
        %v3315 = vmul.f32 %v1905, 0.2
        %v3316 = vmul.f32 %v1910, 0.2
        %v3317 = vmul.f32 %v1915, 0.2
        %v3318 = vmul.f32 %v1920, 0.2
        %v3319 = vmul.f32 %v1925, 0.2
        %v3320 = vmul.f32 %v1930, 0.2
        %v3321 = vmul.f32 %v1935, 0.2
        %v3322 = vmul.f32 %v1940, 0.2
        %v3323 = vmul.f32 %v1945, 0.2
        %v3324 = vmul.f32 %v1950, 0.2
        %v3325 = vmul.f32 %v1955, 0.2
        %v3326 = vmul.f32 %v1960, 0.2
        %v3327 = vmul.f32 %v1965, 0.2
        %v3328 = vmul.f32 %v1970, 0.2
        %v3329 = vmul.f32 %v1975, 0.2
        %v3330 = vmul.f32 %v1980, 0.2
        %v3331 = vmul.f32 %v1985, 0.2
        %v3332 = vmul.f32 %v1990, 0.2
        %v3333 = vmul.f32 %v1995, 0.2
        %v3334 = vmul.f32 %v2000, 0.2
        %v3335 = vmul.f32 %v2005, 0.2
        %v3336 = vmul.f32 %v2010, 0.2
        %v3337 = vmul.f32 %v2015, 0.2
        %v3338 = vmul.f32 %v2020, 0.2
        %v3339 = vmul.f32 %v2025, 0.2
        %v3340 = vmul.f32 %v2030, 0.2
        %v3341 = vmul.f32 %v2035, 0.2
        %v3342 = vmul.f32 %v2040, 0.2
        %v3343 = vmul.f32 %v2045, 0.2
        %v3344 = vmul.f32 %v2050, 0.2
        %v3345 = vmul.f32 %v2055, 0.2
        %v3346 = vmul.f32 %v2060, 0.2
        %v3347 = vmul.f32 %v2065, 0.2
        %v3348 = vmul.f32 %v2070, 0.2
        %v3349 = vmul.f32 %v2075, 0.2
        %v3350 = vmul.f32 %v2080, 0.2
        %v3351 = vmul.f32 %v2085, 0.2
        %v3352 = vmul.f32 %v2090, 0.2
        %v3353 = vmul.f32 %v2095, 0.2
        %v3354 = vmul.f32 %v2100, 0.2
        %v3355 = vmul.f32 %v2105, 0.2
        %v3356 = vmul.f32 %v2110, 0.2
        %v3357 = vmul.f32 %v2115, 0.2
        %v3358 = vmul.f32 %v2120, 0.2
        %v3359 = vmul.f32 %v2125, 0.2
        %v3360 = vmul.f32 %v2130, 0.2
        %v3361 = vmul.f32 %v2135, 0.2
        %v3362 = vmul.f32 %v2140, 0.2
        %v3363 = vmul.f32 %v2145, 0.2
        %v3364 = vmul.f32 %v2150, 0.2
        %v3365 = vmul.f32 %v2155, 0.2
        %v3366 = vmul.f32 %v2160, 0.2
        %v3367 = vmul.f32 %v2165, 0.2
        %v3368 = vmul.f32 %v2170, 0.2
        %v3369 = vmul.f32 %v2175, 0.2
        %v3370 = vmul.f32 %v2180, 0.2
        %v3371 = vmul.f32 %v2185, 0.2
        %v3372 = vmul.f32 %v2190, 0.2
        %v3373 = vmul.f32 %v2195, 0.2
        %v3374 = vmul.f32 %v2200, 0.2
        %v3375 = vmul.f32 %v2205, 0.2
        %v3376 = vmul.f32 %v2210, 0.2
        %v3377 = vmul.f32 %v2215, 0.2
        %v3378 = vmul.f32 %v2220, 0.2
        %v3379 = vmul.f32 %v2225, 0.2
        %v3380 = vmul.f32 %v2230, 0.2
        %v3381 = vmul.f32 %v2235, 0.2
        %v3382 = vmul.f32 %v2240, 0.2
        %v3383 = vmul.f32 %v2245, 0.2
        %v3384 = vmul.f32 %v2250, 0.2
        %v3385 = vmul.f32 %v2255, 0.2
        %v3386 = vmul.f32 %v2260, 0.2
        %v3387 = vmul.f32 %v2265, 0.2
        %v3388 = vmul.f32 %v2270, 0.2
        %v3389 = vmul.f32 %v2275, 0.2
        %v3390 = vmul.f32 %v2280, 0.2
        %v3391 = vmul.f32 %v2285, 0.2
        %v3392 = vmul.f32 %v2290, 0.2
        %v3393 = vmul.f32 %v2295, 0.2
        %v3394 = vmul.f32 %v2300, 0.2
        %v3395 = vmul.f32 %v2305, 0.2
        %v3396 = vmul.f32 %v2310, 0.2
        %v3397 = vmul.f32 %v2315, 0.2
        %v3398 = vmul.f32 %v2320, 0.2
        %v3399 = vmul.f32 %v2325, 0.2
        %v3400 = vmul.f32 %v2330, 0.2
        %v3401 = vmul.f32 %v2335, 0.2
        %v3402 = vmul.f32 %v2340, 0.2
        %v3403 = vmul.f32 %v2345, 0.2
        %v3404 = vmul.f32 %v2350, 0.2
        %v3405 = vmul.f32 %v2355, 0.2
        %v3406 = vmul.f32 %v2360, 0.2
        %v3407 = vmul.f32 %v2365, 0.2
        %v3408 = vmul.f32 %v2370, 0.2
        %v3409 = vmul.f32 %v2375, 0.2
        %v3410 = vmul.f32 %v2380, 0.2
        %v3411 = vmul.f32 %v2385, 0.2
        %v3412 = vmul.f32 %v2390, 0.2
        %v3413 = vmul.f32 %v2395, 0.2
        %v3414 = vmul.f32 %v2400, 0.2
        %v3415 = vmul.f32 %v2405, 0.2
        %v3416 = vmul.f32 %v2410, 0.2
        %v3417 = vmul.f32 %v2415, 0.2
        %v3418 = vmul.f32 %v2420, 0.2
        %v3419 = vmul.f32 %v2425, 0.2
        %v3420 = vmul.f32 %v2430, 0.2
        %v3421 = vmul.f32 %v2435, 0.2
        %v3422 = vmul.f32 %v2440, 0.2
        %v3423 = vmul.f32 %v2445, 0.2
        %v3424 = vmul.f32 %v2450, 0.2
        %v3425 = vmul.f32 %v2455, 0.2
        %v3426 = vmul.f32 %v2460, 0.2
        %v3427 = vmul.f32 %v2465, 0.2
        %v3428 = vmul.f32 %v2470, 0.2
        %v3429 = vmul.f32 %v2475, 0.2
        %v3430 = vmul.f32 %v2480, 0.2
        %v3431 = vmul.f32 %v2485, 0.2
        %v3432 = vmul.f32 %v2490, 0.2
        %v3433 = vmul.f32 %v2495, 0.2
        %v3434 = vmul.f32 %v2500, 0.2
        %v3435 = vmul.f32 %v2505, 0.2
        %v3436 = vmul.f32 %v2510, 0.2
        %v3437 = vmul.f32 %v2515, 0.2
        %v3438 = vmul.f32 %v2520, 0.2
        %v3439 = vmul.f32 %v2525, 0.2
        %v3440 = vmul.f32 %v2530, 0.2
        %v3441 = vmul.f32 %v2535, 0.2
        %v3442 = vmul.f32 %v2540, 0.2
        %v3443 = vmul.f32 %v2545, 0.2
        %v3444 = vmul.f32 %v2550, 0.2
        %v3445 = vmul.f32 %v2555, 0.2
        %v3446 = vmul.f32 %v2560, 0.2
        %v3447 = vmul.f32 %v2565, 0.2
        %v3448 = vmul.f32 %v2570, 0.2
        %v3449 = vmul.f32 %v2575, 0.2
        %v3450 = vmul.f32 %v2580, 0.2
        %v3451 = vmul.f32 %v2585, 0.2
        %v3452 = vmul.f32 %v2590, 0.2
        %v3453 = vmul.f32 %v2595, 0.2
        %v3454 = vmul.f32 %v2600, 0.2
        %v3455 = vmul.f32 %v2605, 0.2
        %v3456 = vmul.f32 %v2610, 0.2
        %v3457 = vmul.f32 %v2615, 0.2
        %v3458 = vmul.f32 %v2620, 0.2
        %v3459 = vmul.f32 %v2625, 0.2
        %v3460 = vmul.f32 %v2630, 0.2
        %v3461 = vmul.f32 %v2635, 0.2
        %v3462 = vmul.f32 %v2640, 0.2
        %v3463 = vmul.f32 %v2645, 0.2
        %v3464 = vmul.f32 %v2650, 0.2
        %v3465 = vmul.f32 %v2655, 0.2
        %v3466 = vmul.f32 %v2660, 0.2
        %v3467 = vmul.f32 %v2665, 0.2
        %v3468 = vmul.f32 %v2670, 0.2
        %v3469 = vmul.f32 %v2675, 0.2
        %v3470 = vmul.f32 %v2680, 0.2
        %v3471 = vmul.f32 %v2685, 0.2
        %v3472 = vmul.f32 %v2690, 0.2
        %v3473 = vmul.f32 %v2695, 0.2
        %v3474 = vmul.f32 %v2700, 0.2
        %v3475 = vmul.f32 %v2705, 0.2
        %v3476 = vmul.f32 %v2710, 0.2
        %v3477 = vmul.f32 %v2715, 0.2
        %v3478 = vmul.f32 %v2720, 0.2
        %v3479 = vmul.f32 %v2725, 0.2
        %v3480 = vmul.f32 %v2730, 0.2
        %v3481 = vmul.f32 %v2735, 0.2
        %v3482 = vmul.f32 %v2740, 0.2
        %v3483 = vmul.f32 %v2745, 0.2
        %v3484 = vmul.f32 %v2750, 0.2
        %v3485 = vmul.f32 %v2755, 0.2
        %v3486 = vmul.f32 %v2760, 0.2
        %v3487 = vmul.f32 %v2765, 0.2
        %v3488 = vmul.f32 %v2770, 0.2
        %v3489 = vmul.f32 %v2775, 0.2
        %v3490 = vmul.f32 %v2780, 0.2
        %v3491 = vmul.f32 %v2785, 0.2
        %v3492 = vmul.f32 %v2790, 0.2
        %v3493 = vmul.f32 %v2795, 0.2
        %v3494 = vmul.f32 %v2800, 0.2
        %v3495 = vmul.f32 %v2805, 0.2
        %v3496 = vmul.f32 %v2810, 0.2
        %v3497 = vmul.f32 %v2815, 0.2
        %v3498 = vmul.f32 %v2820, 0.2
        %v3499 = vmul.f32 %v2825, 0.2
        %v3500 = vmul.f32 %v2830, 0.2
        %v3501 = vmul.f32 %v2835, 0.2
        %v3502 = vmul.f32 %v2840, 0.2
        %v3503 = vmul.f32 %v2845, 0.2
        %v3504 = vmul.f32 %v2850, 0.2
        %v3505 = vmul.f32 %v2855, 0.2
        %v3506 = vmul.f32 %v2860, 0.2
        %v3507 = vmul.f32 %v2865, 0.2
        %v3508 = vmul.f32 %v2870, 0.2
        %v3509 = vmul.f32 %v2875, 0.2
        %v3510 = vmul.f32 %v2880, 0.2
        %v3511 = vmul.f32 %v2885, 0.2
        %v3512 = vmul.f32 %v2890, 0.2
        %v3513 = vmul.f32 %v2895, 0.2
        %v3514 = vmul.f32 %v2900, 0.2
        %v3515 = vmul.f32 %v2905, 0.2
        %v3516 = vmul.f32 %v2910, 0.2
        %v3517 = vmul.f32 %v2915, 0.2
        %v3518 = vmul.f32 %v2920, 0.2
        %v3519 = vmul.f32 %v2925, 0.2
        %v3520 = vmul.f32 %v2930, 0.2
        %v3521 = vmul.f32 %v2935, 0.2
        %v3522 = vmul.f32 %v2940, 0.2
        %v3523 = vmul.f32 %v2945, 0.2
        %v3524 = vmul.f32 %v2950, 0.2
        %v3525 = vmul.f32 %v2955, 0.2
        %v3526 = vmul.f32 %v2960, 0.2
        %v3527 = vmul.f32 %v2965, 0.2
        %v3528 = vmul.f32 %v2970, 0.2
        %v3529 = vmul.f32 %v2975, 0.2
        %v3530 = vmul.f32 %v2980, 0.2
        %v3531 = vmul.f32 %v2985, 0.2
        %v3532 = vmul.f32 %v2990, 0.2
        %v3533 = vmul.f32 %v2995, 0.2
        %v3534 = vmul.f32 %v3000, 0.2
        %v3535 = vmul.f32 %v3005, 0.2
        %v3536 = vmul.f32 %v3010, 0.2
        %v3537 = vmul.f32 %v3015, 0.2
        %v3538 = vmul.f32 %v3020, 0.2
        %v3539 = vmul.f32 %v3025, 0.2
        %v3540 = vsel %vm3028, %v1750, %v3284
        %v3541 = vsel %vm3029, %v1755, %v3285
        %v3542 = vsel %vm3030, %v1760, %v3286
        %v3543 = vsel %vm3031, %v1765, %v3287
        %v3544 = vsel %vm3032, %v1770, %v3288
        %v3545 = vsel %vm3033, %v1775, %v3289
        %v3546 = vsel %vm3034, %v1780, %v3290
        %v3547 = vsel %vm3035, %v1785, %v3291
        %v3548 = vsel %vm3036, %v1790, %v3292
        %v3549 = vsel %vm3037, %v1795, %v3293
        %v3550 = vsel %vm3038, %v1800, %v3294
        %v3551 = vsel %vm3039, %v1805, %v3295
        %v3552 = vsel %vm3040, %v1810, %v3296
        %v3553 = vsel %vm3041, %v1815, %v3297
        %v3554 = vsel %vm3042, %v1820, %v3298
        %v3555 = vsel %vm3043, %v1825, %v3299
        %v3556 = vsel %vm3044, %v1830, %v3300
        %v3557 = vsel %vm3045, %v1835, %v3301
        %v3558 = vsel %vm3046, %v1840, %v3302
        %v3559 = vsel %vm3047, %v1845, %v3303
        %v3560 = vsel %vm3048, %v1850, %v3304
        %v3561 = vsel %vm3049, %v1855, %v3305
        %v3562 = vsel %vm3050, %v1860, %v3306
        %v3563 = vsel %vm3051, %v1865, %v3307
        %v3564 = vsel %vm3052, %v1870, %v3308
        %v3565 = vsel %vm3053, %v1875, %v3309
        %v3566 = vsel %vm3054, %v1880, %v3310
        %v3567 = vsel %vm3055, %v1885, %v3311
        %v3568 = vsel %vm3056, %v1890, %v3312
        %v3569 = vsel %vm3057, %v1895, %v3313
        %v3570 = vsel %vm3058, %v1900, %v3314
        %v3571 = vsel %vm3059, %v1905, %v3315
        %v3572 = vsel %vm3060, %v1910, %v3316
        %v3573 = vsel %vm3061, %v1915, %v3317
        %v3574 = vsel %vm3062, %v1920, %v3318
        %v3575 = vsel %vm3063, %v1925, %v3319
        %v3576 = vsel %vm3064, %v1930, %v3320
        %v3577 = vsel %vm3065, %v1935, %v3321
        %v3578 = vsel %vm3066, %v1940, %v3322
        %v3579 = vsel %vm3067, %v1945, %v3323
        %v3580 = vsel %vm3068, %v1950, %v3324
        %v3581 = vsel %vm3069, %v1955, %v3325
        %v3582 = vsel %vm3070, %v1960, %v3326
        %v3583 = vsel %vm3071, %v1965, %v3327
        %v3584 = vsel %vm3072, %v1970, %v3328
        %v3585 = vsel %vm3073, %v1975, %v3329
        %v3586 = vsel %vm3074, %v1980, %v3330
        %v3587 = vsel %vm3075, %v1985, %v3331
        %v3588 = vsel %vm3076, %v1990, %v3332
        %v3589 = vsel %vm3077, %v1995, %v3333
        %v3590 = vsel %vm3078, %v2000, %v3334
        %v3591 = vsel %vm3079, %v2005, %v3335
        %v3592 = vsel %vm3080, %v2010, %v3336
        %v3593 = vsel %vm3081, %v2015, %v3337
        %v3594 = vsel %vm3082, %v2020, %v3338
        %v3595 = vsel %vm3083, %v2025, %v3339
        %v3596 = vsel %vm3084, %v2030, %v3340
        %v3597 = vsel %vm3085, %v2035, %v3341
        %v3598 = vsel %vm3086, %v2040, %v3342
        %v3599 = vsel %vm3087, %v2045, %v3343
        %v3600 = vsel %vm3088, %v2050, %v3344
        %v3601 = vsel %vm3089, %v2055, %v3345
        %v3602 = vsel %vm3090, %v2060, %v3346
        %v3603 = vsel %vm3091, %v2065, %v3347
        %v3604 = vsel %vm3092, %v2070, %v3348
        %v3605 = vsel %vm3093, %v2075, %v3349
        %v3606 = vsel %vm3094, %v2080, %v3350
        %v3607 = vsel %vm3095, %v2085, %v3351
        %v3608 = vsel %vm3096, %v2090, %v3352
        %v3609 = vsel %vm3097, %v2095, %v3353
        %v3610 = vsel %vm3098, %v2100, %v3354
        %v3611 = vsel %vm3099, %v2105, %v3355
        %v3612 = vsel %vm3100, %v2110, %v3356
        %v3613 = vsel %vm3101, %v2115, %v3357
        %v3614 = vsel %vm3102, %v2120, %v3358
        %v3615 = vsel %vm3103, %v2125, %v3359
        %v3616 = vsel %vm3104, %v2130, %v3360
        %v3617 = vsel %vm3105, %v2135, %v3361
        %v3618 = vsel %vm3106, %v2140, %v3362
        %v3619 = vsel %vm3107, %v2145, %v3363
        %v3620 = vsel %vm3108, %v2150, %v3364
        %v3621 = vsel %vm3109, %v2155, %v3365
        %v3622 = vsel %vm3110, %v2160, %v3366
        %v3623 = vsel %vm3111, %v2165, %v3367
        %v3624 = vsel %vm3112, %v2170, %v3368
        %v3625 = vsel %vm3113, %v2175, %v3369
        %v3626 = vsel %vm3114, %v2180, %v3370
        %v3627 = vsel %vm3115, %v2185, %v3371
        %v3628 = vsel %vm3116, %v2190, %v3372
        %v3629 = vsel %vm3117, %v2195, %v3373
        %v3630 = vsel %vm3118, %v2200, %v3374
        %v3631 = vsel %vm3119, %v2205, %v3375
        %v3632 = vsel %vm3120, %v2210, %v3376
        %v3633 = vsel %vm3121, %v2215, %v3377
        %v3634 = vsel %vm3122, %v2220, %v3378
        %v3635 = vsel %vm3123, %v2225, %v3379
        %v3636 = vsel %vm3124, %v2230, %v3380
        %v3637 = vsel %vm3125, %v2235, %v3381
        %v3638 = vsel %vm3126, %v2240, %v3382
        %v3639 = vsel %vm3127, %v2245, %v3383
        %v3640 = vsel %vm3128, %v2250, %v3384
        %v3641 = vsel %vm3129, %v2255, %v3385
        %v3642 = vsel %vm3130, %v2260, %v3386
        %v3643 = vsel %vm3131, %v2265, %v3387
        %v3644 = vsel %vm3132, %v2270, %v3388
        %v3645 = vsel %vm3133, %v2275, %v3389
        %v3646 = vsel %vm3134, %v2280, %v3390
        %v3647 = vsel %vm3135, %v2285, %v3391
        %v3648 = vsel %vm3136, %v2290, %v3392
        %v3649 = vsel %vm3137, %v2295, %v3393
        %v3650 = vsel %vm3138, %v2300, %v3394
        %v3651 = vsel %vm3139, %v2305, %v3395
        %v3652 = vsel %vm3140, %v2310, %v3396
        %v3653 = vsel %vm3141, %v2315, %v3397
        %v3654 = vsel %vm3142, %v2320, %v3398
        %v3655 = vsel %vm3143, %v2325, %v3399
        %v3656 = vsel %vm3144, %v2330, %v3400
        %v3657 = vsel %vm3145, %v2335, %v3401
        %v3658 = vsel %vm3146, %v2340, %v3402
        %v3659 = vsel %vm3147, %v2345, %v3403
        %v3660 = vsel %vm3148, %v2350, %v3404
        %v3661 = vsel %vm3149, %v2355, %v3405
        %v3662 = vsel %vm3150, %v2360, %v3406
        %v3663 = vsel %vm3151, %v2365, %v3407
        %v3664 = vsel %vm3152, %v2370, %v3408
        %v3665 = vsel %vm3153, %v2375, %v3409
        %v3666 = vsel %vm3154, %v2380, %v3410
        %v3667 = vsel %vm3155, %v2385, %v3411
        %v3668 = vsel %vm3156, %v2390, %v3412
        %v3669 = vsel %vm3157, %v2395, %v3413
        %v3670 = vsel %vm3158, %v2400, %v3414
        %v3671 = vsel %vm3159, %v2405, %v3415
        %v3672 = vsel %vm3160, %v2410, %v3416
        %v3673 = vsel %vm3161, %v2415, %v3417
        %v3674 = vsel %vm3162, %v2420, %v3418
        %v3675 = vsel %vm3163, %v2425, %v3419
        %v3676 = vsel %vm3164, %v2430, %v3420
        %v3677 = vsel %vm3165, %v2435, %v3421
        %v3678 = vsel %vm3166, %v2440, %v3422
        %v3679 = vsel %vm3167, %v2445, %v3423
        %v3680 = vsel %vm3168, %v2450, %v3424
        %v3681 = vsel %vm3169, %v2455, %v3425
        %v3682 = vsel %vm3170, %v2460, %v3426
        %v3683 = vsel %vm3171, %v2465, %v3427
        %v3684 = vsel %vm3172, %v2470, %v3428
        %v3685 = vsel %vm3173, %v2475, %v3429
        %v3686 = vsel %vm3174, %v2480, %v3430
        %v3687 = vsel %vm3175, %v2485, %v3431
        %v3688 = vsel %vm3176, %v2490, %v3432
        %v3689 = vsel %vm3177, %v2495, %v3433
        %v3690 = vsel %vm3178, %v2500, %v3434
        %v3691 = vsel %vm3179, %v2505, %v3435
        %v3692 = vsel %vm3180, %v2510, %v3436
        %v3693 = vsel %vm3181, %v2515, %v3437
        %v3694 = vsel %vm3182, %v2520, %v3438
        %v3695 = vsel %vm3183, %v2525, %v3439
        %v3696 = vsel %vm3184, %v2530, %v3440
        %v3697 = vsel %vm3185, %v2535, %v3441
        %v3698 = vsel %vm3186, %v2540, %v3442
        %v3699 = vsel %vm3187, %v2545, %v3443
        %v3700 = vsel %vm3188, %v2550, %v3444
        %v3701 = vsel %vm3189, %v2555, %v3445
        %v3702 = vsel %vm3190, %v2560, %v3446
        %v3703 = vsel %vm3191, %v2565, %v3447
        %v3704 = vsel %vm3192, %v2570, %v3448
        %v3705 = vsel %vm3193, %v2575, %v3449
        %v3706 = vsel %vm3194, %v2580, %v3450
        %v3707 = vsel %vm3195, %v2585, %v3451
        %v3708 = vsel %vm3196, %v2590, %v3452
        %v3709 = vsel %vm3197, %v2595, %v3453
        %v3710 = vsel %vm3198, %v2600, %v3454
        %v3711 = vsel %vm3199, %v2605, %v3455
        %v3712 = vsel %vm3200, %v2610, %v3456
        %v3713 = vsel %vm3201, %v2615, %v3457
        %v3714 = vsel %vm3202, %v2620, %v3458
        %v3715 = vsel %vm3203, %v2625, %v3459
        %v3716 = vsel %vm3204, %v2630, %v3460
        %v3717 = vsel %vm3205, %v2635, %v3461
        %v3718 = vsel %vm3206, %v2640, %v3462
        %v3719 = vsel %vm3207, %v2645, %v3463
        %v3720 = vsel %vm3208, %v2650, %v3464
        %v3721 = vsel %vm3209, %v2655, %v3465
        %v3722 = vsel %vm3210, %v2660, %v3466
        %v3723 = vsel %vm3211, %v2665, %v3467
        %v3724 = vsel %vm3212, %v2670, %v3468
        %v3725 = vsel %vm3213, %v2675, %v3469
        %v3726 = vsel %vm3214, %v2680, %v3470
        %v3727 = vsel %vm3215, %v2685, %v3471
        %v3728 = vsel %vm3216, %v2690, %v3472
        %v3729 = vsel %vm3217, %v2695, %v3473
        %v3730 = vsel %vm3218, %v2700, %v3474
        %v3731 = vsel %vm3219, %v2705, %v3475
        %v3732 = vsel %vm3220, %v2710, %v3476
        %v3733 = vsel %vm3221, %v2715, %v3477
        %v3734 = vsel %vm3222, %v2720, %v3478
        %v3735 = vsel %vm3223, %v2725, %v3479
        %v3736 = vsel %vm3224, %v2730, %v3480
        %v3737 = vsel %vm3225, %v2735, %v3481
        %v3738 = vsel %vm3226, %v2740, %v3482
        %v3739 = vsel %vm3227, %v2745, %v3483
        %v3740 = vsel %vm3228, %v2750, %v3484
        %v3741 = vsel %vm3229, %v2755, %v3485
        %v3742 = vsel %vm3230, %v2760, %v3486
        %v3743 = vsel %vm3231, %v2765, %v3487
        %v3744 = vsel %vm3232, %v2770, %v3488
        %v3745 = vsel %vm3233, %v2775, %v3489
        %v3746 = vsel %vm3234, %v2780, %v3490
        %v3747 = vsel %vm3235, %v2785, %v3491
        %v3748 = vsel %vm3236, %v2790, %v3492
        %v3749 = vsel %vm3237, %v2795, %v3493
        %v3750 = vsel %vm3238, %v2800, %v3494
        %v3751 = vsel %vm3239, %v2805, %v3495
        %v3752 = vsel %vm3240, %v2810, %v3496
        %v3753 = vsel %vm3241, %v2815, %v3497
        %v3754 = vsel %vm3242, %v2820, %v3498
        %v3755 = vsel %vm3243, %v2825, %v3499
        %v3756 = vsel %vm3244, %v2830, %v3500
        %v3757 = vsel %vm3245, %v2835, %v3501
        %v3758 = vsel %vm3246, %v2840, %v3502
        %v3759 = vsel %vm3247, %v2845, %v3503
        %v3760 = vsel %vm3248, %v2850, %v3504
        %v3761 = vsel %vm3249, %v2855, %v3505
        %v3762 = vsel %vm3250, %v2860, %v3506
        %v3763 = vsel %vm3251, %v2865, %v3507
        %v3764 = vsel %vm3252, %v2870, %v3508
        %v3765 = vsel %vm3253, %v2875, %v3509
        %v3766 = vsel %vm3254, %v2880, %v3510
        %v3767 = vsel %vm3255, %v2885, %v3511
        %v3768 = vsel %vm3256, %v2890, %v3512
        %v3769 = vsel %vm3257, %v2895, %v3513
        %v3770 = vsel %vm3258, %v2900, %v3514
        %v3771 = vsel %vm3259, %v2905, %v3515
        %v3772 = vsel %vm3260, %v2910, %v3516
        %v3773 = vsel %vm3261, %v2915, %v3517
        %v3774 = vsel %vm3262, %v2920, %v3518
        %v3775 = vsel %vm3263, %v2925, %v3519
        %v3776 = vsel %vm3264, %v2930, %v3520
        %v3777 = vsel %vm3265, %v2935, %v3521
        %v3778 = vsel %vm3266, %v2940, %v3522
        %v3779 = vsel %vm3267, %v2945, %v3523
        %v3780 = vsel %vm3268, %v2950, %v3524
        %v3781 = vsel %vm3269, %v2955, %v3525
        %v3782 = vsel %vm3270, %v2960, %v3526
        %v3783 = vsel %vm3271, %v2965, %v3527
        %v3784 = vsel %vm3272, %v2970, %v3528
        %v3785 = vsel %vm3273, %v2975, %v3529
        %v3786 = vsel %vm3274, %v2980, %v3530
        %v3787 = vsel %vm3275, %v2985, %v3531
        %v3788 = vsel %vm3276, %v2990, %v3532
        %v3789 = vsel %vm3277, %v2995, %v3533
        %v3790 = vsel %vm3278, %v3000, %v3534
        %v3791 = vsel %vm3279, %v3005, %v3535
        %v3792 = vsel %vm3280, %v3010, %v3536
        %v3793 = vsel %vm3281, %v3015, %v3537
        %v3794 = vsel %vm3282, %v3020, %v3538
        %v3795 = vsel %vm3283, %v3025, %v3539
        %v3796 = vld [vmem:[%s3] sm:$0xff]
        %v3797 = vld [vmem:[%s3 + $0x8] sm:$0xff]
        %v3798 = vld [vmem:[%s3 + $0x10] sm:$0xff]
        %v3799 = vld [vmem:[%s3 + $0x18] sm:$0xff]
        %v3800 = vld [vmem:[%s3 + $0x20] sm:$0xff]
        %v3801 = vld [vmem:[%s3 + $0x28] sm:$0xff]
        %v3802 = vld [vmem:[%s3 + $0x30] sm:$0xff]
        %v3803 = vld [vmem:[%s3 + $0x38] sm:$0xff]
        %v3804 = vld [vmem:[%s3 + $0x40] sm:$0xff]
        %v3805 = vld [vmem:[%s3 + $0x48] sm:$0xff]
        %v3806 = vld [vmem:[%s3 + $0x50] sm:$0xff]
        %v3807 = vld [vmem:[%s3 + $0x58] sm:$0xff]
        %v3808 = vld [vmem:[%s3 + $0x60] sm:$0xff]
        %v3809 = vld [vmem:[%s3 + $0x68] sm:$0xff]
        %v3810 = vld [vmem:[%s3 + $0x70] sm:$0xff]
        %v3811 = vld [vmem:[%s3 + $0x78] sm:$0xff]
        %v3812 = vld [vmem:[%s3 + $0x80] sm:$0xff]
        %v3813 = vld [vmem:[%s3 + $0x88] sm:$0xff]
        %v3814 = vld [vmem:[%s3 + $0x90] sm:$0xff]
        %v3815 = vld [vmem:[%s3 + $0x98] sm:$0xff]
        %v3816 = vld [vmem:[%s3 + $0xa0] sm:$0xff]
        %v3817 = vld [vmem:[%s3 + $0xa8] sm:$0xff]
        %v3818 = vld [vmem:[%s3 + $0xb0] sm:$0xff]
        %v3819 = vld [vmem:[%s3 + $0xb8] sm:$0xff]
        %v3820 = vld [vmem:[%s3 + $0xc0] sm:$0xff]
        %v3821 = vld [vmem:[%s3 + $0xc8] sm:$0xff]
        %v3822 = vld [vmem:[%s3 + $0xd0] sm:$0xff]
        %v3823 = vld [vmem:[%s3 + $0xd8] sm:$0xff]
        %v3824 = vld [vmem:[%s3 + $0xe0] sm:$0xff]
        %v3825 = vld [vmem:[%s3 + $0xe8] sm:$0xff]
        %v3826 = vld [vmem:[%s3 + $0xf0] sm:$0xff]
        %v3827 = vld [vmem:[%s3 + $0xf8] sm:$0xff]
        %v3828 = vld [vmem:[%s3 + $0x100] sm:$0xff]
        %v3829 = vld [vmem:[%s3 + $0x108] sm:$0xff]
        %v3830 = vld [vmem:[%s3 + $0x110] sm:$0xff]
        %v3831 = vld [vmem:[%s3 + $0x118] sm:$0xff]
        %v3832 = vld [vmem:[%s3 + $0x120] sm:$0xff]
        %v3833 = vld [vmem:[%s3 + $0x128] sm:$0xff]
        %v3834 = vld [vmem:[%s3 + $0x130] sm:$0xff]
        %v3835 = vld [vmem:[%s3 + $0x138] sm:$0xff]
        %v3836 = vld [vmem:[%s3 + $0x140] sm:$0xff]
        %v3837 = vld [vmem:[%s3 + $0x148] sm:$0xff]
        %v3838 = vld [vmem:[%s3 + $0x150] sm:$0xff]
        %v3839 = vld [vmem:[%s3 + $0x158] sm:$0xff]
        %v3840 = vld [vmem:[%s3 + $0x160] sm:$0xff]
        %v3841 = vld [vmem:[%s3 + $0x168] sm:$0xff]
        %v3842 = vld [vmem:[%s3 + $0x170] sm:$0xff]
        %v3843 = vld [vmem:[%s3 + $0x178] sm:$0xff]
        %v3844 = vld [vmem:[%s3 + $0x180] sm:$0xff]
        %v3845 = vld [vmem:[%s3 + $0x188] sm:$0xff]
        %v3846 = vld [vmem:[%s3 + $0x190] sm:$0xff]
        %v3847 = vld [vmem:[%s3 + $0x198] sm:$0xff]
        %v3848 = vld [vmem:[%s3 + $0x1a0] sm:$0xff]
        %v3849 = vld [vmem:[%s3 + $0x1a8] sm:$0xff]
        %v3850 = vld [vmem:[%s3 + $0x1b0] sm:$0xff]
        %v3851 = vld [vmem:[%s3 + $0x1b8] sm:$0xff]
        %v3852 = vld [vmem:[%s3 + $0x1c0] sm:$0xff]
        %v3853 = vld [vmem:[%s3 + $0x1c8] sm:$0xff]
        %v3854 = vld [vmem:[%s3 + $0x1d0] sm:$0xff]
        %v3855 = vld [vmem:[%s3 + $0x1d8] sm:$0xff]
        %v3856 = vld [vmem:[%s3 + $0x1e0] sm:$0xff]
        %v3857 = vld [vmem:[%s3 + $0x1e8] sm:$0xff]
        %v3858 = vld [vmem:[%s3 + $0x1f0] sm:$0xff]
        %v3859 = vld [vmem:[%s3 + $0x1f8] sm:$0xff]
        %v3860 = vld [vmem:[%s3 + $0x200] sm:$0xff]
        %v3861 = vld [vmem:[%s3 + $0x208] sm:$0xff]
        %v3862 = vld [vmem:[%s3 + $0x210] sm:$0xff]
        %v3863 = vld [vmem:[%s3 + $0x218] sm:$0xff]
        %v3864 = vld [vmem:[%s3 + $0x220] sm:$0xff]
        %v3865 = vld [vmem:[%s3 + $0x228] sm:$0xff]
        %v3866 = vld [vmem:[%s3 + $0x230] sm:$0xff]
        %v3867 = vld [vmem:[%s3 + $0x238] sm:$0xff]
        %v3868 = vld [vmem:[%s3 + $0x240] sm:$0xff]
        %v3869 = vld [vmem:[%s3 + $0x248] sm:$0xff]
        %v3870 = vld [vmem:[%s3 + $0x250] sm:$0xff]
        %v3871 = vld [vmem:[%s3 + $0x258] sm:$0xff]
        %v3872 = vld [vmem:[%s3 + $0x260] sm:$0xff]
        %v3873 = vld [vmem:[%s3 + $0x268] sm:$0xff]
        %v3874 = vld [vmem:[%s3 + $0x270] sm:$0xff]
        %v3875 = vld [vmem:[%s3 + $0x278] sm:$0xff]
        %v3876 = vld [vmem:[%s3 + $0x280] sm:$0xff]
        %v3877 = vld [vmem:[%s3 + $0x288] sm:$0xff]
        %v3878 = vld [vmem:[%s3 + $0x290] sm:$0xff]
        %v3879 = vld [vmem:[%s3 + $0x298] sm:$0xff]
        %v3880 = vld [vmem:[%s3 + $0x2a0] sm:$0xff]
        %v3881 = vld [vmem:[%s3 + $0x2a8] sm:$0xff]
        %v3882 = vld [vmem:[%s3 + $0x2b0] sm:$0xff]
        %v3883 = vld [vmem:[%s3 + $0x2b8] sm:$0xff]
        %v3884 = vld [vmem:[%s3 + $0x2c0] sm:$0xff]
        %v3885 = vld [vmem:[%s3 + $0x2c8] sm:$0xff]
        %v3886 = vld [vmem:[%s3 + $0x2d0] sm:$0xff]
        %v3887 = vld [vmem:[%s3 + $0x2d8] sm:$0xff]
        %v3888 = vld [vmem:[%s3 + $0x2e0] sm:$0xff]
        %v3889 = vld [vmem:[%s3 + $0x2e8] sm:$0xff]
        %v3890 = vld [vmem:[%s3 + $0x2f0] sm:$0xff]
        %v3891 = vld [vmem:[%s3 + $0x2f8] sm:$0xff]
        %v3892 = vld [vmem:[%s3 + $0x300] sm:$0xff]
        %v3893 = vld [vmem:[%s3 + $0x308] sm:$0xff]
        %v3894 = vld [vmem:[%s3 + $0x310] sm:$0xff]
        %v3895 = vld [vmem:[%s3 + $0x318] sm:$0xff]
        %v3896 = vld [vmem:[%s3 + $0x320] sm:$0xff]
        %v3897 = vld [vmem:[%s3 + $0x328] sm:$0xff]
        %v3898 = vld [vmem:[%s3 + $0x330] sm:$0xff]
        %v3899 = vld [vmem:[%s3 + $0x338] sm:$0xff]
        %v3900 = vld [vmem:[%s3 + $0x340] sm:$0xff]
        %v3901 = vld [vmem:[%s3 + $0x348] sm:$0xff]
        %v3902 = vld [vmem:[%s3 + $0x350] sm:$0xff]
        %v3903 = vld [vmem:[%s3 + $0x358] sm:$0xff]
        %v3904 = vld [vmem:[%s3 + $0x360] sm:$0xff]
        %v3905 = vld [vmem:[%s3 + $0x368] sm:$0xff]
        %v3906 = vld [vmem:[%s3 + $0x370] sm:$0xff]
        %v3907 = vld [vmem:[%s3 + $0x378] sm:$0xff]
        %v3908 = vld [vmem:[%s3 + $0x380] sm:$0xff]
        %v3909 = vld [vmem:[%s3 + $0x388] sm:$0xff]
        %v3910 = vld [vmem:[%s3 + $0x390] sm:$0xff]
        %v3911 = vld [vmem:[%s3 + $0x398] sm:$0xff]
        %v3912 = vld [vmem:[%s3 + $0x3a0] sm:$0xff]
        %v3913 = vld [vmem:[%s3 + $0x3a8] sm:$0xff]
        %v3914 = vld [vmem:[%s3 + $0x3b0] sm:$0xff]
        %v3915 = vld [vmem:[%s3 + $0x3b8] sm:$0xff]
        %v3916 = vld [vmem:[%s3 + $0x3c0] sm:$0xff]
        %v3917 = vld [vmem:[%s3 + $0x3c8] sm:$0xff]
        %v3918 = vld [vmem:[%s3 + $0x3d0] sm:$0xff]
        %v3919 = vld [vmem:[%s3 + $0x3d8] sm:$0xff]
        %v3920 = vld [vmem:[%s3 + $0x3e0] sm:$0xff]
        %v3921 = vld [vmem:[%s3 + $0x3e8] sm:$0xff]
        %v3922 = vld [vmem:[%s3 + $0x3f0] sm:$0xff]
        %v3923 = vld [vmem:[%s3 + $0x3f8] sm:$0xff]
        %v3924 = vld [vmem:[%s4] sm:$0x1]
        %v3926 = vlaneseq
        %v3927 = vshrl.u32 %v3926, 7
        %v3928 = vsub.s32 0, %v3927
        %v3929 = vrot.slane %v3924, %v3928
        %3931 = vmatprep.subr.mxu0 0.0
        %3932 = vmatpush1.msra.mxu0 %v3811
        %3933 = vmatprep.subr.mxu0 0.0
        %3934 = vmatpush1.msra.mxu0 %v3810
        %3935 = vmatprep.subr.mxu0 0.0
        %3936 = vmatpush1.msra.mxu0 %v3809
        %3937 = vmatprep.subr.mxu0 0.0
        %3938 = vmatpush1.msra.mxu0 %v3808
        %3939 = vmatprep.subr.mxu0 0.0
        %3940 = vmatpush1.msra.mxu0 %v3807
        %3941 = vmatprep.subr.mxu0 0.0
        %3942 = vmatpush1.msra.mxu0 %v3806
        %3943 = vmatprep.subr.mxu0 0.0
        %3944 = vmatpush1.msra.mxu0 %v3805
        %3945 = vmatprep.subr.mxu0 0.0
        %3946 = vmatpush1.msra.mxu0 %v3804
        %3947 = vmatprep.subr.mxu0 0.0
        %3948 = vmatpush1.msra.mxu0 %v3803
        %3949 = vmatprep.subr.mxu0 0.0
        %3950 = vmatpush1.msra.mxu0 %v3802
        %3951 = vmatprep.subr.mxu0 0.0
        %3952 = vmatpush1.msra.mxu0 %v3801
        %3953 = vmatprep.subr.mxu0 0.0
        %3954 = vmatpush1.msra.mxu0 %v3800
        %3955 = vmatprep.subr.mxu0 0.0
        %3956 = vmatpush1.msra.mxu0 %v3799
        %3957 = vmatprep.subr.mxu0 0.0
        %3958 = vmatpush1.msra.mxu0 %v3798
        %3959 = vmatprep.subr.mxu0 0.0
        %3960 = vmatpush1.msra.mxu0 %v3797
        %3961 = vmatprep.subr.mxu0 0.0
        %3962 = vmatpush1.msra.mxu0 %v3796
        %3963 = vmatprep.subr.mxu0 0.0
        %3964 = vmatpush2.msra.mxu0 %v3827
        %3965 = vmatprep.subr.mxu0 0.0
        %3966 = vmatpush2.msra.mxu0 %v3826
        %3967 = vmatprep.subr.mxu0 0.0
        %3968 = vmatpush2.msra.mxu0 %v3825
        %3969 = vmatprep.subr.mxu0 0.0
        %3970 = vmatpush2.msra.mxu0 %v3824
        %3971 = vmatprep.subr.mxu0 0.0
        %3972 = vmatpush2.msra.mxu0 %v3823
        %3973 = vmatprep.subr.mxu0 0.0
        %3974 = vmatpush2.msra.mxu0 %v3822
        %3975 = vmatprep.subr.mxu0 0.0
        %3976 = vmatpush2.msra.mxu0 %v3821
        %3977 = vmatprep.subr.mxu0 0.0
        %3978 = vmatpush2.msra.mxu0 %v3820
        %3979 = vmatprep.subr.mxu0 0.0
        %3980 = vmatpush2.msra.mxu0 %v3819
        %3981 = vmatprep.subr.mxu0 0.0
        %3982 = vmatpush2.msra.mxu0 %v3818
        %3983 = vmatprep.subr.mxu0 0.0
        %3984 = vmatpush2.msra.mxu0 %v3817
        %3985 = vmatprep.subr.mxu0 0.0
        %3986 = vmatpush2.msra.mxu0 %v3816
        %3987 = vmatprep.subr.mxu0 0.0
        %3988 = vmatpush2.msra.mxu0 %v3815
        %3989 = vmatprep.subr.mxu0 0.0
        %3990 = vmatpush2.msra.mxu0 %v3814
        %3991 = vmatprep.subr.mxu0 0.0
        %3992 = vmatpush2.msra.mxu0 %v3813
        %3993 = vmatprep.subr.mxu0 0.0
        %3994 = vmatpush2.msra.mxu0 %v3812
        %3995 = vmatprep.mubr.f32.mxu0 %v3572
        %3996 = vmatmul.mubr.f32.gmra.mxu0 %v3540
        %v3997 = vpop.f32.mrf.mxu0
        %v3998 = vadd.f32 %v3929, %v3997
        %v3999 = vpop.f32.mrf.mxu0
        %4000 = vmatprep.mubr.f32.mxu0 %v3573
        %4001 = vmatmul.mubr.f32.gmra.mxu0 %v3541
        %v4002 = vpop.f32.mrf.mxu0
        %v4003 = vadd.f32 %v3929, %v4002
        %v4004 = vpop.f32.mrf.mxu0
        %4005 = vmatprep.mubr.f32.mxu0 %v3574
        %4006 = vmatmul.mubr.f32.gmra.mxu0 %v3542
        %v4007 = vpop.f32.mrf.mxu0
        %v4008 = vadd.f32 %v3929, %v4007
        %v4009 = vpop.f32.mrf.mxu0
        %4010 = vmatprep.mubr.f32.mxu0 %v3575
        %4011 = vmatmul.mubr.f32.gmra.mxu0 %v3543
        %v4012 = vpop.f32.mrf.mxu0
        %v4013 = vadd.f32 %v3929, %v4012
        %v4014 = vpop.f32.mrf.mxu0
        %4015 = vmatprep.mubr.f32.mxu0 %v3576
        %4016 = vmatmul.mubr.f32.gmra.mxu0 %v3544
        %v4017 = vpop.f32.mrf.mxu0
        %v4018 = vadd.f32 %v3929, %v4017
        %v4019 = vpop.f32.mrf.mxu0
        %4020 = vmatprep.mubr.f32.mxu0 %v3577
        %4021 = vmatmul.mubr.f32.gmra.mxu0 %v3545
        %v4022 = vpop.f32.mrf.mxu0
        %v4023 = vadd.f32 %v3929, %v4022
        %v4024 = vpop.f32.mrf.mxu0
        %4025 = vmatprep.mubr.f32.mxu0 %v3578
        %4026 = vmatmul.mubr.f32.gmra.mxu0 %v3546
        %v4027 = vpop.f32.mrf.mxu0
        %v4028 = vadd.f32 %v3929, %v4027
        %v4029 = vpop.f32.mrf.mxu0
        %4030 = vmatprep.mubr.f32.mxu0 %v3579
        %4031 = vmatmul.mubr.f32.gmra.mxu0 %v3547
        %v4032 = vpop.f32.mrf.mxu0
        %v4033 = vadd.f32 %v3929, %v4032
        %v4034 = vpop.f32.mrf.mxu0
        %4035 = vmatprep.mubr.f32.mxu0 %v3580
        %4036 = vmatmul.mubr.f32.gmra.mxu0 %v3548
        %v4037 = vpop.f32.mrf.mxu0
        %v4038 = vadd.f32 %v3929, %v4037
        %v4039 = vpop.f32.mrf.mxu0
        %4040 = vmatprep.mubr.f32.mxu0 %v3581
        %4041 = vmatmul.mubr.f32.gmra.mxu0 %v3549
        %v4042 = vpop.f32.mrf.mxu0
        %v4043 = vadd.f32 %v3929, %v4042
        %v4044 = vpop.f32.mrf.mxu0
        %4045 = vmatprep.mubr.f32.mxu0 %v3582
        %4046 = vmatmul.mubr.f32.gmra.mxu0 %v3550
        %v4047 = vpop.f32.mrf.mxu0
        %v4048 = vadd.f32 %v3929, %v4047
        %v4049 = vpop.f32.mrf.mxu0
        %4050 = vmatprep.mubr.f32.mxu0 %v3583
        %4051 = vmatmul.mubr.f32.gmra.mxu0 %v3551
        %v4052 = vpop.f32.mrf.mxu0
        %v4053 = vadd.f32 %v3929, %v4052
        %v4054 = vpop.f32.mrf.mxu0
        %4055 = vmatprep.mubr.f32.mxu0 %v3584
        %4056 = vmatmul.mubr.f32.gmra.mxu0 %v3552
        %v4057 = vpop.f32.mrf.mxu0
        %v4058 = vadd.f32 %v3929, %v4057
        %v4059 = vpop.f32.mrf.mxu0
        %4060 = vmatprep.mubr.f32.mxu0 %v3585
        %4061 = vmatmul.mubr.f32.gmra.mxu0 %v3553
        %v4062 = vpop.f32.mrf.mxu0
        %v4063 = vadd.f32 %v3929, %v4062
        %v4064 = vpop.f32.mrf.mxu0
        %4065 = vmatprep.mubr.f32.mxu0 %v3586
        %4066 = vmatmul.mubr.f32.gmra.mxu0 %v3554
        %v4067 = vpop.f32.mrf.mxu0
        %v4068 = vadd.f32 %v3929, %v4067
        %v4069 = vpop.f32.mrf.mxu0
        %4070 = vmatprep.mubr.f32.mxu0 %v3587
        %4071 = vmatmul.mubr.f32.gmra.mxu0 %v3555
        %v4072 = vpop.f32.mrf.mxu0
        %v4073 = vadd.f32 %v3929, %v4072
        %v4074 = vpop.f32.mrf.mxu0
        %4075 = vmatprep.mubr.f32.mxu0 %v3588
        %4076 = vmatmul.mubr.f32.gmra.mxu0 %v3556
        %v4077 = vpop.f32.mrf.mxu0
        %v4078 = vadd.f32 %v3929, %v4077
        %v4079 = vpop.f32.mrf.mxu0
        %4080 = vmatprep.mubr.f32.mxu0 %v3589
        %4081 = vmatmul.mubr.f32.gmra.mxu0 %v3557
        %v4082 = vpop.f32.mrf.mxu0
        %v4083 = vadd.f32 %v3929, %v4082
        %v4084 = vpop.f32.mrf.mxu0
        %4085 = vmatprep.mubr.f32.mxu0 %v3590
        %4086 = vmatmul.mubr.f32.gmra.mxu0 %v3558
        %v4087 = vpop.f32.mrf.mxu0
        %v4088 = vadd.f32 %v3929, %v4087
        %v4089 = vpop.f32.mrf.mxu0
        %4090 = vmatprep.mubr.f32.mxu0 %v3591
        %4091 = vmatmul.mubr.f32.gmra.mxu0 %v3559
        %v4092 = vpop.f32.mrf.mxu0
        %v4093 = vadd.f32 %v3929, %v4092
        %v4094 = vpop.f32.mrf.mxu0
        %4095 = vmatprep.mubr.f32.mxu0 %v3592
        %4096 = vmatmul.mubr.f32.gmra.mxu0 %v3560
        %v4097 = vpop.f32.mrf.mxu0
        %v4098 = vadd.f32 %v3929, %v4097
        %v4099 = vpop.f32.mrf.mxu0
        %4100 = vmatprep.mubr.f32.mxu0 %v3593
        %4101 = vmatmul.mubr.f32.gmra.mxu0 %v3561
        %v4102 = vpop.f32.mrf.mxu0
        %v4103 = vadd.f32 %v3929, %v4102
        %v4104 = vpop.f32.mrf.mxu0
        %4105 = vmatprep.mubr.f32.mxu0 %v3594
        %4106 = vmatmul.mubr.f32.gmra.mxu0 %v3562
        %v4107 = vpop.f32.mrf.mxu0
        %v4108 = vadd.f32 %v3929, %v4107
        %v4109 = vpop.f32.mrf.mxu0
        %4110 = vmatprep.mubr.f32.mxu0 %v3595
        %4111 = vmatmul.mubr.f32.gmra.mxu0 %v3563
        %v4112 = vpop.f32.mrf.mxu0
        %v4113 = vadd.f32 %v3929, %v4112
        %v4114 = vpop.f32.mrf.mxu0
        %4115 = vmatprep.mubr.f32.mxu0 %v3596
        %4116 = vmatmul.mubr.f32.gmra.mxu0 %v3564
        %v4117 = vpop.f32.mrf.mxu0
        %v4118 = vadd.f32 %v3929, %v4117
        %v4119 = vpop.f32.mrf.mxu0
        %4120 = vmatprep.mubr.f32.mxu0 %v3597
        %4121 = vmatmul.mubr.f32.gmra.mxu0 %v3565
        %v4122 = vpop.f32.mrf.mxu0
        %v4123 = vadd.f32 %v3929, %v4122
        %v4124 = vpop.f32.mrf.mxu0
        %4125 = vmatprep.mubr.f32.mxu0 %v3598
        %4126 = vmatmul.mubr.f32.gmra.mxu0 %v3566
        %v4127 = vpop.f32.mrf.mxu0
        %v4128 = vadd.f32 %v3929, %v4127
        %v4129 = vpop.f32.mrf.mxu0
        %4130 = vmatprep.mubr.f32.mxu0 %v3599
        %4131 = vmatmul.mubr.f32.gmra.mxu0 %v3567
        %v4132 = vpop.f32.mrf.mxu0
        %v4133 = vadd.f32 %v3929, %v4132
        %v4134 = vpop.f32.mrf.mxu0
        %4135 = vmatprep.mubr.f32.mxu0 %v3600
        %4136 = vmatmul.mubr.f32.gmra.mxu0 %v3568
        %v4137 = vpop.f32.mrf.mxu0
        %v4138 = vadd.f32 %v3929, %v4137
        %v4139 = vpop.f32.mrf.mxu0
        %4140 = vmatprep.mubr.f32.mxu0 %v3601
        %4141 = vmatmul.mubr.f32.gmra.mxu0 %v3569
        %v4142 = vpop.f32.mrf.mxu0
        %v4143 = vadd.f32 %v3929, %v4142
        %v4144 = vpop.f32.mrf.mxu0
        %4145 = vmatprep.mubr.f32.mxu0 %v3602
        %4146 = vmatmul.mubr.f32.gmra.mxu0 %v3570
        %v4147 = vpop.f32.mrf.mxu0
        %v4148 = vadd.f32 %v3929, %v4147
        %v4149 = vpop.f32.mrf.mxu0
        %4150 = vmatprep.mubr.f32.mxu0 %v3603
        %4151 = vmatmul.mubr.f32.gmra.mxu0 %v3571
        %v4152 = vpop.f32.mrf.mxu0
        %v4153 = vadd.f32 %v3929, %v4152
        %v4154 = vpop.f32.mrf.mxu0
        %4155 = vdwg.mxu0
        %4156 = vmatprep.subr.mxu0 0.0
        %4157 = vmatpush1.msra.mxu0 %v3843
        %4158 = vmatprep.subr.mxu0 0.0
        %4159 = vmatpush1.msra.mxu0 %v3842
        %4160 = vmatprep.subr.mxu0 0.0
        %4161 = vmatpush1.msra.mxu0 %v3841
        %4162 = vmatprep.subr.mxu0 0.0
        %4163 = vmatpush1.msra.mxu0 %v3840
        %4164 = vmatprep.subr.mxu0 0.0
        %4165 = vmatpush1.msra.mxu0 %v3839
        %4166 = vmatprep.subr.mxu0 0.0
        %4167 = vmatpush1.msra.mxu0 %v3838
        %4168 = vmatprep.subr.mxu0 0.0
        %4169 = vmatpush1.msra.mxu0 %v3837
        %4170 = vmatprep.subr.mxu0 0.0
        %4171 = vmatpush1.msra.mxu0 %v3836
        %4172 = vmatprep.subr.mxu0 0.0
        %4173 = vmatpush1.msra.mxu0 %v3835
        %4174 = vmatprep.subr.mxu0 0.0
        %4175 = vmatpush1.msra.mxu0 %v3834
        %4176 = vmatprep.subr.mxu0 0.0
        %4177 = vmatpush1.msra.mxu0 %v3833
        %4178 = vmatprep.subr.mxu0 0.0
        %4179 = vmatpush1.msra.mxu0 %v3832
        %4180 = vmatprep.subr.mxu0 0.0
        %4181 = vmatpush1.msra.mxu0 %v3831
        %4182 = vmatprep.subr.mxu0 0.0
        %4183 = vmatpush1.msra.mxu0 %v3830
        %4184 = vmatprep.subr.mxu0 0.0
        %4185 = vmatpush1.msra.mxu0 %v3829
        %4186 = vmatprep.subr.mxu0 0.0
        %4187 = vmatpush1.msra.mxu0 %v3828
        %4188 = vmatprep.subr.mxu0 0.0
        %4189 = vmatpush2.msra.mxu0 %v3859
        %4190 = vmatprep.subr.mxu0 0.0
        %4191 = vmatpush2.msra.mxu0 %v3858
        %4192 = vmatprep.subr.mxu0 0.0
        %4193 = vmatpush2.msra.mxu0 %v3857
        %4194 = vmatprep.subr.mxu0 0.0
        %4195 = vmatpush2.msra.mxu0 %v3856
        %4196 = vmatprep.subr.mxu0 0.0
        %4197 = vmatpush2.msra.mxu0 %v3855
        %4198 = vmatprep.subr.mxu0 0.0
        %4199 = vmatpush2.msra.mxu0 %v3854
        %4200 = vmatprep.subr.mxu0 0.0
        %4201 = vmatpush2.msra.mxu0 %v3853
        %4202 = vmatprep.subr.mxu0 0.0
        %4203 = vmatpush2.msra.mxu0 %v3852
        %4204 = vmatprep.subr.mxu0 0.0
        %4205 = vmatpush2.msra.mxu0 %v3851
        %4206 = vmatprep.subr.mxu0 0.0
        %4207 = vmatpush2.msra.mxu0 %v3850
        %4208 = vmatprep.subr.mxu0 0.0
        %4209 = vmatpush2.msra.mxu0 %v3849
        %4210 = vmatprep.subr.mxu0 0.0
        %4211 = vmatpush2.msra.mxu0 %v3848
        %4212 = vmatprep.subr.mxu0 0.0
        %4213 = vmatpush2.msra.mxu0 %v3847
        %4214 = vmatprep.subr.mxu0 0.0
        %4215 = vmatpush2.msra.mxu0 %v3846
        %4216 = vmatprep.subr.mxu0 0.0
        %4217 = vmatpush2.msra.mxu0 %v3845
        %4218 = vmatprep.subr.mxu0 0.0
        %4219 = vmatpush2.msra.mxu0 %v3844
        %4220 = vmatprep.mubr.f32.mxu0 %v3636
        %4221 = vmatmul.mubr.f32.gmra.mxu0 %v3604
        %v4222 = vpop.f32.mrf.mxu0
        %v4223 = vadd.f32 %v3998, %v4222
        %v4224 = vpop.f32.mrf.mxu0
        %4225 = vmatprep.mubr.f32.mxu0 %v3637
        %4226 = vmatmul.mubr.f32.gmra.mxu0 %v3605
        %v4227 = vpop.f32.mrf.mxu0
        %v4228 = vadd.f32 %v4003, %v4227
        %v4229 = vpop.f32.mrf.mxu0
        %4230 = vmatprep.mubr.f32.mxu0 %v3638
        %4231 = vmatmul.mubr.f32.gmra.mxu0 %v3606
        %v4232 = vpop.f32.mrf.mxu0
        %v4233 = vadd.f32 %v4008, %v4232
        %v4234 = vpop.f32.mrf.mxu0
        %4235 = vmatprep.mubr.f32.mxu0 %v3639
        %4236 = vmatmul.mubr.f32.gmra.mxu0 %v3607
        %v4237 = vpop.f32.mrf.mxu0
        %v4238 = vadd.f32 %v4013, %v4237
        %v4239 = vpop.f32.mrf.mxu0
        %4240 = vmatprep.mubr.f32.mxu0 %v3640
        %4241 = vmatmul.mubr.f32.gmra.mxu0 %v3608
        %v4242 = vpop.f32.mrf.mxu0
        %v4243 = vadd.f32 %v4018, %v4242
        %v4244 = vpop.f32.mrf.mxu0
        %4245 = vmatprep.mubr.f32.mxu0 %v3641
        %4246 = vmatmul.mubr.f32.gmra.mxu0 %v3609
        %v4247 = vpop.f32.mrf.mxu0
        %v4248 = vadd.f32 %v4023, %v4247
        %v4249 = vpop.f32.mrf.mxu0
        %4250 = vmatprep.mubr.f32.mxu0 %v3642
        %4251 = vmatmul.mubr.f32.gmra.mxu0 %v3610
        %v4252 = vpop.f32.mrf.mxu0
        %v4253 = vadd.f32 %v4028, %v4252
        %v4254 = vpop.f32.mrf.mxu0
        %4255 = vmatprep.mubr.f32.mxu0 %v3643
        %4256 = vmatmul.mubr.f32.gmra.mxu0 %v3611
        %v4257 = vpop.f32.mrf.mxu0
        %v4258 = vadd.f32 %v4033, %v4257
        %v4259 = vpop.f32.mrf.mxu0
        %4260 = vmatprep.mubr.f32.mxu0 %v3644
        %4261 = vmatmul.mubr.f32.gmra.mxu0 %v3612
        %v4262 = vpop.f32.mrf.mxu0
        %v4263 = vadd.f32 %v4038, %v4262
        %v4264 = vpop.f32.mrf.mxu0
        %4265 = vmatprep.mubr.f32.mxu0 %v3645
        %4266 = vmatmul.mubr.f32.gmra.mxu0 %v3613
        %v4267 = vpop.f32.mrf.mxu0
        %v4268 = vadd.f32 %v4043, %v4267
        %v4269 = vpop.f32.mrf.mxu0
        %4270 = vmatprep.mubr.f32.mxu0 %v3646
        %4271 = vmatmul.mubr.f32.gmra.mxu0 %v3614
        %v4272 = vpop.f32.mrf.mxu0
        %v4273 = vadd.f32 %v4048, %v4272
        %v4274 = vpop.f32.mrf.mxu0
        %4275 = vmatprep.mubr.f32.mxu0 %v3647
        %4276 = vmatmul.mubr.f32.gmra.mxu0 %v3615
        %v4277 = vpop.f32.mrf.mxu0
        %v4278 = vadd.f32 %v4053, %v4277
        %v4279 = vpop.f32.mrf.mxu0
        %4280 = vmatprep.mubr.f32.mxu0 %v3648
        %4281 = vmatmul.mubr.f32.gmra.mxu0 %v3616
        %v4282 = vpop.f32.mrf.mxu0
        %v4283 = vadd.f32 %v4058, %v4282
        %v4284 = vpop.f32.mrf.mxu0
        %4285 = vmatprep.mubr.f32.mxu0 %v3649
        %4286 = vmatmul.mubr.f32.gmra.mxu0 %v3617
        %v4287 = vpop.f32.mrf.mxu0
        %v4288 = vadd.f32 %v4063, %v4287
        %v4289 = vpop.f32.mrf.mxu0
        %4290 = vmatprep.mubr.f32.mxu0 %v3650
        %4291 = vmatmul.mubr.f32.gmra.mxu0 %v3618
        %v4292 = vpop.f32.mrf.mxu0
        %v4293 = vadd.f32 %v4068, %v4292
        %v4294 = vpop.f32.mrf.mxu0
        %4295 = vmatprep.mubr.f32.mxu0 %v3651
        %4296 = vmatmul.mubr.f32.gmra.mxu0 %v3619
        %v4297 = vpop.f32.mrf.mxu0
        %v4298 = vadd.f32 %v4073, %v4297
        %v4299 = vpop.f32.mrf.mxu0
        %4300 = vmatprep.mubr.f32.mxu0 %v3652
        %4301 = vmatmul.mubr.f32.gmra.mxu0 %v3620
        %v4302 = vpop.f32.mrf.mxu0
        %v4303 = vadd.f32 %v4078, %v4302
        %v4304 = vpop.f32.mrf.mxu0
        %4305 = vmatprep.mubr.f32.mxu0 %v3653
        %4306 = vmatmul.mubr.f32.gmra.mxu0 %v3621
        %v4307 = vpop.f32.mrf.mxu0
        %v4308 = vadd.f32 %v4083, %v4307
        %v4309 = vpop.f32.mrf.mxu0
        %4310 = vmatprep.mubr.f32.mxu0 %v3654
        %4311 = vmatmul.mubr.f32.gmra.mxu0 %v3622
        %v4312 = vpop.f32.mrf.mxu0
        %v4313 = vadd.f32 %v4088, %v4312
        %v4314 = vpop.f32.mrf.mxu0
        %4315 = vmatprep.mubr.f32.mxu0 %v3655
        %4316 = vmatmul.mubr.f32.gmra.mxu0 %v3623
        %v4317 = vpop.f32.mrf.mxu0
        %v4318 = vadd.f32 %v4093, %v4317
        %v4319 = vpop.f32.mrf.mxu0
        %4320 = vmatprep.mubr.f32.mxu0 %v3656
        %4321 = vmatmul.mubr.f32.gmra.mxu0 %v3624
        %v4322 = vpop.f32.mrf.mxu0
        %v4323 = vadd.f32 %v4098, %v4322
        %v4324 = vpop.f32.mrf.mxu0
        %4325 = vmatprep.mubr.f32.mxu0 %v3657
        %4326 = vmatmul.mubr.f32.gmra.mxu0 %v3625
        %v4327 = vpop.f32.mrf.mxu0
        %v4328 = vadd.f32 %v4103, %v4327
        %v4329 = vpop.f32.mrf.mxu0
        %4330 = vmatprep.mubr.f32.mxu0 %v3658
        %4331 = vmatmul.mubr.f32.gmra.mxu0 %v3626
        %v4332 = vpop.f32.mrf.mxu0
        %v4333 = vadd.f32 %v4108, %v4332
        %v4334 = vpop.f32.mrf.mxu0
        %4335 = vmatprep.mubr.f32.mxu0 %v3659
        %4336 = vmatmul.mubr.f32.gmra.mxu0 %v3627
        %v4337 = vpop.f32.mrf.mxu0
        %v4338 = vadd.f32 %v4113, %v4337
        %v4339 = vpop.f32.mrf.mxu0
        %4340 = vmatprep.mubr.f32.mxu0 %v3660
        %4341 = vmatmul.mubr.f32.gmra.mxu0 %v3628
        %v4342 = vpop.f32.mrf.mxu0
        %v4343 = vadd.f32 %v4118, %v4342
        %v4344 = vpop.f32.mrf.mxu0
        %4345 = vmatprep.mubr.f32.mxu0 %v3661
        %4346 = vmatmul.mubr.f32.gmra.mxu0 %v3629
        %v4347 = vpop.f32.mrf.mxu0
        %v4348 = vadd.f32 %v4123, %v4347
        %v4349 = vpop.f32.mrf.mxu0
        %4350 = vmatprep.mubr.f32.mxu0 %v3662
        %4351 = vmatmul.mubr.f32.gmra.mxu0 %v3630
        %v4352 = vpop.f32.mrf.mxu0
        %v4353 = vadd.f32 %v4128, %v4352
        %v4354 = vpop.f32.mrf.mxu0
        %4355 = vmatprep.mubr.f32.mxu0 %v3663
        %4356 = vmatmul.mubr.f32.gmra.mxu0 %v3631
        %v4357 = vpop.f32.mrf.mxu0
        %v4358 = vadd.f32 %v4133, %v4357
        %v4359 = vpop.f32.mrf.mxu0
        %4360 = vmatprep.mubr.f32.mxu0 %v3664
        %4361 = vmatmul.mubr.f32.gmra.mxu0 %v3632
        %v4362 = vpop.f32.mrf.mxu0
        %v4363 = vadd.f32 %v4138, %v4362
        %v4364 = vpop.f32.mrf.mxu0
        %4365 = vmatprep.mubr.f32.mxu0 %v3665
        %4366 = vmatmul.mubr.f32.gmra.mxu0 %v3633
        %v4367 = vpop.f32.mrf.mxu0
        %v4368 = vadd.f32 %v4143, %v4367
        %v4369 = vpop.f32.mrf.mxu0
        %4370 = vmatprep.mubr.f32.mxu0 %v3666
        %4371 = vmatmul.mubr.f32.gmra.mxu0 %v3634
        %v4372 = vpop.f32.mrf.mxu0
        %v4373 = vadd.f32 %v4148, %v4372
        %v4374 = vpop.f32.mrf.mxu0
        %4375 = vmatprep.mubr.f32.mxu0 %v3667
        %4376 = vmatmul.mubr.f32.gmra.mxu0 %v3635
        %v4377 = vpop.f32.mrf.mxu0
        %v4378 = vadd.f32 %v4153, %v4377
        %v4379 = vpop.f32.mrf.mxu0
        %4380 = vdwg.mxu0
        %4381 = vmatprep.subr.mxu0 0.0
        %4382 = vmatpush1.msra.mxu0 %v3875
        %4383 = vmatprep.subr.mxu0 0.0
        %4384 = vmatpush1.msra.mxu0 %v3874
        %4385 = vmatprep.subr.mxu0 0.0
        %4386 = vmatpush1.msra.mxu0 %v3873
        %4387 = vmatprep.subr.mxu0 0.0
        %4388 = vmatpush1.msra.mxu0 %v3872
        %4389 = vmatprep.subr.mxu0 0.0
        %4390 = vmatpush1.msra.mxu0 %v3871
        %4391 = vmatprep.subr.mxu0 0.0
        %4392 = vmatpush1.msra.mxu0 %v3870
        %4393 = vmatprep.subr.mxu0 0.0
        %4394 = vmatpush1.msra.mxu0 %v3869
        %4395 = vmatprep.subr.mxu0 0.0
        %4396 = vmatpush1.msra.mxu0 %v3868
        %4397 = vmatprep.subr.mxu0 0.0
        %4398 = vmatpush1.msra.mxu0 %v3867
        %4399 = vmatprep.subr.mxu0 0.0
        %4400 = vmatpush1.msra.mxu0 %v3866
        %4401 = vmatprep.subr.mxu0 0.0
        %4402 = vmatpush1.msra.mxu0 %v3865
        %4403 = vmatprep.subr.mxu0 0.0
        %4404 = vmatpush1.msra.mxu0 %v3864
        %4405 = vmatprep.subr.mxu0 0.0
        %4406 = vmatpush1.msra.mxu0 %v3863
        %4407 = vmatprep.subr.mxu0 0.0
        %4408 = vmatpush1.msra.mxu0 %v3862
        %4409 = vmatprep.subr.mxu0 0.0
        %4410 = vmatpush1.msra.mxu0 %v3861
        %4411 = vmatprep.subr.mxu0 0.0
        %4412 = vmatpush1.msra.mxu0 %v3860
        %4413 = vmatprep.subr.mxu0 0.0
        %4414 = vmatpush2.msra.mxu0 %v3891
        %4415 = vmatprep.subr.mxu0 0.0
        %4416 = vmatpush2.msra.mxu0 %v3890
        %4417 = vmatprep.subr.mxu0 0.0
        %4418 = vmatpush2.msra.mxu0 %v3889
        %4419 = vmatprep.subr.mxu0 0.0
        %4420 = vmatpush2.msra.mxu0 %v3888
        %4421 = vmatprep.subr.mxu0 0.0
        %4422 = vmatpush2.msra.mxu0 %v3887
        %4423 = vmatprep.subr.mxu0 0.0
        %4424 = vmatpush2.msra.mxu0 %v3886
        %4425 = vmatprep.subr.mxu0 0.0
        %4426 = vmatpush2.msra.mxu0 %v3885
        %4427 = vmatprep.subr.mxu0 0.0
        %4428 = vmatpush2.msra.mxu0 %v3884
        %4429 = vmatprep.subr.mxu0 0.0
        %4430 = vmatpush2.msra.mxu0 %v3883
        %4431 = vmatprep.subr.mxu0 0.0
        %4432 = vmatpush2.msra.mxu0 %v3882
        %4433 = vmatprep.subr.mxu0 0.0
        %4434 = vmatpush2.msra.mxu0 %v3881
        %4435 = vmatprep.subr.mxu0 0.0
        %4436 = vmatpush2.msra.mxu0 %v3880
        %4437 = vmatprep.subr.mxu0 0.0
        %4438 = vmatpush2.msra.mxu0 %v3879
        %4439 = vmatprep.subr.mxu0 0.0
        %4440 = vmatpush2.msra.mxu0 %v3878
        %4441 = vmatprep.subr.mxu0 0.0
        %4442 = vmatpush2.msra.mxu0 %v3877
        %4443 = vmatprep.subr.mxu0 0.0
        %4444 = vmatpush2.msra.mxu0 %v3876
        %4445 = vmatprep.mubr.f32.mxu0 %v3700
        %4446 = vmatmul.mubr.f32.gmra.mxu0 %v3668
        %v4447 = vpop.f32.mrf.mxu0
        %v4448 = vadd.f32 %v4223, %v4447
        %v4449 = vpop.f32.mrf.mxu0
        %4450 = vmatprep.mubr.f32.mxu0 %v3701
        %4451 = vmatmul.mubr.f32.gmra.mxu0 %v3669
        %v4452 = vpop.f32.mrf.mxu0
        %v4453 = vadd.f32 %v4228, %v4452
        %v4454 = vpop.f32.mrf.mxu0
        %4455 = vmatprep.mubr.f32.mxu0 %v3702
        %4456 = vmatmul.mubr.f32.gmra.mxu0 %v3670
        %v4457 = vpop.f32.mrf.mxu0
        %v4458 = vadd.f32 %v4233, %v4457
        %v4459 = vpop.f32.mrf.mxu0
        %4460 = vmatprep.mubr.f32.mxu0 %v3703
        %4461 = vmatmul.mubr.f32.gmra.mxu0 %v3671
        %v4462 = vpop.f32.mrf.mxu0
        %v4463 = vadd.f32 %v4238, %v4462
        %v4464 = vpop.f32.mrf.mxu0
        %4465 = vmatprep.mubr.f32.mxu0 %v3704
        %4466 = vmatmul.mubr.f32.gmra.mxu0 %v3672
        %v4467 = vpop.f32.mrf.mxu0
        %v4468 = vadd.f32 %v4243, %v4467
        %v4469 = vpop.f32.mrf.mxu0
        %4470 = vmatprep.mubr.f32.mxu0 %v3705
        %4471 = vmatmul.mubr.f32.gmra.mxu0 %v3673
        %v4472 = vpop.f32.mrf.mxu0
        %v4473 = vadd.f32 %v4248, %v4472
        %v4474 = vpop.f32.mrf.mxu0
        %4475 = vmatprep.mubr.f32.mxu0 %v3706
        %4476 = vmatmul.mubr.f32.gmra.mxu0 %v3674
        %v4477 = vpop.f32.mrf.mxu0
        %v4478 = vadd.f32 %v4253, %v4477
        %v4479 = vpop.f32.mrf.mxu0
        %4480 = vmatprep.mubr.f32.mxu0 %v3707
        %4481 = vmatmul.mubr.f32.gmra.mxu0 %v3675
        %v4482 = vpop.f32.mrf.mxu0
        %v4483 = vadd.f32 %v4258, %v4482
        %v4484 = vpop.f32.mrf.mxu0
        %4485 = vmatprep.mubr.f32.mxu0 %v3708
        %4486 = vmatmul.mubr.f32.gmra.mxu0 %v3676
        %v4487 = vpop.f32.mrf.mxu0
        %v4488 = vadd.f32 %v4263, %v4487
        %v4489 = vpop.f32.mrf.mxu0
        %4490 = vmatprep.mubr.f32.mxu0 %v3709
        %4491 = vmatmul.mubr.f32.gmra.mxu0 %v3677
        %v4492 = vpop.f32.mrf.mxu0
        %v4493 = vadd.f32 %v4268, %v4492
        %v4494 = vpop.f32.mrf.mxu0
        %4495 = vmatprep.mubr.f32.mxu0 %v3710
        %4496 = vmatmul.mubr.f32.gmra.mxu0 %v3678
        %v4497 = vpop.f32.mrf.mxu0
        %v4498 = vadd.f32 %v4273, %v4497
        %v4499 = vpop.f32.mrf.mxu0
        %4500 = vmatprep.mubr.f32.mxu0 %v3711
        %4501 = vmatmul.mubr.f32.gmra.mxu0 %v3679
        %v4502 = vpop.f32.mrf.mxu0
        %v4503 = vadd.f32 %v4278, %v4502
        %v4504 = vpop.f32.mrf.mxu0
        %4505 = vmatprep.mubr.f32.mxu0 %v3712
        %4506 = vmatmul.mubr.f32.gmra.mxu0 %v3680
        %v4507 = vpop.f32.mrf.mxu0
        %v4508 = vadd.f32 %v4283, %v4507
        %v4509 = vpop.f32.mrf.mxu0
        %4510 = vmatprep.mubr.f32.mxu0 %v3713
        %4511 = vmatmul.mubr.f32.gmra.mxu0 %v3681
        %v4512 = vpop.f32.mrf.mxu0
        %v4513 = vadd.f32 %v4288, %v4512
        %v4514 = vpop.f32.mrf.mxu0
        %4515 = vmatprep.mubr.f32.mxu0 %v3714
        %4516 = vmatmul.mubr.f32.gmra.mxu0 %v3682
        %v4517 = vpop.f32.mrf.mxu0
        %v4518 = vadd.f32 %v4293, %v4517
        %v4519 = vpop.f32.mrf.mxu0
        %4520 = vmatprep.mubr.f32.mxu0 %v3715
        %4521 = vmatmul.mubr.f32.gmra.mxu0 %v3683
        %v4522 = vpop.f32.mrf.mxu0
        %v4523 = vadd.f32 %v4298, %v4522
        %v4524 = vpop.f32.mrf.mxu0
        %4525 = vmatprep.mubr.f32.mxu0 %v3716
        %4526 = vmatmul.mubr.f32.gmra.mxu0 %v3684
        %v4527 = vpop.f32.mrf.mxu0
        %v4528 = vadd.f32 %v4303, %v4527
        %v4529 = vpop.f32.mrf.mxu0
        %4530 = vmatprep.mubr.f32.mxu0 %v3717
        %4531 = vmatmul.mubr.f32.gmra.mxu0 %v3685
        %v4532 = vpop.f32.mrf.mxu0
        %v4533 = vadd.f32 %v4308, %v4532
        %v4534 = vpop.f32.mrf.mxu0
        %4535 = vmatprep.mubr.f32.mxu0 %v3718
        %4536 = vmatmul.mubr.f32.gmra.mxu0 %v3686
        %v4537 = vpop.f32.mrf.mxu0
        %v4538 = vadd.f32 %v4313, %v4537
        %v4539 = vpop.f32.mrf.mxu0
        %4540 = vmatprep.mubr.f32.mxu0 %v3719
        %4541 = vmatmul.mubr.f32.gmra.mxu0 %v3687
        %v4542 = vpop.f32.mrf.mxu0
        %v4543 = vadd.f32 %v4318, %v4542
        %v4544 = vpop.f32.mrf.mxu0
        %4545 = vmatprep.mubr.f32.mxu0 %v3720
        %4546 = vmatmul.mubr.f32.gmra.mxu0 %v3688
        %v4547 = vpop.f32.mrf.mxu0
        %v4548 = vadd.f32 %v4323, %v4547
        %v4549 = vpop.f32.mrf.mxu0
        %4550 = vmatprep.mubr.f32.mxu0 %v3721
        %4551 = vmatmul.mubr.f32.gmra.mxu0 %v3689
        %v4552 = vpop.f32.mrf.mxu0
        %v4553 = vadd.f32 %v4328, %v4552
        %v4554 = vpop.f32.mrf.mxu0
        %4555 = vmatprep.mubr.f32.mxu0 %v3722
        %4556 = vmatmul.mubr.f32.gmra.mxu0 %v3690
        %v4557 = vpop.f32.mrf.mxu0
        %v4558 = vadd.f32 %v4333, %v4557
        %v4559 = vpop.f32.mrf.mxu0
        %4560 = vmatprep.mubr.f32.mxu0 %v3723
        %4561 = vmatmul.mubr.f32.gmra.mxu0 %v3691
        %v4562 = vpop.f32.mrf.mxu0
        %v4563 = vadd.f32 %v4338, %v4562
        %v4564 = vpop.f32.mrf.mxu0
        %4565 = vmatprep.mubr.f32.mxu0 %v3724
        %4566 = vmatmul.mubr.f32.gmra.mxu0 %v3692
        %v4567 = vpop.f32.mrf.mxu0
        %v4568 = vadd.f32 %v4343, %v4567
        %v4569 = vpop.f32.mrf.mxu0
        %4570 = vmatprep.mubr.f32.mxu0 %v3725
        %4571 = vmatmul.mubr.f32.gmra.mxu0 %v3693
        %v4572 = vpop.f32.mrf.mxu0
        %v4573 = vadd.f32 %v4348, %v4572
        %v4574 = vpop.f32.mrf.mxu0
        %4575 = vmatprep.mubr.f32.mxu0 %v3726
        %4576 = vmatmul.mubr.f32.gmra.mxu0 %v3694
        %v4577 = vpop.f32.mrf.mxu0
        %v4578 = vadd.f32 %v4353, %v4577
        %v4579 = vpop.f32.mrf.mxu0
        %4580 = vmatprep.mubr.f32.mxu0 %v3727
        %4581 = vmatmul.mubr.f32.gmra.mxu0 %v3695
        %v4582 = vpop.f32.mrf.mxu0
        %v4583 = vadd.f32 %v4358, %v4582
        %v4584 = vpop.f32.mrf.mxu0
        %4585 = vmatprep.mubr.f32.mxu0 %v3728
        %4586 = vmatmul.mubr.f32.gmra.mxu0 %v3696
        %v4587 = vpop.f32.mrf.mxu0
        %v4588 = vadd.f32 %v4363, %v4587
        %v4589 = vpop.f32.mrf.mxu0
        %4590 = vmatprep.mubr.f32.mxu0 %v3729
        %4591 = vmatmul.mubr.f32.gmra.mxu0 %v3697
        %v4592 = vpop.f32.mrf.mxu0
        %v4593 = vadd.f32 %v4368, %v4592
        %v4594 = vpop.f32.mrf.mxu0
        %4595 = vmatprep.mubr.f32.mxu0 %v3730
        %4596 = vmatmul.mubr.f32.gmra.mxu0 %v3698
        %v4597 = vpop.f32.mrf.mxu0
        %v4598 = vadd.f32 %v4373, %v4597
        %v4599 = vpop.f32.mrf.mxu0
        %4600 = vmatprep.mubr.f32.mxu0 %v3731
        %4601 = vmatmul.mubr.f32.gmra.mxu0 %v3699
        %v4602 = vpop.f32.mrf.mxu0
        %v4603 = vadd.f32 %v4378, %v4602
        %v4604 = vpop.f32.mrf.mxu0
        %4605 = vdwg.mxu0
        %4606 = vmatprep.subr.mxu0 0.0
        %4607 = vmatpush1.msra.mxu0 %v3907
        %4608 = vmatprep.subr.mxu0 0.0
        %4609 = vmatpush1.msra.mxu0 %v3906
        %4610 = vmatprep.subr.mxu0 0.0
        %4611 = vmatpush1.msra.mxu0 %v3905
        %4612 = vmatprep.subr.mxu0 0.0
        %4613 = vmatpush1.msra.mxu0 %v3904
        %4614 = vmatprep.subr.mxu0 0.0
        %4615 = vmatpush1.msra.mxu0 %v3903
        %4616 = vmatprep.subr.mxu0 0.0
        %4617 = vmatpush1.msra.mxu0 %v3902
        %4618 = vmatprep.subr.mxu0 0.0
        %4619 = vmatpush1.msra.mxu0 %v3901
        %4620 = vmatprep.subr.mxu0 0.0
        %4621 = vmatpush1.msra.mxu0 %v3900
        %4622 = vmatprep.subr.mxu0 0.0
        %4623 = vmatpush1.msra.mxu0 %v3899
        %4624 = vmatprep.subr.mxu0 0.0
        %4625 = vmatpush1.msra.mxu0 %v3898
        %4626 = vmatprep.subr.mxu0 0.0
        %4627 = vmatpush1.msra.mxu0 %v3897
        %4628 = vmatprep.subr.mxu0 0.0
        %4629 = vmatpush1.msra.mxu0 %v3896
        %4630 = vmatprep.subr.mxu0 0.0
        %4631 = vmatpush1.msra.mxu0 %v3895
        %4632 = vmatprep.subr.mxu0 0.0
        %4633 = vmatpush1.msra.mxu0 %v3894
        %4634 = vmatprep.subr.mxu0 0.0
        %4635 = vmatpush1.msra.mxu0 %v3893
        %4636 = vmatprep.subr.mxu0 0.0
        %4637 = vmatpush1.msra.mxu0 %v3892
        %4638 = vmatprep.subr.mxu0 0.0
        %4639 = vmatpush2.msra.mxu0 %v3923
        %4640 = vmatprep.subr.mxu0 0.0
        %4641 = vmatpush2.msra.mxu0 %v3922
        %4642 = vmatprep.subr.mxu0 0.0
        %4643 = vmatpush2.msra.mxu0 %v3921
        %4644 = vmatprep.subr.mxu0 0.0
        %4645 = vmatpush2.msra.mxu0 %v3920
        %4646 = vmatprep.subr.mxu0 0.0
        %4647 = vmatpush2.msra.mxu0 %v3919
        %4648 = vmatprep.subr.mxu0 0.0
        %4649 = vmatpush2.msra.mxu0 %v3918
        %4650 = vmatprep.subr.mxu0 0.0
        %4651 = vmatpush2.msra.mxu0 %v3917
        %4652 = vmatprep.subr.mxu0 0.0
        %4653 = vmatpush2.msra.mxu0 %v3916
        %4654 = vmatprep.subr.mxu0 0.0
        %4655 = vmatpush2.msra.mxu0 %v3915
        %4656 = vmatprep.subr.mxu0 0.0
        %4657 = vmatpush2.msra.mxu0 %v3914
        %4658 = vmatprep.subr.mxu0 0.0
        %4659 = vmatpush2.msra.mxu0 %v3913
        %4660 = vmatprep.subr.mxu0 0.0
        %4661 = vmatpush2.msra.mxu0 %v3912
        %4662 = vmatprep.subr.mxu0 0.0
        %4663 = vmatpush2.msra.mxu0 %v3911
        %4664 = vmatprep.subr.mxu0 0.0
        %4665 = vmatpush2.msra.mxu0 %v3910
        %4666 = vmatprep.subr.mxu0 0.0
        %4667 = vmatpush2.msra.mxu0 %v3909
        %4668 = vmatprep.subr.mxu0 0.0
        %4669 = vmatpush2.msra.mxu0 %v3908
        %4670 = vmatprep.mubr.f32.mxu0 %v3764
        %4671 = vmatmul.mubr.f32.gmra.mxu0 %v3732
        %v4672 = vpop.f32.mrf.mxu0
        %v4673 = vadd.f32 %v4448, %v4672
        %v4674 = vpop.f32.mrf.mxu0
        %4675 = vmatprep.mubr.f32.mxu0 %v3765
        %4676 = vmatmul.mubr.f32.gmra.mxu0 %v3733
        %v4677 = vpop.f32.mrf.mxu0
        %v4678 = vadd.f32 %v4453, %v4677
        %v4679 = vpop.f32.mrf.mxu0
        %4680 = vmatprep.mubr.f32.mxu0 %v3766
        %4681 = vmatmul.mubr.f32.gmra.mxu0 %v3734
        %v4682 = vpop.f32.mrf.mxu0
        %v4683 = vadd.f32 %v4458, %v4682
        %v4684 = vpop.f32.mrf.mxu0
        %4685 = vmatprep.mubr.f32.mxu0 %v3767
        %4686 = vmatmul.mubr.f32.gmra.mxu0 %v3735
        %v4687 = vpop.f32.mrf.mxu0
        %v4688 = vadd.f32 %v4463, %v4687
        %v4689 = vpop.f32.mrf.mxu0
        %4690 = vmatprep.mubr.f32.mxu0 %v3768
        %4691 = vmatmul.mubr.f32.gmra.mxu0 %v3736
        %v4692 = vpop.f32.mrf.mxu0
        %v4693 = vadd.f32 %v4468, %v4692
        %v4694 = vpop.f32.mrf.mxu0
        %4695 = vmatprep.mubr.f32.mxu0 %v3769
        %4696 = vmatmul.mubr.f32.gmra.mxu0 %v3737
        %v4697 = vpop.f32.mrf.mxu0
        %v4698 = vadd.f32 %v4473, %v4697
        %v4699 = vpop.f32.mrf.mxu0
        %4700 = vmatprep.mubr.f32.mxu0 %v3770
        %4701 = vmatmul.mubr.f32.gmra.mxu0 %v3738
        %v4702 = vpop.f32.mrf.mxu0
        %v4703 = vadd.f32 %v4478, %v4702
        %v4704 = vpop.f32.mrf.mxu0
        %4705 = vmatprep.mubr.f32.mxu0 %v3771
        %4706 = vmatmul.mubr.f32.gmra.mxu0 %v3739
        %v4707 = vpop.f32.mrf.mxu0
        %v4708 = vadd.f32 %v4483, %v4707
        %v4709 = vpop.f32.mrf.mxu0
        %4710 = vmatprep.mubr.f32.mxu0 %v3772
        %4711 = vmatmul.mubr.f32.gmra.mxu0 %v3740
        %v4712 = vpop.f32.mrf.mxu0
        %v4713 = vadd.f32 %v4488, %v4712
        %v4714 = vpop.f32.mrf.mxu0
        %4715 = vmatprep.mubr.f32.mxu0 %v3773
        %4716 = vmatmul.mubr.f32.gmra.mxu0 %v3741
        %v4717 = vpop.f32.mrf.mxu0
        %v4718 = vadd.f32 %v4493, %v4717
        %v4719 = vpop.f32.mrf.mxu0
        %4720 = vmatprep.mubr.f32.mxu0 %v3774
        %4721 = vmatmul.mubr.f32.gmra.mxu0 %v3742
        %v4722 = vpop.f32.mrf.mxu0
        %v4723 = vadd.f32 %v4498, %v4722
        %v4724 = vpop.f32.mrf.mxu0
        %4725 = vmatprep.mubr.f32.mxu0 %v3775
        %4726 = vmatmul.mubr.f32.gmra.mxu0 %v3743
        %v4727 = vpop.f32.mrf.mxu0
        %v4728 = vadd.f32 %v4503, %v4727
        %v4729 = vpop.f32.mrf.mxu0
        %4730 = vmatprep.mubr.f32.mxu0 %v3776
        %4731 = vmatmul.mubr.f32.gmra.mxu0 %v3744
        %v4732 = vpop.f32.mrf.mxu0
        %v4733 = vadd.f32 %v4508, %v4732
        %v4734 = vpop.f32.mrf.mxu0
        %4735 = vmatprep.mubr.f32.mxu0 %v3777
        %4736 = vmatmul.mubr.f32.gmra.mxu0 %v3745
        %v4737 = vpop.f32.mrf.mxu0
        %v4738 = vadd.f32 %v4513, %v4737
        %v4739 = vpop.f32.mrf.mxu0
        %4740 = vmatprep.mubr.f32.mxu0 %v3778
        %4741 = vmatmul.mubr.f32.gmra.mxu0 %v3746
        %v4742 = vpop.f32.mrf.mxu0
        %v4743 = vadd.f32 %v4518, %v4742
        %v4744 = vpop.f32.mrf.mxu0
        %4745 = vmatprep.mubr.f32.mxu0 %v3779
        %4746 = vmatmul.mubr.f32.gmra.mxu0 %v3747
        %v4747 = vpop.f32.mrf.mxu0
        %v4748 = vadd.f32 %v4523, %v4747
        %v4749 = vpop.f32.mrf.mxu0
        %4750 = vmatprep.mubr.f32.mxu0 %v3780
        %4751 = vmatmul.mubr.f32.gmra.mxu0 %v3748
        %v4752 = vpop.f32.mrf.mxu0
        %v4753 = vadd.f32 %v4528, %v4752
        %v4754 = vpop.f32.mrf.mxu0
        %4755 = vmatprep.mubr.f32.mxu0 %v3781
        %4756 = vmatmul.mubr.f32.gmra.mxu0 %v3749
        %v4757 = vpop.f32.mrf.mxu0
        %v4758 = vadd.f32 %v4533, %v4757
        %v4759 = vpop.f32.mrf.mxu0
        %4760 = vmatprep.mubr.f32.mxu0 %v3782
        %4761 = vmatmul.mubr.f32.gmra.mxu0 %v3750
        %v4762 = vpop.f32.mrf.mxu0
        %v4763 = vadd.f32 %v4538, %v4762
        %v4764 = vpop.f32.mrf.mxu0
        %4765 = vmatprep.mubr.f32.mxu0 %v3783
        %4766 = vmatmul.mubr.f32.gmra.mxu0 %v3751
        %v4767 = vpop.f32.mrf.mxu0
        %v4768 = vadd.f32 %v4543, %v4767
        %v4769 = vpop.f32.mrf.mxu0
        %4770 = vmatprep.mubr.f32.mxu0 %v3784
        %4771 = vmatmul.mubr.f32.gmra.mxu0 %v3752
        %v4772 = vpop.f32.mrf.mxu0
        %v4773 = vadd.f32 %v4548, %v4772
        %v4774 = vpop.f32.mrf.mxu0
        %4775 = vmatprep.mubr.f32.mxu0 %v3785
        %4776 = vmatmul.mubr.f32.gmra.mxu0 %v3753
        %v4777 = vpop.f32.mrf.mxu0
        %v4778 = vadd.f32 %v4553, %v4777
        %v4779 = vpop.f32.mrf.mxu0
        %4780 = vmatprep.mubr.f32.mxu0 %v3786
        %4781 = vmatmul.mubr.f32.gmra.mxu0 %v3754
        %v4782 = vpop.f32.mrf.mxu0
        %v4783 = vadd.f32 %v4558, %v4782
        %v4784 = vpop.f32.mrf.mxu0
        %4785 = vmatprep.mubr.f32.mxu0 %v3787
        %4786 = vmatmul.mubr.f32.gmra.mxu0 %v3755
        %v4787 = vpop.f32.mrf.mxu0
        %v4788 = vadd.f32 %v4563, %v4787
        %v4789 = vpop.f32.mrf.mxu0
        %4790 = vmatprep.mubr.f32.mxu0 %v3788
        %4791 = vmatmul.mubr.f32.gmra.mxu0 %v3756
        %v4792 = vpop.f32.mrf.mxu0
        %v4793 = vadd.f32 %v4568, %v4792
        %v4794 = vpop.f32.mrf.mxu0
        %4795 = vmatprep.mubr.f32.mxu0 %v3789
        %4796 = vmatmul.mubr.f32.gmra.mxu0 %v3757
        %v4797 = vpop.f32.mrf.mxu0
        %v4798 = vadd.f32 %v4573, %v4797
        %v4799 = vpop.f32.mrf.mxu0
        %4800 = vmatprep.mubr.f32.mxu0 %v3790
        %4801 = vmatmul.mubr.f32.gmra.mxu0 %v3758
        %v4802 = vpop.f32.mrf.mxu0
        %v4803 = vadd.f32 %v4578, %v4802
        %v4804 = vpop.f32.mrf.mxu0
        %4805 = vmatprep.mubr.f32.mxu0 %v3791
        %4806 = vmatmul.mubr.f32.gmra.mxu0 %v3759
        %v4807 = vpop.f32.mrf.mxu0
        %v4808 = vadd.f32 %v4583, %v4807
        %v4809 = vpop.f32.mrf.mxu0
        %4810 = vmatprep.mubr.f32.mxu0 %v3792
        %4811 = vmatmul.mubr.f32.gmra.mxu0 %v3760
        %v4812 = vpop.f32.mrf.mxu0
        %v4813 = vadd.f32 %v4588, %v4812
        %v4814 = vpop.f32.mrf.mxu0
        %4815 = vmatprep.mubr.f32.mxu0 %v3793
        %4816 = vmatmul.mubr.f32.gmra.mxu0 %v3761
        %v4817 = vpop.f32.mrf.mxu0
        %v4818 = vadd.f32 %v4593, %v4817
        %v4819 = vpop.f32.mrf.mxu0
        %4820 = vmatprep.mubr.f32.mxu0 %v3794
        %4821 = vmatmul.mubr.f32.gmra.mxu0 %v3762
        %v4822 = vpop.f32.mrf.mxu0
        %v4823 = vadd.f32 %v4598, %v4822
        %v4824 = vpop.f32.mrf.mxu0
        %4825 = vmatprep.mubr.f32.mxu0 %v3795
        %4826 = vmatmul.mubr.f32.gmra.mxu0 %v3763
        %v4827 = vpop.f32.mrf.mxu0
        %v4828 = vadd.f32 %v4603, %v4827
        %v4829 = vpop.f32.mrf.mxu0
        %4830 = vdwg.mxu0
        %vm4831 = vcmp.ge.f32.partialorder %v4673, 0.0
        %vm4832 = vcmp.ge.f32.partialorder %v4678, 0.0
        %vm4833 = vcmp.ge.f32.partialorder %v4683, 0.0
        %vm4834 = vcmp.ge.f32.partialorder %v4688, 0.0
        %vm4835 = vcmp.ge.f32.partialorder %v4693, 0.0
        %vm4836 = vcmp.ge.f32.partialorder %v4698, 0.0
        %vm4837 = vcmp.ge.f32.partialorder %v4703, 0.0
        %vm4838 = vcmp.ge.f32.partialorder %v4708, 0.0
        %vm4839 = vcmp.ge.f32.partialorder %v4713, 0.0
        %vm4840 = vcmp.ge.f32.partialorder %v4718, 0.0
        %vm4841 = vcmp.ge.f32.partialorder %v4723, 0.0
        %vm4842 = vcmp.ge.f32.partialorder %v4728, 0.0
        %vm4843 = vcmp.ge.f32.partialorder %v4733, 0.0
        %vm4844 = vcmp.ge.f32.partialorder %v4738, 0.0
        %vm4845 = vcmp.ge.f32.partialorder %v4743, 0.0
        %vm4846 = vcmp.ge.f32.partialorder %v4748, 0.0
        %vm4847 = vcmp.ge.f32.partialorder %v4753, 0.0
        %vm4848 = vcmp.ge.f32.partialorder %v4758, 0.0
        %vm4849 = vcmp.ge.f32.partialorder %v4763, 0.0
        %vm4850 = vcmp.ge.f32.partialorder %v4768, 0.0
        %vm4851 = vcmp.ge.f32.partialorder %v4773, 0.0
        %vm4852 = vcmp.ge.f32.partialorder %v4778, 0.0
        %vm4853 = vcmp.ge.f32.partialorder %v4783, 0.0
        %vm4854 = vcmp.ge.f32.partialorder %v4788, 0.0
        %vm4855 = vcmp.ge.f32.partialorder %v4793, 0.0
        %vm4856 = vcmp.ge.f32.partialorder %v4798, 0.0
        %vm4857 = vcmp.ge.f32.partialorder %v4803, 0.0
        %vm4858 = vcmp.ge.f32.partialorder %v4808, 0.0
        %vm4859 = vcmp.ge.f32.partialorder %v4813, 0.0
        %vm4860 = vcmp.ge.f32.partialorder %v4818, 0.0
        %vm4861 = vcmp.ge.f32.partialorder %v4823, 0.0
        %vm4862 = vcmp.ge.f32.partialorder %v4828, 0.0
        %v4863 = vmul.f32 %v4673, 0.2
        %v4864 = vmul.f32 %v4678, 0.2
        %v4865 = vmul.f32 %v4683, 0.2
        %v4866 = vmul.f32 %v4688, 0.2
        %v4867 = vmul.f32 %v4693, 0.2
        %v4868 = vmul.f32 %v4698, 0.2
        %v4869 = vmul.f32 %v4703, 0.2
        %v4870 = vmul.f32 %v4708, 0.2
        %v4871 = vmul.f32 %v4713, 0.2
        %v4872 = vmul.f32 %v4718, 0.2
        %v4873 = vmul.f32 %v4723, 0.2
        %v4874 = vmul.f32 %v4728, 0.2
        %v4875 = vmul.f32 %v4733, 0.2
        %v4876 = vmul.f32 %v4738, 0.2
        %v4877 = vmul.f32 %v4743, 0.2
        %v4878 = vmul.f32 %v4748, 0.2
        %v4879 = vmul.f32 %v4753, 0.2
        %v4880 = vmul.f32 %v4758, 0.2
        %v4881 = vmul.f32 %v4763, 0.2
        %v4882 = vmul.f32 %v4768, 0.2
        %v4883 = vmul.f32 %v4773, 0.2
        %v4884 = vmul.f32 %v4778, 0.2
        %v4885 = vmul.f32 %v4783, 0.2
        %v4886 = vmul.f32 %v4788, 0.2
        %v4887 = vmul.f32 %v4793, 0.2
        %v4888 = vmul.f32 %v4798, 0.2
        %v4889 = vmul.f32 %v4803, 0.2
        %v4890 = vmul.f32 %v4808, 0.2
        %v4891 = vmul.f32 %v4813, 0.2
        %v4892 = vmul.f32 %v4818, 0.2
        %v4893 = vmul.f32 %v4823, 0.2
        %v4894 = vmul.f32 %v4828, 0.2
        %v4895 = vsel %vm4831, %v4673, %v4863
        %v4896 = vsel %vm4832, %v4678, %v4864
        %v4897 = vsel %vm4833, %v4683, %v4865
        %v4898 = vsel %vm4834, %v4688, %v4866
        %v4899 = vsel %vm4835, %v4693, %v4867
        %v4900 = vsel %vm4836, %v4698, %v4868
        %v4901 = vsel %vm4837, %v4703, %v4869
        %v4902 = vsel %vm4838, %v4708, %v4870
        %v4903 = vsel %vm4839, %v4713, %v4871
        %v4904 = vsel %vm4840, %v4718, %v4872
        %v4905 = vsel %vm4841, %v4723, %v4873
        %v4906 = vsel %vm4842, %v4728, %v4874
        %v4907 = vsel %vm4843, %v4733, %v4875
        %v4908 = vsel %vm4844, %v4738, %v4876
        %v4909 = vsel %vm4845, %v4743, %v4877
        %v4910 = vsel %vm4846, %v4748, %v4878
        %v4911 = vsel %vm4847, %v4753, %v4879
        %v4912 = vsel %vm4848, %v4758, %v4880
        %v4913 = vsel %vm4849, %v4763, %v4881
        %v4914 = vsel %vm4850, %v4768, %v4882
        %v4915 = vsel %vm4851, %v4773, %v4883
        %v4916 = vsel %vm4852, %v4778, %v4884
        %v4917 = vsel %vm4853, %v4783, %v4885
        %v4918 = vsel %vm4854, %v4788, %v4886
        %v4919 = vsel %vm4855, %v4793, %v4887
        %v4920 = vsel %vm4856, %v4798, %v4888
        %v4921 = vsel %vm4857, %v4803, %v4889
        %v4922 = vsel %vm4858, %v4808, %v4890
        %v4923 = vsel %vm4859, %v4813, %v4891
        %v4924 = vsel %vm4860, %v4818, %v4892
        %v4925 = vsel %vm4861, %v4823, %v4893
        %v4926 = vsel %vm4862, %v4828, %v4894
        %v4927 = vld [vmem:[%s5] sm:$0xff]
        %v4928 = vld [vmem:[%s5 + $0x8] sm:$0xff]
        %v4929 = vld [vmem:[%s5 + $0x10] sm:$0xff]
        %v4930 = vld [vmem:[%s5 + $0x18] sm:$0xff]
        %v4931 = vld [vmem:[%s5 + $0x20] sm:$0xff]
        %v4932 = vld [vmem:[%s5 + $0x28] sm:$0xff]
        %v4933 = vld [vmem:[%s5 + $0x30] sm:$0xff]
        %v4934 = vld [vmem:[%s5 + $0x38] sm:$0xff]
        %v4935 = vld [vmem:[%s5 + $0x40] sm:$0xff]
        %v4936 = vld [vmem:[%s5 + $0x48] sm:$0xff]
        %v4937 = vld [vmem:[%s5 + $0x50] sm:$0xff]
        %v4938 = vld [vmem:[%s5 + $0x58] sm:$0xff]
        %v4939 = vld [vmem:[%s5 + $0x60] sm:$0xff]
        %v4940 = vld [vmem:[%s5 + $0x68] sm:$0xff]
        %v4941 = vld [vmem:[%s5 + $0x70] sm:$0xff]
        %v4942 = vld [vmem:[%s5 + $0x78] sm:$0xff]
        %v4943 = vld [vmem:[%s5 + $0x80] sm:$0xff]
        %v4944 = vld [vmem:[%s5 + $0x88] sm:$0xff]
        %v4945 = vld [vmem:[%s5 + $0x90] sm:$0xff]
        %v4946 = vld [vmem:[%s5 + $0x98] sm:$0xff]
        %v4947 = vld [vmem:[%s5 + $0xa0] sm:$0xff]
        %v4948 = vld [vmem:[%s5 + $0xa8] sm:$0xff]
        %v4949 = vld [vmem:[%s5 + $0xb0] sm:$0xff]
        %v4950 = vld [vmem:[%s5 + $0xb8] sm:$0xff]
        %v4951 = vld [vmem:[%s5 + $0xc0] sm:$0xff]
        %v4952 = vld [vmem:[%s5 + $0xc8] sm:$0xff]
        %v4953 = vld [vmem:[%s5 + $0xd0] sm:$0xff]
        %v4954 = vld [vmem:[%s5 + $0xd8] sm:$0xff]
        %v4955 = vld [vmem:[%s5 + $0xe0] sm:$0xff]
        %v4956 = vld [vmem:[%s5 + $0xe8] sm:$0xff]
        %v4957 = vld [vmem:[%s5 + $0xf0] sm:$0xff]
        %v4958 = vld [vmem:[%s5 + $0xf8] sm:$0xff]
        %v4959 = vld [vmem:[%s5 + $0x100] sm:$0xff]
        %v4960 = vld [vmem:[%s5 + $0x108] sm:$0xff]
        %v4961 = vld [vmem:[%s5 + $0x110] sm:$0xff]
        %v4962 = vld [vmem:[%s5 + $0x118] sm:$0xff]
        %v4963 = vld [vmem:[%s5 + $0x120] sm:$0xff]
        %v4964 = vld [vmem:[%s5 + $0x128] sm:$0xff]
        %v4965 = vld [vmem:[%s5 + $0x130] sm:$0xff]
        %v4966 = vld [vmem:[%s5 + $0x138] sm:$0xff]
        %v4967 = vld [vmem:[%s5 + $0x140] sm:$0xff]
        %v4968 = vld [vmem:[%s5 + $0x148] sm:$0xff]
        %v4969 = vld [vmem:[%s5 + $0x150] sm:$0xff]
        %v4970 = vld [vmem:[%s5 + $0x158] sm:$0xff]
        %v4971 = vld [vmem:[%s5 + $0x160] sm:$0xff]
        %v4972 = vld [vmem:[%s5 + $0x168] sm:$0xff]
        %v4973 = vld [vmem:[%s5 + $0x170] sm:$0xff]
        %v4974 = vld [vmem:[%s5 + $0x178] sm:$0xff]
        %v4975 = vld [vmem:[%s5 + $0x180] sm:$0xff]
        %v4976 = vld [vmem:[%s5 + $0x188] sm:$0xff]
        %v4977 = vld [vmem:[%s5 + $0x190] sm:$0xff]
        %v4978 = vld [vmem:[%s5 + $0x198] sm:$0xff]
        %v4979 = vld [vmem:[%s5 + $0x1a0] sm:$0xff]
        %v4980 = vld [vmem:[%s5 + $0x1a8] sm:$0xff]
        %v4981 = vld [vmem:[%s5 + $0x1b0] sm:$0xff]
        %v4982 = vld [vmem:[%s5 + $0x1b8] sm:$0xff]
        %v4983 = vld [vmem:[%s5 + $0x1c0] sm:$0xff]
        %v4984 = vld [vmem:[%s5 + $0x1c8] sm:$0xff]
        %v4985 = vld [vmem:[%s5 + $0x1d0] sm:$0xff]
        %v4986 = vld [vmem:[%s5 + $0x1d8] sm:$0xff]
        %v4987 = vld [vmem:[%s5 + $0x1e0] sm:$0xff]
        %v4988 = vld [vmem:[%s5 + $0x1e8] sm:$0xff]
        %v4989 = vld [vmem:[%s5 + $0x1f0] sm:$0xff]
        %v4990 = vld [vmem:[%s5 + $0x1f8] sm:$0xff]
        %v4991 = vld [vmem:[%s5 + $0x200] sm:$0xff]
        %v4992 = vld [vmem:[%s5 + $0x208] sm:$0xff]
        %v4993 = vld [vmem:[%s5 + $0x210] sm:$0xff]
        %v4994 = vld [vmem:[%s5 + $0x218] sm:$0xff]
        %v4995 = vld [vmem:[%s5 + $0x220] sm:$0xff]
        %v4996 = vld [vmem:[%s5 + $0x228] sm:$0xff]
        %v4997 = vld [vmem:[%s5 + $0x230] sm:$0xff]
        %v4998 = vld [vmem:[%s5 + $0x238] sm:$0xff]
        %v4999 = vld [vmem:[%s5 + $0x240] sm:$0xff]
        %v5000 = vld [vmem:[%s5 + $0x248] sm:$0xff]
        %v5001 = vld [vmem:[%s5 + $0x250] sm:$0xff]
        %v5002 = vld [vmem:[%s5 + $0x258] sm:$0xff]
        %v5003 = vld [vmem:[%s5 + $0x260] sm:$0xff]
        %v5004 = vld [vmem:[%s5 + $0x268] sm:$0xff]
        %v5005 = vld [vmem:[%s5 + $0x270] sm:$0xff]
        %v5006 = vld [vmem:[%s5 + $0x278] sm:$0xff]
        %v5007 = vld [vmem:[%s5 + $0x280] sm:$0xff]
        %v5008 = vld [vmem:[%s5 + $0x288] sm:$0xff]
        %v5009 = vld [vmem:[%s5 + $0x290] sm:$0xff]
        %v5010 = vld [vmem:[%s5 + $0x298] sm:$0xff]
        %v5011 = vld [vmem:[%s5 + $0x2a0] sm:$0xff]
        %v5012 = vld [vmem:[%s5 + $0x2a8] sm:$0xff]
        %v5013 = vld [vmem:[%s5 + $0x2b0] sm:$0xff]
        %v5014 = vld [vmem:[%s5 + $0x2b8] sm:$0xff]
        %v5015 = vld [vmem:[%s5 + $0x2c0] sm:$0xff]
        %v5016 = vld [vmem:[%s5 + $0x2c8] sm:$0xff]
        %v5017 = vld [vmem:[%s5 + $0x2d0] sm:$0xff]
        %v5018 = vld [vmem:[%s5 + $0x2d8] sm:$0xff]
        %v5019 = vld [vmem:[%s5 + $0x2e0] sm:$0xff]
        %v5020 = vld [vmem:[%s5 + $0x2e8] sm:$0xff]
        %v5021 = vld [vmem:[%s5 + $0x2f0] sm:$0xff]
        %v5022 = vld [vmem:[%s5 + $0x2f8] sm:$0xff]
        %v5023 = vld [vmem:[%s5 + $0x300] sm:$0xff]
        %v5024 = vld [vmem:[%s5 + $0x308] sm:$0xff]
        %v5025 = vld [vmem:[%s5 + $0x310] sm:$0xff]
        %v5026 = vld [vmem:[%s5 + $0x318] sm:$0xff]
        %v5027 = vld [vmem:[%s5 + $0x320] sm:$0xff]
        %v5028 = vld [vmem:[%s5 + $0x328] sm:$0xff]
        %v5029 = vld [vmem:[%s5 + $0x330] sm:$0xff]
        %v5030 = vld [vmem:[%s5 + $0x338] sm:$0xff]
        %v5031 = vld [vmem:[%s5 + $0x340] sm:$0xff]
        %v5032 = vld [vmem:[%s5 + $0x348] sm:$0xff]
        %v5033 = vld [vmem:[%s5 + $0x350] sm:$0xff]
        %v5034 = vld [vmem:[%s5 + $0x358] sm:$0xff]
        %v5035 = vld [vmem:[%s5 + $0x360] sm:$0xff]
        %v5036 = vld [vmem:[%s5 + $0x368] sm:$0xff]
        %v5037 = vld [vmem:[%s5 + $0x370] sm:$0xff]
        %v5038 = vld [vmem:[%s5 + $0x378] sm:$0xff]
        %v5039 = vld [vmem:[%s5 + $0x380] sm:$0xff]
        %v5040 = vld [vmem:[%s5 + $0x388] sm:$0xff]
        %v5041 = vld [vmem:[%s5 + $0x390] sm:$0xff]
        %v5042 = vld [vmem:[%s5 + $0x398] sm:$0xff]
        %v5043 = vld [vmem:[%s5 + $0x3a0] sm:$0xff]
        %v5044 = vld [vmem:[%s5 + $0x3a8] sm:$0xff]
        %v5045 = vld [vmem:[%s5 + $0x3b0] sm:$0xff]
        %v5046 = vld [vmem:[%s5 + $0x3b8] sm:$0xff]
        %v5047 = vld [vmem:[%s5 + $0x3c0] sm:$0xff]
        %v5048 = vld [vmem:[%s5 + $0x3c8] sm:$0xff]
        %v5049 = vld [vmem:[%s5 + $0x3d0] sm:$0xff]
        %v5050 = vld [vmem:[%s5 + $0x3d8] sm:$0xff]
        %v5051 = vld [vmem:[%s5 + $0x3e0] sm:$0xff]
        %v5052 = vld [vmem:[%s5 + $0x3e8] sm:$0xff]
        %v5053 = vld [vmem:[%s5 + $0x3f0] sm:$0xff]
        %v5054 = vld [vmem:[%s5 + $0x3f8] sm:$0xff]
        %v5055 = vld [vmem:[%s5 + $0x400] sm:$0xff]
        %v5056 = vld [vmem:[%s5 + $0x408] sm:$0xff]
        %v5057 = vld [vmem:[%s5 + $0x410] sm:$0xff]
        %v5058 = vld [vmem:[%s5 + $0x418] sm:$0xff]
        %v5059 = vld [vmem:[%s5 + $0x420] sm:$0xff]
        %v5060 = vld [vmem:[%s5 + $0x428] sm:$0xff]
        %v5061 = vld [vmem:[%s5 + $0x430] sm:$0xff]
        %v5062 = vld [vmem:[%s5 + $0x438] sm:$0xff]
        %v5063 = vld [vmem:[%s5 + $0x440] sm:$0xff]
        %v5064 = vld [vmem:[%s5 + $0x448] sm:$0xff]
        %v5065 = vld [vmem:[%s5 + $0x450] sm:$0xff]
        %v5066 = vld [vmem:[%s5 + $0x458] sm:$0xff]
        %v5067 = vld [vmem:[%s5 + $0x460] sm:$0xff]
        %v5068 = vld [vmem:[%s5 + $0x468] sm:$0xff]
        %v5069 = vld [vmem:[%s5 + $0x470] sm:$0xff]
        %v5070 = vld [vmem:[%s5 + $0x478] sm:$0xff]
        %v5071 = vld [vmem:[%s5 + $0x480] sm:$0xff]
        %v5072 = vld [vmem:[%s5 + $0x488] sm:$0xff]
        %v5073 = vld [vmem:[%s5 + $0x490] sm:$0xff]
        %v5074 = vld [vmem:[%s5 + $0x498] sm:$0xff]
        %v5075 = vld [vmem:[%s5 + $0x4a0] sm:$0xff]
        %v5076 = vld [vmem:[%s5 + $0x4a8] sm:$0xff]
        %v5077 = vld [vmem:[%s5 + $0x4b0] sm:$0xff]
        %v5078 = vld [vmem:[%s5 + $0x4b8] sm:$0xff]
        %v5079 = vld [vmem:[%s5 + $0x4c0] sm:$0xff]
        %v5080 = vld [vmem:[%s5 + $0x4c8] sm:$0xff]
        %v5081 = vld [vmem:[%s5 + $0x4d0] sm:$0xff]
        %v5082 = vld [vmem:[%s5 + $0x4d8] sm:$0xff]
        %v5083 = vld [vmem:[%s5 + $0x4e0] sm:$0xff]
        %v5084 = vld [vmem:[%s5 + $0x4e8] sm:$0xff]
        %v5085 = vld [vmem:[%s5 + $0x4f0] sm:$0xff]
        %v5086 = vld [vmem:[%s5 + $0x4f8] sm:$0xff]
        %v5087 = vld [vmem:[%s5 + $0x500] sm:$0xff]
        %v5088 = vld [vmem:[%s5 + $0x508] sm:$0xff]
        %v5089 = vld [vmem:[%s5 + $0x510] sm:$0xff]
        %v5090 = vld [vmem:[%s5 + $0x518] sm:$0xff]
        %v5091 = vld [vmem:[%s5 + $0x520] sm:$0xff]
        %v5092 = vld [vmem:[%s5 + $0x528] sm:$0xff]
        %v5093 = vld [vmem:[%s5 + $0x530] sm:$0xff]
        %v5094 = vld [vmem:[%s5 + $0x538] sm:$0xff]
        %v5095 = vld [vmem:[%s5 + $0x540] sm:$0xff]
        %v5096 = vld [vmem:[%s5 + $0x548] sm:$0xff]
        %v5097 = vld [vmem:[%s5 + $0x550] sm:$0xff]
        %v5098 = vld [vmem:[%s5 + $0x558] sm:$0xff]
        %v5099 = vld [vmem:[%s5 + $0x560] sm:$0xff]
        %v5100 = vld [vmem:[%s5 + $0x568] sm:$0xff]
        %v5101 = vld [vmem:[%s5 + $0x570] sm:$0xff]
        %v5102 = vld [vmem:[%s5 + $0x578] sm:$0xff]
        %v5103 = vld [vmem:[%s5 + $0x580] sm:$0xff]
        %v5104 = vld [vmem:[%s5 + $0x588] sm:$0xff]
        %v5105 = vld [vmem:[%s5 + $0x590] sm:$0xff]
        %v5106 = vld [vmem:[%s5 + $0x598] sm:$0xff]
        %v5107 = vld [vmem:[%s5 + $0x5a0] sm:$0xff]
        %v5108 = vld [vmem:[%s5 + $0x5a8] sm:$0xff]
        %v5109 = vld [vmem:[%s5 + $0x5b0] sm:$0xff]
        %v5110 = vld [vmem:[%s5 + $0x5b8] sm:$0xff]
        %v5111 = vld [vmem:[%s5 + $0x5c0] sm:$0xff]
        %v5112 = vld [vmem:[%s5 + $0x5c8] sm:$0xff]
        %v5113 = vld [vmem:[%s5 + $0x5d0] sm:$0xff]
        %v5114 = vld [vmem:[%s5 + $0x5d8] sm:$0xff]
        %v5115 = vld [vmem:[%s5 + $0x5e0] sm:$0xff]
        %v5116 = vld [vmem:[%s5 + $0x5e8] sm:$0xff]
        %v5117 = vld [vmem:[%s5 + $0x5f0] sm:$0xff]
        %v5118 = vld [vmem:[%s5 + $0x5f8] sm:$0xff]
        %v5119 = vld [vmem:[%s5 + $0x600] sm:$0xff]
        %v5120 = vld [vmem:[%s5 + $0x608] sm:$0xff]
        %v5121 = vld [vmem:[%s5 + $0x610] sm:$0xff]
        %v5122 = vld [vmem:[%s5 + $0x618] sm:$0xff]
        %v5123 = vld [vmem:[%s5 + $0x620] sm:$0xff]
        %v5124 = vld [vmem:[%s5 + $0x628] sm:$0xff]
        %v5125 = vld [vmem:[%s5 + $0x630] sm:$0xff]
        %v5126 = vld [vmem:[%s5 + $0x638] sm:$0xff]
        %v5127 = vld [vmem:[%s5 + $0x640] sm:$0xff]
        %v5128 = vld [vmem:[%s5 + $0x648] sm:$0xff]
        %v5129 = vld [vmem:[%s5 + $0x650] sm:$0xff]
        %v5130 = vld [vmem:[%s5 + $0x658] sm:$0xff]
        %v5131 = vld [vmem:[%s5 + $0x660] sm:$0xff]
        %v5132 = vld [vmem:[%s5 + $0x668] sm:$0xff]
        %v5133 = vld [vmem:[%s5 + $0x670] sm:$0xff]
        %v5134 = vld [vmem:[%s5 + $0x678] sm:$0xff]
        %v5135 = vld [vmem:[%s5 + $0x680] sm:$0xff]
        %v5136 = vld [vmem:[%s5 + $0x688] sm:$0xff]
        %v5137 = vld [vmem:[%s5 + $0x690] sm:$0xff]
        %v5138 = vld [vmem:[%s5 + $0x698] sm:$0xff]
        %v5139 = vld [vmem:[%s5 + $0x6a0] sm:$0xff]
        %v5140 = vld [vmem:[%s5 + $0x6a8] sm:$0xff]
        %v5141 = vld [vmem:[%s5 + $0x6b0] sm:$0xff]
        %v5142 = vld [vmem:[%s5 + $0x6b8] sm:$0xff]
        %v5143 = vld [vmem:[%s5 + $0x6c0] sm:$0xff]
        %v5144 = vld [vmem:[%s5 + $0x6c8] sm:$0xff]
        %v5145 = vld [vmem:[%s5 + $0x6d0] sm:$0xff]
        %v5146 = vld [vmem:[%s5 + $0x6d8] sm:$0xff]
        %v5147 = vld [vmem:[%s5 + $0x6e0] sm:$0xff]
        %v5148 = vld [vmem:[%s5 + $0x6e8] sm:$0xff]
        %v5149 = vld [vmem:[%s5 + $0x6f0] sm:$0xff]
        %v5150 = vld [vmem:[%s5 + $0x6f8] sm:$0xff]
        %v5151 = vld [vmem:[%s5 + $0x700] sm:$0xff]
        %v5152 = vld [vmem:[%s5 + $0x708] sm:$0xff]
        %v5153 = vld [vmem:[%s5 + $0x710] sm:$0xff]
        %v5154 = vld [vmem:[%s5 + $0x718] sm:$0xff]
        %v5155 = vld [vmem:[%s5 + $0x720] sm:$0xff]
        %v5156 = vld [vmem:[%s5 + $0x728] sm:$0xff]
        %v5157 = vld [vmem:[%s5 + $0x730] sm:$0xff]
        %v5158 = vld [vmem:[%s5 + $0x738] sm:$0xff]
        %v5159 = vld [vmem:[%s5 + $0x740] sm:$0xff]
        %v5160 = vld [vmem:[%s5 + $0x748] sm:$0xff]
        %v5161 = vld [vmem:[%s5 + $0x750] sm:$0xff]
        %v5162 = vld [vmem:[%s5 + $0x758] sm:$0xff]
        %v5163 = vld [vmem:[%s5 + $0x760] sm:$0xff]
        %v5164 = vld [vmem:[%s5 + $0x768] sm:$0xff]
        %v5165 = vld [vmem:[%s5 + $0x770] sm:$0xff]
        %v5166 = vld [vmem:[%s5 + $0x778] sm:$0xff]
        %v5167 = vld [vmem:[%s5 + $0x780] sm:$0xff]
        %v5168 = vld [vmem:[%s5 + $0x788] sm:$0xff]
        %v5169 = vld [vmem:[%s5 + $0x790] sm:$0xff]
        %v5170 = vld [vmem:[%s5 + $0x798] sm:$0xff]
        %v5171 = vld [vmem:[%s5 + $0x7a0] sm:$0xff]
        %v5172 = vld [vmem:[%s5 + $0x7a8] sm:$0xff]
        %v5173 = vld [vmem:[%s5 + $0x7b0] sm:$0xff]
        %v5174 = vld [vmem:[%s5 + $0x7b8] sm:$0xff]
        %v5175 = vld [vmem:[%s5 + $0x7c0] sm:$0xff]
        %v5176 = vld [vmem:[%s5 + $0x7c8] sm:$0xff]
        %v5177 = vld [vmem:[%s5 + $0x7d0] sm:$0xff]
        %v5178 = vld [vmem:[%s5 + $0x7d8] sm:$0xff]
        %v5179 = vld [vmem:[%s5 + $0x7e0] sm:$0xff]
        %v5180 = vld [vmem:[%s5 + $0x7e8] sm:$0xff]
        %v5181 = vld [vmem:[%s5 + $0x7f0] sm:$0xff]
        %v5182 = vld [vmem:[%s5 + $0x7f8] sm:$0xff]
        %v5183 = vld [vmem:[%s5 + $0x800] sm:$0xff]
        %v5184 = vld [vmem:[%s5 + $0x808] sm:$0xff]
        %v5185 = vld [vmem:[%s5 + $0x810] sm:$0xff]
        %v5186 = vld [vmem:[%s5 + $0x818] sm:$0xff]
        %v5187 = vld [vmem:[%s5 + $0x820] sm:$0xff]
        %v5188 = vld [vmem:[%s5 + $0x828] sm:$0xff]
        %v5189 = vld [vmem:[%s5 + $0x830] sm:$0xff]
        %v5190 = vld [vmem:[%s5 + $0x838] sm:$0xff]
        %v5191 = vld [vmem:[%s5 + $0x840] sm:$0xff]
        %v5192 = vld [vmem:[%s5 + $0x848] sm:$0xff]
        %v5193 = vld [vmem:[%s5 + $0x850] sm:$0xff]
        %v5194 = vld [vmem:[%s5 + $0x858] sm:$0xff]
        %v5195 = vld [vmem:[%s5 + $0x860] sm:$0xff]
        %v5196 = vld [vmem:[%s5 + $0x868] sm:$0xff]
        %v5197 = vld [vmem:[%s5 + $0x870] sm:$0xff]
        %v5198 = vld [vmem:[%s5 + $0x878] sm:$0xff]
        %v5199 = vld [vmem:[%s5 + $0x880] sm:$0xff]
        %v5200 = vld [vmem:[%s5 + $0x888] sm:$0xff]
        %v5201 = vld [vmem:[%s5 + $0x890] sm:$0xff]
        %v5202 = vld [vmem:[%s5 + $0x898] sm:$0xff]
        %v5203 = vld [vmem:[%s5 + $0x8a0] sm:$0xff]
        %v5204 = vld [vmem:[%s5 + $0x8a8] sm:$0xff]
        %v5205 = vld [vmem:[%s5 + $0x8b0] sm:$0xff]
        %v5206 = vld [vmem:[%s5 + $0x8b8] sm:$0xff]
        %v5207 = vld [vmem:[%s5 + $0x8c0] sm:$0xff]
        %v5208 = vld [vmem:[%s5 + $0x8c8] sm:$0xff]
        %v5209 = vld [vmem:[%s5 + $0x8d0] sm:$0xff]
        %v5210 = vld [vmem:[%s5 + $0x8d8] sm:$0xff]
        %v5211 = vld [vmem:[%s5 + $0x8e0] sm:$0xff]
        %v5212 = vld [vmem:[%s5 + $0x8e8] sm:$0xff]
        %v5213 = vld [vmem:[%s5 + $0x8f0] sm:$0xff]
        %v5214 = vld [vmem:[%s5 + $0x8f8] sm:$0xff]
        %v5215 = vld [vmem:[%s5 + $0x900] sm:$0xff]
        %v5216 = vld [vmem:[%s5 + $0x908] sm:$0xff]
        %v5217 = vld [vmem:[%s5 + $0x910] sm:$0xff]
        %v5218 = vld [vmem:[%s5 + $0x918] sm:$0xff]
        %v5219 = vld [vmem:[%s5 + $0x920] sm:$0xff]
        %v5220 = vld [vmem:[%s5 + $0x928] sm:$0xff]
        %v5221 = vld [vmem:[%s5 + $0x930] sm:$0xff]
        %v5222 = vld [vmem:[%s5 + $0x938] sm:$0xff]
        %v5223 = vld [vmem:[%s5 + $0x940] sm:$0xff]
        %v5224 = vld [vmem:[%s5 + $0x948] sm:$0xff]
        %v5225 = vld [vmem:[%s5 + $0x950] sm:$0xff]
        %v5226 = vld [vmem:[%s5 + $0x958] sm:$0xff]
        %v5227 = vld [vmem:[%s5 + $0x960] sm:$0xff]
        %v5228 = vld [vmem:[%s5 + $0x968] sm:$0xff]
        %v5229 = vld [vmem:[%s5 + $0x970] sm:$0xff]
        %v5230 = vld [vmem:[%s5 + $0x978] sm:$0xff]
        %v5231 = vld [vmem:[%s5 + $0x980] sm:$0xff]
        %v5232 = vld [vmem:[%s5 + $0x988] sm:$0xff]
        %v5233 = vld [vmem:[%s5 + $0x990] sm:$0xff]
        %v5234 = vld [vmem:[%s5 + $0x998] sm:$0xff]
        %v5235 = vld [vmem:[%s5 + $0x9a0] sm:$0xff]
        %v5236 = vld [vmem:[%s5 + $0x9a8] sm:$0xff]
        %v5237 = vld [vmem:[%s5 + $0x9b0] sm:$0xff]
        %v5238 = vld [vmem:[%s5 + $0x9b8] sm:$0xff]
        %v5239 = vld [vmem:[%s5 + $0x9c0] sm:$0xff]
        %v5240 = vld [vmem:[%s5 + $0x9c8] sm:$0xff]
        %v5241 = vld [vmem:[%s5 + $0x9d0] sm:$0xff]
        %v5242 = vld [vmem:[%s5 + $0x9d8] sm:$0xff]
        %v5243 = vld [vmem:[%s5 + $0x9e0] sm:$0xff]
        %v5244 = vld [vmem:[%s5 + $0x9e8] sm:$0xff]
        %v5245 = vld [vmem:[%s5 + $0x9f0] sm:$0xff]
        %v5246 = vld [vmem:[%s5 + $0x9f8] sm:$0xff]
        %v5247 = vld [vmem:[%s5 + $0xa00] sm:$0xff]
        %v5248 = vld [vmem:[%s5 + $0xa08] sm:$0xff]
        %v5249 = vld [vmem:[%s5 + $0xa10] sm:$0xff]
        %v5250 = vld [vmem:[%s5 + $0xa18] sm:$0xff]
        %v5251 = vld [vmem:[%s5 + $0xa20] sm:$0xff]
        %v5252 = vld [vmem:[%s5 + $0xa28] sm:$0xff]
        %v5253 = vld [vmem:[%s5 + $0xa30] sm:$0xff]
        %v5254 = vld [vmem:[%s5 + $0xa38] sm:$0xff]
        %v5255 = vld [vmem:[%s5 + $0xa40] sm:$0xff]
        %v5256 = vld [vmem:[%s5 + $0xa48] sm:$0xff]
        %v5257 = vld [vmem:[%s5 + $0xa50] sm:$0xff]
        %v5258 = vld [vmem:[%s5 + $0xa58] sm:$0xff]
        %v5259 = vld [vmem:[%s5 + $0xa60] sm:$0xff]
        %v5260 = vld [vmem:[%s5 + $0xa68] sm:$0xff]
        %v5261 = vld [vmem:[%s5 + $0xa70] sm:$0xff]
        %v5262 = vld [vmem:[%s5 + $0xa78] sm:$0xff]
        %v5263 = vld [vmem:[%s5 + $0xa80] sm:$0xff]
        %v5264 = vld [vmem:[%s5 + $0xa88] sm:$0xff]
        %v5265 = vld [vmem:[%s5 + $0xa90] sm:$0xff]
        %v5266 = vld [vmem:[%s5 + $0xa98] sm:$0xff]
        %v5267 = vld [vmem:[%s5 + $0xaa0] sm:$0xff]
        %v5268 = vld [vmem:[%s5 + $0xaa8] sm:$0xff]
        %v5269 = vld [vmem:[%s5 + $0xab0] sm:$0xff]
        %v5270 = vld [vmem:[%s5 + $0xab8] sm:$0xff]
        %v5271 = vld [vmem:[%s5 + $0xac0] sm:$0xff]
        %v5272 = vld [vmem:[%s5 + $0xac8] sm:$0xff]
        %v5273 = vld [vmem:[%s5 + $0xad0] sm:$0xff]
        %v5274 = vld [vmem:[%s5 + $0xad8] sm:$0xff]
        %v5275 = vld [vmem:[%s5 + $0xae0] sm:$0xff]
        %v5276 = vld [vmem:[%s5 + $0xae8] sm:$0xff]
        %v5277 = vld [vmem:[%s5 + $0xaf0] sm:$0xff]
        %v5278 = vld [vmem:[%s5 + $0xaf8] sm:$0xff]
        %v5279 = vld [vmem:[%s5 + $0xb00] sm:$0xff]
        %v5280 = vld [vmem:[%s5 + $0xb08] sm:$0xff]
        %v5281 = vld [vmem:[%s5 + $0xb10] sm:$0xff]
        %v5282 = vld [vmem:[%s5 + $0xb18] sm:$0xff]
        %v5283 = vld [vmem:[%s5 + $0xb20] sm:$0xff]
        %v5284 = vld [vmem:[%s5 + $0xb28] sm:$0xff]
        %v5285 = vld [vmem:[%s5 + $0xb30] sm:$0xff]
        %v5286 = vld [vmem:[%s5 + $0xb38] sm:$0xff]
        %v5287 = vld [vmem:[%s5 + $0xb40] sm:$0xff]
        %v5288 = vld [vmem:[%s5 + $0xb48] sm:$0xff]
        %v5289 = vld [vmem:[%s5 + $0xb50] sm:$0xff]
        %v5290 = vld [vmem:[%s5 + $0xb58] sm:$0xff]
        %v5291 = vld [vmem:[%s5 + $0xb60] sm:$0xff]
        %v5292 = vld [vmem:[%s5 + $0xb68] sm:$0xff]
        %v5293 = vld [vmem:[%s5 + $0xb70] sm:$0xff]
        %v5294 = vld [vmem:[%s5 + $0xb78] sm:$0xff]
        %v5295 = vld [vmem:[%s5 + $0xb80] sm:$0xff]
        %v5296 = vld [vmem:[%s5 + $0xb88] sm:$0xff]
        %v5297 = vld [vmem:[%s5 + $0xb90] sm:$0xff]
        %v5298 = vld [vmem:[%s5 + $0xb98] sm:$0xff]
        %v5299 = vld [vmem:[%s5 + $0xba0] sm:$0xff]
        %v5300 = vld [vmem:[%s5 + $0xba8] sm:$0xff]
        %v5301 = vld [vmem:[%s5 + $0xbb0] sm:$0xff]
        %v5302 = vld [vmem:[%s5 + $0xbb8] sm:$0xff]
        %v5303 = vld [vmem:[%s5 + $0xbc0] sm:$0xff]
        %v5304 = vld [vmem:[%s5 + $0xbc8] sm:$0xff]
        %v5305 = vld [vmem:[%s5 + $0xbd0] sm:$0xff]
        %v5306 = vld [vmem:[%s5 + $0xbd8] sm:$0xff]
        %v5307 = vld [vmem:[%s5 + $0xbe0] sm:$0xff]
        %v5308 = vld [vmem:[%s5 + $0xbe8] sm:$0xff]
        %v5309 = vld [vmem:[%s5 + $0xbf0] sm:$0xff]
        %v5310 = vld [vmem:[%s5 + $0xbf8] sm:$0xff]
        %v5311 = vld [vmem:[%s5 + $0xc00] sm:$0xff]
        %v5312 = vld [vmem:[%s5 + $0xc08] sm:$0xff]
        %v5313 = vld [vmem:[%s5 + $0xc10] sm:$0xff]
        %v5314 = vld [vmem:[%s5 + $0xc18] sm:$0xff]
        %v5315 = vld [vmem:[%s5 + $0xc20] sm:$0xff]
        %v5316 = vld [vmem:[%s5 + $0xc28] sm:$0xff]
        %v5317 = vld [vmem:[%s5 + $0xc30] sm:$0xff]
        %v5318 = vld [vmem:[%s5 + $0xc38] sm:$0xff]
        %v5319 = vld [vmem:[%s5 + $0xc40] sm:$0xff]
        %v5320 = vld [vmem:[%s5 + $0xc48] sm:$0xff]
        %v5321 = vld [vmem:[%s5 + $0xc50] sm:$0xff]
        %v5322 = vld [vmem:[%s5 + $0xc58] sm:$0xff]
        %v5323 = vld [vmem:[%s5 + $0xc60] sm:$0xff]
        %v5324 = vld [vmem:[%s5 + $0xc68] sm:$0xff]
        %v5325 = vld [vmem:[%s5 + $0xc70] sm:$0xff]
        %v5326 = vld [vmem:[%s5 + $0xc78] sm:$0xff]
        %v5327 = vld [vmem:[%s5 + $0xc80] sm:$0xff]
        %v5328 = vld [vmem:[%s5 + $0xc88] sm:$0xff]
        %v5329 = vld [vmem:[%s5 + $0xc90] sm:$0xff]
        %v5330 = vld [vmem:[%s5 + $0xc98] sm:$0xff]
        %v5331 = vld [vmem:[%s5 + $0xca0] sm:$0xff]
        %v5332 = vld [vmem:[%s5 + $0xca8] sm:$0xff]
        %v5333 = vld [vmem:[%s5 + $0xcb0] sm:$0xff]
        %v5334 = vld [vmem:[%s5 + $0xcb8] sm:$0xff]
        %v5335 = vld [vmem:[%s5 + $0xcc0] sm:$0xff]
        %v5336 = vld [vmem:[%s5 + $0xcc8] sm:$0xff]
        %v5337 = vld [vmem:[%s5 + $0xcd0] sm:$0xff]
        %v5338 = vld [vmem:[%s5 + $0xcd8] sm:$0xff]
        %v5339 = vld [vmem:[%s5 + $0xce0] sm:$0xff]
        %v5340 = vld [vmem:[%s5 + $0xce8] sm:$0xff]
        %v5341 = vld [vmem:[%s5 + $0xcf0] sm:$0xff]
        %v5342 = vld [vmem:[%s5 + $0xcf8] sm:$0xff]
        %v5343 = vld [vmem:[%s5 + $0xd00] sm:$0xff]
        %v5344 = vld [vmem:[%s5 + $0xd08] sm:$0xff]
        %v5345 = vld [vmem:[%s5 + $0xd10] sm:$0xff]
        %v5346 = vld [vmem:[%s5 + $0xd18] sm:$0xff]
        %v5347 = vld [vmem:[%s5 + $0xd20] sm:$0xff]
        %v5348 = vld [vmem:[%s5 + $0xd28] sm:$0xff]
        %v5349 = vld [vmem:[%s5 + $0xd30] sm:$0xff]
        %v5350 = vld [vmem:[%s5 + $0xd38] sm:$0xff]
        %v5351 = vld [vmem:[%s5 + $0xd40] sm:$0xff]
        %v5352 = vld [vmem:[%s5 + $0xd48] sm:$0xff]
        %v5353 = vld [vmem:[%s5 + $0xd50] sm:$0xff]
        %v5354 = vld [vmem:[%s5 + $0xd58] sm:$0xff]
        %v5355 = vld [vmem:[%s5 + $0xd60] sm:$0xff]
        %v5356 = vld [vmem:[%s5 + $0xd68] sm:$0xff]
        %v5357 = vld [vmem:[%s5 + $0xd70] sm:$0xff]
        %v5358 = vld [vmem:[%s5 + $0xd78] sm:$0xff]
        %v5359 = vld [vmem:[%s5 + $0xd80] sm:$0xff]
        %v5360 = vld [vmem:[%s5 + $0xd88] sm:$0xff]
        %v5361 = vld [vmem:[%s5 + $0xd90] sm:$0xff]
        %v5362 = vld [vmem:[%s5 + $0xd98] sm:$0xff]
        %v5363 = vld [vmem:[%s5 + $0xda0] sm:$0xff]
        %v5364 = vld [vmem:[%s5 + $0xda8] sm:$0xff]
        %v5365 = vld [vmem:[%s5 + $0xdb0] sm:$0xff]
        %v5366 = vld [vmem:[%s5 + $0xdb8] sm:$0xff]
        %v5367 = vld [vmem:[%s5 + $0xdc0] sm:$0xff]
        %v5368 = vld [vmem:[%s5 + $0xdc8] sm:$0xff]
        %v5369 = vld [vmem:[%s5 + $0xdd0] sm:$0xff]
        %v5370 = vld [vmem:[%s5 + $0xdd8] sm:$0xff]
        %v5371 = vld [vmem:[%s5 + $0xde0] sm:$0xff]
        %v5372 = vld [vmem:[%s5 + $0xde8] sm:$0xff]
        %v5373 = vld [vmem:[%s5 + $0xdf0] sm:$0xff]
        %v5374 = vld [vmem:[%s5 + $0xdf8] sm:$0xff]
        %v5375 = vld [vmem:[%s5 + $0xe00] sm:$0xff]
        %v5376 = vld [vmem:[%s5 + $0xe08] sm:$0xff]
        %v5377 = vld [vmem:[%s5 + $0xe10] sm:$0xff]
        %v5378 = vld [vmem:[%s5 + $0xe18] sm:$0xff]
        %v5379 = vld [vmem:[%s5 + $0xe20] sm:$0xff]
        %v5380 = vld [vmem:[%s5 + $0xe28] sm:$0xff]
        %v5381 = vld [vmem:[%s5 + $0xe30] sm:$0xff]
        %v5382 = vld [vmem:[%s5 + $0xe38] sm:$0xff]
        %v5383 = vld [vmem:[%s5 + $0xe40] sm:$0xff]
        %v5384 = vld [vmem:[%s5 + $0xe48] sm:$0xff]
        %v5385 = vld [vmem:[%s5 + $0xe50] sm:$0xff]
        %v5386 = vld [vmem:[%s5 + $0xe58] sm:$0xff]
        %v5387 = vld [vmem:[%s5 + $0xe60] sm:$0xff]
        %v5388 = vld [vmem:[%s5 + $0xe68] sm:$0xff]
        %v5389 = vld [vmem:[%s5 + $0xe70] sm:$0xff]
        %v5390 = vld [vmem:[%s5 + $0xe78] sm:$0xff]
        %v5391 = vld [vmem:[%s5 + $0xe80] sm:$0xff]
        %v5392 = vld [vmem:[%s5 + $0xe88] sm:$0xff]
        %v5393 = vld [vmem:[%s5 + $0xe90] sm:$0xff]
        %v5394 = vld [vmem:[%s5 + $0xe98] sm:$0xff]
        %v5395 = vld [vmem:[%s5 + $0xea0] sm:$0xff]
        %v5396 = vld [vmem:[%s5 + $0xea8] sm:$0xff]
        %v5397 = vld [vmem:[%s5 + $0xeb0] sm:$0xff]
        %v5398 = vld [vmem:[%s5 + $0xeb8] sm:$0xff]
        %v5399 = vld [vmem:[%s5 + $0xec0] sm:$0xff]
        %v5400 = vld [vmem:[%s5 + $0xec8] sm:$0xff]
        %v5401 = vld [vmem:[%s5 + $0xed0] sm:$0xff]
        %v5402 = vld [vmem:[%s5 + $0xed8] sm:$0xff]
        %v5403 = vld [vmem:[%s5 + $0xee0] sm:$0xff]
        %v5404 = vld [vmem:[%s5 + $0xee8] sm:$0xff]
        %v5405 = vld [vmem:[%s5 + $0xef0] sm:$0xff]
        %v5406 = vld [vmem:[%s5 + $0xef8] sm:$0xff]
        %v5407 = vld [vmem:[%s5 + $0xf00] sm:$0xff]
        %v5408 = vld [vmem:[%s5 + $0xf08] sm:$0xff]
        %v5409 = vld [vmem:[%s5 + $0xf10] sm:$0xff]
        %v5410 = vld [vmem:[%s5 + $0xf18] sm:$0xff]
        %v5411 = vld [vmem:[%s5 + $0xf20] sm:$0xff]
        %v5412 = vld [vmem:[%s5 + $0xf28] sm:$0xff]
        %v5413 = vld [vmem:[%s5 + $0xf30] sm:$0xff]
        %v5414 = vld [vmem:[%s5 + $0xf38] sm:$0xff]
        %v5415 = vld [vmem:[%s5 + $0xf40] sm:$0xff]
        %v5416 = vld [vmem:[%s5 + $0xf48] sm:$0xff]
        %v5417 = vld [vmem:[%s5 + $0xf50] sm:$0xff]
        %v5418 = vld [vmem:[%s5 + $0xf58] sm:$0xff]
        %v5419 = vld [vmem:[%s5 + $0xf60] sm:$0xff]
        %v5420 = vld [vmem:[%s5 + $0xf68] sm:$0xff]
        %v5421 = vld [vmem:[%s5 + $0xf70] sm:$0xff]
        %v5422 = vld [vmem:[%s5 + $0xf78] sm:$0xff]
        %v5423 = vld [vmem:[%s5 + $0xf80] sm:$0xff]
        %v5424 = vld [vmem:[%s5 + $0xf88] sm:$0xff]
        %v5425 = vld [vmem:[%s5 + $0xf90] sm:$0xff]
        %v5426 = vld [vmem:[%s5 + $0xf98] sm:$0xff]
        %v5427 = vld [vmem:[%s5 + $0xfa0] sm:$0xff]
        %v5428 = vld [vmem:[%s5 + $0xfa8] sm:$0xff]
        %v5429 = vld [vmem:[%s5 + $0xfb0] sm:$0xff]
        %v5430 = vld [vmem:[%s5 + $0xfb8] sm:$0xff]
        %v5431 = vld [vmem:[%s5 + $0xfc0] sm:$0xff]
        %v5432 = vld [vmem:[%s5 + $0xfc8] sm:$0xff]
        %v5433 = vld [vmem:[%s5 + $0xfd0] sm:$0xff]
        %v5434 = vld [vmem:[%s5 + $0xfd8] sm:$0xff]
        %v5435 = vld [vmem:[%s5 + $0xfe0] sm:$0xff]
        %v5436 = vld [vmem:[%s5 + $0xfe8] sm:$0xff]
        %v5437 = vld [vmem:[%s5 + $0xff0] sm:$0xff]
        %v5438 = vld [vmem:[%s5 + $0xff8] sm:$0xff]
        %v5439 = vld [vmem:[%s6] sm:$0x3]
        %v5441 = vlaneseq
        %v5442 = vshrl.u32 %v5441, 7
        %v5443 = vsub.s32 0, %v5442
        %v5444 = vrot.slane %v5439, %v5443
        %v5445 = vlaneseq
        %v5446 = vshrl.u32 %v5445, 7
        %v5447 = vsub.s32 1, %v5446
        %v5448 = vrot.slane %v5439, %v5447
        %5451 = vmatprep.subr.mxu0 %v4958
        %5452 = vmatpush1.msra.mxu0 %v4957
        %5453 = vmatprep.subr.mxu0 %v4956
        %5454 = vmatpush1.msra.mxu0 %v4955
        %5455 = vmatprep.subr.mxu0 %v4954
        %5456 = vmatpush1.msra.mxu0 %v4953
        %5457 = vmatprep.subr.mxu0 %v4952
        %5458 = vmatpush1.msra.mxu0 %v4951
        %5459 = vmatprep.subr.mxu0 %v4950
        %5460 = vmatpush1.msra.mxu0 %v4949
        %5461 = vmatprep.subr.mxu0 %v4948
        %5462 = vmatpush1.msra.mxu0 %v4947
        %5463 = vmatprep.subr.mxu0 %v4946
        %5464 = vmatpush1.msra.mxu0 %v4945
        %5465 = vmatprep.subr.mxu0 %v4944
        %5466 = vmatpush1.msra.mxu0 %v4943
        %5467 = vmatprep.subr.mxu0 %v4942
        %5468 = vmatpush1.msra.mxu0 %v4941
        %5469 = vmatprep.subr.mxu0 %v4940
        %5470 = vmatpush1.msra.mxu0 %v4939
        %5471 = vmatprep.subr.mxu0 %v4938
        %5472 = vmatpush1.msra.mxu0 %v4937
        %5473 = vmatprep.subr.mxu0 %v4936
        %5474 = vmatpush1.msra.mxu0 %v4935
        %5475 = vmatprep.subr.mxu0 %v4934
        %5476 = vmatpush1.msra.mxu0 %v4933
        %5477 = vmatprep.subr.mxu0 %v4932
        %5478 = vmatpush1.msra.mxu0 %v4931
        %5479 = vmatprep.subr.mxu0 %v4930
        %5480 = vmatpush1.msra.mxu0 %v4929
        %5481 = vmatprep.subr.mxu0 %v4928
        %5482 = vmatpush1.msra.mxu0 %v4927
        %5483 = vmatprep.subr.mxu0 %v4990
        %5484 = vmatpush2.msra.mxu0 %v4989
        %5485 = vmatprep.subr.mxu0 %v4988
        %5486 = vmatpush2.msra.mxu0 %v4987
        %5487 = vmatprep.subr.mxu0 %v4986
        %5488 = vmatpush2.msra.mxu0 %v4985
        %5489 = vmatprep.subr.mxu0 %v4984
        %5490 = vmatpush2.msra.mxu0 %v4983
        %5491 = vmatprep.subr.mxu0 %v4982
        %5492 = vmatpush2.msra.mxu0 %v4981
        %5493 = vmatprep.subr.mxu0 %v4980
        %5494 = vmatpush2.msra.mxu0 %v4979
        %5495 = vmatprep.subr.mxu0 %v4978
        %5496 = vmatpush2.msra.mxu0 %v4977
        %5497 = vmatprep.subr.mxu0 %v4976
        %5498 = vmatpush2.msra.mxu0 %v4975
        %5499 = vmatprep.subr.mxu0 %v4974
        %5500 = vmatpush2.msra.mxu0 %v4973
        %5501 = vmatprep.subr.mxu0 %v4972
        %5502 = vmatpush2.msra.mxu0 %v4971
        %5503 = vmatprep.subr.mxu0 %v4970
        %5504 = vmatpush2.msra.mxu0 %v4969
        %5505 = vmatprep.subr.mxu0 %v4968
        %5506 = vmatpush2.msra.mxu0 %v4967
        %5507 = vmatprep.subr.mxu0 %v4966
        %5508 = vmatpush2.msra.mxu0 %v4965
        %5509 = vmatprep.subr.mxu0 %v4964
        %5510 = vmatpush2.msra.mxu0 %v4963
        %5511 = vmatprep.subr.mxu0 %v4962
        %5512 = vmatpush2.msra.mxu0 %v4961
        %5513 = vmatprep.subr.mxu0 %v4960
        %5514 = vmatpush2.msra.mxu0 %v4959
        %5515 = vmatprep.mubr.f32.mxu0 %v4896
        %5516 = vmatmul.mubr.f32.gmra.mxu0 %v4895
        %v5517 = vpop.f32.mrf.mxu0
        %v5518 = vadd.f32 %v5444, %v5517
        %v5519 = vpop.f32.mrf.mxu0
        %v5520 = vadd.f32 %v5448, %v5519
        %5521 = vmatprep.mubr.f32.mxu0 %v4900
        %5522 = vmatmul.mubr.f32.gmra.mxu0 %v4899
        %v5523 = vpop.f32.mrf.mxu0
        %v5524 = vadd.f32 %v5444, %v5523
        %v5525 = vpop.f32.mrf.mxu0
        %v5526 = vadd.f32 %v5448, %v5525
        %5527 = vdwg.mxu0
        %5528 = vmatprep.subr.mxu0 %v5022
        %5529 = vmatpush1.msra.mxu0 %v5021
        %5530 = vmatprep.subr.mxu0 %v5020
        %5531 = vmatpush1.msra.mxu0 %v5019
        %5532 = vmatprep.subr.mxu0 %v5018
        %5533 = vmatpush1.msra.mxu0 %v5017
        %5534 = vmatprep.subr.mxu0 %v5016
        %5535 = vmatpush1.msra.mxu0 %v5015
        %5536 = vmatprep.subr.mxu0 %v5014
        %5537 = vmatpush1.msra.mxu0 %v5013
        %5538 = vmatprep.subr.mxu0 %v5012
        %5539 = vmatpush1.msra.mxu0 %v5011
        %5540 = vmatprep.subr.mxu0 %v5010
        %5541 = vmatpush1.msra.mxu0 %v5009
        %5542 = vmatprep.subr.mxu0 %v5008
        %5543 = vmatpush1.msra.mxu0 %v5007
        %5544 = vmatprep.subr.mxu0 %v5006
        %5545 = vmatpush1.msra.mxu0 %v5005
        %5546 = vmatprep.subr.mxu0 %v5004
        %5547 = vmatpush1.msra.mxu0 %v5003
        %5548 = vmatprep.subr.mxu0 %v5002
        %5549 = vmatpush1.msra.mxu0 %v5001
        %5550 = vmatprep.subr.mxu0 %v5000
        %5551 = vmatpush1.msra.mxu0 %v4999
        %5552 = vmatprep.subr.mxu0 %v4998
        %5553 = vmatpush1.msra.mxu0 %v4997
        %5554 = vmatprep.subr.mxu0 %v4996
        %5555 = vmatpush1.msra.mxu0 %v4995
        %5556 = vmatprep.subr.mxu0 %v4994
        %5557 = vmatpush1.msra.mxu0 %v4993
        %5558 = vmatprep.subr.mxu0 %v4992
        %5559 = vmatpush1.msra.mxu0 %v4991
        %5560 = vmatprep.subr.mxu0 %v5054
        %5561 = vmatpush2.msra.mxu0 %v5053
        %5562 = vmatprep.subr.mxu0 %v5052
        %5563 = vmatpush2.msra.mxu0 %v5051
        %5564 = vmatprep.subr.mxu0 %v5050
        %5565 = vmatpush2.msra.mxu0 %v5049
        %5566 = vmatprep.subr.mxu0 %v5048
        %5567 = vmatpush2.msra.mxu0 %v5047
        %5568 = vmatprep.subr.mxu0 %v5046
        %5569 = vmatpush2.msra.mxu0 %v5045
        %5570 = vmatprep.subr.mxu0 %v5044
        %5571 = vmatpush2.msra.mxu0 %v5043
        %5572 = vmatprep.subr.mxu0 %v5042
        %5573 = vmatpush2.msra.mxu0 %v5041
        %5574 = vmatprep.subr.mxu0 %v5040
        %5575 = vmatpush2.msra.mxu0 %v5039
        %5576 = vmatprep.subr.mxu0 %v5038
        %5577 = vmatpush2.msra.mxu0 %v5037
        %5578 = vmatprep.subr.mxu0 %v5036
        %5579 = vmatpush2.msra.mxu0 %v5035
        %5580 = vmatprep.subr.mxu0 %v5034
        %5581 = vmatpush2.msra.mxu0 %v5033
        %5582 = vmatprep.subr.mxu0 %v5032
        %5583 = vmatpush2.msra.mxu0 %v5031
        %5584 = vmatprep.subr.mxu0 %v5030
        %5585 = vmatpush2.msra.mxu0 %v5029
        %5586 = vmatprep.subr.mxu0 %v5028
        %5587 = vmatpush2.msra.mxu0 %v5027
        %5588 = vmatprep.subr.mxu0 %v5026
        %5589 = vmatpush2.msra.mxu0 %v5025
        %5590 = vmatprep.subr.mxu0 %v5024
        %5591 = vmatpush2.msra.mxu0 %v5023
        %5592 = vmatprep.mubr.f32.mxu0 %v4898
        %5593 = vmatmul.mubr.f32.gmra.mxu0 %v4897
        %v5594 = vpop.f32.mrf.mxu0
        %v5595 = vadd.f32 %v5518, %v5594
        %v5596 = vpop.f32.mrf.mxu0
        %v5597 = vadd.f32 %v5520, %v5596
        %5598 = vmatprep.mubr.f32.mxu0 %v4902
        %5599 = vmatmul.mubr.f32.gmra.mxu0 %v4901
        %v5600 = vpop.f32.mrf.mxu0
        %v5601 = vadd.f32 %v5524, %v5600
        %v5602 = vpop.f32.mrf.mxu0
        %v5603 = vadd.f32 %v5526, %v5602
        %5604 = vdwg.mxu0
        %5605 = vmatprep.subr.mxu0 %v5086
        %5606 = vmatpush1.msra.mxu0 %v5085
        %5607 = vmatprep.subr.mxu0 %v5084
        %5608 = vmatpush1.msra.mxu0 %v5083
        %5609 = vmatprep.subr.mxu0 %v5082
        %5610 = vmatpush1.msra.mxu0 %v5081
        %5611 = vmatprep.subr.mxu0 %v5080
        %5612 = vmatpush1.msra.mxu0 %v5079
        %5613 = vmatprep.subr.mxu0 %v5078
        %5614 = vmatpush1.msra.mxu0 %v5077
        %5615 = vmatprep.subr.mxu0 %v5076
        %5616 = vmatpush1.msra.mxu0 %v5075
        %5617 = vmatprep.subr.mxu0 %v5074
        %5618 = vmatpush1.msra.mxu0 %v5073
        %5619 = vmatprep.subr.mxu0 %v5072
        %5620 = vmatpush1.msra.mxu0 %v5071
        %5621 = vmatprep.subr.mxu0 %v5070
        %5622 = vmatpush1.msra.mxu0 %v5069
        %5623 = vmatprep.subr.mxu0 %v5068
        %5624 = vmatpush1.msra.mxu0 %v5067
        %5625 = vmatprep.subr.mxu0 %v5066
        %5626 = vmatpush1.msra.mxu0 %v5065
        %5627 = vmatprep.subr.mxu0 %v5064
        %5628 = vmatpush1.msra.mxu0 %v5063
        %5629 = vmatprep.subr.mxu0 %v5062
        %5630 = vmatpush1.msra.mxu0 %v5061
        %5631 = vmatprep.subr.mxu0 %v5060
        %5632 = vmatpush1.msra.mxu0 %v5059
        %5633 = vmatprep.subr.mxu0 %v5058
        %5634 = vmatpush1.msra.mxu0 %v5057
        %5635 = vmatprep.subr.mxu0 %v5056
        %5636 = vmatpush1.msra.mxu0 %v5055
        %5637 = vmatprep.subr.mxu0 %v5118
        %5638 = vmatpush2.msra.mxu0 %v5117
        %5639 = vmatprep.subr.mxu0 %v5116
        %5640 = vmatpush2.msra.mxu0 %v5115
        %5641 = vmatprep.subr.mxu0 %v5114
        %5642 = vmatpush2.msra.mxu0 %v5113
        %5643 = vmatprep.subr.mxu0 %v5112
        %5644 = vmatpush2.msra.mxu0 %v5111
        %5645 = vmatprep.subr.mxu0 %v5110
        %5646 = vmatpush2.msra.mxu0 %v5109
        %5647 = vmatprep.subr.mxu0 %v5108
        %5648 = vmatpush2.msra.mxu0 %v5107
        %5649 = vmatprep.subr.mxu0 %v5106
        %5650 = vmatpush2.msra.mxu0 %v5105
        %5651 = vmatprep.subr.mxu0 %v5104
        %5652 = vmatpush2.msra.mxu0 %v5103
        %5653 = vmatprep.subr.mxu0 %v5102
        %5654 = vmatpush2.msra.mxu0 %v5101
        %5655 = vmatprep.subr.mxu0 %v5100
        %5656 = vmatpush2.msra.mxu0 %v5099
        %5657 = vmatprep.subr.mxu0 %v5098
        %5658 = vmatpush2.msra.mxu0 %v5097
        %5659 = vmatprep.subr.mxu0 %v5096
        %5660 = vmatpush2.msra.mxu0 %v5095
        %5661 = vmatprep.subr.mxu0 %v5094
        %5662 = vmatpush2.msra.mxu0 %v5093
        %5663 = vmatprep.subr.mxu0 %v5092
        %5664 = vmatpush2.msra.mxu0 %v5091
        %5665 = vmatprep.subr.mxu0 %v5090
        %5666 = vmatpush2.msra.mxu0 %v5089
        %5667 = vmatprep.subr.mxu0 %v5088
        %5668 = vmatpush2.msra.mxu0 %v5087
        %5669 = vmatprep.mubr.f32.mxu0 %v4904
        %5670 = vmatmul.mubr.f32.gmra.mxu0 %v4903
        %v5671 = vpop.f32.mrf.mxu0
        %v5672 = vadd.f32 %v5595, %v5671
        %v5673 = vpop.f32.mrf.mxu0
        %v5674 = vadd.f32 %v5597, %v5673
        %5675 = vmatprep.mubr.f32.mxu0 %v4908
        %5676 = vmatmul.mubr.f32.gmra.mxu0 %v4907
        %v5677 = vpop.f32.mrf.mxu0
        %v5678 = vadd.f32 %v5601, %v5677
        %v5679 = vpop.f32.mrf.mxu0
        %v5680 = vadd.f32 %v5603, %v5679
        %5681 = vdwg.mxu0
        %5682 = vmatprep.subr.mxu0 %v5150
        %5683 = vmatpush1.msra.mxu0 %v5149
        %5684 = vmatprep.subr.mxu0 %v5148
        %5685 = vmatpush1.msra.mxu0 %v5147
        %5686 = vmatprep.subr.mxu0 %v5146
        %5687 = vmatpush1.msra.mxu0 %v5145
        %5688 = vmatprep.subr.mxu0 %v5144
        %5689 = vmatpush1.msra.mxu0 %v5143
        %5690 = vmatprep.subr.mxu0 %v5142
        %5691 = vmatpush1.msra.mxu0 %v5141
        %5692 = vmatprep.subr.mxu0 %v5140
        %5693 = vmatpush1.msra.mxu0 %v5139
        %5694 = vmatprep.subr.mxu0 %v5138
        %5695 = vmatpush1.msra.mxu0 %v5137
        %5696 = vmatprep.subr.mxu0 %v5136
        %5697 = vmatpush1.msra.mxu0 %v5135
        %5698 = vmatprep.subr.mxu0 %v5134
        %5699 = vmatpush1.msra.mxu0 %v5133
        %5700 = vmatprep.subr.mxu0 %v5132
        %5701 = vmatpush1.msra.mxu0 %v5131
        %5702 = vmatprep.subr.mxu0 %v5130
        %5703 = vmatpush1.msra.mxu0 %v5129
        %5704 = vmatprep.subr.mxu0 %v5128
        %5705 = vmatpush1.msra.mxu0 %v5127
        %5706 = vmatprep.subr.mxu0 %v5126
        %5707 = vmatpush1.msra.mxu0 %v5125
        %5708 = vmatprep.subr.mxu0 %v5124
        %5709 = vmatpush1.msra.mxu0 %v5123
        %5710 = vmatprep.subr.mxu0 %v5122
        %5711 = vmatpush1.msra.mxu0 %v5121
        %5712 = vmatprep.subr.mxu0 %v5120
        %5713 = vmatpush1.msra.mxu0 %v5119
        %5714 = vmatprep.subr.mxu0 %v5182
        %5715 = vmatpush2.msra.mxu0 %v5181
        %5716 = vmatprep.subr.mxu0 %v5180
        %5717 = vmatpush2.msra.mxu0 %v5179
        %5718 = vmatprep.subr.mxu0 %v5178
        %5719 = vmatpush2.msra.mxu0 %v5177
        %5720 = vmatprep.subr.mxu0 %v5176
        %5721 = vmatpush2.msra.mxu0 %v5175
        %5722 = vmatprep.subr.mxu0 %v5174
        %5723 = vmatpush2.msra.mxu0 %v5173
        %5724 = vmatprep.subr.mxu0 %v5172
        %5725 = vmatpush2.msra.mxu0 %v5171
        %5726 = vmatprep.subr.mxu0 %v5170
        %5727 = vmatpush2.msra.mxu0 %v5169
        %5728 = vmatprep.subr.mxu0 %v5168
        %5729 = vmatpush2.msra.mxu0 %v5167
        %5730 = vmatprep.subr.mxu0 %v5166
        %5731 = vmatpush2.msra.mxu0 %v5165
        %5732 = vmatprep.subr.mxu0 %v5164
        %5733 = vmatpush2.msra.mxu0 %v5163
        %5734 = vmatprep.subr.mxu0 %v5162
        %5735 = vmatpush2.msra.mxu0 %v5161
        %5736 = vmatprep.subr.mxu0 %v5160
        %5737 = vmatpush2.msra.mxu0 %v5159
        %5738 = vmatprep.subr.mxu0 %v5158
        %5739 = vmatpush2.msra.mxu0 %v5157
        %5740 = vmatprep.subr.mxu0 %v5156
        %5741 = vmatpush2.msra.mxu0 %v5155
        %5742 = vmatprep.subr.mxu0 %v5154
        %5743 = vmatpush2.msra.mxu0 %v5153
        %5744 = vmatprep.subr.mxu0 %v5152
        %5745 = vmatpush2.msra.mxu0 %v5151
        %5746 = vmatprep.mubr.f32.mxu0 %v4906
        %5747 = vmatmul.mubr.f32.gmra.mxu0 %v4905
        %v5748 = vpop.f32.mrf.mxu0
        %v5749 = vadd.f32 %v5672, %v5748
        %v5750 = vpop.f32.mrf.mxu0
        %v5751 = vadd.f32 %v5674, %v5750
        %5752 = vmatprep.mubr.f32.mxu0 %v4910
        %5753 = vmatmul.mubr.f32.gmra.mxu0 %v4909
        %v5754 = vpop.f32.mrf.mxu0
        %v5755 = vadd.f32 %v5678, %v5754
        %v5756 = vpop.f32.mrf.mxu0
        %v5757 = vadd.f32 %v5680, %v5756
        %5758 = vdwg.mxu0
        %5759 = vmatprep.subr.mxu0 %v5214
        %5760 = vmatpush1.msra.mxu0 %v5213
        %5761 = vmatprep.subr.mxu0 %v5212
        %5762 = vmatpush1.msra.mxu0 %v5211
        %5763 = vmatprep.subr.mxu0 %v5210
        %5764 = vmatpush1.msra.mxu0 %v5209
        %5765 = vmatprep.subr.mxu0 %v5208
        %5766 = vmatpush1.msra.mxu0 %v5207
        %5767 = vmatprep.subr.mxu0 %v5206
        %5768 = vmatpush1.msra.mxu0 %v5205
        %5769 = vmatprep.subr.mxu0 %v5204
        %5770 = vmatpush1.msra.mxu0 %v5203
        %5771 = vmatprep.subr.mxu0 %v5202
        %5772 = vmatpush1.msra.mxu0 %v5201
        %5773 = vmatprep.subr.mxu0 %v5200
        %5774 = vmatpush1.msra.mxu0 %v5199
        %5775 = vmatprep.subr.mxu0 %v5198
        %5776 = vmatpush1.msra.mxu0 %v5197
        %5777 = vmatprep.subr.mxu0 %v5196
        %5778 = vmatpush1.msra.mxu0 %v5195
        %5779 = vmatprep.subr.mxu0 %v5194
        %5780 = vmatpush1.msra.mxu0 %v5193
        %5781 = vmatprep.subr.mxu0 %v5192
        %5782 = vmatpush1.msra.mxu0 %v5191
        %5783 = vmatprep.subr.mxu0 %v5190
        %5784 = vmatpush1.msra.mxu0 %v5189
        %5785 = vmatprep.subr.mxu0 %v5188
        %5786 = vmatpush1.msra.mxu0 %v5187
        %5787 = vmatprep.subr.mxu0 %v5186
        %5788 = vmatpush1.msra.mxu0 %v5185
        %5789 = vmatprep.subr.mxu0 %v5184
        %5790 = vmatpush1.msra.mxu0 %v5183
        %5791 = vmatprep.subr.mxu0 %v5246
        %5792 = vmatpush2.msra.mxu0 %v5245
        %5793 = vmatprep.subr.mxu0 %v5244
        %5794 = vmatpush2.msra.mxu0 %v5243
        %5795 = vmatprep.subr.mxu0 %v5242
        %5796 = vmatpush2.msra.mxu0 %v5241
        %5797 = vmatprep.subr.mxu0 %v5240
        %5798 = vmatpush2.msra.mxu0 %v5239
        %5799 = vmatprep.subr.mxu0 %v5238
        %5800 = vmatpush2.msra.mxu0 %v5237
        %5801 = vmatprep.subr.mxu0 %v5236
        %5802 = vmatpush2.msra.mxu0 %v5235
        %5803 = vmatprep.subr.mxu0 %v5234
        %5804 = vmatpush2.msra.mxu0 %v5233
        %5805 = vmatprep.subr.mxu0 %v5232
        %5806 = vmatpush2.msra.mxu0 %v5231
        %5807 = vmatprep.subr.mxu0 %v5230
        %5808 = vmatpush2.msra.mxu0 %v5229
        %5809 = vmatprep.subr.mxu0 %v5228
        %5810 = vmatpush2.msra.mxu0 %v5227
        %5811 = vmatprep.subr.mxu0 %v5226
        %5812 = vmatpush2.msra.mxu0 %v5225
        %5813 = vmatprep.subr.mxu0 %v5224
        %5814 = vmatpush2.msra.mxu0 %v5223
        %5815 = vmatprep.subr.mxu0 %v5222
        %5816 = vmatpush2.msra.mxu0 %v5221
        %5817 = vmatprep.subr.mxu0 %v5220
        %5818 = vmatpush2.msra.mxu0 %v5219
        %5819 = vmatprep.subr.mxu0 %v5218
        %5820 = vmatpush2.msra.mxu0 %v5217
        %5821 = vmatprep.subr.mxu0 %v5216
        %5822 = vmatpush2.msra.mxu0 %v5215
        %5823 = vmatprep.mubr.f32.mxu0 %v4912
        %5824 = vmatmul.mubr.f32.gmra.mxu0 %v4911
        %v5825 = vpop.f32.mrf.mxu0
        %v5826 = vadd.f32 %v5749, %v5825
        %v5827 = vpop.f32.mrf.mxu0
        %v5828 = vadd.f32 %v5751, %v5827
        %5829 = vmatprep.mubr.f32.mxu0 %v4916
        %5830 = vmatmul.mubr.f32.gmra.mxu0 %v4915
        %v5831 = vpop.f32.mrf.mxu0
        %v5832 = vadd.f32 %v5755, %v5831
        %v5833 = vpop.f32.mrf.mxu0
        %v5834 = vadd.f32 %v5757, %v5833
        %5835 = vdwg.mxu0
        %5836 = vmatprep.subr.mxu0 %v5278
        %5837 = vmatpush1.msra.mxu0 %v5277
        %5838 = vmatprep.subr.mxu0 %v5276
        %5839 = vmatpush1.msra.mxu0 %v5275
        %5840 = vmatprep.subr.mxu0 %v5274
        %5841 = vmatpush1.msra.mxu0 %v5273
        %5842 = vmatprep.subr.mxu0 %v5272
        %5843 = vmatpush1.msra.mxu0 %v5271
        %5844 = vmatprep.subr.mxu0 %v5270
        %5845 = vmatpush1.msra.mxu0 %v5269
        %5846 = vmatprep.subr.mxu0 %v5268
        %5847 = vmatpush1.msra.mxu0 %v5267
        %5848 = vmatprep.subr.mxu0 %v5266
        %5849 = vmatpush1.msra.mxu0 %v5265
        %5850 = vmatprep.subr.mxu0 %v5264
        %5851 = vmatpush1.msra.mxu0 %v5263
        %5852 = vmatprep.subr.mxu0 %v5262
        %5853 = vmatpush1.msra.mxu0 %v5261
        %5854 = vmatprep.subr.mxu0 %v5260
        %5855 = vmatpush1.msra.mxu0 %v5259
        %5856 = vmatprep.subr.mxu0 %v5258
        %5857 = vmatpush1.msra.mxu0 %v5257
        %5858 = vmatprep.subr.mxu0 %v5256
        %5859 = vmatpush1.msra.mxu0 %v5255
        %5860 = vmatprep.subr.mxu0 %v5254
        %5861 = vmatpush1.msra.mxu0 %v5253
        %5862 = vmatprep.subr.mxu0 %v5252
        %5863 = vmatpush1.msra.mxu0 %v5251
        %5864 = vmatprep.subr.mxu0 %v5250
        %5865 = vmatpush1.msra.mxu0 %v5249
        %5866 = vmatprep.subr.mxu0 %v5248
        %5867 = vmatpush1.msra.mxu0 %v5247
        %5868 = vmatprep.subr.mxu0 %v5310
        %5869 = vmatpush2.msra.mxu0 %v5309
        %5870 = vmatprep.subr.mxu0 %v5308
        %5871 = vmatpush2.msra.mxu0 %v5307
        %5872 = vmatprep.subr.mxu0 %v5306
        %5873 = vmatpush2.msra.mxu0 %v5305
        %5874 = vmatprep.subr.mxu0 %v5304
        %5875 = vmatpush2.msra.mxu0 %v5303
        %5876 = vmatprep.subr.mxu0 %v5302
        %5877 = vmatpush2.msra.mxu0 %v5301
        %5878 = vmatprep.subr.mxu0 %v5300
        %5879 = vmatpush2.msra.mxu0 %v5299
        %5880 = vmatprep.subr.mxu0 %v5298
        %5881 = vmatpush2.msra.mxu0 %v5297
        %5882 = vmatprep.subr.mxu0 %v5296
        %5883 = vmatpush2.msra.mxu0 %v5295
        %5884 = vmatprep.subr.mxu0 %v5294
        %5885 = vmatpush2.msra.mxu0 %v5293
        %5886 = vmatprep.subr.mxu0 %v5292
        %5887 = vmatpush2.msra.mxu0 %v5291
        %5888 = vmatprep.subr.mxu0 %v5290
        %5889 = vmatpush2.msra.mxu0 %v5289
        %5890 = vmatprep.subr.mxu0 %v5288
        %5891 = vmatpush2.msra.mxu0 %v5287
        %5892 = vmatprep.subr.mxu0 %v5286
        %5893 = vmatpush2.msra.mxu0 %v5285
        %5894 = vmatprep.subr.mxu0 %v5284
        %5895 = vmatpush2.msra.mxu0 %v5283
        %5896 = vmatprep.subr.mxu0 %v5282
        %5897 = vmatpush2.msra.mxu0 %v5281
        %5898 = vmatprep.subr.mxu0 %v5280
        %5899 = vmatpush2.msra.mxu0 %v5279
        %5900 = vmatprep.mubr.f32.mxu0 %v4914
        %5901 = vmatmul.mubr.f32.gmra.mxu0 %v4913
        %v5902 = vpop.f32.mrf.mxu0
        %v5903 = vadd.f32 %v5826, %v5902
        %v5904 = vpop.f32.mrf.mxu0
        %v5905 = vadd.f32 %v5828, %v5904
        %5906 = vmatprep.mubr.f32.mxu0 %v4918
        %5907 = vmatmul.mubr.f32.gmra.mxu0 %v4917
        %v5908 = vpop.f32.mrf.mxu0
        %v5909 = vadd.f32 %v5832, %v5908
        %v5910 = vpop.f32.mrf.mxu0
        %v5911 = vadd.f32 %v5834, %v5910
        %5912 = vdwg.mxu0
        %5913 = vmatprep.subr.mxu0 %v5342
        %5914 = vmatpush1.msra.mxu0 %v5341
        %5915 = vmatprep.subr.mxu0 %v5340
        %5916 = vmatpush1.msra.mxu0 %v5339
        %5917 = vmatprep.subr.mxu0 %v5338
        %5918 = vmatpush1.msra.mxu0 %v5337
        %5919 = vmatprep.subr.mxu0 %v5336
        %5920 = vmatpush1.msra.mxu0 %v5335
        %5921 = vmatprep.subr.mxu0 %v5334
        %5922 = vmatpush1.msra.mxu0 %v5333
        %5923 = vmatprep.subr.mxu0 %v5332
        %5924 = vmatpush1.msra.mxu0 %v5331
        %5925 = vmatprep.subr.mxu0 %v5330
        %5926 = vmatpush1.msra.mxu0 %v5329
        %5927 = vmatprep.subr.mxu0 %v5328
        %5928 = vmatpush1.msra.mxu0 %v5327
        %5929 = vmatprep.subr.mxu0 %v5326
        %5930 = vmatpush1.msra.mxu0 %v5325
        %5931 = vmatprep.subr.mxu0 %v5324
        %5932 = vmatpush1.msra.mxu0 %v5323
        %5933 = vmatprep.subr.mxu0 %v5322
        %5934 = vmatpush1.msra.mxu0 %v5321
        %5935 = vmatprep.subr.mxu0 %v5320
        %5936 = vmatpush1.msra.mxu0 %v5319
        %5937 = vmatprep.subr.mxu0 %v5318
        %5938 = vmatpush1.msra.mxu0 %v5317
        %5939 = vmatprep.subr.mxu0 %v5316
        %5940 = vmatpush1.msra.mxu0 %v5315
        %5941 = vmatprep.subr.mxu0 %v5314
        %5942 = vmatpush1.msra.mxu0 %v5313
        %5943 = vmatprep.subr.mxu0 %v5312
        %5944 = vmatpush1.msra.mxu0 %v5311
        %5945 = vmatprep.subr.mxu0 %v5374
        %5946 = vmatpush2.msra.mxu0 %v5373
        %5947 = vmatprep.subr.mxu0 %v5372
        %5948 = vmatpush2.msra.mxu0 %v5371
        %5949 = vmatprep.subr.mxu0 %v5370
        %5950 = vmatpush2.msra.mxu0 %v5369
        %5951 = vmatprep.subr.mxu0 %v5368
        %5952 = vmatpush2.msra.mxu0 %v5367
        %5953 = vmatprep.subr.mxu0 %v5366
        %5954 = vmatpush2.msra.mxu0 %v5365
        %5955 = vmatprep.subr.mxu0 %v5364
        %5956 = vmatpush2.msra.mxu0 %v5363
        %5957 = vmatprep.subr.mxu0 %v5362
        %5958 = vmatpush2.msra.mxu0 %v5361
        %5959 = vmatprep.subr.mxu0 %v5360
        %5960 = vmatpush2.msra.mxu0 %v5359
        %5961 = vmatprep.subr.mxu0 %v5358
        %5962 = vmatpush2.msra.mxu0 %v5357
        %5963 = vmatprep.subr.mxu0 %v5356
        %5964 = vmatpush2.msra.mxu0 %v5355
        %5965 = vmatprep.subr.mxu0 %v5354
        %5966 = vmatpush2.msra.mxu0 %v5353
        %5967 = vmatprep.subr.mxu0 %v5352
        %5968 = vmatpush2.msra.mxu0 %v5351
        %5969 = vmatprep.subr.mxu0 %v5350
        %5970 = vmatpush2.msra.mxu0 %v5349
        %5971 = vmatprep.subr.mxu0 %v5348
        %5972 = vmatpush2.msra.mxu0 %v5347
        %5973 = vmatprep.subr.mxu0 %v5346
        %5974 = vmatpush2.msra.mxu0 %v5345
        %5975 = vmatprep.subr.mxu0 %v5344
        %5976 = vmatpush2.msra.mxu0 %v5343
        %5977 = vmatprep.mubr.f32.mxu0 %v4920
        %5978 = vmatmul.mubr.f32.gmra.mxu0 %v4919
        %v5979 = vpop.f32.mrf.mxu0
        %v5980 = vadd.f32 %v5903, %v5979
        %v5981 = vpop.f32.mrf.mxu0
        %v5982 = vadd.f32 %v5905, %v5981
        %5983 = vmatprep.mubr.f32.mxu0 %v4924
        %5984 = vmatmul.mubr.f32.gmra.mxu0 %v4923
        %v5985 = vpop.f32.mrf.mxu0
        %v5986 = vadd.f32 %v5909, %v5985
        %v5987 = vpop.f32.mrf.mxu0
        %v5988 = vadd.f32 %v5911, %v5987
        %5989 = vdwg.mxu0
        %5990 = vmatprep.subr.mxu0 %v5406
        %5991 = vmatpush1.msra.mxu0 %v5405
        %5992 = vmatprep.subr.mxu0 %v5404
        %5993 = vmatpush1.msra.mxu0 %v5403
        %5994 = vmatprep.subr.mxu0 %v5402
        %5995 = vmatpush1.msra.mxu0 %v5401
        %5996 = vmatprep.subr.mxu0 %v5400
        %5997 = vmatpush1.msra.mxu0 %v5399
        %5998 = vmatprep.subr.mxu0 %v5398
        %5999 = vmatpush1.msra.mxu0 %v5397
        %6000 = vmatprep.subr.mxu0 %v5396
        %6001 = vmatpush1.msra.mxu0 %v5395
        %6002 = vmatprep.subr.mxu0 %v5394
        %6003 = vmatpush1.msra.mxu0 %v5393
        %6004 = vmatprep.subr.mxu0 %v5392
        %6005 = vmatpush1.msra.mxu0 %v5391
        %6006 = vmatprep.subr.mxu0 %v5390
        %6007 = vmatpush1.msra.mxu0 %v5389
        %6008 = vmatprep.subr.mxu0 %v5388
        %6009 = vmatpush1.msra.mxu0 %v5387
        %6010 = vmatprep.subr.mxu0 %v5386
        %6011 = vmatpush1.msra.mxu0 %v5385
        %6012 = vmatprep.subr.mxu0 %v5384
        %6013 = vmatpush1.msra.mxu0 %v5383
        %6014 = vmatprep.subr.mxu0 %v5382
        %6015 = vmatpush1.msra.mxu0 %v5381
        %6016 = vmatprep.subr.mxu0 %v5380
        %6017 = vmatpush1.msra.mxu0 %v5379
        %6018 = vmatprep.subr.mxu0 %v5378
        %6019 = vmatpush1.msra.mxu0 %v5377
        %6020 = vmatprep.subr.mxu0 %v5376
        %6021 = vmatpush1.msra.mxu0 %v5375
        %6022 = vmatprep.subr.mxu0 %v5438
        %6023 = vmatpush2.msra.mxu0 %v5437
        %6024 = vmatprep.subr.mxu0 %v5436
        %6025 = vmatpush2.msra.mxu0 %v5435
        %6026 = vmatprep.subr.mxu0 %v5434
        %6027 = vmatpush2.msra.mxu0 %v5433
        %6028 = vmatprep.subr.mxu0 %v5432
        %6029 = vmatpush2.msra.mxu0 %v5431
        %6030 = vmatprep.subr.mxu0 %v5430
        %6031 = vmatpush2.msra.mxu0 %v5429
        %6032 = vmatprep.subr.mxu0 %v5428
        %6033 = vmatpush2.msra.mxu0 %v5427
        %6034 = vmatprep.subr.mxu0 %v5426
        %6035 = vmatpush2.msra.mxu0 %v5425
        %6036 = vmatprep.subr.mxu0 %v5424
        %6037 = vmatpush2.msra.mxu0 %v5423
        %6038 = vmatprep.subr.mxu0 %v5422
        %6039 = vmatpush2.msra.mxu0 %v5421
        %6040 = vmatprep.subr.mxu0 %v5420
        %6041 = vmatpush2.msra.mxu0 %v5419
        %6042 = vmatprep.subr.mxu0 %v5418
        %6043 = vmatpush2.msra.mxu0 %v5417
        %6044 = vmatprep.subr.mxu0 %v5416
        %6045 = vmatpush2.msra.mxu0 %v5415
        %6046 = vmatprep.subr.mxu0 %v5414
        %6047 = vmatpush2.msra.mxu0 %v5413
        %6048 = vmatprep.subr.mxu0 %v5412
        %6049 = vmatpush2.msra.mxu0 %v5411
        %6050 = vmatprep.subr.mxu0 %v5410
        %6051 = vmatpush2.msra.mxu0 %v5409
        %6052 = vmatprep.subr.mxu0 %v5408
        %6053 = vmatpush2.msra.mxu0 %v5407
        %6054 = vmatprep.mubr.f32.mxu0 %v4922
        %6055 = vmatmul.mubr.f32.gmra.mxu0 %v4921
        %v6056 = vpop.f32.mrf.mxu0
        %v6057 = vadd.f32 %v5980, %v6056
        %v6058 = vpop.f32.mrf.mxu0
        %v6059 = vadd.f32 %v5982, %v6058
        %6060 = vmatprep.mubr.f32.mxu0 %v4926
        %6061 = vmatmul.mubr.f32.gmra.mxu0 %v4925
        %v6062 = vpop.f32.mrf.mxu0
        %v6063 = vadd.f32 %v5986, %v6062
        %v6064 = vpop.f32.mrf.mxu0
        %v6065 = vadd.f32 %v5988, %v6064
        %6066 = vdwg.mxu0
        %vm6067 = vcmp.ge.f32.partialorder %v6057, 0.0
        %vm6068 = vcmp.ge.f32.partialorder %v6059, 0.0
        %vm6069 = vcmp.ge.f32.partialorder %v6063, 0.0
        %vm6070 = vcmp.ge.f32.partialorder %v6065, 0.0
        %v6071 = vmul.f32 %v6057, 0.2
        %v6072 = vmul.f32 %v6059, 0.2
        %v6073 = vmul.f32 %v6063, 0.2
        %v6074 = vmul.f32 %v6065, 0.2
        %v6075 = vsel %vm6067, %v6057, %v6071
        %v6076 = vsel %vm6068, %v6059, %v6072
        %v6077 = vsel %vm6069, %v6063, %v6073
        %v6078 = vsel %vm6070, %v6065, %v6074
        %v6079 = vld [vmem:[%s7] sm:$0xff]
        %v6080 = vld [vmem:[%s7 + $0x8] sm:$0xff]
        %v6081 = vld [vmem:[%s7 + $0x10] sm:$0xff]
        %v6082 = vld [vmem:[%s7 + $0x18] sm:$0xff]
        %v6083 = vld [vmem:[%s7 + $0x20] sm:$0xff]
        %v6084 = vld [vmem:[%s7 + $0x28] sm:$0xff]
        %v6085 = vld [vmem:[%s7 + $0x30] sm:$0xff]
        %v6086 = vld [vmem:[%s7 + $0x38] sm:$0xff]
        %v6087 = vld [vmem:[%s7 + $0x40] sm:$0xff]
        %v6088 = vld [vmem:[%s7 + $0x48] sm:$0xff]
        %v6089 = vld [vmem:[%s7 + $0x50] sm:$0xff]
        %v6090 = vld [vmem:[%s7 + $0x58] sm:$0xff]
        %v6091 = vld [vmem:[%s7 + $0x60] sm:$0xff]
        %v6092 = vld [vmem:[%s7 + $0x68] sm:$0xff]
        %v6093 = vld [vmem:[%s7 + $0x70] sm:$0xff]
        %v6094 = vld [vmem:[%s7 + $0x78] sm:$0xff]
        %v6095 = vld [vmem:[%s7 + $0x80] sm:$0xff]
        %v6096 = vld [vmem:[%s7 + $0x88] sm:$0xff]
        %v6097 = vld [vmem:[%s7 + $0x90] sm:$0xff]
        %v6098 = vld [vmem:[%s7 + $0x98] sm:$0xff]
        %v6099 = vld [vmem:[%s7 + $0xa0] sm:$0xff]
        %v6100 = vld [vmem:[%s7 + $0xa8] sm:$0xff]
        %v6101 = vld [vmem:[%s7 + $0xb0] sm:$0xff]
        %v6102 = vld [vmem:[%s7 + $0xb8] sm:$0xff]
        %v6103 = vld [vmem:[%s7 + $0xc0] sm:$0xff]
        %v6104 = vld [vmem:[%s7 + $0xc8] sm:$0xff]
        %v6105 = vld [vmem:[%s7 + $0xd0] sm:$0xff]
        %v6106 = vld [vmem:[%s7 + $0xd8] sm:$0xff]
        %v6107 = vld [vmem:[%s7 + $0xe0] sm:$0xff]
        %v6108 = vld [vmem:[%s7 + $0xe8] sm:$0xff]
        %v6109 = vld [vmem:[%s7 + $0xf0] sm:$0xff]
        %v6110 = vld [vmem:[%s7 + $0xf8] sm:$0xff]
        %v6111 = vld [vmem:[%s7 + $0x100] sm:$0xff]
        %v6112 = vld [vmem:[%s7 + $0x108] sm:$0xff]
        %v6113 = vld [vmem:[%s7 + $0x110] sm:$0xff]
        %v6114 = vld [vmem:[%s7 + $0x118] sm:$0xff]
        %v6115 = vld [vmem:[%s7 + $0x120] sm:$0xff]
        %v6116 = vld [vmem:[%s7 + $0x128] sm:$0xff]
        %v6117 = vld [vmem:[%s7 + $0x130] sm:$0xff]
        %v6118 = vld [vmem:[%s7 + $0x138] sm:$0xff]
        %v6119 = vld [vmem:[%s7 + $0x140] sm:$0xff]
        %v6120 = vld [vmem:[%s7 + $0x148] sm:$0xff]
        %v6121 = vld [vmem:[%s7 + $0x150] sm:$0xff]
        %v6122 = vld [vmem:[%s7 + $0x158] sm:$0xff]
        %v6123 = vld [vmem:[%s7 + $0x160] sm:$0xff]
        %v6124 = vld [vmem:[%s7 + $0x168] sm:$0xff]
        %v6125 = vld [vmem:[%s7 + $0x170] sm:$0xff]
        %v6126 = vld [vmem:[%s7 + $0x178] sm:$0xff]
        %v6127 = vld [vmem:[%s7 + $0x180] sm:$0xff]
        %v6128 = vld [vmem:[%s7 + $0x188] sm:$0xff]
        %v6129 = vld [vmem:[%s7 + $0x190] sm:$0xff]
        %v6130 = vld [vmem:[%s7 + $0x198] sm:$0xff]
        %v6131 = vld [vmem:[%s7 + $0x1a0] sm:$0xff]
        %v6132 = vld [vmem:[%s7 + $0x1a8] sm:$0xff]
        %v6133 = vld [vmem:[%s7 + $0x1b0] sm:$0xff]
        %v6134 = vld [vmem:[%s7 + $0x1b8] sm:$0xff]
        %v6135 = vld [vmem:[%s7 + $0x1c0] sm:$0xff]
        %v6136 = vld [vmem:[%s7 + $0x1c8] sm:$0xff]
        %v6137 = vld [vmem:[%s7 + $0x1d0] sm:$0xff]
        %v6138 = vld [vmem:[%s7 + $0x1d8] sm:$0xff]
        %v6139 = vld [vmem:[%s7 + $0x1e0] sm:$0xff]
        %v6140 = vld [vmem:[%s7 + $0x1e8] sm:$0xff]
        %v6141 = vld [vmem:[%s7 + $0x1f0] sm:$0xff]
        %v6142 = vld [vmem:[%s7 + $0x1f8] sm:$0xff]
        %v6143 = vld [vmem:[%s8] sm:$0x1]
        %v6145 = vlaneseq
        %v6146 = vshrl.u32 %v6145, 7
        %v6147 = vsub.s32 0, %v6146
        %v6148 = vrot.slane %v6143, %v6147
        %6150 = vmatprep.subr.mxu0 0.0
        %6151 = vmatpush1.msra.mxu0 %v6094
        %6152 = vmatprep.subr.mxu0 0.0
        %6153 = vmatpush1.msra.mxu0 %v6093
        %6154 = vmatprep.subr.mxu0 0.0
        %6155 = vmatpush1.msra.mxu0 %v6092
        %6156 = vmatprep.subr.mxu0 0.0
        %6157 = vmatpush1.msra.mxu0 %v6091
        %6158 = vmatprep.subr.mxu0 0.0
        %6159 = vmatpush1.msra.mxu0 %v6090
        %6160 = vmatprep.subr.mxu0 0.0
        %6161 = vmatpush1.msra.mxu0 %v6089
        %6162 = vmatprep.subr.mxu0 0.0
        %6163 = vmatpush1.msra.mxu0 %v6088
        %6164 = vmatprep.subr.mxu0 0.0
        %6165 = vmatpush1.msra.mxu0 %v6087
        %6166 = vmatprep.subr.mxu0 0.0
        %6167 = vmatpush1.msra.mxu0 %v6086
        %6168 = vmatprep.subr.mxu0 0.0
        %6169 = vmatpush1.msra.mxu0 %v6085
        %6170 = vmatprep.subr.mxu0 0.0
        %6171 = vmatpush1.msra.mxu0 %v6084
        %6172 = vmatprep.subr.mxu0 0.0
        %6173 = vmatpush1.msra.mxu0 %v6083
        %6174 = vmatprep.subr.mxu0 0.0
        %6175 = vmatpush1.msra.mxu0 %v6082
        %6176 = vmatprep.subr.mxu0 0.0
        %6177 = vmatpush1.msra.mxu0 %v6081
        %6178 = vmatprep.subr.mxu0 0.0
        %6179 = vmatpush1.msra.mxu0 %v6080
        %6180 = vmatprep.subr.mxu0 0.0
        %6181 = vmatpush1.msra.mxu0 %v6079
        %6182 = vmatprep.subr.mxu0 0.0
        %6183 = vmatpush2.msra.mxu0 %v6110
        %6184 = vmatprep.subr.mxu0 0.0
        %6185 = vmatpush2.msra.mxu0 %v6109
        %6186 = vmatprep.subr.mxu0 0.0
        %6187 = vmatpush2.msra.mxu0 %v6108
        %6188 = vmatprep.subr.mxu0 0.0
        %6189 = vmatpush2.msra.mxu0 %v6107
        %6190 = vmatprep.subr.mxu0 0.0
        %6191 = vmatpush2.msra.mxu0 %v6106
        %6192 = vmatprep.subr.mxu0 0.0
        %6193 = vmatpush2.msra.mxu0 %v6105
        %6194 = vmatprep.subr.mxu0 0.0
        %6195 = vmatpush2.msra.mxu0 %v6104
        %6196 = vmatprep.subr.mxu0 0.0
        %6197 = vmatpush2.msra.mxu0 %v6103
        %6198 = vmatprep.subr.mxu0 0.0
        %6199 = vmatpush2.msra.mxu0 %v6102
        %6200 = vmatprep.subr.mxu0 0.0
        %6201 = vmatpush2.msra.mxu0 %v6101
        %6202 = vmatprep.subr.mxu0 0.0
        %6203 = vmatpush2.msra.mxu0 %v6100
        %6204 = vmatprep.subr.mxu0 0.0
        %6205 = vmatpush2.msra.mxu0 %v6099
        %6206 = vmatprep.subr.mxu0 0.0
        %6207 = vmatpush2.msra.mxu0 %v6098
        %6208 = vmatprep.subr.mxu0 0.0
        %6209 = vmatpush2.msra.mxu0 %v6097
        %6210 = vmatprep.subr.mxu0 0.0
        %6211 = vmatpush2.msra.mxu0 %v6096
        %6212 = vmatprep.subr.mxu0 0.0
        %6213 = vmatpush2.msra.mxu0 %v6095
        %6214 = vmatprep.mubr.f32.mxu0 %v6076
        %6215 = vmatmul.mubr.f32.gmra.mxu0 %v6075
        %v6216 = vpop.f32.mrf.mxu0
        %v6217 = vadd.f32 %v6148, %v6216
        %v6218 = vpop.f32.mrf.mxu0
        %6219 = vdwg.mxu0
        %6220 = vmatprep.subr.mxu0 0.0
        %6221 = vmatpush1.msra.mxu0 %v6126
        %6222 = vmatprep.subr.mxu0 0.0
        %6223 = vmatpush1.msra.mxu0 %v6125
        %6224 = vmatprep.subr.mxu0 0.0
        %6225 = vmatpush1.msra.mxu0 %v6124
        %6226 = vmatprep.subr.mxu0 0.0
        %6227 = vmatpush1.msra.mxu0 %v6123
        %6228 = vmatprep.subr.mxu0 0.0
        %6229 = vmatpush1.msra.mxu0 %v6122
        %6230 = vmatprep.subr.mxu0 0.0
        %6231 = vmatpush1.msra.mxu0 %v6121
        %6232 = vmatprep.subr.mxu0 0.0
        %6233 = vmatpush1.msra.mxu0 %v6120
        %6234 = vmatprep.subr.mxu0 0.0
        %6235 = vmatpush1.msra.mxu0 %v6119
        %6236 = vmatprep.subr.mxu0 0.0
        %6237 = vmatpush1.msra.mxu0 %v6118
        %6238 = vmatprep.subr.mxu0 0.0
        %6239 = vmatpush1.msra.mxu0 %v6117
        %6240 = vmatprep.subr.mxu0 0.0
        %6241 = vmatpush1.msra.mxu0 %v6116
        %6242 = vmatprep.subr.mxu0 0.0
        %6243 = vmatpush1.msra.mxu0 %v6115
        %6244 = vmatprep.subr.mxu0 0.0
        %6245 = vmatpush1.msra.mxu0 %v6114
        %6246 = vmatprep.subr.mxu0 0.0
        %6247 = vmatpush1.msra.mxu0 %v6113
        %6248 = vmatprep.subr.mxu0 0.0
        %6249 = vmatpush1.msra.mxu0 %v6112
        %6250 = vmatprep.subr.mxu0 0.0
        %6251 = vmatpush1.msra.mxu0 %v6111
        %6252 = vmatprep.subr.mxu0 0.0
        %6253 = vmatpush2.msra.mxu0 %v6142
        %6254 = vmatprep.subr.mxu0 0.0
        %6255 = vmatpush2.msra.mxu0 %v6141
        %6256 = vmatprep.subr.mxu0 0.0
        %6257 = vmatpush2.msra.mxu0 %v6140
        %6258 = vmatprep.subr.mxu0 0.0
        %6259 = vmatpush2.msra.mxu0 %v6139
        %6260 = vmatprep.subr.mxu0 0.0
        %6261 = vmatpush2.msra.mxu0 %v6138
        %6262 = vmatprep.subr.mxu0 0.0
        %6263 = vmatpush2.msra.mxu0 %v6137
        %6264 = vmatprep.subr.mxu0 0.0
        %6265 = vmatpush2.msra.mxu0 %v6136
        %6266 = vmatprep.subr.mxu0 0.0
        %6267 = vmatpush2.msra.mxu0 %v6135
        %6268 = vmatprep.subr.mxu0 0.0
        %6269 = vmatpush2.msra.mxu0 %v6134
        %6270 = vmatprep.subr.mxu0 0.0
        %6271 = vmatpush2.msra.mxu0 %v6133
        %6272 = vmatprep.subr.mxu0 0.0
        %6273 = vmatpush2.msra.mxu0 %v6132
        %6274 = vmatprep.subr.mxu0 0.0
        %6275 = vmatpush2.msra.mxu0 %v6131
        %6276 = vmatprep.subr.mxu0 0.0
        %6277 = vmatpush2.msra.mxu0 %v6130
        %6278 = vmatprep.subr.mxu0 0.0
        %6279 = vmatpush2.msra.mxu0 %v6129
        %6280 = vmatprep.subr.mxu0 0.0
        %6281 = vmatpush2.msra.mxu0 %v6128
        %6282 = vmatprep.subr.mxu0 0.0
        %6283 = vmatpush2.msra.mxu0 %v6127
        %6284 = vmatprep.mubr.f32.mxu0 %v6078
        %6285 = vmatmul.mubr.f32.gmra.mxu0 %v6077
        %v6286 = vpop.f32.mrf.mxu0
        %v6287 = vadd.f32 %v6217, %v6286
        %v6288 = vpop.f32.mrf.mxu0
        %6289 = vdwg.mxu0
        %6290 = vst [vmem:[%s1403] sm:$0xff] %v6287
        %s6291 = sand.u32 %s241, 1
        %s6292 = scalar_lea.sflag [#allocation4], %s6291
        %s6293 = sand.u32 %s241, 1
        %s6294 = smul.addr %s6293, 8
        %s6295 = scalar_lea.vmem [#allocation3], %s6294
        // Predicated region
        $region95: #{_lambda_.1} parent=89 // pred_check
          %p6296 = pneg %p251
        $region96: #{_lambda_.1} parent=89 // pred_check_branch
          %6298 = sbr.rel (%p6296) target = $region98
        $region97: #{_lambda_.1} parent=89 // pred_region
          %s6300 = ssub.s32 128, 128
          %6301 = vsyncadd %s6292, %s6300
          %s6302 = smul.addr %s27, 4
          %s6303 = sadd.s32 %s28, %s6302
          %s6304 = smul.addr %s6303, 128
          %s6305 = scalar_lea.hbm %s9, %s6304
          %s6307 = sshll.u32 %s6295, 4
          %s6308 = int_to_ptr.vmem [resolvable:$true] %s6307
          %6310 = dma.vmem_to_hbm [thread:$0]  %s6308, 128, %s6305, %s6292
        $region98: #{_lambda_.1} parent=89 // pred_fallthru
          _
      $region90: #{_lambda_.1} parent=5 // pred_fallthru
        _
      %p6311 = scmp.le.s32.totalorder 2, %s18
      // Predicated region
      $region99: #{_lambda_.1} parent=5 // pred_check
        %p6312 = pneg %p6311
      $region100: #{_lambda_.1} parent=5 // pred_check_branch
        %6314 = sbr.rel (%p6312) target = $region102
      $region101: #{_lambda_.1} parent=5 // pred_region
        %s6315 = ssub.s32 %s18, 2
        // Predicated region
        $region103: #{_lambda_.1} parent=101 // pred_check
          %p6316 = pneg %p257
        $region104: #{_lambda_.1} parent=101 // pred_check_branch
          %6318 = sbr.rel (%p6316) target = $region106
        $region105: #{_lambda_.1} parent=101 // pred_region
          %s6319 = sand.u32 %s242, 1
          %s6320 = scalar_lea.sflag [#allocation4], %s6319
          %s6321 = sand.u32 %s242, 1
          %s6322 = smul.addr %s6321, 8
          %s6323 = scalar_lea.vmem [#allocation3], %s6322
          %6324 = dma.done %s6320, 128
        $region106: #{_lambda_.1} parent=101 // pred_fallthru
          _
      $region102: #{_lambda_.1} parent=5 // pred_fallthru
        _
    $region6: #{_lambda_.1} parent=1 // loop_footer
      %s22 = sadd.s32 1, %s18
    $region7: #{_lambda_.1} parent=1 // loop_footer_branch
      %17 = sbr.rel target = $region3
    $region8: #{_lambda_.1} parent=1 // loop_exit
      _
    %6325 = vsyncpa [#allocation4], 1
    %s6326 = scalar_lea.sflag [#allocation4], 1
    %6327 = vsyncpa %s6326, 1

</llo_original>
